<compile_context>
chip_gen: v7x
topology: tpu7x:2x2x1
jax: 0.10.0
libtpu: 0.0.40
codegen_flags: <defaults>
</compile_context>

<pallas_src>
import functools

import jax
import jax.numpy as jnp
from jax.experimental import pallas as pl
from jax.experimental.pallas import tpu as pltpu


# ----------------------------------------------------------------------------
# Fused generator kernel (one batch element per grid step, everything in VMEM)
# ----------------------------------------------------------------------------
def _make_generator_kernel(H, W, c_in, hidden):
    HW = H * W
    taps = [(dy, dx) for dy in range(3) for dx in range(3)]

    def conv_im2col(pad_ref, col_ref, w_ref, cin):
        """3x3 SAME conv over the padded map as one K=9*cin im2col matmul."""
        cout = w_ref.shape[-1]
        xp = pad_ref[...]                                   # (H+2, W+2, hidden)
        # Build the im2col matrix once in VMEM scratch (lane blocks of cin).
        for t, (dy, dx) in enumerate(taps):
            patch = xp[dy:dy + H, dx:dx + W, :cin].reshape(HW, cin)
            col_ref[:, t * cin:(t + 1) * cin] = patch
        # Single fused matmul, chunked at K<=128 (v5e MXU width).
        K = 9 * cin
        acc = jnp.zeros((HW, cout), jnp.float32)
        for k0 in range(0, K, 128):
            k1 = min(k0 + 128, K)
            acc = acc + jnp.dot(col_ref[:, k0:k1], w_ref[k0:k1, :],
                                preferred_element_type=jnp.float32)
        return acc

    def inorm_act(acc, g_ref, bt_ref, relu):
        # Single-pass instance-norm stats (E[x^2] - mu^2), fused affine + act.
        inv_n = 1.0 / HW
        mean = jnp.sum(acc, axis=0, keepdims=True) * inv_n
        ex2 = jnp.sum(acc * acc, axis=0, keepdims=True) * inv_n
        var = jnp.maximum(ex2 - mean * mean, 0.0)   # guard tiny cancellation
        y = (acc - mean) * (jax.lax.rsqrt(var + 1e-5) * g_ref[...]) + bt_ref[...]
        if relu:
            y = jnp.maximum(y, 0.0)
        return y

    def kernel(x_ref, w1_ref, g1_ref, bt1_ref, w2_ref, g2_ref, bt2_ref,
               w3_ref, g3_ref, bt3_ref, w4_ref, b4_ref, o_ref,
               pad_ref, col_ref):
        # Zero the padded scratch once per batch element: the 1-pixel border
        # stays zero (SAME padding); interiors are overwritten per layer.
        pad_ref[...] = jnp.zeros(pad_ref.shape, pad_ref.dtype)

        # ---- layer 1: conv3x3 -> IN -> ReLU   (c_in -> hidden) --------------
        pad_ref[1:H + 1, 1:W + 1, 0:c_in] = x_ref[0]
        h = inorm_act(conv_im2col(pad_ref, col_ref, w1_ref, c_in),
                      g1_ref, bt1_ref, relu=True)             # (HW, hidden)

        # ---- residual block --------------------------------------------------
        pad_ref[1:H + 1, 1:W + 1, :] = h.reshape(H, W, hidden)
        r = inorm_act(conv_im2col(pad_ref, col_ref, w2_ref, hidden),
                      g2_ref, bt2_ref, relu=True)

        pad_ref[1:H + 1, 1:W + 1, :] = r.reshape(H, W, hidden)
        r = inorm_act(conv_im2col(pad_ref, col_ref, w3_ref, hidden),
                      g3_ref, bt3_ref, relu=False)

        h = h + r                                             # skip connection

        # ---- output layer: conv3x3 -> bias -> tanh (hidden -> c_in) ---------
        pad_ref[1:H + 1, 1:W + 1, :] = h.reshape(H, W, hidden)
        y = conv_im2col(pad_ref, col_ref, w4_ref, hidden) + b4_ref[...]
        y = jnp.tanh(y)
        o_ref[...] = y.reshape(1, H, W, c_in)

    return kernel


# ----------------------------------------------------------------------------
# IIT model (generator only — see TODO above)
# ----------------------------------------------------------------------------
def init_iit_params(key, c_in=4, hidden=32):
    """Deterministic synthetic generator parameters."""
    ks = jax.random.split(key, 4)

    def conv_params(k, cin, cout, scale=0.05):
        w = scale * jax.random.normal(k, (3, 3, cin, cout), jnp.float32)
        b = jnp.zeros((1, cout), jnp.float32)
        g = jnp.ones((1, cout), jnp.float32)
        bt = jnp.zeros((1, cout), jnp.float32)
        return {"w": w, "b": b, "g": g, "bt": bt}

    return {
        "l1": conv_params(ks[0], c_in, hidden),
        "l2": conv_params(ks[1], hidden, hidden),
        "l3": conv_params(ks[2], hidden, hidden),
        "l4": conv_params(ks[3], hidden, c_in),
    }


def iit_generate(params, x_nchw):
    """IIT.generate(x): translated image.  x_nchw: (B, C, H, W) float32."""
    x = jnp.transpose(x_nchw, (0, 2, 3, 1))   # NCHW -> NHWC (channels on lanes)
    B, H, W, C = x.shape
    hidden = params["l1"]["w"].shape[-1]

    # Flatten conv weights to the im2col layout (9*Cin, Cout) host-side (free).
    w1 = params["l1"]["w"].reshape(9 * C, hidden)
    w2 = params["l2"]["w"].reshape(9 * hidden, hidden)
    w3 = params["l3"]["w"].reshape(9 * hidden, hidden)
    w4 = params["l4"]["w"].reshape(9 * hidden, C)

    kernel = _make_generator_kernel(H, W, C, hidden)

    def full(shape):
        return pl.BlockSpec(shape, lambda b: (0,) * len(shape))

    out = pl.pallas_call(
        kernel,
        out_shape=jax.ShapeDtypeStruct((B, H, W, C), jnp.float32),
        grid=(B,),
        in_specs=[
            pl.BlockSpec((1, H, W, C), lambda b: (b, 0, 0, 0)),
            full((9 * C, hidden)), full((1, hidden)), full((1, hidden)),
            full((9 * hidden, hidden)), full((1, hidden)), full((1, hidden)),
            full((9 * hidden, hidden)), full((1, hidden)), full((1, hidden)),
            full((9 * hidden, C)), full((1, C)),
        ],
        out_specs=pl.BlockSpec((1, H, W, C), lambda b: (b, 0, 0, 0)),
        scratch_shapes=[
            pltpu.VMEM((H + 2, W + 2, hidden), jnp.float32),   # padded map
            pltpu.VMEM((H * W, 9 * hidden), jnp.float32),      # im2col buffer
        ],
        compiler_params=pltpu.CompilerParams(
            dimension_semantics=("parallel",),
            vmem_limit_bytes=32 * 1024 * 1024,
        ),
    )(x, w1, params["l1"]["g"], params["l1"]["bt"],
      w2, params["l2"]["g"], params["l2"]["bt"],
      w3, params["l3"]["g"], params["l3"]["bt"],
      w4, params["l4"]["b"])

    return jnp.transpose(out, (0, 3, 1, 2))   # NHWC -> NCHW


# ----------------------------------------------------------------------------
# Pure-JAX reference (for correctness checking)
# ----------------------------------------------------------------------------
def _ref_block(x, w, b, gamma, beta, *, use_in, act):
    y = jax.lax.conv_general_dilated(
        x, w, window_strides=(1, 1), padding="SAME",
        dimension_numbers=("NHWC", "HWIO", "NHWC"))
    y = y + b.reshape(1, 1, 1, -1)
    if use_in:
        mean = jnp.mean(y, axis=(1, 2), keepdims=True)
        var = jnp.mean((y - mean) ** 2, axis=(1, 2), keepdims=True)
        y = (y - mean) * jax.lax.rsqrt(var + 1e-5)
        y = y * gamma.reshape(1, 1, 1, -1) + beta.reshape(1, 1, 1, -1)
    if act == "relu":
        y = jnp.maximum(y, 0.0)
    elif act == "tanh":
        y = jnp.tanh(y)
    return y


def iit_generate_ref(params, x_nchw):
    x = jnp.transpose(x_nchw, (0, 2, 3, 1))
    p = params["l1"]
    h = _ref_block(x, p["w"], p["b"], p["g"], p["bt"], use_in=True, act="relu")
    p = params["l2"]
    r = _ref_block(h, p["w"], p["b"], p["g"], p["bt"], use_in=True, act="relu")
    p = params["l3"]
    r = _ref_block(r, p["w"], p["b"], p["g"], p["bt"], use_in=True, act="none")
    h = h + r
    p = params["l4"]
    y = _ref_block(h, p["w"], p["b"], p["g"], p["bt"], use_in=False, act="tanh")
    return jnp.transpose(y, (0, 3, 1, 2))


# ----------------------------------------------------------------------------
if __name__ == "__main__":
    key = jax.random.PRNGKey(0)
    k_param, k_x = jax.random.split(key)

    B, C, H, W = 2, 4, 16, 16
    hidden = 32

    params = init_iit_params(k_param, c_in=C, hidden=hidden)
    x = jax.random.normal(k_x, (B, C, H, W), jnp.float32)

    out = jax.jit(functools.partial(iit_generate, params))(x)
    out = jax.block_until_ready(out)

    ref = jax.block_until_ready(iit_generate_ref(params, x))

    assert out.shape == (B, C, H, W), out.shape
    assert out.dtype == jnp.float32
    assert jnp.allclose(out, ref, rtol=1e-3, atol=1e-3), (
        float(jnp.max(jnp.abs(out - ref))))

    print("KERNEL_OK")
</pallas_src>

<mosaic_0001>
module attributes {stable_mosaic.version = 11 : i64} {
  func.func @kernel(%arg0: i32, %arg1: memref<1x16x16x4xf32, #tpu.memory_space<vmem>>, %arg2: memref<36x32xf32, #tpu.memory_space<vmem>>, %arg3: memref<1x32xf32, #tpu.memory_space<vmem>>, %arg4: memref<1x32xf32, #tpu.memory_space<vmem>>, %arg5: memref<288x32xf32, #tpu.memory_space<vmem>>, %arg6: memref<1x32xf32, #tpu.memory_space<vmem>>, %arg7: memref<1x32xf32, #tpu.memory_space<vmem>>, %arg8: memref<288x32xf32, #tpu.memory_space<vmem>>, %arg9: memref<1x32xf32, #tpu.memory_space<vmem>>, %arg10: memref<1x32xf32, #tpu.memory_space<vmem>>, %arg11: memref<288x4xf32, #tpu.memory_space<vmem>>, %arg12: memref<1x4xf32, #tpu.memory_space<vmem>>, %arg13: memref<1x16x16x4xf32, #tpu.memory_space<vmem>>, %arg14: memref<18x18x32xf32, #tpu.memory_space<vmem>>, %arg15: memref<256x288xf32, #tpu.memory_space<vmem>>) attributes {dimension_semantics = [#tpu.dimension_semantics<parallel>], iteration_bounds = array<i64: 2>, scalar_prefetch = 0 : i64, scratch_operands = 2 : i64, tpu.core_type = #tpu.core_type<tc>, window_params = [{transform_indices = @transform_0, window_bounds = array<i64: 1, 16, 16, 4>}, {pipeline_mode = #tpu.pipeline_mode<synchronous>, transform_indices = @transform_1, window_bounds = array<i64: 36, 32>}, {pipeline_mode = #tpu.pipeline_mode<synchronous>, transform_indices = @transform_2, window_bounds = array<i64: 1, 32>}, {pipeline_mode = #tpu.pipeline_mode<synchronous>, transform_indices = @transform_3, window_bounds = array<i64: 1, 32>}, {pipeline_mode = #tpu.pipeline_mode<synchronous>, transform_indices = @transform_4, window_bounds = array<i64: 288, 32>}, {pipeline_mode = #tpu.pipeline_mode<synchronous>, transform_indices = @transform_5, window_bounds = array<i64: 1, 32>}, {pipeline_mode = #tpu.pipeline_mode<synchronous>, transform_indices = @transform_6, window_bounds = array<i64: 1, 32>}, {pipeline_mode = #tpu.pipeline_mode<synchronous>, transform_indices = @transform_7, window_bounds = array<i64: 288, 32>}, {pipeline_mode = #tpu.pipeline_mode<synchronous>, transform_indices = @transform_8, window_bounds = array<i64: 1, 32>}, {pipeline_mode = #tpu.pipeline_mode<synchronous>, transform_indices = @transform_9, window_bounds = array<i64: 1, 32>}, {pipeline_mode = #tpu.pipeline_mode<synchronous>, transform_indices = @transform_10, window_bounds = array<i64: 288, 4>}, {pipeline_mode = #tpu.pipeline_mode<synchronous>, transform_indices = @transform_11, window_bounds = array<i64: 1, 4>}, {transform_indices = @transform_12, window_bounds = array<i64: 1, 16, 16, 4>}]} {
    %cst = arith.constant 0.000000e+00 : f32
    %0 = vector.broadcast %cst : f32 to vector<18x18x32xf32>
    %c0 = arith.constant 0 : index
    %c0_0 = arith.constant 0 : index
    %c0_1 = arith.constant 0 : index
    %1 = vector.load %arg14[%c0, %c0_0, %c0_1] : memref<18x18x32xf32, #tpu.memory_space<vmem>>, vector<18x18x32xf32>
    tpu.vector_store %arg14[%c0, %c0_0, %c0_1], %0 {strides = array<i32>} : memref<18x18x32xf32, #tpu.memory_space<vmem>>, vector<18x18x32xf32>,
    %c0_2 = arith.constant 0 : index
    %c0_3 = arith.constant 0 : index
    %c0_4 = arith.constant 0 : index
    %c0_5 = arith.constant 0 : index
    %2 = vector.load %arg1[%c0_2, %c0_3, %c0_4, %c0_5] : memref<1x16x16x4xf32, #tpu.memory_space<vmem>>, vector<1x16x16x4xf32>
    %3 = vector.shape_cast %2 : vector<1x16x16x4xf32> to vector<16x16x4xf32>
    %c1 = arith.constant 1 : index
    %c1_6 = arith.constant 1 : index
    %c0_7 = arith.constant 0 : index
    %4 = vector.load %arg14[%c1, %c1_6, %c0_7] : memref<18x18x32xf32, #tpu.memory_space<vmem>>, vector<16x16x4xf32>
    tpu.vector_store %arg14[%c1, %c1_6, %c0_7], %3 {strides = array<i32>} : memref<18x18x32xf32, #tpu.memory_space<vmem>>, vector<16x16x4xf32>,
    %c0_8 = arith.constant 0 : index
    %c0_9 = arith.constant 0 : index
    %c0_10 = arith.constant 0 : index
    %5 = vector.load %arg14[%c0_8, %c0_9, %c0_10] : memref<18x18x32xf32, #tpu.memory_space<vmem>>, vector<18x18x32xf32>
    %6 = vector.extract_strided_slice %5 {offsets = [0, 0, 0], sizes = [16, 16, 4], strides = [1, 1, 1]} : vector<18x18x32xf32> to vector<16x16x4xf32>
    %7 = vector.shape_cast %6 : vector<16x16x4xf32> to vector<256x4xf32>
    %c0_11 = arith.constant 0 : index
    %c0_12 = arith.constant 0 : index
    %8 = vector.load %arg15[%c0_11, %c0_12] : memref<256x288xf32, #tpu.memory_space<vmem>>, vector<256x4xf32>
    tpu.vector_store %arg15[%c0_11, %c0_12], %7 {strides = array<i32>} : memref<256x288xf32, #tpu.memory_space<vmem>>, vector<256x4xf32>,
    %9 = vector.extract_strided_slice %5 {offsets = [0, 1, 0], sizes = [16, 16, 4], strides = [1, 1, 1]} : vector<18x18x32xf32> to vector<16x16x4xf32>
    %10 = vector.shape_cast %9 : vector<16x16x4xf32> to vector<256x4xf32>
    %c0_13 = arith.constant 0 : index
    %c4 = arith.constant 4 : index
    %11 = vector.load %arg15[%c0_13, %c4] : memref<256x288xf32, #tpu.memory_space<vmem>>, vector<256x4xf32>
    tpu.vector_store %arg15[%c0_13, %c4], %10 {strides = array<i32>} : memref<256x288xf32, #tpu.memory_space<vmem>>, vector<256x4xf32>,
    %12 = vector.extract_strided_slice %5 {offsets = [0, 2, 0], sizes = [16, 16, 4], strides = [1, 1, 1]} : vector<18x18x32xf32> to vector<16x16x4xf32>
    %13 = vector.shape_cast %12 : vector<16x16x4xf32> to vector<256x4xf32>
    %c0_14 = arith.constant 0 : index
    %c8 = arith.constant 8 : index
    %14 = vector.load %arg15[%c0_14, %c8] : memref<256x288xf32, #tpu.memory_space<vmem>>, vector<256x4xf32>
    tpu.vector_store %arg15[%c0_14, %c8], %13 {strides = array<i32>} : memref<256x288xf32, #tpu.memory_space<vmem>>, vector<256x4xf32>,
    %15 = vector.extract_strided_slice %5 {offsets = [1, 0, 0], sizes = [16, 16, 4], strides = [1, 1, 1]} : vector<18x18x32xf32> to vector<16x16x4xf32>
    %16 = vector.shape_cast %15 : vector<16x16x4xf32> to vector<256x4xf32>
    %c0_15 = arith.constant 0 : index
    %c12 = arith.constant 12 : index
    %17 = vector.load %arg15[%c0_15, %c12] : memref<256x288xf32, #tpu.memory_space<vmem>>, vector<256x4xf32>
    tpu.vector_store %arg15[%c0_15, %c12], %16 {strides = array<i32>} : memref<256x288xf32, #tpu.memory_space<vmem>>, vector<256x4xf32>,
    %18 = vector.extract_strided_slice %5 {offsets = [1, 1, 0], sizes = [16, 16, 4], strides = [1, 1, 1]} : vector<18x18x32xf32> to vector<16x16x4xf32>
    %19 = vector.shape_cast %18 : vector<16x16x4xf32> to vector<256x4xf32>
    %c0_16 = arith.constant 0 : index
    %c16 = arith.constant 16 : index
    %20 = vector.load %arg15[%c0_16, %c16] : memref<256x288xf32, #tpu.memory_space<vmem>>, vector<256x4xf32>
    tpu.vector_store %arg15[%c0_16, %c16], %19 {strides = array<i32>} : memref<256x288xf32, #tpu.memory_space<vmem>>, vector<256x4xf32>,
    %21 = vector.extract_strided_slice %5 {offsets = [1, 2, 0], sizes = [16, 16, 4], strides = [1, 1, 1]} : vector<18x18x32xf32> to vector<16x16x4xf32>
    %22 = vector.shape_cast %21 : vector<16x16x4xf32> to vector<256x4xf32>
    %c0_17 = arith.constant 0 : index
    %c20 = arith.constant 20 : index
    %23 = vector.load %arg15[%c0_17, %c20] : memref<256x288xf32, #tpu.memory_space<vmem>>, vector<256x4xf32>
    tpu.vector_store %arg15[%c0_17, %c20], %22 {strides = array<i32>} : memref<256x288xf32, #tpu.memory_space<vmem>>, vector<256x4xf32>,
    %24 = vector.extract_strided_slice %5 {offsets = [2, 0, 0], sizes = [16, 16, 4], strides = [1, 1, 1]} : vector<18x18x32xf32> to vector<16x16x4xf32>
    %25 = vector.shape_cast %24 : vector<16x16x4xf32> to vector<256x4xf32>
    %c0_18 = arith.constant 0 : index
    %c24 = arith.constant 24 : index
    %26 = vector.load %arg15[%c0_18, %c24] : memref<256x288xf32, #tpu.memory_space<vmem>>, vector<256x4xf32>
    tpu.vector_store %arg15[%c0_18, %c24], %25 {strides = array<i32>} : memref<256x288xf32, #tpu.memory_space<vmem>>, vector<256x4xf32>,
    %27 = vector.extract_strided_slice %5 {offsets = [2, 1, 0], sizes = [16, 16, 4], strides = [1, 1, 1]} : vector<18x18x32xf32> to vector<16x16x4xf32>
    %28 = vector.shape_cast %27 : vector<16x16x4xf32> to vector<256x4xf32>
    %c0_19 = arith.constant 0 : index
    %c28 = arith.constant 28 : index
    %29 = vector.load %arg15[%c0_19, %c28] : memref<256x288xf32, #tpu.memory_space<vmem>>, vector<256x4xf32>
    tpu.vector_store %arg15[%c0_19, %c28], %28 {strides = array<i32>} : memref<256x288xf32, #tpu.memory_space<vmem>>, vector<256x4xf32>,
    %30 = vector.extract_strided_slice %5 {offsets = [2, 2, 0], sizes = [16, 16, 4], strides = [1, 1, 1]} : vector<18x18x32xf32> to vector<16x16x4xf32>
    %31 = vector.shape_cast %30 : vector<16x16x4xf32> to vector<256x4xf32>
    %c0_20 = arith.constant 0 : index
    %c32 = arith.constant 32 : index
    %32 = vector.load %arg15[%c0_20, %c32] : memref<256x288xf32, #tpu.memory_space<vmem>>, vector<256x4xf32>
    tpu.vector_store %arg15[%c0_20, %c32], %31 {strides = array<i32>} : memref<256x288xf32, #tpu.memory_space<vmem>>, vector<256x4xf32>,
    %cst_21 = arith.constant 0.000000e+00 : f32
    %33 = vector.broadcast %cst_21 : f32 to vector<256x32xf32>
    %c0_22 = arith.constant 0 : index
    %c0_23 = arith.constant 0 : index
    %34 = vector.load %arg15[%c0_22, %c0_23] : memref<256x288xf32, #tpu.memory_space<vmem>>, vector<256x36xf32>
    %c0_24 = arith.constant 0 : index
    %c0_25 = arith.constant 0 : index
    %35 = vector.load %arg2[%c0_24, %c0_25] : memref<36x32xf32, #tpu.memory_space<vmem>>, vector<36x32xf32>
    %cst_26 = arith.constant dense<0.000000e+00> : vector<256x32xf32>
    %36 = tpu.matmul %34, %35, %cst_26 {dimension_numbers = #tpu.dot_dimension_numbers<[1], [0], [0], [1], [0, 0, 1, 1], [], []>} : vector<256x36xf32>, vector<36x32xf32>, vector<256x32xf32> -> vector<256x32xf32>
    %37 = arith.addf %33, %36 : vector<256x32xf32>
    %cst_27 = arith.constant dense<0.000000e+00> : vector<32xf32>
    %38 = vector.multi_reduction <add>, %37, %cst_27 [0] : vector<256x32xf32> to vector<32xf32>
    %39 = vector.shape_cast %38 : vector<32xf32> to vector<1x32xf32>
    %cst_28 = arith.constant 3.906250e-03 : f32
    %40 = vector.broadcast %cst_28 : f32 to vector<1x32xf32>
    %41 = arith.mulf %39, %40 : vector<1x32xf32>
    %42 = arith.mulf %37, %37 : vector<256x32xf32>
    %cst_29 = arith.constant dense<0.000000e+00> : vector<32xf32>
    %43 = vector.multi_reduction <add>, %42, %cst_29 [0] : vector<256x32xf32> to vector<32xf32>
    %44 = vector.shape_cast %43 : vector<32xf32> to vector<1x32xf32>
    %cst_30 = arith.constant 3.906250e-03 : f32
    %45 = vector.broadcast %cst_30 : f32 to vector<1x32xf32>
    %46 = arith.mulf %44, %45 : vector<1x32xf32>
    %47 = arith.mulf %41, %41 : vector<1x32xf32>
    %48 = arith.subf %46, %47 : vector<1x32xf32>
    %cst_31 = arith.constant 0.000000e+00 : f32
    %49 = vector.broadcast %cst_31 : f32 to vector<1x32xf32>
    %50 = arith.maximumf %48, %49 : vector<1x32xf32>
    %51 = vector.broadcast %41 : vector<1x32xf32> to vector<256x32xf32>
    %52 = arith.subf %37, %51 : vector<256x32xf32>
    %cst_32 = arith.constant 9.99999974E-6 : f32
    %53 = vector.broadcast %cst_32 : f32 to vector<1x32xf32>
    %54 = arith.addf %50, %53 : vector<1x32xf32>
    %55 = math.rsqrt %54 : vector<1x32xf32>
    %c0_33 = arith.constant 0 : index
    %c0_34 = arith.constant 0 : index
    %56 = vector.load %arg3[%c0_33, %c0_34] : memref<1x32xf32, #tpu.memory_space<vmem>>, vector<1x32xf32>
    %57 = arith.mulf %55, %56 : vector<1x32xf32>
    %58 = vector.broadcast %57 : vector<1x32xf32> to vector<256x32xf32>
    %59 = arith.mulf %52, %58 : vector<256x32xf32>
    %c0_35 = arith.constant 0 : index
    %c0_36 = arith.constant 0 : index
    %60 = vector.load %arg4[%c0_35, %c0_36] : memref<1x32xf32, #tpu.memory_space<vmem>>, vector<1x32xf32>
    %61 = vector.broadcast %60 : vector<1x32xf32> to vector<256x32xf32>
    %62 = arith.addf %59, %61 : vector<256x32xf32>
    %cst_37 = arith.constant 0.000000e+00 : f32
    %63 = vector.broadcast %cst_37 : f32 to vector<256x32xf32>
    %64 = arith.maximumf %62, %63 : vector<256x32xf32>
    %65 = vector.shape_cast %64 : vector<256x32xf32> to vector<16x16x32xf32>
    %c1_38 = arith.constant 1 : index
    %c1_39 = arith.constant 1 : index
    %c0_40 = arith.constant 0 : index
    %66 = vector.load %arg14[%c1_38, %c1_39, %c0_40] : memref<18x18x32xf32, #tpu.memory_space<vmem>>, vector<16x16x32xf32>
    tpu.vector_store %arg14[%c1_38, %c1_39, %c0_40], %65 {strides = array<i32>} : memref<18x18x32xf32, #tpu.memory_space<vmem>>, vector<16x16x32xf32>,
    %c0_41 = arith.constant 0 : index
    %c0_42 = arith.constant 0 : index
    %c0_43 = arith.constant 0 : index
    %67 = vector.load %arg14[%c0_41, %c0_42, %c0_43] : memref<18x18x32xf32, #tpu.memory_space<vmem>>, vector<18x18x32xf32>
    %68 = vector.extract_strided_slice %67 {offsets = [0, 0, 0], sizes = [16, 16, 32], strides = [1, 1, 1]} : vector<18x18x32xf32> to vector<16x16x32xf32>
    %69 = vector.shape_cast %68 : vector<16x16x32xf32> to vector<256x32xf32>
    %c0_44 = arith.constant 0 : index
    %c0_45 = arith.constant 0 : index
    %70 = vector.load %arg15[%c0_44, %c0_45] : memref<256x288xf32, #tpu.memory_space<vmem>>, vector<256x32xf32>
    tpu.vector_store %arg15[%c0_44, %c0_45], %69 {strides = array<i32>} : memref<256x288xf32, #tpu.memory_space<vmem>>, vector<256x32xf32>,
    %71 = vector.extract_strided_slice %67 {offsets = [0, 1, 0], sizes = [16, 16, 32], strides = [1, 1, 1]} : vector<18x18x32xf32> to vector<16x16x32xf32>
    %72 = vector.shape_cast %71 : vector<16x16x32xf32> to vector<256x32xf32>
    %c0_46 = arith.constant 0 : index
    %c32_47 = arith.constant 32 : index
    %73 = vector.load %arg15[%c0_46, %c32_47] : memref<256x288xf32, #tpu.memory_space<vmem>>, vector<256x32xf32>
    tpu.vector_store %arg15[%c0_46, %c32_47], %72 {strides = array<i32>} : memref<256x288xf32, #tpu.memory_space<vmem>>, vector<256x32xf32>,
    %74 = vector.extract_strided_slice %67 {offsets = [0, 2, 0], sizes = [16, 16, 32], strides = [1, 1, 1]} : vector<18x18x32xf32> to vector<16x16x32xf32>
    %75 = vector.shape_cast %74 : vector<16x16x32xf32> to vector<256x32xf32>
    %c0_48 = arith.constant 0 : index
    %c64 = arith.constant 64 : index
    %76 = vector.load %arg15[%c0_48, %c64] : memref<256x288xf32, #tpu.memory_space<vmem>>, vector<256x32xf32>
    tpu.vector_store %arg15[%c0_48, %c64], %75 {strides = array<i32>} : memref<256x288xf32, #tpu.memory_space<vmem>>, vector<256x32xf32>,
    %77 = vector.extract_strided_slice %67 {offsets = [1, 0, 0], sizes = [16, 16, 32], strides = [1, 1, 1]} : vector<18x18x32xf32> to vector<16x16x32xf32>
    %78 = vector.shape_cast %77 : vector<16x16x32xf32> to vector<256x32xf32>
    %c0_49 = arith.constant 0 : index
    %c96 = arith.constant 96 : index
    %79 = vector.load %arg15[%c0_49, %c96] : memref<256x288xf32, #tpu.memory_space<vmem>>, vector<256x32xf32>
    tpu.vector_store %arg15[%c0_49, %c96], %78 {strides = array<i32>} : memref<256x288xf32, #tpu.memory_space<vmem>>, vector<256x32xf32>,
    %80 = vector.extract_strided_slice %67 {offsets = [1, 1, 0], sizes = [16, 16, 32], strides = [1, 1, 1]} : vector<18x18x32xf32> to vector<16x16x32xf32>
    %81 = vector.shape_cast %80 : vector<16x16x32xf32> to vector<256x32xf32>
    %c0_50 = arith.constant 0 : index
    %c128 = arith.constant 128 : index
    %82 = vector.load %arg15[%c0_50, %c128] : memref<256x288xf32, #tpu.memory_space<vmem>>, vector<256x32xf32>
    tpu.vector_store %arg15[%c0_50, %c128], %81 {strides = array<i32>} : memref<256x288xf32, #tpu.memory_space<vmem>>, vector<256x32xf32>,
    %83 = vector.extract_strided_slice %67 {offsets = [1, 2, 0], sizes = [16, 16, 32], strides = [1, 1, 1]} : vector<18x18x32xf32> to vector<16x16x32xf32>
    %84 = vector.shape_cast %83 : vector<16x16x32xf32> to vector<256x32xf32>
    %c0_51 = arith.constant 0 : index
    %c160 = arith.constant 160 : index
    %85 = vector.load %arg15[%c0_51, %c160] : memref<256x288xf32, #tpu.memory_space<vmem>>, vector<256x32xf32>
    tpu.vector_store %arg15[%c0_51, %c160], %84 {strides = array<i32>} : memref<256x288xf32, #tpu.memory_space<vmem>>, vector<256x32xf32>,
    %86 = vector.extract_strided_slice %67 {offsets = [2, 0, 0], sizes = [16, 16, 32], strides = [1, 1, 1]} : vector<18x18x32xf32> to vector<16x16x32xf32>
    %87 = vector.shape_cast %86 : vector<16x16x32xf32> to vector<256x32xf32>
    %c0_52 = arith.constant 0 : index
    %c192 = arith.constant 192 : index
    %88 = vector.load %arg15[%c0_52, %c192] : memref<256x288xf32, #tpu.memory_space<vmem>>, vector<256x32xf32>
    tpu.vector_store %arg15[%c0_52, %c192], %87 {strides = array<i32>} : memref<256x288xf32, #tpu.memory_space<vmem>>, vector<256x32xf32>,
    %89 = vector.extract_strided_slice %67 {offsets = [2, 1, 0], sizes = [16, 16, 32], strides = [1, 1, 1]} : vector<18x18x32xf32> to vector<16x16x32xf32>
    %90 = vector.shape_cast %89 : vector<16x16x32xf32> to vector<256x32xf32>
    %c0_53 = arith.constant 0 : index
    %c224 = arith.constant 224 : index
    %91 = vector.load %arg15[%c0_53, %c224] : memref<256x288xf32, #tpu.memory_space<vmem>>, vector<256x32xf32>
    tpu.vector_store %arg15[%c0_53, %c224], %90 {strides = array<i32>} : memref<256x288xf32, #tpu.memory_space<vmem>>, vector<256x32xf32>,
    %92 = vector.extract_strided_slice %67 {offsets = [2, 2, 0], sizes = [16, 16, 32], strides = [1, 1, 1]} : vector<18x18x32xf32> to vector<16x16x32xf32>
    %93 = vector.shape_cast %92 : vector<16x16x32xf32> to vector<256x32xf32>
    %c0_54 = arith.constant 0 : index
    %c256 = arith.constant 256 : index
    %94 = vector.load %arg15[%c0_54, %c256] : memref<256x288xf32, #tpu.memory_space<vmem>>, vector<256x32xf32>
    tpu.vector_store %arg15[%c0_54, %c256], %93 {strides = array<i32>} : memref<256x288xf32, #tpu.memory_space<vmem>>, vector<256x32xf32>,
    %cst_55 = arith.constant 0.000000e+00 : f32
    %95 = vector.broadcast %cst_55 : f32 to vector<256x32xf32>
    %c0_56 = arith.constant 0 : index
    %c0_57 = arith.constant 0 : index
    %96 = vector.load %arg15[%c0_56, %c0_57] : memref<256x288xf32, #tpu.memory_space<vmem>>, vector<256x128xf32>
    %c0_58 = arith.constant 0 : index
    %c0_59 = arith.constant 0 : index
    %97 = vector.load %arg5[%c0_58, %c0_59] : memref<288x32xf32, #tpu.memory_space<vmem>>, vector<128x32xf32>
    %cst_60 = arith.constant dense<0.000000e+00> : vector<256x32xf32>
    %98 = tpu.matmul %96, %97, %cst_60 {dimension_numbers = #tpu.dot_dimension_numbers<[1], [0], [0], [1], [0, 0, 1, 1], [], []>} : vector<256x128xf32>, vector<128x32xf32>, vector<256x32xf32> -> vector<256x32xf32>
    %99 = arith.addf %95, %98 : vector<256x32xf32>
    %c0_61 = arith.constant 0 : index
    %c128_62 = arith.constant 128 : index
    %100 = vector.load %arg15[%c0_61, %c128_62] : memref<256x288xf32, #tpu.memory_space<vmem>>, vector<256x128xf32>
    %c128_63 = arith.constant 128 : index
    %c0_64 = arith.constant 0 : index
    %101 = vector.load %arg5[%c128_63, %c0_64] : memref<288x32xf32, #tpu.memory_space<vmem>>, vector<128x32xf32>
    %cst_65 = arith.constant dense<0.000000e+00> : vector<256x32xf32>
    %102 = tpu.matmul %100, %101, %cst_65 {dimension_numbers = #tpu.dot_dimension_numbers<[1], [0], [0], [1], [0, 0, 1, 1], [], []>} : vector<256x128xf32>, vector<128x32xf32>, vector<256x32xf32> -> vector<256x32xf32>
    %103 = arith.addf %99, %102 : vector<256x32xf32>
    %c0_66 = arith.constant 0 : index
    %c256_67 = arith.constant 256 : index
    %104 = vector.load %arg15[%c0_66, %c256_67] : memref<256x288xf32, #tpu.memory_space<vmem>>, vector<256x32xf32>
    %c256_68 = arith.constant 256 : index
    %c0_69 = arith.constant 0 : index
    %105 = vector.load %arg5[%c256_68, %c0_69] : memref<288x32xf32, #tpu.memory_space<vmem>>, vector<32x32xf32>
    %cst_70 = arith.constant dense<0.000000e+00> : vector<256x32xf32>
    %106 = tpu.matmul %104, %105, %cst_70 {dimension_numbers = #tpu.dot_dimension_numbers<[1], [0], [0], [1], [0, 0, 1, 1], [], []>} : vector<256x32xf32>, vector<32x32xf32>, vector<256x32xf32> -> vector<256x32xf32>
    %107 = arith.addf %103, %106 : vector<256x32xf32>
    %cst_71 = arith.constant dense<0.000000e+00> : vector<32xf32>
    %108 = vector.multi_reduction <add>, %107, %cst_71 [0] : vector<256x32xf32> to vector<32xf32>
    %109 = vector.shape_cast %108 : vector<32xf32> to vector<1x32xf32>
    %cst_72 = arith.constant 3.906250e-03 : f32
    %110 = vector.broadcast %cst_72 : f32 to vector<1x32xf32>
    %111 = arith.mulf %109, %110 : vector<1x32xf32>
    %112 = arith.mulf %107, %107 : vector<256x32xf32>
    %cst_73 = arith.constant dense<0.000000e+00> : vector<32xf32>
    %113 = vector.multi_reduction <add>, %112, %cst_73 [0] : vector<256x32xf32> to vector<32xf32>
    %114 = vector.shape_cast %113 : vector<32xf32> to vector<1x32xf32>
    %cst_74 = arith.constant 3.906250e-03 : f32
    %115 = vector.broadcast %cst_74 : f32 to vector<1x32xf32>
    %116 = arith.mulf %114, %115 : vector<1x32xf32>
    %117 = arith.mulf %111, %111 : vector<1x32xf32>
    %118 = arith.subf %116, %117 : vector<1x32xf32>
    %cst_75 = arith.constant 0.000000e+00 : f32
    %119 = vector.broadcast %cst_75 : f32 to vector<1x32xf32>
    %120 = arith.maximumf %118, %119 : vector<1x32xf32>
    %121 = vector.broadcast %111 : vector<1x32xf32> to vector<256x32xf32>
    %122 = arith.subf %107, %121 : vector<256x32xf32>
    %cst_76 = arith.constant 9.99999974E-6 : f32
    %123 = vector.broadcast %cst_76 : f32 to vector<1x32xf32>
    %124 = arith.addf %120, %123 : vector<1x32xf32>
    %125 = math.rsqrt %124 : vector<1x32xf32>
    %c0_77 = arith.constant 0 : index
    %c0_78 = arith.constant 0 : index
    %126 = vector.load %arg6[%c0_77, %c0_78] : memref<1x32xf32, #tpu.memory_space<vmem>>, vector<1x32xf32>
    %127 = arith.mulf %125, %126 : vector<1x32xf32>
    %128 = vector.broadcast %127 : vector<1x32xf32> to vector<256x32xf32>
    %129 = arith.mulf %122, %128 : vector<256x32xf32>
    %c0_79 = arith.constant 0 : index
    %c0_80 = arith.constant 0 : index
    %130 = vector.load %arg7[%c0_79, %c0_80] : memref<1x32xf32, #tpu.memory_space<vmem>>, vector<1x32xf32>
    %131 = vector.broadcast %130 : vector<1x32xf32> to vector<256x32xf32>
    %132 = arith.addf %129, %131 : vector<256x32xf32>
    %cst_81 = arith.constant 0.000000e+00 : f32
    %133 = vector.broadcast %cst_81 : f32 to vector<256x32xf32>
    %134 = arith.maximumf %132, %133 : vector<256x32xf32>
    %135 = vector.shape_cast %134 : vector<256x32xf32> to vector<16x16x32xf32>
    %c1_82 = arith.constant 1 : index
    %c1_83 = arith.constant 1 : index
    %c0_84 = arith.constant 0 : index
    %136 = vector.load %arg14[%c1_82, %c1_83, %c0_84] : memref<18x18x32xf32, #tpu.memory_space<vmem>>, vector<16x16x32xf32>
    tpu.vector_store %arg14[%c1_82, %c1_83, %c0_84], %135 {strides = array<i32>} : memref<18x18x32xf32, #tpu.memory_space<vmem>>, vector<16x16x32xf32>,
    %c0_85 = arith.constant 0 : index
    %c0_86 = arith.constant 0 : index
    %c0_87 = arith.constant 0 : index
    %137 = vector.load %arg14[%c0_85, %c0_86, %c0_87] : memref<18x18x32xf32, #tpu.memory_space<vmem>>, vector<18x18x32xf32>
    %138 = vector.extract_strided_slice %137 {offsets = [0, 0, 0], sizes = [16, 16, 32], strides = [1, 1, 1]} : vector<18x18x32xf32> to vector<16x16x32xf32>
    %139 = vector.shape_cast %138 : vector<16x16x32xf32> to vector<256x32xf32>
    %c0_88 = arith.constant 0 : index
    %c0_89 = arith.constant 0 : index
    %140 = vector.load %arg15[%c0_88, %c0_89] : memref<256x288xf32, #tpu.memory_space<vmem>>, vector<256x32xf32>
    tpu.vector_store %arg15[%c0_88, %c0_89], %139 {strides = array<i32>} : memref<256x288xf32, #tpu.memory_space<vmem>>, vector<256x32xf32>,
    %141 = vector.extract_strided_slice %137 {offsets = [0, 1, 0], sizes = [16, 16, 32], strides = [1, 1, 1]} : vector<18x18x32xf32> to vector<16x16x32xf32>
    %142 = vector.shape_cast %141 : vector<16x16x32xf32> to vector<256x32xf32>
    %c0_90 = arith.constant 0 : index
    %c32_91 = arith.constant 32 : index
    %143 = vector.load %arg15[%c0_90, %c32_91] : memref<256x288xf32, #tpu.memory_space<vmem>>, vector<256x32xf32>
    tpu.vector_store %arg15[%c0_90, %c32_91], %142 {strides = array<i32>} : memref<256x288xf32, #tpu.memory_space<vmem>>, vector<256x32xf32>,
    %144 = vector.extract_strided_slice %137 {offsets = [0, 2, 0], sizes = [16, 16, 32], strides = [1, 1, 1]} : vector<18x18x32xf32> to vector<16x16x32xf32>
    %145 = vector.shape_cast %144 : vector<16x16x32xf32> to vector<256x32xf32>
    %c0_92 = arith.constant 0 : index
    %c64_93 = arith.constant 64 : index
    %146 = vector.load %arg15[%c0_92, %c64_93] : memref<256x288xf32, #tpu.memory_space<vmem>>, vector<256x32xf32>
    tpu.vector_store %arg15[%c0_92, %c64_93], %145 {strides = array<i32>} : memref<256x288xf32, #tpu.memory_space<vmem>>, vector<256x32xf32>,
    %147 = vector.extract_strided_slice %137 {offsets = [1, 0, 0], sizes = [16, 16, 32], strides = [1, 1, 1]} : vector<18x18x32xf32> to vector<16x16x32xf32>
    %148 = vector.shape_cast %147 : vector<16x16x32xf32> to vector<256x32xf32>
    %c0_94 = arith.constant 0 : index
    %c96_95 = arith.constant 96 : index
    %149 = vector.load %arg15[%c0_94, %c96_95] : memref<256x288xf32, #tpu.memory_space<vmem>>, vector<256x32xf32>
    tpu.vector_store %arg15[%c0_94, %c96_95], %148 {strides = array<i32>} : memref<256x288xf32, #tpu.memory_space<vmem>>, vector<256x32xf32>,
    %150 = vector.extract_strided_slice %137 {offsets = [1, 1, 0], sizes = [16, 16, 32], strides = [1, 1, 1]} : vector<18x18x32xf32> to vector<16x16x32xf32>
    %151 = vector.shape_cast %150 : vector<16x16x32xf32> to vector<256x32xf32>
    %c0_96 = arith.constant 0 : index
    %c128_97 = arith.constant 128 : index
    %152 = vector.load %arg15[%c0_96, %c128_97] : memref<256x288xf32, #tpu.memory_space<vmem>>, vector<256x32xf32>
    tpu.vector_store %arg15[%c0_96, %c128_97], %151 {strides = array<i32>} : memref<256x288xf32, #tpu.memory_space<vmem>>, vector<256x32xf32>,
    %153 = vector.extract_strided_slice %137 {offsets = [1, 2, 0], sizes = [16, 16, 32], strides = [1, 1, 1]} : vector<18x18x32xf32> to vector<16x16x32xf32>
    %154 = vector.shape_cast %153 : vector<16x16x32xf32> to vector<256x32xf32>
    %c0_98 = arith.constant 0 : index
    %c160_99 = arith.constant 160 : index
    %155 = vector.load %arg15[%c0_98, %c160_99] : memref<256x288xf32, #tpu.memory_space<vmem>>, vector<256x32xf32>
    tpu.vector_store %arg15[%c0_98, %c160_99], %154 {strides = array<i32>} : memref<256x288xf32, #tpu.memory_space<vmem>>, vector<256x32xf32>,
    %156 = vector.extract_strided_slice %137 {offsets = [2, 0, 0], sizes = [16, 16, 32], strides = [1, 1, 1]} : vector<18x18x32xf32> to vector<16x16x32xf32>
    %157 = vector.shape_cast %156 : vector<16x16x32xf32> to vector<256x32xf32>
    %c0_100 = arith.constant 0 : index
    %c192_101 = arith.constant 192 : index
    %158 = vector.load %arg15[%c0_100, %c192_101] : memref<256x288xf32, #tpu.memory_space<vmem>>, vector<256x32xf32>
    tpu.vector_store %arg15[%c0_100, %c192_101], %157 {strides = array<i32>} : memref<256x288xf32, #tpu.memory_space<vmem>>, vector<256x32xf32>,
    %159 = vector.extract_strided_slice %137 {offsets = [2, 1, 0], sizes = [16, 16, 32], strides = [1, 1, 1]} : vector<18x18x32xf32> to vector<16x16x32xf32>
    %160 = vector.shape_cast %159 : vector<16x16x32xf32> to vector<256x32xf32>
    %c0_102 = arith.constant 0 : index
    %c224_103 = arith.constant 224 : index
    %161 = vector.load %arg15[%c0_102, %c224_103] : memref<256x288xf32, #tpu.memory_space<vmem>>, vector<256x32xf32>
    tpu.vector_store %arg15[%c0_102, %c224_103], %160 {strides = array<i32>} : memref<256x288xf32, #tpu.memory_space<vmem>>, vector<256x32xf32>,
    %162 = vector.extract_strided_slice %137 {offsets = [2, 2, 0], sizes = [16, 16, 32], strides = [1, 1, 1]} : vector<18x18x32xf32> to vector<16x16x32xf32>
    %163 = vector.shape_cast %162 : vector<16x16x32xf32> to vector<256x32xf32>
    %c0_104 = arith.constant 0 : index
    %c256_105 = arith.constant 256 : index
    %164 = vector.load %arg15[%c0_104, %c256_105] : memref<256x288xf32, #tpu.memory_space<vmem>>, vector<256x32xf32>
    tpu.vector_store %arg15[%c0_104, %c256_105], %163 {strides = array<i32>} : memref<256x288xf32, #tpu.memory_space<vmem>>, vector<256x32xf32>,
    %cst_106 = arith.constant 0.000000e+00 : f32
    %165 = vector.broadcast %cst_106 : f32 to vector<256x32xf32>
    %c0_107 = arith.constant 0 : index
    %c0_108 = arith.constant 0 : index
    %166 = vector.load %arg15[%c0_107, %c0_108] : memref<256x288xf32, #tpu.memory_space<vmem>>, vector<256x128xf32>
    %c0_109 = arith.constant 0 : index
    %c0_110 = arith.constant 0 : index
    %167 = vector.load %arg8[%c0_109, %c0_110] : memref<288x32xf32, #tpu.memory_space<vmem>>, vector<128x32xf32>
    %cst_111 = arith.constant dense<0.000000e+00> : vector<256x32xf32>
    %168 = tpu.matmul %166, %167, %cst_111 {dimension_numbers = #tpu.dot_dimension_numbers<[1], [0], [0], [1], [0, 0, 1, 1], [], []>} : vector<256x128xf32>, vector<128x32xf32>, vector<256x32xf32> -> vector<256x32xf32>
    %169 = arith.addf %165, %168 : vector<256x32xf32>
    %c0_112 = arith.constant 0 : index
    %c128_113 = arith.constant 128 : index
    %170 = vector.load %arg15[%c0_112, %c128_113] : memref<256x288xf32, #tpu.memory_space<vmem>>, vector<256x128xf32>
    %c128_114 = arith.constant 128 : index
    %c0_115 = arith.constant 0 : index
    %171 = vector.load %arg8[%c128_114, %c0_115] : memref<288x32xf32, #tpu.memory_space<vmem>>, vector<128x32xf32>
    %cst_116 = arith.constant dense<0.000000e+00> : vector<256x32xf32>
    %172 = tpu.matmul %170, %171, %cst_116 {dimension_numbers = #tpu.dot_dimension_numbers<[1], [0], [0], [1], [0, 0, 1, 1], [], []>} : vector<256x128xf32>, vector<128x32xf32>, vector<256x32xf32> -> vector<256x32xf32>
    %173 = arith.addf %169, %172 : vector<256x32xf32>
    %c0_117 = arith.constant 0 : index
    %c256_118 = arith.constant 256 : index
    %174 = vector.load %arg15[%c0_117, %c256_118] : memref<256x288xf32, #tpu.memory_space<vmem>>, vector<256x32xf32>
    %c256_119 = arith.constant 256 : index
    %c0_120 = arith.constant 0 : index
    %175 = vector.load %arg8[%c256_119, %c0_120] : memref<288x32xf32, #tpu.memory_space<vmem>>, vector<32x32xf32>
    %cst_121 = arith.constant dense<0.000000e+00> : vector<256x32xf32>
    %176 = tpu.matmul %174, %175, %cst_121 {dimension_numbers = #tpu.dot_dimension_numbers<[1], [0], [0], [1], [0, 0, 1, 1], [], []>} : vector<256x32xf32>, vector<32x32xf32>, vector<256x32xf32> -> vector<256x32xf32>
    %177 = arith.addf %173, %176 : vector<256x32xf32>
    %cst_122 = arith.constant dense<0.000000e+00> : vector<32xf32>
    %178 = vector.multi_reduction <add>, %177, %cst_122 [0] : vector<256x32xf32> to vector<32xf32>
    %179 = vector.shape_cast %178 : vector<32xf32> to vector<1x32xf32>
    %cst_123 = arith.constant 3.906250e-03 : f32
    %180 = vector.broadcast %cst_123 : f32 to vector<1x32xf32>
    %181 = arith.mulf %179, %180 : vector<1x32xf32>
    %182 = arith.mulf %177, %177 : vector<256x32xf32>
    %cst_124 = arith.constant dense<0.000000e+00> : vector<32xf32>
    %183 = vector.multi_reduction <add>, %182, %cst_124 [0] : vector<256x32xf32> to vector<32xf32>
    %184 = vector.shape_cast %183 : vector<32xf32> to vector<1x32xf32>
    %cst_125 = arith.constant 3.906250e-03 : f32
    %185 = vector.broadcast %cst_125 : f32 to vector<1x32xf32>
    %186 = arith.mulf %184, %185 : vector<1x32xf32>
    %187 = arith.mulf %181, %181 : vector<1x32xf32>
    %188 = arith.subf %186, %187 : vector<1x32xf32>
    %cst_126 = arith.constant 0.000000e+00 : f32
    %189 = vector.broadcast %cst_126 : f32 to vector<1x32xf32>
    %190 = arith.maximumf %188, %189 : vector<1x32xf32>
    %191 = vector.broadcast %181 : vector<1x32xf32> to vector<256x32xf32>
    %192 = arith.subf %177, %191 : vector<256x32xf32>
    %cst_127 = arith.constant 9.99999974E-6 : f32
    %193 = vector.broadcast %cst_127 : f32 to vector<1x32xf32>
    %194 = arith.addf %190, %193 : vector<1x32xf32>
    %195 = math.rsqrt %194 : vector<1x32xf32>
    %c0_128 = arith.constant 0 : index
    %c0_129 = arith.constant 0 : index
    %196 = vector.load %arg9[%c0_128, %c0_129] : memref<1x32xf32, #tpu.memory_space<vmem>>, vector<1x32xf32>
    %197 = arith.mulf %195, %196 : vector<1x32xf32>
    %198 = vector.broadcast %197 : vector<1x32xf32> to vector<256x32xf32>
    %199 = arith.mulf %192, %198 : vector<256x32xf32>
    %c0_130 = arith.constant 0 : index
    %c0_131 = arith.constant 0 : index
    %200 = vector.load %arg10[%c0_130, %c0_131] : memref<1x32xf32, #tpu.memory_space<vmem>>, vector<1x32xf32>
    %201 = vector.broadcast %200 : vector<1x32xf32> to vector<256x32xf32>
    %202 = arith.addf %199, %201 : vector<256x32xf32>
    %203 = arith.addf %64, %202 : vector<256x32xf32>
    %204 = vector.shape_cast %203 : vector<256x32xf32> to vector<16x16x32xf32>
    %c1_132 = arith.constant 1 : index
    %c1_133 = arith.constant 1 : index
    %c0_134 = arith.constant 0 : index
    %205 = vector.load %arg14[%c1_132, %c1_133, %c0_134] : memref<18x18x32xf32, #tpu.memory_space<vmem>>, vector<16x16x32xf32>
    tpu.vector_store %arg14[%c1_132, %c1_133, %c0_134], %204 {strides = array<i32>} : memref<18x18x32xf32, #tpu.memory_space<vmem>>, vector<16x16x32xf32>,
    %c0_135 = arith.constant 0 : index
    %c0_136 = arith.constant 0 : index
    %c0_137 = arith.constant 0 : index
    %206 = vector.load %arg14[%c0_135, %c0_136, %c0_137] : memref<18x18x32xf32, #tpu.memory_space<vmem>>, vector<18x18x32xf32>
    %207 = vector.extract_strided_slice %206 {offsets = [0, 0, 0], sizes = [16, 16, 32], strides = [1, 1, 1]} : vector<18x18x32xf32> to vector<16x16x32xf32>
    %208 = vector.shape_cast %207 : vector<16x16x32xf32> to vector<256x32xf32>
    %c0_138 = arith.constant 0 : index
    %c0_139 = arith.constant 0 : index
    %209 = vector.load %arg15[%c0_138, %c0_139] : memref<256x288xf32, #tpu.memory_space<vmem>>, vector<256x32xf32>
    tpu.vector_store %arg15[%c0_138, %c0_139], %208 {strides = array<i32>} : memref<256x288xf32, #tpu.memory_space<vmem>>, vector<256x32xf32>,
    %210 = vector.extract_strided_slice %206 {offsets = [0, 1, 0], sizes = [16, 16, 32], strides = [1, 1, 1]} : vector<18x18x32xf32> to vector<16x16x32xf32>
    %211 = vector.shape_cast %210 : vector<16x16x32xf32> to vector<256x32xf32>
    %c0_140 = arith.constant 0 : index
    %c32_141 = arith.constant 32 : index
    %212 = vector.load %arg15[%c0_140, %c32_141] : memref<256x288xf32, #tpu.memory_space<vmem>>, vector<256x32xf32>
    tpu.vector_store %arg15[%c0_140, %c32_141], %211 {strides = array<i32>} : memref<256x288xf32, #tpu.memory_space<vmem>>, vector<256x32xf32>,
    %213 = vector.extract_strided_slice %206 {offsets = [0, 2, 0], sizes = [16, 16, 32], strides = [1, 1, 1]} : vector<18x18x32xf32> to vector<16x16x32xf32>
    %214 = vector.shape_cast %213 : vector<16x16x32xf32> to vector<256x32xf32>
    %c0_142 = arith.constant 0 : index
    %c64_143 = arith.constant 64 : index
    %215 = vector.load %arg15[%c0_142, %c64_143] : memref<256x288xf32, #tpu.memory_space<vmem>>, vector<256x32xf32>
    tpu.vector_store %arg15[%c0_142, %c64_143], %214 {strides = array<i32>} : memref<256x288xf32, #tpu.memory_space<vmem>>, vector<256x32xf32>,
    %216 = vector.extract_strided_slice %206 {offsets = [1, 0, 0], sizes = [16, 16, 32], strides = [1, 1, 1]} : vector<18x18x32xf32> to vector<16x16x32xf32>
    %217 = vector.shape_cast %216 : vector<16x16x32xf32> to vector<256x32xf32>
    %c0_144 = arith.constant 0 : index
    %c96_145 = arith.constant 96 : index
    %218 = vector.load %arg15[%c0_144, %c96_145] : memref<256x288xf32, #tpu.memory_space<vmem>>, vector<256x32xf32>
    tpu.vector_store %arg15[%c0_144, %c96_145], %217 {strides = array<i32>} : memref<256x288xf32, #tpu.memory_space<vmem>>, vector<256x32xf32>,
    %219 = vector.extract_strided_slice %206 {offsets = [1, 1, 0], sizes = [16, 16, 32], strides = [1, 1, 1]} : vector<18x18x32xf32> to vector<16x16x32xf32>
    %220 = vector.shape_cast %219 : vector<16x16x32xf32> to vector<256x32xf32>
    %c0_146 = arith.constant 0 : index
    %c128_147 = arith.constant 128 : index
    %221 = vector.load %arg15[%c0_146, %c128_147] : memref<256x288xf32, #tpu.memory_space<vmem>>, vector<256x32xf32>
    tpu.vector_store %arg15[%c0_146, %c128_147], %220 {strides = array<i32>} : memref<256x288xf32, #tpu.memory_space<vmem>>, vector<256x32xf32>,
    %222 = vector.extract_strided_slice %206 {offsets = [1, 2, 0], sizes = [16, 16, 32], strides = [1, 1, 1]} : vector<18x18x32xf32> to vector<16x16x32xf32>
    %223 = vector.shape_cast %222 : vector<16x16x32xf32> to vector<256x32xf32>
    %c0_148 = arith.constant 0 : index
    %c160_149 = arith.constant 160 : index
    %224 = vector.load %arg15[%c0_148, %c160_149] : memref<256x288xf32, #tpu.memory_space<vmem>>, vector<256x32xf32>
    tpu.vector_store %arg15[%c0_148, %c160_149], %223 {strides = array<i32>} : memref<256x288xf32, #tpu.memory_space<vmem>>, vector<256x32xf32>,
    %225 = vector.extract_strided_slice %206 {offsets = [2, 0, 0], sizes = [16, 16, 32], strides = [1, 1, 1]} : vector<18x18x32xf32> to vector<16x16x32xf32>
    %226 = vector.shape_cast %225 : vector<16x16x32xf32> to vector<256x32xf32>
    %c0_150 = arith.constant 0 : index
    %c192_151 = arith.constant 192 : index
    %227 = vector.load %arg15[%c0_150, %c192_151] : memref<256x288xf32, #tpu.memory_space<vmem>>, vector<256x32xf32>
    tpu.vector_store %arg15[%c0_150, %c192_151], %226 {strides = array<i32>} : memref<256x288xf32, #tpu.memory_space<vmem>>, vector<256x32xf32>,
    %228 = vector.extract_strided_slice %206 {offsets = [2, 1, 0], sizes = [16, 16, 32], strides = [1, 1, 1]} : vector<18x18x32xf32> to vector<16x16x32xf32>
    %229 = vector.shape_cast %228 : vector<16x16x32xf32> to vector<256x32xf32>
    %c0_152 = arith.constant 0 : index
    %c224_153 = arith.constant 224 : index
    %230 = vector.load %arg15[%c0_152, %c224_153] : memref<256x288xf32, #tpu.memory_space<vmem>>, vector<256x32xf32>
    tpu.vector_store %arg15[%c0_152, %c224_153], %229 {strides = array<i32>} : memref<256x288xf32, #tpu.memory_space<vmem>>, vector<256x32xf32>,
    %231 = vector.extract_strided_slice %206 {offsets = [2, 2, 0], sizes = [16, 16, 32], strides = [1, 1, 1]} : vector<18x18x32xf32> to vector<16x16x32xf32>
    %232 = vector.shape_cast %231 : vector<16x16x32xf32> to vector<256x32xf32>
    %c0_154 = arith.constant 0 : index
    %c256_155 = arith.constant 256 : index
    %233 = vector.load %arg15[%c0_154, %c256_155] : memref<256x288xf32, #tpu.memory_space<vmem>>, vector<256x32xf32>
    tpu.vector_store %arg15[%c0_154, %c256_155], %232 {strides = array<i32>} : memref<256x288xf32, #tpu.memory_space<vmem>>, vector<256x32xf32>,
    %cst_156 = arith.constant 0.000000e+00 : f32
    %234 = vector.broadcast %cst_156 : f32 to vector<256x4xf32>
    %c0_157 = arith.constant 0 : index
    %c0_158 = arith.constant 0 : index
    %235 = vector.load %arg15[%c0_157, %c0_158] : memref<256x288xf32, #tpu.memory_space<vmem>>, vector<256x128xf32>
    %c0_159 = arith.constant 0 : index
    %c0_160 = arith.constant 0 : index
    %236 = vector.load %arg11[%c0_159, %c0_160] : memref<288x4xf32, #tpu.memory_space<vmem>>, vector<128x4xf32>
    %cst_161 = arith.constant dense<0.000000e+00> : vector<256x4xf32>
    %237 = tpu.matmul %235, %236, %cst_161 {dimension_numbers = #tpu.dot_dimension_numbers<[1], [0], [0], [1], [0, 0, 1, 1], [], []>} : vector<256x128xf32>, vector<128x4xf32>, vector<256x4xf32> -> vector<256x4xf32>
    %238 = arith.addf %234, %237 : vector<256x4xf32>
    %c0_162 = arith.constant 0 : index
    %c128_163 = arith.constant 128 : index
    %239 = vector.load %arg15[%c0_162, %c128_163] : memref<256x288xf32, #tpu.memory_space<vmem>>, vector<256x128xf32>
    %c128_164 = arith.constant 128 : index
    %c0_165 = arith.constant 0 : index
    %240 = vector.load %arg11[%c128_164, %c0_165] : memref<288x4xf32, #tpu.memory_space<vmem>>, vector<128x4xf32>
    %cst_166 = arith.constant dense<0.000000e+00> : vector<256x4xf32>
    %241 = tpu.matmul %239, %240, %cst_166 {dimension_numbers = #tpu.dot_dimension_numbers<[1], [0], [0], [1], [0, 0, 1, 1], [], []>} : vector<256x128xf32>, vector<128x4xf32>, vector<256x4xf32> -> vector<256x4xf32>
    %242 = arith.addf %238, %241 : vector<256x4xf32>
    %c0_167 = arith.constant 0 : index
    %c256_168 = arith.constant 256 : index
    %243 = vector.load %arg15[%c0_167, %c256_168] : memref<256x288xf32, #tpu.memory_space<vmem>>, vector<256x32xf32>
    %c256_169 = arith.constant 256 : index
    %c0_170 = arith.constant 0 : index
    %244 = vector.load %arg11[%c256_169, %c0_170] : memref<288x4xf32, #tpu.memory_space<vmem>>, vector<32x4xf32>
    %cst_171 = arith.constant dense<0.000000e+00> : vector<256x4xf32>
    %245 = tpu.matmul %243, %244, %cst_171 {dimension_numbers = #tpu.dot_dimension_numbers<[1], [0], [0], [1], [0, 0, 1, 1], [], []>} : vector<256x32xf32>, vector<32x4xf32>, vector<256x4xf32> -> vector<256x4xf32>
    %246 = arith.addf %242, %245 : vector<256x4xf32>
    %c0_172 = arith.constant 0 : index
    %c0_173 = arith.constant 0 : index
    %247 = vector.load %arg12[%c0_172, %c0_173] : memref<1x4xf32, #tpu.memory_space<vmem>>, vector<1x4xf32>
    %248 = vector.broadcast %247 : vector<1x4xf32> to vector<256x4xf32>
    %249 = arith.addf %246, %248 : vector<256x4xf32>
    %250 = math.tanh %249 : vector<256x4xf32>
    %251 = vector.shape_cast %250 : vector<256x4xf32> to vector<1x16x16x4xf32>
    %c0_174 = arith.constant 0 : index
    %c0_175 = arith.constant 0 : index
    %c0_176 = arith.constant 0 : index
    %c0_177 = arith.constant 0 : index
    %252 = vector.load %arg13[%c0_174, %c0_175, %c0_176, %c0_177] : memref<1x16x16x4xf32, #tpu.memory_space<vmem>>, vector<1x16x16x4xf32>
    tpu.vector_store %arg13[%c0_174, %c0_175, %c0_176, %c0_177], %251 {strides = array<i32>} : memref<1x16x16x4xf32, #tpu.memory_space<vmem>>, vector<1x16x16x4xf32>,
    return
  }
  func.func @transform_0(%arg0: i32) -> (i32, i32, i32, i32) {
    %c0_i32 = arith.constant 0 : i32
    %c0_i32_0 = arith.constant 0 : i32
    %c0_i32_1 = arith.constant 0 : i32
    %c0_i32_2 = arith.constant 0 : i32
    return %arg0, %c0_i32, %c0_i32_0, %c0_i32_1 : i32, i32, i32, i32
  }
  func.func @transform_1(%arg0: i32) -> (i32, i32) {
    %c0_i32 = arith.constant 0 : i32
    %c0_i32_0 = arith.constant 0 : i32
    %c0_i32_1 = arith.constant 0 : i32
    return %c0_i32, %c0_i32_0 : i32, i32
  }
  func.func @transform_2(%arg0: i32) -> (i32, i32) {
    %c0_i32 = arith.constant 0 : i32
    %c0_i32_0 = arith.constant 0 : i32
    %c0_i32_1 = arith.constant 0 : i32
    return %c0_i32, %c0_i32_0 : i32, i32
  }
  func.func @transform_3(%arg0: i32) -> (i32, i32) {
    %c0_i32 = arith.constant 0 : i32
    %c0_i32_0 = arith.constant 0 : i32
    %c0_i32_1 = arith.constant 0 : i32
    return %c0_i32, %c0_i32_0 : i32, i32
  }
  func.func @transform_4(%arg0: i32) -> (i32, i32) {
    %c0_i32 = arith.constant 0 : i32
    %c0_i32_0 = arith.constant 0 : i32
    %c0_i32_1 = arith.constant 0 : i32
    return %c0_i32, %c0_i32_0 : i32, i32
  }
  func.func @transform_5(%arg0: i32) -> (i32, i32) {
    %c0_i32 = arith.constant 0 : i32
    %c0_i32_0 = arith.constant 0 : i32
    %c0_i32_1 = arith.constant 0 : i32
    return %c0_i32, %c0_i32_0 : i32, i32
  }
  func.func @transform_6(%arg0: i32) -> (i32, i32) {
    %c0_i32 = arith.constant 0 : i32
    %c0_i32_0 = arith.constant 0 : i32
    %c0_i32_1 = arith.constant 0 : i32
    return %c0_i32, %c0_i32_0 : i32, i32
  }
  func.func @transform_7(%arg0: i32) -> (i32, i32) {
    %c0_i32 = arith.constant 0 : i32
    %c0_i32_0 = arith.constant 0 : i32
    %c0_i32_1 = arith.constant 0 : i32
    return %c0_i32, %c0_i32_0 : i32, i32
  }
  func.func @transform_8(%arg0: i32) -> (i32, i32) {
    %c0_i32 = arith.constant 0 : i32
    %c0_i32_0 = arith.constant 0 : i32
    %c0_i32_1 = arith.constant 0 : i32
    return %c0_i32, %c0_i32_0 : i32, i32
  }
  func.func @transform_9(%arg0: i32) -> (i32, i32) {
    %c0_i32 = arith.constant 0 : i32
    %c0_i32_0 = arith.constant 0 : i32
    %c0_i32_1 = arith.constant 0 : i32
    return %c0_i32, %c0_i32_0 : i32, i32
  }
  func.func @transform_10(%arg0: i32) -> (i32, i32) {
    %c0_i32 = arith.constant 0 : i32
    %c0_i32_0 = arith.constant 0 : i32
    %c0_i32_1 = arith.constant 0 : i32
    return %c0_i32, %c0_i32_0 : i32, i32
  }
  func.func @transform_11(%arg0: i32) -> (i32, i32) {
    %c0_i32 = arith.constant 0 : i32
    %c0_i32_0 = arith.constant 0 : i32
    %c0_i32_1 = arith.constant 0 : i32
    return %c0_i32, %c0_i32_0 : i32, i32
  }
  func.func @transform_12(%arg0: i32) -> (i32, i32, i32, i32) {
    %c0_i32 = arith.constant 0 : i32
    %c0_i32_0 = arith.constant 0 : i32
    %c0_i32_1 = arith.constant 0 : i32
    %c0_i32_2 = arith.constant 0 : i32
    return %arg0, %c0_i32, %c0_i32_0, %c0_i32_1 : i32, i32, i32, i32
  }
}

</mosaic_0001>

<llo_original>
// kernel: iit_generate.1
$region0: #{iit_generate.1}
  #allocation0 [shape = 'u32[]', space=smem, size = 0x4, offset = 0x4, fixed_abs, tag = 'smem constant byte address 0x4 - core index']
  #allocation1 [shape = 'u32[144,128]{1,0:T(1,128)}', space=vmem, size = 0x12000, scoped, tag = 'internal scratch']
  #allocation2 [shape = 'f32[18,18,32]{2,1,0:T(8,128)}', space=vmem, size = 0x36000, scoped, tag = 'scratch operand']
  #allocation3 [shape = 'f32[256,288]{1,0:T(8,128)}', space=vmem, size = 0x60000, scoped, tag = 'scratch operand']
  %s0 = inlined_call_operand.vmem [shape: f32[2,16,16,4], index: 0, kind: input, shape index: {}]
  %s1 = inlined_call_operand.vmem [shape: f32[36,32], index: 1, kind: input, shape index: {}]
  %s2 = inlined_call_operand.vmem [shape: f32[1,32], index: 2, kind: input, shape index: {}, may-alias: {2,5,8}]
  %s3 = inlined_call_operand.vmem [shape: f32[1,32], index: 3, kind: input, shape index: {}, may-alias: {3,6,9}]
  %s4 = inlined_call_operand.vmem [shape: f32[288,32], index: 4, kind: input, shape index: {}]
  %s5 = inlined_call_operand.vmem [shape: f32[1,32], index: 5, kind: input, shape index: {}, may-alias: {2,5,8}]
  %s6 = inlined_call_operand.vmem [shape: f32[1,32], index: 6, kind: input, shape index: {}, may-alias: {3,6,9}]
  %s7 = inlined_call_operand.vmem [shape: f32[288,32], index: 7, kind: input, shape index: {}]
  %s8 = inlined_call_operand.vmem [shape: f32[1,32], index: 8, kind: input, shape index: {}, may-alias: {2,5,8}]
  %s9 = inlined_call_operand.vmem [shape: f32[1,32], index: 9, kind: input, shape index: {}, may-alias: {3,6,9}]
  %s10 = inlined_call_operand.hbm [shape: f32[288,4], index: 10, kind: input, shape index: {}]
  %s11 = inlined_call_operand.vmem [shape: f32[1,4], index: 11, kind: input, shape index: {}]
  %s12 = inlined_call_operand.vmem [shape: f32[2,16,16,4], index: 12, kind: output, shape index: {}]
  %s13 = sld [smem:[#allocation0]]
  $region85: #{iit_generate.1} parent=0
    _
  %s15 = ssub.s32 1, %s13
  %s16 = scalar_select 0, %s15, %s13
  $region1: #{iit_generate.1} parent=0
    #allocation4 [shape = 'u8[147456]{0}', space=vmem, size = 0x24000, scoped, tag = 'input window, operand 10, single buffered']
    #allocation5 [shape = 's32[2]{0}', space=sflag, size = 0x8, scoped, tag = 'scoped memory for iit_generate.1']
    %17 = vsyncpa [#allocation5], 0
    loop: start=0, step=1, limit=4
    $region2: #{iit_generate.1} parent=1 // loop_pre_header
      _
    $region3: #{iit_generate.1} parent=1 // loop_header
      %s19 = sphi 0, %s23
      %p20 = scmp.ge.s32.totalorder %s19, 4
      %s29 = sphi 0, %s31
      %s32 = sphi 0, %s29
      %s33 = sphi 0, %s32
      %s49 = sphi 0, %s33
      %s53 = sphi 0, %s53
      %s55 = sphi 0, %s53
      %s56 = sphi 0, %s55
      %s70 = sphi 0, %s56
      %s74 = sphi 0, %s74
      %s76 = sphi 0, %s74
      %s77 = sphi 0, %s76
      %s91 = sphi 0, %s77
      %s95 = sphi 0, %s95
      %s97 = sphi 0, %s95
      %s98 = sphi 0, %s97
      %s112 = sphi 0, %s98
      %s116 = sphi 0, %s116
      %s118 = sphi 0, %s116
      %s119 = sphi 0, %s118
      %s133 = sphi 0, %s119
      %s137 = sphi 0, %s137
      %s139 = sphi 0, %s137
      %s140 = sphi 0, %s139
      %s154 = sphi 0, %s140
      %s158 = sphi 0, %s158
      %s160 = sphi 0, %s158
      %s161 = sphi 0, %s160
      %s175 = sphi 0, %s161
      %s179 = sphi 0, %s179
      %s181 = sphi 0, %s179
      %s182 = sphi 0, %s181
      %s196 = sphi 0, %s182
      %s200 = sphi 0, %s200
      %s202 = sphi 0, %s200
      %s203 = sphi 0, %s202
      %s217 = sphi 0, %s203
      %s221 = sphi 0, %s221
      %s223 = sphi 0, %s221
      %s224 = sphi 0, %s223
      %s238 = sphi 0, %s224
      %s242 = sphi 0, %s242
      %s244 = sphi 0, %s242
      %s245 = sphi 0, %s244
      %s259 = sphi 0, %s245
      %s263 = sphi 0, %s263
      %s265 = sphi 0, %s263
      %s266 = sphi 0, %s265
      %s280 = sphi 0, %s266
      %s286 = sphi 0, %s288
      %s289 = sphi 0, %s286
      %s290 = sphi 0, %s289
      %s306 = sphi 0, %s290
    $region4: #{iit_generate.1} parent=1 // loop_header_branch
      %22 = sbr.rel (%p20) target = $region8
    $region5: #{iit_generate.1} parent=1 // loop_body
      %s24 = ssub.s32 %s19, 1
      %s25 = ssub.s32 %s19, 2
      %s26 = sadd.s32 %s19, 1
      %s27 = ssub.s32 %s19, %s26
      %p28 = scmp.eq.s32.totalorder %s27, 0
      %s30 = sadd.s32 %s29, 1
      %s31 = scalar_select %p28, %s29, %s30
      %p34 = pneg %p28
      %p35 = scmp.eq.s32.totalorder %s19, 1
      %p36 = por %p34, %p35
      %p37 = scmp.ne.s32.totalorder %s29, %s32
      %p38 = scmp.eq.s32.totalorder %s19, 0
      %p39 = por %p37, %p38
      %p40 = scmp.ne.s32.totalorder %s29, %s32
      %p41 = scmp.eq.s32.totalorder %s24, 1
      %p42 = por %p40, %p41
      %p43 = scmp.ne.s32.totalorder %s32, %s33
      %p44 = scmp.eq.s32.totalorder %s24, 0
      %p45 = por %p43, %p44
      %p46 = scmp.ne.s32.totalorder %s32, %s33
      %p47 = scmp.eq.s32.totalorder %s25, 1
      %p48 = por %p46, %p47
      %p50 = scmp.ne.s32.totalorder %s33, %s49
      %p51 = scmp.eq.s32.totalorder %s25, 0
      %p52 = por %p50, %p51
      %s54 = sadd.s32 %s53, 1
      %p57 = scmp.eq.s32.totalorder %s19, 1
      %p58 = scmp.ne.s32.totalorder %s53, %s55
      %p59 = scmp.eq.s32.totalorder %s19, 0
      %p60 = por %p58, %p59
      %p61 = scmp.ne.s32.totalorder %s53, %s55
      %p62 = scmp.eq.s32.totalorder %s24, 1
      %p63 = por %p61, %p62
      %p64 = scmp.ne.s32.totalorder %s55, %s56
      %p65 = scmp.eq.s32.totalorder %s24, 0
      %p66 = por %p64, %p65
      %p67 = scmp.ne.s32.totalorder %s55, %s56
      %p68 = scmp.eq.s32.totalorder %s25, 1
      %p69 = por %p67, %p68
      %p71 = scmp.ne.s32.totalorder %s56, %s70
      %p72 = scmp.eq.s32.totalorder %s25, 0
      %p73 = por %p71, %p72
      %s75 = sadd.s32 %s74, 1
      %p78 = scmp.eq.s32.totalorder %s19, 1
      %p79 = scmp.ne.s32.totalorder %s74, %s76
      %p80 = scmp.eq.s32.totalorder %s19, 0
      %p81 = por %p79, %p80
      %p82 = scmp.ne.s32.totalorder %s74, %s76
      %p83 = scmp.eq.s32.totalorder %s24, 1
      %p84 = por %p82, %p83
      %p85 = scmp.ne.s32.totalorder %s76, %s77
      %p86 = scmp.eq.s32.totalorder %s24, 0
      %p87 = por %p85, %p86
      %p88 = scmp.ne.s32.totalorder %s76, %s77
      %p89 = scmp.eq.s32.totalorder %s25, 1
      %p90 = por %p88, %p89
      %p92 = scmp.ne.s32.totalorder %s77, %s91
      %p93 = scmp.eq.s32.totalorder %s25, 0
      %p94 = por %p92, %p93
      %s96 = sadd.s32 %s95, 1
      %p99 = scmp.eq.s32.totalorder %s19, 1
      %p100 = scmp.ne.s32.totalorder %s95, %s97
      %p101 = scmp.eq.s32.totalorder %s19, 0
      %p102 = por %p100, %p101
      %p103 = scmp.ne.s32.totalorder %s95, %s97
      %p104 = scmp.eq.s32.totalorder %s24, 1
      %p105 = por %p103, %p104
      %p106 = scmp.ne.s32.totalorder %s97, %s98
      %p107 = scmp.eq.s32.totalorder %s24, 0
      %p108 = por %p106, %p107
      %p109 = scmp.ne.s32.totalorder %s97, %s98
      %p110 = scmp.eq.s32.totalorder %s25, 1
      %p111 = por %p109, %p110
      %p113 = scmp.ne.s32.totalorder %s98, %s112
      %p114 = scmp.eq.s32.totalorder %s25, 0
      %p115 = por %p113, %p114
      %s117 = sadd.s32 %s116, 1
      %p120 = scmp.eq.s32.totalorder %s19, 1
      %p121 = scmp.ne.s32.totalorder %s116, %s118
      %p122 = scmp.eq.s32.totalorder %s19, 0
      %p123 = por %p121, %p122
      %p124 = scmp.ne.s32.totalorder %s116, %s118
      %p125 = scmp.eq.s32.totalorder %s24, 1
      %p126 = por %p124, %p125
      %p127 = scmp.ne.s32.totalorder %s118, %s119
      %p128 = scmp.eq.s32.totalorder %s24, 0
      %p129 = por %p127, %p128
      %p130 = scmp.ne.s32.totalorder %s118, %s119
      %p131 = scmp.eq.s32.totalorder %s25, 1
      %p132 = por %p130, %p131
      %p134 = scmp.ne.s32.totalorder %s119, %s133
      %p135 = scmp.eq.s32.totalorder %s25, 0
      %p136 = por %p134, %p135
      %s138 = sadd.s32 %s137, 1
      %p141 = scmp.eq.s32.totalorder %s19, 1
      %p142 = scmp.ne.s32.totalorder %s137, %s139
      %p143 = scmp.eq.s32.totalorder %s19, 0
      %p144 = por %p142, %p143
      %p145 = scmp.ne.s32.totalorder %s137, %s139
      %p146 = scmp.eq.s32.totalorder %s24, 1
      %p147 = por %p145, %p146
      %p148 = scmp.ne.s32.totalorder %s139, %s140
      %p149 = scmp.eq.s32.totalorder %s24, 0
      %p150 = por %p148, %p149
      %p151 = scmp.ne.s32.totalorder %s139, %s140
      %p152 = scmp.eq.s32.totalorder %s25, 1
      %p153 = por %p151, %p152
      %p155 = scmp.ne.s32.totalorder %s140, %s154
      %p156 = scmp.eq.s32.totalorder %s25, 0
      %p157 = por %p155, %p156
      %s159 = sadd.s32 %s158, 1
      %p162 = scmp.eq.s32.totalorder %s19, 1
      %p163 = scmp.ne.s32.totalorder %s158, %s160
      %p164 = scmp.eq.s32.totalorder %s19, 0
      %p165 = por %p163, %p164
      %p166 = scmp.ne.s32.totalorder %s158, %s160
      %p167 = scmp.eq.s32.totalorder %s24, 1
      %p168 = por %p166, %p167
      %p169 = scmp.ne.s32.totalorder %s160, %s161
      %p170 = scmp.eq.s32.totalorder %s24, 0
      %p171 = por %p169, %p170
      %p172 = scmp.ne.s32.totalorder %s160, %s161
      %p173 = scmp.eq.s32.totalorder %s25, 1
      %p174 = por %p172, %p173
      %p176 = scmp.ne.s32.totalorder %s161, %s175
      %p177 = scmp.eq.s32.totalorder %s25, 0
      %p178 = por %p176, %p177
      %s180 = sadd.s32 %s179, 1
      %p183 = scmp.eq.s32.totalorder %s19, 1
      %p184 = scmp.ne.s32.totalorder %s179, %s181
      %p185 = scmp.eq.s32.totalorder %s19, 0
      %p186 = por %p184, %p185
      %p187 = scmp.ne.s32.totalorder %s179, %s181
      %p188 = scmp.eq.s32.totalorder %s24, 1
      %p189 = por %p187, %p188
      %p190 = scmp.ne.s32.totalorder %s181, %s182
      %p191 = scmp.eq.s32.totalorder %s24, 0
      %p192 = por %p190, %p191
      %p193 = scmp.ne.s32.totalorder %s181, %s182
      %p194 = scmp.eq.s32.totalorder %s25, 1
      %p195 = por %p193, %p194
      %p197 = scmp.ne.s32.totalorder %s182, %s196
      %p198 = scmp.eq.s32.totalorder %s25, 0
      %p199 = por %p197, %p198
      %s201 = sadd.s32 %s200, 1
      %p204 = scmp.eq.s32.totalorder %s19, 1
      %p205 = scmp.ne.s32.totalorder %s200, %s202
      %p206 = scmp.eq.s32.totalorder %s19, 0
      %p207 = por %p205, %p206
      %p208 = scmp.ne.s32.totalorder %s200, %s202
      %p209 = scmp.eq.s32.totalorder %s24, 1
      %p210 = por %p208, %p209
      %p211 = scmp.ne.s32.totalorder %s202, %s203
      %p212 = scmp.eq.s32.totalorder %s24, 0
      %p213 = por %p211, %p212
      %p214 = scmp.ne.s32.totalorder %s202, %s203
      %p215 = scmp.eq.s32.totalorder %s25, 1
      %p216 = por %p214, %p215
      %p218 = scmp.ne.s32.totalorder %s203, %s217
      %p219 = scmp.eq.s32.totalorder %s25, 0
      %p220 = por %p218, %p219
      %s222 = sadd.s32 %s221, 1
      %p225 = scmp.eq.s32.totalorder %s19, 1
      %p226 = scmp.ne.s32.totalorder %s221, %s223
      %p227 = scmp.eq.s32.totalorder %s19, 0
      %p228 = por %p226, %p227
      %p229 = scmp.ne.s32.totalorder %s221, %s223
      %p230 = scmp.eq.s32.totalorder %s24, 1
      %p231 = por %p229, %p230
      %p232 = scmp.ne.s32.totalorder %s223, %s224
      %p233 = scmp.eq.s32.totalorder %s24, 0
      %p234 = por %p232, %p233
      %p235 = scmp.ne.s32.totalorder %s223, %s224
      %p236 = scmp.eq.s32.totalorder %s25, 1
      %p237 = por %p235, %p236
      %p239 = scmp.ne.s32.totalorder %s224, %s238
      %p240 = scmp.eq.s32.totalorder %s25, 0
      %p241 = por %p239, %p240
      %s243 = sadd.s32 %s242, 1
      %p246 = scmp.eq.s32.totalorder %s19, 1
      %p247 = scmp.ne.s32.totalorder %s242, %s244
      %p248 = scmp.eq.s32.totalorder %s19, 0
      %p249 = por %p247, %p248
      %p250 = scmp.ne.s32.totalorder %s242, %s244
      %p251 = scmp.eq.s32.totalorder %s24, 1
      %p252 = por %p250, %p251
      %p253 = scmp.ne.s32.totalorder %s244, %s245
      %p254 = scmp.eq.s32.totalorder %s24, 0
      %p255 = por %p253, %p254
      %p256 = scmp.ne.s32.totalorder %s244, %s245
      %p257 = scmp.eq.s32.totalorder %s25, 1
      %p258 = por %p256, %p257
      %p260 = scmp.ne.s32.totalorder %s245, %s259
      %p261 = scmp.eq.s32.totalorder %s25, 0
      %p262 = por %p260, %p261
      %s264 = sadd.s32 %s263, 1
      %p267 = scmp.eq.s32.totalorder %s19, 1
      %p268 = scmp.ne.s32.totalorder %s263, %s265
      %p269 = scmp.eq.s32.totalorder %s19, 0
      %p270 = por %p268, %p269
      %p271 = scmp.ne.s32.totalorder %s263, %s265
      %p272 = scmp.eq.s32.totalorder %s24, 1
      %p273 = por %p271, %p272
      %p274 = scmp.ne.s32.totalorder %s265, %s266
      %p275 = scmp.eq.s32.totalorder %s24, 0
      %p276 = por %p274, %p275
      %p277 = scmp.ne.s32.totalorder %s265, %s266
      %p278 = scmp.eq.s32.totalorder %s25, 1
      %p279 = por %p277, %p278
      %p281 = scmp.ne.s32.totalorder %s266, %s280
      %p282 = scmp.eq.s32.totalorder %s25, 0
      %p283 = por %p281, %p282
      %s284 = ssub.s32 %s19, %s26
      %p285 = scmp.eq.s32.totalorder %s284, 0
      %s287 = sadd.s32 %s286, 1
      %s288 = scalar_select %p285, %s286, %s287
      %p291 = pneg %p285
      %p292 = scmp.eq.s32.totalorder %s19, 1
      %p293 = por %p291, %p292
      %p294 = scmp.ne.s32.totalorder %s286, %s289
      %p295 = scmp.eq.s32.totalorder %s19, 0
      %p296 = por %p294, %p295
      %p297 = scmp.ne.s32.totalorder %s286, %s289
      %p298 = scmp.eq.s32.totalorder %s24, 1
      %p299 = por %p297, %p298
      %p300 = scmp.ne.s32.totalorder %s289, %s290
      %p301 = scmp.eq.s32.totalorder %s24, 0
      %p302 = por %p300, %p301
      %p303 = scmp.ne.s32.totalorder %s289, %s290
      %p304 = scmp.eq.s32.totalorder %s25, 1
      %p305 = por %p303, %p304
      %p307 = scmp.ne.s32.totalorder %s290, %s306
      %p308 = scmp.eq.s32.totalorder %s25, 0
      %p309 = por %p307, %p308
      %p310 = scmp.le.s32.totalorder 1, %s19
      %p311 = scmp.lt.s32.totalorder %s19, 3
      %p312 = pnand %p310, %p311
      %p313 = pneg %p312
      // Predicated region
      $region9: #{iit_generate.1} parent=5 // pred_check
        _
      $region10: #{iit_generate.1} parent=5 // pred_check_branch
        %315 = sbr.rel (%p312) target = $region12
      $region11: #{iit_generate.1} parent=5 // pred_region
        %s316 = ssub.s32 %s19, 1
        // Predicated region
        $region13: #{iit_generate.1} parent=11 // pred_check
          %p317 = pneg %p66
        $region14: #{iit_generate.1} parent=11 // pred_check_branch
          %319 = sbr.rel (%p317) target = $region16
        $region15: #{iit_generate.1} parent=11 // pred_region
          _
        $region16: #{iit_generate.1} parent=11 // pred_fallthru
          _
        // Predicated region
        $region17: #{iit_generate.1} parent=11 // pred_check
          %p320 = pneg %p87
        $region18: #{iit_generate.1} parent=11 // pred_check_branch
          %322 = sbr.rel (%p320) target = $region20
        $region19: #{iit_generate.1} parent=11 // pred_region
          _
        $region20: #{iit_generate.1} parent=11 // pred_fallthru
          _
        // Predicated region
        $region21: #{iit_generate.1} parent=11 // pred_check
          %p323 = pneg %p108
        $region22: #{iit_generate.1} parent=11 // pred_check_branch
          %325 = sbr.rel (%p323) target = $region24
        $region23: #{iit_generate.1} parent=11 // pred_region
          _
        $region24: #{iit_generate.1} parent=11 // pred_fallthru
          _
        // Predicated region
        $region25: #{iit_generate.1} parent=11 // pred_check
          %p326 = pneg %p129
        $region26: #{iit_generate.1} parent=11 // pred_check_branch
          %328 = sbr.rel (%p326) target = $region28
        $region27: #{iit_generate.1} parent=11 // pred_region
          _
        $region28: #{iit_generate.1} parent=11 // pred_fallthru
          _
        // Predicated region
        $region29: #{iit_generate.1} parent=11 // pred_check
          %p329 = pneg %p150
        $region30: #{iit_generate.1} parent=11 // pred_check_branch
          %331 = sbr.rel (%p329) target = $region32
        $region31: #{iit_generate.1} parent=11 // pred_region
          _
        $region32: #{iit_generate.1} parent=11 // pred_fallthru
          _
        // Predicated region
        $region33: #{iit_generate.1} parent=11 // pred_check
          %p332 = pneg %p171
        $region34: #{iit_generate.1} parent=11 // pred_check_branch
          %334 = sbr.rel (%p332) target = $region36
        $region35: #{iit_generate.1} parent=11 // pred_region
          _
        $region36: #{iit_generate.1} parent=11 // pred_fallthru
          _
        // Predicated region
        $region37: #{iit_generate.1} parent=11 // pred_check
          %p335 = pneg %p192
        $region38: #{iit_generate.1} parent=11 // pred_check_branch
          %337 = sbr.rel (%p335) target = $region40
        $region39: #{iit_generate.1} parent=11 // pred_region
          _
        $region40: #{iit_generate.1} parent=11 // pred_fallthru
          _
        // Predicated region
        $region41: #{iit_generate.1} parent=11 // pred_check
          %p338 = pneg %p213
        $region42: #{iit_generate.1} parent=11 // pred_check_branch
          %340 = sbr.rel (%p338) target = $region44
        $region43: #{iit_generate.1} parent=11 // pred_region
          _
        $region44: #{iit_generate.1} parent=11 // pred_fallthru
          _
        // Predicated region
        $region45: #{iit_generate.1} parent=11 // pred_check
          %p341 = pneg %p234
        $region46: #{iit_generate.1} parent=11 // pred_check_branch
          %343 = sbr.rel (%p341) target = $region48
        $region47: #{iit_generate.1} parent=11 // pred_region
          _
        $region48: #{iit_generate.1} parent=11 // pred_fallthru
          _
        // Predicated region
        $region49: #{iit_generate.1} parent=11 // pred_check
          %p344 = pneg %p255
        $region50: #{iit_generate.1} parent=11 // pred_check_branch
          %346 = sbr.rel (%p344) target = $region52
        $region51: #{iit_generate.1} parent=11 // pred_region
          %s348 = ssub.s32 4608, 4608
          %349 = vsyncadd [#allocation5], %s348
          %s350 = sshll.u32 [#allocation4], 4
          %s351 = int_to_ptr.vmem [resolvable:$true] %s350
          %356 = dma.hbm_to_vmem [thread:$0]  %s10, 4608, %s351, [#allocation5], 128, 128, 8
        $region52: #{iit_generate.1} parent=11 // pred_fallthru
          _
        // Predicated region
        $region53: #{iit_generate.1} parent=11 // pred_check
          %p357 = pneg %p276
        $region54: #{iit_generate.1} parent=11 // pred_check_branch
          %359 = sbr.rel (%p357) target = $region56
        $region55: #{iit_generate.1} parent=11 // pred_region
          _
        $region56: #{iit_generate.1} parent=11 // pred_fallthru
          _
      $region12: #{iit_generate.1} parent=5 // pred_fallthru
        _
      %p360 = scmp.lt.s32.totalorder %s19, 2
      // Predicated region
      $region57: #{iit_generate.1} parent=5 // pred_check
        %p361 = pneg %p360
      $region58: #{iit_generate.1} parent=5 // pred_check_branch
        %363 = sbr.rel (%p361) target = $region60
      $region59: #{iit_generate.1} parent=5 // pred_region
        // Predicated region
        $region61: #{iit_generate.1} parent=59 // pred_check
          %p364 = pneg %p39
        $region62: #{iit_generate.1} parent=59 // pred_check_branch
          %366 = sbr.rel (%p364) target = $region64
        $region63: #{iit_generate.1} parent=59 // pred_region
          %p367 = scmp.lt.s32.totalorder %s19, 1
          %s368 = scalar_select %p367, %s19, 1
          %s369 = smul.addr %s368, 32
          %s370 = smul.addr %s369, 8
          %s371 = scalar_lea.vmem %s0, %s370
        $region64: #{iit_generate.1} parent=59 // pred_fallthru
          _
      $region60: #{iit_generate.1} parent=5 // pred_fallthru
        _
      %p372 = scmp.le.s32.totalorder 1, %s19
      %p373 = scmp.lt.s32.totalorder %s19, 3
      %p374 = pnand %p372, %p373
      %p375 = pneg %p374
      // Predicated region
      $region65: #{iit_generate.1} parent=5 // pred_check
        _
      $region66: #{iit_generate.1} parent=5 // pred_check_branch
        %377 = sbr.rel (%p374) target = $region68
      $region67: #{iit_generate.1} parent=5 // pred_region
        %s378 = ssub.s32 %s19, 1
        // Predicated region
        $region69: #{iit_generate.1} parent=67 // pred_check
          %p379 = pneg %p255
        $region70: #{iit_generate.1} parent=67 // pred_check_branch
          %381 = sbr.rel (%p379) target = $region72
        $region71: #{iit_generate.1} parent=67 // pred_region
          %382 = dma.done [#allocation5], 4608
        $region72: #{iit_generate.1} parent=67 // pred_fallthru
          _
        %p383 = scmp.lt.s32.totalorder %s24, 1
        %s384 = scalar_select %p383, %s24, 1
        %s385 = smul.addr %s384, 32
        %s386 = smul.addr %s385, 8
        %s387 = scalar_lea.vmem %s0, %s386
        %p388 = pneg %p45
        %p389 = pneg %p42
        %p390 = pneg %p66
        %p391 = pneg %p63
        %p392 = pneg %p87
        %p393 = pneg %p84
        %p394 = pneg %p108
        %p395 = pneg %p105
        %p396 = pneg %p129
        %p397 = pneg %p126
        %p398 = pneg %p150
        %p399 = pneg %p147
        %p400 = pneg %p171
        %p401 = pneg %p168
        %p402 = pneg %p192
        %p403 = pneg %p189
        %p404 = pneg %p213
        %p405 = pneg %p210
        %p406 = pneg %p234
        %p407 = pneg %p231
        %p408 = pneg %p255
        %p409 = pneg %p252
        %p410 = pneg %p276
        %p411 = pneg %p273
        %p412 = pneg %p302
        %p413 = pneg %p299
        %p414 = scmp.lt.s32.totalorder %s24, 1
        %s415 = scalar_select %p414, %s24, 1
        %s416 = smul.addr %s415, 32
        %s417 = smul.addr %s416, 8
        %s418 = scalar_lea.vmem %s12, %s417
        %p419 = scmp.lt.s32.totalorder %s24, 1
        %s420 = scalar_select %p419, %s24, 1
        %s421 = smul.addr %s420, 32
        %s422 = smul.addr %s421, 8
        %s423 = scalar_lea.vmem %s0, %s422
        %p424 = scmp.lt.s32.totalorder %s24, 1
        %s425 = scalar_select %p424, %s24, 1
        %s426 = smul.addr %s425, 32
        %s427 = smul.addr %s426, 8
        %s428 = scalar_lea.vmem %s12, %s427
        %vm429 = vcmask 261120
        %430 = vst.msk [vmem:[#allocation2] sm:$0xff] %vm429, 0.0
        %431 = vst.msk [vmem:[#allocation2 + $0x8] sm:$0xff] %vm429, 0.0
        %vm432 = vcmask 254976
        %433 = vst.msk [vmem:[#allocation2 + $0x10] sm:$0x3] %vm432, 0.0
        %434 = vst.msk [vmem:[#allocation2 + $0x18] sm:$0xff] %vm429, 0.0
        %435 = vst.msk [vmem:[#allocation2 + $0x20] sm:$0xff] %vm429, 0.0
        %436 = vst.msk [vmem:[#allocation2 + $0x28] sm:$0x3] %vm432, 0.0
        %437 = vst.msk [vmem:[#allocation2 + $0x30] sm:$0xff] %vm429, 0.0
        %438 = vst.msk [vmem:[#allocation2 + $0x38] sm:$0xff] %vm429, 0.0
        %439 = vst.msk [vmem:[#allocation2 + $0x40] sm:$0x3] %vm432, 0.0
        %440 = vst.msk [vmem:[#allocation2 + $0x48] sm:$0xff] %vm429, 0.0
        %441 = vst.msk [vmem:[#allocation2 + $0x50] sm:$0xff] %vm429, 0.0
        %442 = vst.msk [vmem:[#allocation2 + $0x58] sm:$0x3] %vm432, 0.0
        %443 = vst.msk [vmem:[#allocation2 + $0x60] sm:$0xff] %vm429, 0.0
        %444 = vst.msk [vmem:[#allocation2 + $0x68] sm:$0xff] %vm429, 0.0
        %445 = vst.msk [vmem:[#allocation2 + $0x70] sm:$0x3] %vm432, 0.0
        %446 = vst.msk [vmem:[#allocation2 + $0x78] sm:$0xff] %vm429, 0.0
        %447 = vst.msk [vmem:[#allocation2 + $0x80] sm:$0xff] %vm429, 0.0
        %448 = vst.msk [vmem:[#allocation2 + $0x88] sm:$0x3] %vm432, 0.0
        %449 = vst.msk [vmem:[#allocation2 + $0x90] sm:$0xff] %vm429, 0.0
        %450 = vst.msk [vmem:[#allocation2 + $0x98] sm:$0xff] %vm429, 0.0
        %451 = vst.msk [vmem:[#allocation2 + $0xa0] sm:$0x3] %vm432, 0.0
        %452 = vst.msk [vmem:[#allocation2 + $0xa8] sm:$0xff] %vm429, 0.0
        %453 = vst.msk [vmem:[#allocation2 + $0xb0] sm:$0xff] %vm429, 0.0
        %454 = vst.msk [vmem:[#allocation2 + $0xb8] sm:$0x3] %vm432, 0.0
        %455 = vst.msk [vmem:[#allocation2 + $0xc0] sm:$0xff] %vm429, 0.0
        %456 = vst.msk [vmem:[#allocation2 + $0xc8] sm:$0xff] %vm429, 0.0
        %457 = vst.msk [vmem:[#allocation2 + $0xd0] sm:$0x3] %vm432, 0.0
        %458 = vst.msk [vmem:[#allocation2 + $0xd8] sm:$0xff] %vm429, 0.0
        %459 = vst.msk [vmem:[#allocation2 + $0xe0] sm:$0xff] %vm429, 0.0
        %460 = vst.msk [vmem:[#allocation2 + $0xe8] sm:$0x3] %vm432, 0.0
        %461 = vst.msk [vmem:[#allocation2 + $0xf0] sm:$0xff] %vm429, 0.0
        %462 = vst.msk [vmem:[#allocation2 + $0xf8] sm:$0xff] %vm429, 0.0
        %463 = vst.msk [vmem:[#allocation2 + $0x100] sm:$0x3] %vm432, 0.0
        %464 = vst.msk [vmem:[#allocation2 + $0x108] sm:$0xff] %vm429, 0.0
        %465 = vst.msk [vmem:[#allocation2 + $0x110] sm:$0xff] %vm429, 0.0
        %466 = vst.msk [vmem:[#allocation2 + $0x118] sm:$0x3] %vm432, 0.0
        %467 = vst.msk [vmem:[#allocation2 + $0x120] sm:$0xff] %vm429, 0.0
        %468 = vst.msk [vmem:[#allocation2 + $0x128] sm:$0xff] %vm429, 0.0
        %469 = vst.msk [vmem:[#allocation2 + $0x130] sm:$0x3] %vm432, 0.0
        %470 = vst.msk [vmem:[#allocation2 + $0x138] sm:$0xff] %vm429, 0.0
        %471 = vst.msk [vmem:[#allocation2 + $0x140] sm:$0xff] %vm429, 0.0
        %472 = vst.msk [vmem:[#allocation2 + $0x148] sm:$0x3] %vm432, 0.0
        %473 = vst.msk [vmem:[#allocation2 + $0x150] sm:$0xff] %vm429, 0.0
        %474 = vst.msk [vmem:[#allocation2 + $0x158] sm:$0xff] %vm429, 0.0
        %475 = vst.msk [vmem:[#allocation2 + $0x160] sm:$0x3] %vm432, 0.0
        %476 = vst.msk [vmem:[#allocation2 + $0x168] sm:$0xff] %vm429, 0.0
        %477 = vst.msk [vmem:[#allocation2 + $0x170] sm:$0xff] %vm429, 0.0
        %478 = vst.msk [vmem:[#allocation2 + $0x178] sm:$0x3] %vm432, 0.0
        %479 = vst.msk [vmem:[#allocation2 + $0x180] sm:$0xff] %vm429, 0.0
        %480 = vst.msk [vmem:[#allocation2 + $0x188] sm:$0xff] %vm429, 0.0
        %481 = vst.msk [vmem:[#allocation2 + $0x190] sm:$0x3] %vm432, 0.0
        %482 = vst.msk [vmem:[#allocation2 + $0x198] sm:$0xff] %vm429, 0.0
        %483 = vst.msk [vmem:[#allocation2 + $0x1a0] sm:$0xff] %vm429, 0.0
        %484 = vst.msk [vmem:[#allocation2 + $0x1a8] sm:$0x3] %vm432, 0.0
        %v485 = vld [vmem:[%s423] sm:$0xff]
        %v486 = vld [vmem:[%s423 + $0x8] sm:$0xff]
        %v487 = vld [vmem:[%s423 + $0x10] sm:$0xff]
        %v488 = vld [vmem:[%s423 + $0x18] sm:$0xff]
        %v489 = vld [vmem:[%s423 + $0x20] sm:$0xff]
        %v490 = vld [vmem:[%s423 + $0x28] sm:$0xff]
        %v491 = vld [vmem:[%s423 + $0x30] sm:$0xff]
        %v492 = vld [vmem:[%s423 + $0x38] sm:$0xff]
        %v493 = vld [vmem:[%s423 + $0x40] sm:$0xff]
        %v494 = vld [vmem:[%s423 + $0x48] sm:$0xff]
        %v495 = vld [vmem:[%s423 + $0x50] sm:$0xff]
        %v496 = vld [vmem:[%s423 + $0x58] sm:$0xff]
        %v497 = vld [vmem:[%s423 + $0x60] sm:$0xff]
        %v498 = vld [vmem:[%s423 + $0x68] sm:$0xff]
        %v499 = vld [vmem:[%s423 + $0x70] sm:$0xff]
        %v500 = vld [vmem:[%s423 + $0x78] sm:$0xff]
        %v501 = vld [vmem:[%s423 + $0x80] sm:$0xff]
        %v502 = vld [vmem:[%s423 + $0x88] sm:$0xff]
        %v503 = vld [vmem:[%s423 + $0x90] sm:$0xff]
        %v504 = vld [vmem:[%s423 + $0x98] sm:$0xff]
        %v505 = vld [vmem:[%s423 + $0xa0] sm:$0xff]
        %v506 = vld [vmem:[%s423 + $0xa8] sm:$0xff]
        %v507 = vld [vmem:[%s423 + $0xb0] sm:$0xff]
        %v508 = vld [vmem:[%s423 + $0xb8] sm:$0xff]
        %v509 = vld [vmem:[%s423 + $0xc0] sm:$0xff]
        %v510 = vld [vmem:[%s423 + $0xc8] sm:$0xff]
        %v511 = vld [vmem:[%s423 + $0xd0] sm:$0xff]
        %v512 = vld [vmem:[%s423 + $0xd8] sm:$0xff]
        %v513 = vld [vmem:[%s423 + $0xe0] sm:$0xff]
        %v514 = vld [vmem:[%s423 + $0xe8] sm:$0xff]
        %v515 = vld [vmem:[%s423 + $0xf0] sm:$0xff]
        %v516 = vld [vmem:[%s423 + $0xf8] sm:$0xff]
        %s517 = scalar_lea.vmem [#allocation2], 24
        %vm518 = vcmask 31744
        %519 = vst.msk [vmem:[%s517 + $0x1] sm:$0xff] %vm518, %v485
        %520 = vst.msk [vmem:[%s517 + $0x9] sm:$0xff] %vm518, %v486
        %521 = vst.msk [vmem:[%s517 + $0x19] sm:$0xff] %vm518, %v487
        %522 = vst.msk [vmem:[%s517 + $0x21] sm:$0xff] %vm518, %v488
        %523 = vst.msk [vmem:[%s517 + $0x31] sm:$0xff] %vm518, %v489
        %524 = vst.msk [vmem:[%s517 + $0x39] sm:$0xff] %vm518, %v490
        %525 = vst.msk [vmem:[%s517 + $0x49] sm:$0xff] %vm518, %v491
        %526 = vst.msk [vmem:[%s517 + $0x51] sm:$0xff] %vm518, %v492
        %527 = vst.msk [vmem:[%s517 + $0x61] sm:$0xff] %vm518, %v493
        %528 = vst.msk [vmem:[%s517 + $0x69] sm:$0xff] %vm518, %v494
        %529 = vst.msk [vmem:[%s517 + $0x79] sm:$0xff] %vm518, %v495
        %530 = vst.msk [vmem:[%s517 + $0x81] sm:$0xff] %vm518, %v496
        %531 = vst.msk [vmem:[%s517 + $0x91] sm:$0xff] %vm518, %v497
        %532 = vst.msk [vmem:[%s517 + $0x99] sm:$0xff] %vm518, %v498
        %533 = vst.msk [vmem:[%s517 + $0xa9] sm:$0xff] %vm518, %v499
        %534 = vst.msk [vmem:[%s517 + $0xb1] sm:$0xff] %vm518, %v500
        %535 = vst.msk [vmem:[%s517 + $0xc1] sm:$0xff] %vm518, %v501
        %536 = vst.msk [vmem:[%s517 + $0xc9] sm:$0xff] %vm518, %v502
        %537 = vst.msk [vmem:[%s517 + $0xd9] sm:$0xff] %vm518, %v503
        %538 = vst.msk [vmem:[%s517 + $0xe1] sm:$0xff] %vm518, %v504
        %539 = vst.msk [vmem:[%s517 + $0xf1] sm:$0xff] %vm518, %v505
        %540 = vst.msk [vmem:[%s517 + $0xf9] sm:$0xff] %vm518, %v506
        %541 = vst.msk [vmem:[%s517 + $0x109] sm:$0xff] %vm518, %v507
        %542 = vst.msk [vmem:[%s517 + $0x111] sm:$0xff] %vm518, %v508
        %543 = vst.msk [vmem:[%s517 + $0x121] sm:$0xff] %vm518, %v509
        %544 = vst.msk [vmem:[%s517 + $0x129] sm:$0xff] %vm518, %v510
        %545 = vst.msk [vmem:[%s517 + $0x139] sm:$0xff] %vm518, %v511
        %546 = vst.msk [vmem:[%s517 + $0x141] sm:$0xff] %vm518, %v512
        %547 = vst.msk [vmem:[%s517 + $0x151] sm:$0xff] %vm518, %v513
        %548 = vst.msk [vmem:[%s517 + $0x159] sm:$0xff] %vm518, %v514
        %549 = vst.msk [vmem:[%s517 + $0x169] sm:$0xff] %vm518, %v515
        %550 = vst.msk [vmem:[%s517 + $0x171] sm:$0xff] %vm518, %v516
        %v551 = vld [vmem:[#allocation2] sm:$0xff]
        %v552 = vld [vmem:[#allocation2 + $0x8] sm:$0xff]
        %v553 = vld [vmem:[#allocation2 + $0x10] sm:$0x3]
        %v554 = vld [vmem:[#allocation2 + $0x18] sm:$0xff]
        %v555 = vld [vmem:[#allocation2 + $0x20] sm:$0xff]
        %v556 = vld [vmem:[#allocation2 + $0x28] sm:$0x3]
        %v557 = vld [vmem:[#allocation2 + $0x30] sm:$0xff]
        %v558 = vld [vmem:[#allocation2 + $0x38] sm:$0xff]
        %v559 = vld [vmem:[#allocation2 + $0x40] sm:$0x3]
        %v560 = vld [vmem:[#allocation2 + $0x48] sm:$0xff]
        %v561 = vld [vmem:[#allocation2 + $0x50] sm:$0xff]
        %v562 = vld [vmem:[#allocation2 + $0x58] sm:$0x3]
        %v563 = vld [vmem:[#allocation2 + $0x60] sm:$0xff]
        %v564 = vld [vmem:[#allocation2 + $0x68] sm:$0xff]
        %v565 = vld [vmem:[#allocation2 + $0x70] sm:$0x3]
        %v566 = vld [vmem:[#allocation2 + $0x78] sm:$0xff]
        %v567 = vld [vmem:[#allocation2 + $0x80] sm:$0xff]
        %v568 = vld [vmem:[#allocation2 + $0x88] sm:$0x3]
        %v569 = vld [vmem:[#allocation2 + $0x90] sm:$0xff]
        %v570 = vld [vmem:[#allocation2 + $0x98] sm:$0xff]
        %v571 = vld [vmem:[#allocation2 + $0xa0] sm:$0x3]
        %v572 = vld [vmem:[#allocation2 + $0xa8] sm:$0xff]
        %v573 = vld [vmem:[#allocation2 + $0xb0] sm:$0xff]
        %v574 = vld [vmem:[#allocation2 + $0xb8] sm:$0x3]
        %v575 = vld [vmem:[#allocation2 + $0xc0] sm:$0xff]
        %v576 = vld [vmem:[#allocation2 + $0xc8] sm:$0xff]
        %v577 = vld [vmem:[#allocation2 + $0xd0] sm:$0x3]
        %v578 = vld [vmem:[#allocation2 + $0xd8] sm:$0xff]
        %v579 = vld [vmem:[#allocation2 + $0xe0] sm:$0xff]
        %v580 = vld [vmem:[#allocation2 + $0xe8] sm:$0x3]
        %v581 = vld [vmem:[#allocation2 + $0xf0] sm:$0xff]
        %v582 = vld [vmem:[#allocation2 + $0xf8] sm:$0xff]
        %v583 = vld [vmem:[#allocation2 + $0x100] sm:$0x3]
        %v584 = vld [vmem:[#allocation2 + $0x108] sm:$0xff]
        %v585 = vld [vmem:[#allocation2 + $0x110] sm:$0xff]
        %v586 = vld [vmem:[#allocation2 + $0x118] sm:$0x3]
        %v587 = vld [vmem:[#allocation2 + $0x120] sm:$0xff]
        %v588 = vld [vmem:[#allocation2 + $0x128] sm:$0xff]
        %v589 = vld [vmem:[#allocation2 + $0x130] sm:$0x3]
        %v590 = vld [vmem:[#allocation2 + $0x138] sm:$0xff]
        %v591 = vld [vmem:[#allocation2 + $0x140] sm:$0xff]
        %v592 = vld [vmem:[#allocation2 + $0x148] sm:$0x3]
        %v593 = vld [vmem:[#allocation2 + $0x150] sm:$0xff]
        %v594 = vld [vmem:[#allocation2 + $0x158] sm:$0xff]
        %v595 = vld [vmem:[#allocation2 + $0x160] sm:$0x3]
        %v596 = vld [vmem:[#allocation2 + $0x168] sm:$0xff]
        %v597 = vld [vmem:[#allocation2 + $0x170] sm:$0xff]
        %v598 = vld [vmem:[#allocation2 + $0x178] sm:$0x3]
        %v599 = vld [vmem:[#allocation2 + $0x180] sm:$0xff]
        %v600 = vld [vmem:[#allocation2 + $0x188] sm:$0xff]
        %v601 = vld [vmem:[#allocation2 + $0x190] sm:$0x3]
        %v602 = vld [vmem:[#allocation2 + $0x198] sm:$0xff]
        %v603 = vld [vmem:[#allocation2 + $0x1a0] sm:$0xff]
        %v604 = vld [vmem:[#allocation2 + $0x1a8] sm:$0x3]
        %605 = vst.msk [vmem:[#allocation3] sm:$0xff] %vm518, %v551
        %606 = vst.msk [vmem:[#allocation3 + $0x18] sm:$0xff] %vm518, %v552
        %607 = vst.msk [vmem:[#allocation3 + $0x30] sm:$0xff] %vm518, %v554
        %608 = vst.msk [vmem:[#allocation3 + $0x48] sm:$0xff] %vm518, %v555
        %609 = vst.msk [vmem:[#allocation3 + $0x60] sm:$0xff] %vm518, %v557
        %610 = vst.msk [vmem:[#allocation3 + $0x78] sm:$0xff] %vm518, %v558
        %611 = vst.msk [vmem:[#allocation3 + $0x90] sm:$0xff] %vm518, %v560
        %612 = vst.msk [vmem:[#allocation3 + $0xa8] sm:$0xff] %vm518, %v561
        %613 = vst.msk [vmem:[#allocation3 + $0xc0] sm:$0xff] %vm518, %v563
        %614 = vst.msk [vmem:[#allocation3 + $0xd8] sm:$0xff] %vm518, %v564
        %615 = vst.msk [vmem:[#allocation3 + $0xf0] sm:$0xff] %vm518, %v566
        %616 = vst.msk [vmem:[#allocation3 + $0x108] sm:$0xff] %vm518, %v567
        %617 = vst.msk [vmem:[#allocation3 + $0x120] sm:$0xff] %vm518, %v569
        %618 = vst.msk [vmem:[#allocation3 + $0x138] sm:$0xff] %vm518, %v570
        %619 = vst.msk [vmem:[#allocation3 + $0x150] sm:$0xff] %vm518, %v572
        %620 = vst.msk [vmem:[#allocation3 + $0x168] sm:$0xff] %vm518, %v573
        %621 = vst.msk [vmem:[#allocation3 + $0x180] sm:$0xff] %vm518, %v575
        %622 = vst.msk [vmem:[#allocation3 + $0x198] sm:$0xff] %vm518, %v576
        %623 = vst.msk [vmem:[#allocation3 + $0x1b0] sm:$0xff] %vm518, %v578
        %624 = vst.msk [vmem:[#allocation3 + $0x1c8] sm:$0xff] %vm518, %v579
        %625 = vst.msk [vmem:[#allocation3 + $0x1e0] sm:$0xff] %vm518, %v581
        %626 = vst.msk [vmem:[#allocation3 + $0x1f8] sm:$0xff] %vm518, %v582
        %627 = vst.msk [vmem:[#allocation3 + $0x210] sm:$0xff] %vm518, %v584
        %628 = vst.msk [vmem:[#allocation3 + $0x228] sm:$0xff] %vm518, %v585
        %629 = vst.msk [vmem:[#allocation3 + $0x240] sm:$0xff] %vm518, %v587
        %630 = vst.msk [vmem:[#allocation3 + $0x258] sm:$0xff] %vm518, %v588
        %631 = vst.msk [vmem:[#allocation3 + $0x270] sm:$0xff] %vm518, %v590
        %632 = vst.msk [vmem:[#allocation3 + $0x288] sm:$0xff] %vm518, %v591
        %633 = vst.msk [vmem:[#allocation3 + $0x2a0] sm:$0xff] %vm518, %v593
        %634 = vst.msk [vmem:[#allocation3 + $0x2b8] sm:$0xff] %vm518, %v594
        %635 = vst.msk [vmem:[#allocation3 + $0x2d0] sm:$0xff] %vm518, %v596
        %636 = vst.msk [vmem:[#allocation3 + $0x2e8] sm:$0xff] %vm518, %v597
        %vm685 = vcmask 1046528
        %v686 = vrot.slane %v551, 1
        %v687 = vrot.slane %v552, 1
        %v688 = vsel %vm685, %v686, %v687
        %v689 = vrot.slane %v553, 1
        %v690 = vsel %vm685, %v687, %v689
        %v691 = vrot.slane %v554, 1
        %v692 = vrot.slane %v555, 1
        %v693 = vsel %vm685, %v691, %v692
        %v694 = vrot.slane %v556, 1
        %v695 = vsel %vm685, %v692, %v694
        %v696 = vrot.slane %v557, 1
        %v697 = vrot.slane %v558, 1
        %v698 = vsel %vm685, %v696, %v697
        %v699 = vrot.slane %v559, 1
        %v700 = vsel %vm685, %v697, %v699
        %v701 = vrot.slane %v560, 1
        %v702 = vrot.slane %v561, 1
        %v703 = vsel %vm685, %v701, %v702
        %v704 = vrot.slane %v562, 1
        %v705 = vsel %vm685, %v702, %v704
        %v706 = vrot.slane %v563, 1
        %v707 = vrot.slane %v564, 1
        %v708 = vsel %vm685, %v706, %v707
        %v709 = vrot.slane %v565, 1
        %v710 = vsel %vm685, %v707, %v709
        %v711 = vrot.slane %v566, 1
        %v712 = vrot.slane %v567, 1
        %v713 = vsel %vm685, %v711, %v712
        %v714 = vrot.slane %v568, 1
        %v715 = vsel %vm685, %v712, %v714
        %v716 = vrot.slane %v569, 1
        %v717 = vrot.slane %v570, 1
        %v718 = vsel %vm685, %v716, %v717
        %v719 = vrot.slane %v571, 1
        %v720 = vsel %vm685, %v717, %v719
        %v721 = vrot.slane %v572, 1
        %v722 = vrot.slane %v573, 1
        %v723 = vsel %vm685, %v721, %v722
        %v724 = vrot.slane %v574, 1
        %v725 = vsel %vm685, %v722, %v724
        %v726 = vrot.slane %v575, 1
        %v727 = vrot.slane %v576, 1
        %v728 = vsel %vm685, %v726, %v727
        %v729 = vrot.slane %v577, 1
        %v730 = vsel %vm685, %v727, %v729
        %v731 = vrot.slane %v578, 1
        %v732 = vrot.slane %v579, 1
        %v733 = vsel %vm685, %v731, %v732
        %v734 = vrot.slane %v580, 1
        %v735 = vsel %vm685, %v732, %v734
        %v736 = vrot.slane %v581, 1
        %v737 = vrot.slane %v582, 1
        %v738 = vsel %vm685, %v736, %v737
        %v739 = vrot.slane %v583, 1
        %v740 = vsel %vm685, %v737, %v739
        %v741 = vrot.slane %v584, 1
        %v742 = vrot.slane %v585, 1
        %v743 = vsel %vm685, %v741, %v742
        %v744 = vrot.slane %v586, 1
        %v745 = vsel %vm685, %v742, %v744
        %v746 = vrot.slane %v587, 1
        %v747 = vrot.slane %v588, 1
        %v748 = vsel %vm685, %v746, %v747
        %v749 = vrot.slane %v589, 1
        %v750 = vsel %vm685, %v747, %v749
        %v751 = vrot.slane %v590, 1
        %v752 = vrot.slane %v591, 1
        %v753 = vsel %vm685, %v751, %v752
        %v754 = vrot.slane %v592, 1
        %v755 = vsel %vm685, %v752, %v754
        %v756 = vrot.slane %v593, 1
        %v757 = vrot.slane %v594, 1
        %v758 = vsel %vm685, %v756, %v757
        %v759 = vrot.slane %v595, 1
        %v760 = vsel %vm685, %v757, %v759
        %v761 = vrot.slane %v596, 1
        %v762 = vrot.slane %v597, 1
        %v763 = vsel %vm685, %v761, %v762
        %v764 = vrot.slane %v598, 1
        %v765 = vsel %vm685, %v762, %v764
        %766 = vrot.lane.b32.xlu0 %v688, 4
        %v767 = vpop.permute.xlu0 %766
        %768 = vrot.lane.b32.xlu0 %v690, 4
        %v769 = vpop.permute.xlu0 %768
        %770 = vrot.lane.b32.xlu0 %v693, 4
        %v771 = vpop.permute.xlu0 %770
        %772 = vrot.lane.b32.xlu0 %v695, 4
        %v773 = vpop.permute.xlu0 %772
        %774 = vrot.lane.b32.xlu0 %v698, 4
        %v775 = vpop.permute.xlu0 %774
        %776 = vrot.lane.b32.xlu0 %v700, 4
        %v777 = vpop.permute.xlu0 %776
        %778 = vrot.lane.b32.xlu0 %v703, 4
        %v779 = vpop.permute.xlu0 %778
        %780 = vrot.lane.b32.xlu0 %v705, 4
        %v781 = vpop.permute.xlu0 %780
        %782 = vrot.lane.b32.xlu0 %v708, 4
        %v783 = vpop.permute.xlu0 %782
        %784 = vrot.lane.b32.xlu0 %v710, 4
        %v785 = vpop.permute.xlu0 %784
        %786 = vrot.lane.b32.xlu0 %v713, 4
        %v787 = vpop.permute.xlu0 %786
        %788 = vrot.lane.b32.xlu0 %v715, 4
        %v789 = vpop.permute.xlu0 %788
        %790 = vrot.lane.b32.xlu0 %v718, 4
        %v791 = vpop.permute.xlu0 %790
        %792 = vrot.lane.b32.xlu0 %v720, 4
        %v793 = vpop.permute.xlu0 %792
        %794 = vrot.lane.b32.xlu0 %v723, 4
        %v795 = vpop.permute.xlu0 %794
        %796 = vrot.lane.b32.xlu0 %v725, 4
        %v797 = vpop.permute.xlu0 %796
        %798 = vrot.lane.b32.xlu0 %v728, 4
        %v799 = vpop.permute.xlu0 %798
        %800 = vrot.lane.b32.xlu0 %v730, 4
        %v801 = vpop.permute.xlu0 %800
        %802 = vrot.lane.b32.xlu0 %v733, 4
        %v803 = vpop.permute.xlu0 %802
        %804 = vrot.lane.b32.xlu0 %v735, 4
        %v805 = vpop.permute.xlu0 %804
        %806 = vrot.lane.b32.xlu0 %v738, 4
        %v807 = vpop.permute.xlu0 %806
        %808 = vrot.lane.b32.xlu0 %v740, 4
        %v809 = vpop.permute.xlu0 %808
        %810 = vrot.lane.b32.xlu0 %v743, 4
        %v811 = vpop.permute.xlu0 %810
        %812 = vrot.lane.b32.xlu0 %v745, 4
        %v813 = vpop.permute.xlu0 %812
        %814 = vrot.lane.b32.xlu0 %v748, 4
        %v815 = vpop.permute.xlu0 %814
        %816 = vrot.lane.b32.xlu0 %v750, 4
        %v817 = vpop.permute.xlu0 %816
        %818 = vrot.lane.b32.xlu0 %v753, 4
        %v819 = vpop.permute.xlu0 %818
        %820 = vrot.lane.b32.xlu0 %v755, 4
        %v821 = vpop.permute.xlu0 %820
        %822 = vrot.lane.b32.xlu0 %v758, 4
        %v823 = vpop.permute.xlu0 %822
        %824 = vrot.lane.b32.xlu0 %v760, 4
        %v825 = vpop.permute.xlu0 %824
        %826 = vrot.lane.b32.xlu0 %v763, 4
        %v827 = vpop.permute.xlu0 %826
        %828 = vrot.lane.b32.xlu0 %v765, 4
        %v829 = vpop.permute.xlu0 %828
        %vm862 = vcmask 64544
        %863 = vst.msk [vmem:[#allocation3] sm:$0xff] %vm862, %v767
        %864 = vst.msk [vmem:[#allocation3 + $0x18] sm:$0xff] %vm862, %v769
        %865 = vst.msk [vmem:[#allocation3 + $0x30] sm:$0xff] %vm862, %v771
        %866 = vst.msk [vmem:[#allocation3 + $0x48] sm:$0xff] %vm862, %v773
        %867 = vst.msk [vmem:[#allocation3 + $0x60] sm:$0xff] %vm862, %v775
        %868 = vst.msk [vmem:[#allocation3 + $0x78] sm:$0xff] %vm862, %v777
        %869 = vst.msk [vmem:[#allocation3 + $0x90] sm:$0xff] %vm862, %v779
        %870 = vst.msk [vmem:[#allocation3 + $0xa8] sm:$0xff] %vm862, %v781
        %871 = vst.msk [vmem:[#allocation3 + $0xc0] sm:$0xff] %vm862, %v783
        %872 = vst.msk [vmem:[#allocation3 + $0xd8] sm:$0xff] %vm862, %v785
        %873 = vst.msk [vmem:[#allocation3 + $0xf0] sm:$0xff] %vm862, %v787
        %874 = vst.msk [vmem:[#allocation3 + $0x108] sm:$0xff] %vm862, %v789
        %875 = vst.msk [vmem:[#allocation3 + $0x120] sm:$0xff] %vm862, %v791
        %876 = vst.msk [vmem:[#allocation3 + $0x138] sm:$0xff] %vm862, %v793
        %877 = vst.msk [vmem:[#allocation3 + $0x150] sm:$0xff] %vm862, %v795
        %878 = vst.msk [vmem:[#allocation3 + $0x168] sm:$0xff] %vm862, %v797
        %879 = vst.msk [vmem:[#allocation3 + $0x180] sm:$0xff] %vm862, %v799
        %880 = vst.msk [vmem:[#allocation3 + $0x198] sm:$0xff] %vm862, %v801
        %881 = vst.msk [vmem:[#allocation3 + $0x1b0] sm:$0xff] %vm862, %v803
        %882 = vst.msk [vmem:[#allocation3 + $0x1c8] sm:$0xff] %vm862, %v805
        %883 = vst.msk [vmem:[#allocation3 + $0x1e0] sm:$0xff] %vm862, %v807
        %884 = vst.msk [vmem:[#allocation3 + $0x1f8] sm:$0xff] %vm862, %v809
        %885 = vst.msk [vmem:[#allocation3 + $0x210] sm:$0xff] %vm862, %v811
        %886 = vst.msk [vmem:[#allocation3 + $0x228] sm:$0xff] %vm862, %v813
        %887 = vst.msk [vmem:[#allocation3 + $0x240] sm:$0xff] %vm862, %v815
        %888 = vst.msk [vmem:[#allocation3 + $0x258] sm:$0xff] %vm862, %v817
        %889 = vst.msk [vmem:[#allocation3 + $0x270] sm:$0xff] %vm862, %v819
        %890 = vst.msk [vmem:[#allocation3 + $0x288] sm:$0xff] %vm862, %v821
        %891 = vst.msk [vmem:[#allocation3 + $0x2a0] sm:$0xff] %vm862, %v823
        %892 = vst.msk [vmem:[#allocation3 + $0x2b8] sm:$0xff] %vm862, %v825
        %893 = vst.msk [vmem:[#allocation3 + $0x2d0] sm:$0xff] %vm862, %v827
        %894 = vst.msk [vmem:[#allocation3 + $0x2e8] sm:$0xff] %vm862, %v829
        %vm895 = vcmask 1045504
        %v896 = vrot.slane %v551, 2
        %v897 = vrot.slane %v552, 2
        %v898 = vsel %vm895, %v896, %v897
        %v899 = vrot.slane %v553, 2
        %v900 = vsel %vm895, %v897, %v899
        %v901 = vrot.slane %v554, 2
        %v902 = vrot.slane %v555, 2
        %v903 = vsel %vm895, %v901, %v902
        %v904 = vrot.slane %v556, 2
        %v905 = vsel %vm895, %v902, %v904
        %v906 = vrot.slane %v557, 2
        %v907 = vrot.slane %v558, 2
        %v908 = vsel %vm895, %v906, %v907
        %v909 = vrot.slane %v559, 2
        %v910 = vsel %vm895, %v907, %v909
        %v911 = vrot.slane %v560, 2
        %v912 = vrot.slane %v561, 2
        %v913 = vsel %vm895, %v911, %v912
        %v914 = vrot.slane %v562, 2
        %v915 = vsel %vm895, %v912, %v914
        %v916 = vrot.slane %v563, 2
        %v917 = vrot.slane %v564, 2
        %v918 = vsel %vm895, %v916, %v917
        %v919 = vrot.slane %v565, 2
        %v920 = vsel %vm895, %v917, %v919
        %v921 = vrot.slane %v566, 2
        %v922 = vrot.slane %v567, 2
        %v923 = vsel %vm895, %v921, %v922
        %v924 = vrot.slane %v568, 2
        %v925 = vsel %vm895, %v922, %v924
        %v926 = vrot.slane %v569, 2
        %v927 = vrot.slane %v570, 2
        %v928 = vsel %vm895, %v926, %v927
        %v929 = vrot.slane %v571, 2
        %v930 = vsel %vm895, %v927, %v929
        %v931 = vrot.slane %v572, 2
        %v932 = vrot.slane %v573, 2
        %v933 = vsel %vm895, %v931, %v932
        %v934 = vrot.slane %v574, 2
        %v935 = vsel %vm895, %v932, %v934
        %v936 = vrot.slane %v575, 2
        %v937 = vrot.slane %v576, 2
        %v938 = vsel %vm895, %v936, %v937
        %v939 = vrot.slane %v577, 2
        %v940 = vsel %vm895, %v937, %v939
        %v941 = vrot.slane %v578, 2
        %v942 = vrot.slane %v579, 2
        %v943 = vsel %vm895, %v941, %v942
        %v944 = vrot.slane %v580, 2
        %v945 = vsel %vm895, %v942, %v944
        %v946 = vrot.slane %v581, 2
        %v947 = vrot.slane %v582, 2
        %v948 = vsel %vm895, %v946, %v947
        %v949 = vrot.slane %v583, 2
        %v950 = vsel %vm895, %v947, %v949
        %v951 = vrot.slane %v584, 2
        %v952 = vrot.slane %v585, 2
        %v953 = vsel %vm895, %v951, %v952
        %v954 = vrot.slane %v586, 2
        %v955 = vsel %vm895, %v952, %v954
        %v956 = vrot.slane %v587, 2
        %v957 = vrot.slane %v588, 2
        %v958 = vsel %vm895, %v956, %v957
        %v959 = vrot.slane %v589, 2
        %v960 = vsel %vm895, %v957, %v959
        %v961 = vrot.slane %v590, 2
        %v962 = vrot.slane %v591, 2
        %v963 = vsel %vm895, %v961, %v962
        %v964 = vrot.slane %v592, 2
        %v965 = vsel %vm895, %v962, %v964
        %v966 = vrot.slane %v593, 2
        %v967 = vrot.slane %v594, 2
        %v968 = vsel %vm895, %v966, %v967
        %v969 = vrot.slane %v595, 2
        %v970 = vsel %vm895, %v967, %v969
        %v971 = vrot.slane %v596, 2
        %v972 = vrot.slane %v597, 2
        %v973 = vsel %vm895, %v971, %v972
        %v974 = vrot.slane %v598, 2
        %v975 = vsel %vm895, %v972, %v974
        %976 = vrot.lane.b32.xlu0 %v898, 8
        %v977 = vpop.permute.xlu0 %976
        %978 = vrot.lane.b32.xlu0 %v900, 8
        %v979 = vpop.permute.xlu0 %978
        %980 = vrot.lane.b32.xlu0 %v903, 8
        %v981 = vpop.permute.xlu0 %980
        %982 = vrot.lane.b32.xlu0 %v905, 8
        %v983 = vpop.permute.xlu0 %982
        %984 = vrot.lane.b32.xlu0 %v908, 8
        %v985 = vpop.permute.xlu0 %984
        %986 = vrot.lane.b32.xlu0 %v910, 8
        %v987 = vpop.permute.xlu0 %986
        %988 = vrot.lane.b32.xlu0 %v913, 8
        %v989 = vpop.permute.xlu0 %988
        %990 = vrot.lane.b32.xlu0 %v915, 8
        %v991 = vpop.permute.xlu0 %990
        %992 = vrot.lane.b32.xlu0 %v918, 8
        %v993 = vpop.permute.xlu0 %992
        %994 = vrot.lane.b32.xlu0 %v920, 8
        %v995 = vpop.permute.xlu0 %994
        %996 = vrot.lane.b32.xlu0 %v923, 8
        %v997 = vpop.permute.xlu0 %996
        %998 = vrot.lane.b32.xlu0 %v925, 8
        %v999 = vpop.permute.xlu0 %998
        %1000 = vrot.lane.b32.xlu0 %v928, 8
        %v1001 = vpop.permute.xlu0 %1000
        %1002 = vrot.lane.b32.xlu0 %v930, 8
        %v1003 = vpop.permute.xlu0 %1002
        %1004 = vrot.lane.b32.xlu0 %v933, 8
        %v1005 = vpop.permute.xlu0 %1004
        %1006 = vrot.lane.b32.xlu0 %v935, 8
        %v1007 = vpop.permute.xlu0 %1006
        %1008 = vrot.lane.b32.xlu0 %v938, 8
        %v1009 = vpop.permute.xlu0 %1008
        %1010 = vrot.lane.b32.xlu0 %v940, 8
        %v1011 = vpop.permute.xlu0 %1010
        %1012 = vrot.lane.b32.xlu0 %v943, 8
        %v1013 = vpop.permute.xlu0 %1012
        %1014 = vrot.lane.b32.xlu0 %v945, 8
        %v1015 = vpop.permute.xlu0 %1014
        %1016 = vrot.lane.b32.xlu0 %v948, 8
        %v1017 = vpop.permute.xlu0 %1016
        %1018 = vrot.lane.b32.xlu0 %v950, 8
        %v1019 = vpop.permute.xlu0 %1018
        %1020 = vrot.lane.b32.xlu0 %v953, 8
        %v1021 = vpop.permute.xlu0 %1020
        %1022 = vrot.lane.b32.xlu0 %v955, 8
        %v1023 = vpop.permute.xlu0 %1022
        %1024 = vrot.lane.b32.xlu0 %v958, 8
        %v1025 = vpop.permute.xlu0 %1024
        %1026 = vrot.lane.b32.xlu0 %v960, 8
        %v1027 = vpop.permute.xlu0 %1026
        %1028 = vrot.lane.b32.xlu0 %v963, 8
        %v1029 = vpop.permute.xlu0 %1028
        %1030 = vrot.lane.b32.xlu0 %v965, 8
        %v1031 = vpop.permute.xlu0 %1030
        %1032 = vrot.lane.b32.xlu0 %v968, 8
        %v1033 = vpop.permute.xlu0 %1032
        %1034 = vrot.lane.b32.xlu0 %v970, 8
        %v1035 = vpop.permute.xlu0 %1034
        %1036 = vrot.lane.b32.xlu0 %v973, 8
        %v1037 = vpop.permute.xlu0 %1036
        %1038 = vrot.lane.b32.xlu0 %v975, 8
        %v1039 = vpop.permute.xlu0 %1038
        %vm1072 = vcmask 97344
        %1073 = vst.msk [vmem:[#allocation3] sm:$0xff] %vm1072, %v977
        %1074 = vst.msk [vmem:[#allocation3 + $0x18] sm:$0xff] %vm1072, %v979
        %1075 = vst.msk [vmem:[#allocation3 + $0x30] sm:$0xff] %vm1072, %v981
        %1076 = vst.msk [vmem:[#allocation3 + $0x48] sm:$0xff] %vm1072, %v983
        %1077 = vst.msk [vmem:[#allocation3 + $0x60] sm:$0xff] %vm1072, %v985
        %1078 = vst.msk [vmem:[#allocation3 + $0x78] sm:$0xff] %vm1072, %v987
        %1079 = vst.msk [vmem:[#allocation3 + $0x90] sm:$0xff] %vm1072, %v989
        %1080 = vst.msk [vmem:[#allocation3 + $0xa8] sm:$0xff] %vm1072, %v991
        %1081 = vst.msk [vmem:[#allocation3 + $0xc0] sm:$0xff] %vm1072, %v993
        %1082 = vst.msk [vmem:[#allocation3 + $0xd8] sm:$0xff] %vm1072, %v995
        %1083 = vst.msk [vmem:[#allocation3 + $0xf0] sm:$0xff] %vm1072, %v997
        %1084 = vst.msk [vmem:[#allocation3 + $0x108] sm:$0xff] %vm1072, %v999
        %1085 = vst.msk [vmem:[#allocation3 + $0x120] sm:$0xff] %vm1072, %v1001
        %1086 = vst.msk [vmem:[#allocation3 + $0x138] sm:$0xff] %vm1072, %v1003
        %1087 = vst.msk [vmem:[#allocation3 + $0x150] sm:$0xff] %vm1072, %v1005
        %1088 = vst.msk [vmem:[#allocation3 + $0x168] sm:$0xff] %vm1072, %v1007
        %1089 = vst.msk [vmem:[#allocation3 + $0x180] sm:$0xff] %vm1072, %v1009
        %1090 = vst.msk [vmem:[#allocation3 + $0x198] sm:$0xff] %vm1072, %v1011
        %1091 = vst.msk [vmem:[#allocation3 + $0x1b0] sm:$0xff] %vm1072, %v1013
        %1092 = vst.msk [vmem:[#allocation3 + $0x1c8] sm:$0xff] %vm1072, %v1015
        %1093 = vst.msk [vmem:[#allocation3 + $0x1e0] sm:$0xff] %vm1072, %v1017
        %1094 = vst.msk [vmem:[#allocation3 + $0x1f8] sm:$0xff] %vm1072, %v1019
        %1095 = vst.msk [vmem:[#allocation3 + $0x210] sm:$0xff] %vm1072, %v1021
        %1096 = vst.msk [vmem:[#allocation3 + $0x228] sm:$0xff] %vm1072, %v1023
        %1097 = vst.msk [vmem:[#allocation3 + $0x240] sm:$0xff] %vm1072, %v1025
        %1098 = vst.msk [vmem:[#allocation3 + $0x258] sm:$0xff] %vm1072, %v1027
        %1099 = vst.msk [vmem:[#allocation3 + $0x270] sm:$0xff] %vm1072, %v1029
        %1100 = vst.msk [vmem:[#allocation3 + $0x288] sm:$0xff] %vm1072, %v1031
        %1101 = vst.msk [vmem:[#allocation3 + $0x2a0] sm:$0xff] %vm1072, %v1033
        %1102 = vst.msk [vmem:[#allocation3 + $0x2b8] sm:$0xff] %vm1072, %v1035
        %1103 = vst.msk [vmem:[#allocation3 + $0x2d0] sm:$0xff] %vm1072, %v1037
        %1104 = vst.msk [vmem:[#allocation3 + $0x2e8] sm:$0xff] %vm1072, %v1039
        %1107 = vrot.lane.b32.xlu0 %v554, 12
        %v1108 = vpop.permute.xlu0 %1107
        %1109 = vrot.lane.b32.xlu0 %v555, 12
        %v1110 = vpop.permute.xlu0 %1109
        %1111 = vrot.lane.b32.xlu0 %v557, 12
        %v1112 = vpop.permute.xlu0 %1111
        %1113 = vrot.lane.b32.xlu0 %v558, 12
        %v1114 = vpop.permute.xlu0 %1113
        %1115 = vrot.lane.b32.xlu0 %v560, 12
        %v1116 = vpop.permute.xlu0 %1115
        %1117 = vrot.lane.b32.xlu0 %v561, 12
        %v1118 = vpop.permute.xlu0 %1117
        %1119 = vrot.lane.b32.xlu0 %v563, 12
        %v1120 = vpop.permute.xlu0 %1119
        %1121 = vrot.lane.b32.xlu0 %v564, 12
        %v1122 = vpop.permute.xlu0 %1121
        %1123 = vrot.lane.b32.xlu0 %v566, 12
        %v1124 = vpop.permute.xlu0 %1123
        %1125 = vrot.lane.b32.xlu0 %v567, 12
        %v1126 = vpop.permute.xlu0 %1125
        %1127 = vrot.lane.b32.xlu0 %v569, 12
        %v1128 = vpop.permute.xlu0 %1127
        %1129 = vrot.lane.b32.xlu0 %v570, 12
        %v1130 = vpop.permute.xlu0 %1129
        %1131 = vrot.lane.b32.xlu0 %v572, 12
        %v1132 = vpop.permute.xlu0 %1131
        %1133 = vrot.lane.b32.xlu0 %v573, 12
        %v1134 = vpop.permute.xlu0 %1133
        %1135 = vrot.lane.b32.xlu0 %v575, 12
        %v1136 = vpop.permute.xlu0 %1135
        %1137 = vrot.lane.b32.xlu0 %v576, 12
        %v1138 = vpop.permute.xlu0 %1137
        %1139 = vrot.lane.b32.xlu0 %v578, 12
        %v1140 = vpop.permute.xlu0 %1139
        %1141 = vrot.lane.b32.xlu0 %v579, 12
        %v1142 = vpop.permute.xlu0 %1141
        %1143 = vrot.lane.b32.xlu0 %v581, 12
        %v1144 = vpop.permute.xlu0 %1143
        %1145 = vrot.lane.b32.xlu0 %v582, 12
        %v1146 = vpop.permute.xlu0 %1145
        %1147 = vrot.lane.b32.xlu0 %v584, 12
        %v1148 = vpop.permute.xlu0 %1147
        %1149 = vrot.lane.b32.xlu0 %v585, 12
        %v1150 = vpop.permute.xlu0 %1149
        %1151 = vrot.lane.b32.xlu0 %v587, 12
        %v1152 = vpop.permute.xlu0 %1151
        %1153 = vrot.lane.b32.xlu0 %v588, 12
        %v1154 = vpop.permute.xlu0 %1153
        %1155 = vrot.lane.b32.xlu0 %v590, 12
        %v1156 = vpop.permute.xlu0 %1155
        %1157 = vrot.lane.b32.xlu0 %v591, 12
        %v1158 = vpop.permute.xlu0 %1157
        %1159 = vrot.lane.b32.xlu0 %v593, 12
        %v1160 = vpop.permute.xlu0 %1159
        %1161 = vrot.lane.b32.xlu0 %v594, 12
        %v1162 = vpop.permute.xlu0 %1161
        %1163 = vrot.lane.b32.xlu0 %v596, 12
        %v1164 = vpop.permute.xlu0 %1163
        %1165 = vrot.lane.b32.xlu0 %v597, 12
        %v1166 = vpop.permute.xlu0 %1165
        %1167 = vrot.lane.b32.xlu0 %v599, 12
        %v1168 = vpop.permute.xlu0 %1167
        %1169 = vrot.lane.b32.xlu0 %v600, 12
        %v1170 = vpop.permute.xlu0 %1169
        %vm1203 = vcmask 130144
        %1204 = vst.msk [vmem:[#allocation3] sm:$0xff] %vm1203, %v1108
        %1205 = vst.msk [vmem:[#allocation3 + $0x18] sm:$0xff] %vm1203, %v1110
        %1206 = vst.msk [vmem:[#allocation3 + $0x30] sm:$0xff] %vm1203, %v1112
        %1207 = vst.msk [vmem:[#allocation3 + $0x48] sm:$0xff] %vm1203, %v1114
        %1208 = vst.msk [vmem:[#allocation3 + $0x60] sm:$0xff] %vm1203, %v1116
        %1209 = vst.msk [vmem:[#allocation3 + $0x78] sm:$0xff] %vm1203, %v1118
        %1210 = vst.msk [vmem:[#allocation3 + $0x90] sm:$0xff] %vm1203, %v1120
        %1211 = vst.msk [vmem:[#allocation3 + $0xa8] sm:$0xff] %vm1203, %v1122
        %1212 = vst.msk [vmem:[#allocation3 + $0xc0] sm:$0xff] %vm1203, %v1124
        %1213 = vst.msk [vmem:[#allocation3 + $0xd8] sm:$0xff] %vm1203, %v1126
        %1214 = vst.msk [vmem:[#allocation3 + $0xf0] sm:$0xff] %vm1203, %v1128
        %1215 = vst.msk [vmem:[#allocation3 + $0x108] sm:$0xff] %vm1203, %v1130
        %1216 = vst.msk [vmem:[#allocation3 + $0x120] sm:$0xff] %vm1203, %v1132
        %1217 = vst.msk [vmem:[#allocation3 + $0x138] sm:$0xff] %vm1203, %v1134
        %1218 = vst.msk [vmem:[#allocation3 + $0x150] sm:$0xff] %vm1203, %v1136
        %1219 = vst.msk [vmem:[#allocation3 + $0x168] sm:$0xff] %vm1203, %v1138
        %1220 = vst.msk [vmem:[#allocation3 + $0x180] sm:$0xff] %vm1203, %v1140
        %1221 = vst.msk [vmem:[#allocation3 + $0x198] sm:$0xff] %vm1203, %v1142
        %1222 = vst.msk [vmem:[#allocation3 + $0x1b0] sm:$0xff] %vm1203, %v1144
        %1223 = vst.msk [vmem:[#allocation3 + $0x1c8] sm:$0xff] %vm1203, %v1146
        %1224 = vst.msk [vmem:[#allocation3 + $0x1e0] sm:$0xff] %vm1203, %v1148
        %1225 = vst.msk [vmem:[#allocation3 + $0x1f8] sm:$0xff] %vm1203, %v1150
        %1226 = vst.msk [vmem:[#allocation3 + $0x210] sm:$0xff] %vm1203, %v1152
        %1227 = vst.msk [vmem:[#allocation3 + $0x228] sm:$0xff] %vm1203, %v1154
        %1228 = vst.msk [vmem:[#allocation3 + $0x240] sm:$0xff] %vm1203, %v1156
        %1229 = vst.msk [vmem:[#allocation3 + $0x258] sm:$0xff] %vm1203, %v1158
        %1230 = vst.msk [vmem:[#allocation3 + $0x270] sm:$0xff] %vm1203, %v1160
        %1231 = vst.msk [vmem:[#allocation3 + $0x288] sm:$0xff] %vm1203, %v1162
        %1232 = vst.msk [vmem:[#allocation3 + $0x2a0] sm:$0xff] %vm1203, %v1164
        %1233 = vst.msk [vmem:[#allocation3 + $0x2b8] sm:$0xff] %vm1203, %v1166
        %1234 = vst.msk [vmem:[#allocation3 + $0x2d0] sm:$0xff] %vm1203, %v1168
        %1235 = vst.msk [vmem:[#allocation3 + $0x2e8] sm:$0xff] %vm1203, %v1170
        %v1237 = vrot.slane %v599, 1
        %v1238 = vrot.slane %v600, 1
        %v1239 = vsel %vm685, %v1237, %v1238
        %v1240 = vrot.slane %v601, 1
        %v1241 = vsel %vm685, %v1238, %v1240
        %1242 = vrot.lane.b32.xlu0 %v693, 16
        %v1243 = vpop.permute.xlu0 %1242
        %1244 = vrot.lane.b32.xlu0 %v695, 16
        %v1245 = vpop.permute.xlu0 %1244
        %1246 = vrot.lane.b32.xlu0 %v698, 16
        %v1247 = vpop.permute.xlu0 %1246
        %1248 = vrot.lane.b32.xlu0 %v700, 16
        %v1249 = vpop.permute.xlu0 %1248
        %1250 = vrot.lane.b32.xlu0 %v703, 16
        %v1251 = vpop.permute.xlu0 %1250
        %1252 = vrot.lane.b32.xlu0 %v705, 16
        %v1253 = vpop.permute.xlu0 %1252
        %1254 = vrot.lane.b32.xlu0 %v708, 16
        %v1255 = vpop.permute.xlu0 %1254
        %1256 = vrot.lane.b32.xlu0 %v710, 16
        %v1257 = vpop.permute.xlu0 %1256
        %1258 = vrot.lane.b32.xlu0 %v713, 16
        %v1259 = vpop.permute.xlu0 %1258
        %1260 = vrot.lane.b32.xlu0 %v715, 16
        %v1261 = vpop.permute.xlu0 %1260
        %1262 = vrot.lane.b32.xlu0 %v718, 16
        %v1263 = vpop.permute.xlu0 %1262
        %1264 = vrot.lane.b32.xlu0 %v720, 16
        %v1265 = vpop.permute.xlu0 %1264
        %1266 = vrot.lane.b32.xlu0 %v723, 16
        %v1267 = vpop.permute.xlu0 %1266
        %1268 = vrot.lane.b32.xlu0 %v725, 16
        %v1269 = vpop.permute.xlu0 %1268
        %1270 = vrot.lane.b32.xlu0 %v728, 16
        %v1271 = vpop.permute.xlu0 %1270
        %1272 = vrot.lane.b32.xlu0 %v730, 16
        %v1273 = vpop.permute.xlu0 %1272
        %1274 = vrot.lane.b32.xlu0 %v733, 16
        %v1275 = vpop.permute.xlu0 %1274
        %1276 = vrot.lane.b32.xlu0 %v735, 16
        %v1277 = vpop.permute.xlu0 %1276
        %1278 = vrot.lane.b32.xlu0 %v738, 16
        %v1279 = vpop.permute.xlu0 %1278
        %1280 = vrot.lane.b32.xlu0 %v740, 16
        %v1281 = vpop.permute.xlu0 %1280
        %1282 = vrot.lane.b32.xlu0 %v743, 16
        %v1283 = vpop.permute.xlu0 %1282
        %1284 = vrot.lane.b32.xlu0 %v745, 16
        %v1285 = vpop.permute.xlu0 %1284
        %1286 = vrot.lane.b32.xlu0 %v748, 16
        %v1287 = vpop.permute.xlu0 %1286
        %1288 = vrot.lane.b32.xlu0 %v750, 16
        %v1289 = vpop.permute.xlu0 %1288
        %1290 = vrot.lane.b32.xlu0 %v753, 16
        %v1291 = vpop.permute.xlu0 %1290
        %1292 = vrot.lane.b32.xlu0 %v755, 16
        %v1293 = vpop.permute.xlu0 %1292
        %1294 = vrot.lane.b32.xlu0 %v758, 16
        %v1295 = vpop.permute.xlu0 %1294
        %1296 = vrot.lane.b32.xlu0 %v760, 16
        %v1297 = vpop.permute.xlu0 %1296
        %1298 = vrot.lane.b32.xlu0 %v763, 16
        %v1299 = vpop.permute.xlu0 %1298
        %1300 = vrot.lane.b32.xlu0 %v765, 16
        %v1301 = vpop.permute.xlu0 %1300
        %1302 = vrot.lane.b32.xlu0 %v1239, 16
        %v1303 = vpop.permute.xlu0 %1302
        %1304 = vrot.lane.b32.xlu0 %v1241, 16
        %v1305 = vpop.permute.xlu0 %1304
        %vm1338 = vcmask 162944
        %1339 = vst.msk [vmem:[#allocation3] sm:$0xff] %vm1338, %v1243
        %1340 = vst.msk [vmem:[#allocation3 + $0x18] sm:$0xff] %vm1338, %v1245
        %1341 = vst.msk [vmem:[#allocation3 + $0x30] sm:$0xff] %vm1338, %v1247
        %1342 = vst.msk [vmem:[#allocation3 + $0x48] sm:$0xff] %vm1338, %v1249
        %1343 = vst.msk [vmem:[#allocation3 + $0x60] sm:$0xff] %vm1338, %v1251
        %1344 = vst.msk [vmem:[#allocation3 + $0x78] sm:$0xff] %vm1338, %v1253
        %1345 = vst.msk [vmem:[#allocation3 + $0x90] sm:$0xff] %vm1338, %v1255
        %1346 = vst.msk [vmem:[#allocation3 + $0xa8] sm:$0xff] %vm1338, %v1257
        %1347 = vst.msk [vmem:[#allocation3 + $0xc0] sm:$0xff] %vm1338, %v1259
        %1348 = vst.msk [vmem:[#allocation3 + $0xd8] sm:$0xff] %vm1338, %v1261
        %1349 = vst.msk [vmem:[#allocation3 + $0xf0] sm:$0xff] %vm1338, %v1263
        %1350 = vst.msk [vmem:[#allocation3 + $0x108] sm:$0xff] %vm1338, %v1265
        %1351 = vst.msk [vmem:[#allocation3 + $0x120] sm:$0xff] %vm1338, %v1267
        %1352 = vst.msk [vmem:[#allocation3 + $0x138] sm:$0xff] %vm1338, %v1269
        %1353 = vst.msk [vmem:[#allocation3 + $0x150] sm:$0xff] %vm1338, %v1271
        %1354 = vst.msk [vmem:[#allocation3 + $0x168] sm:$0xff] %vm1338, %v1273
        %1355 = vst.msk [vmem:[#allocation3 + $0x180] sm:$0xff] %vm1338, %v1275
        %1356 = vst.msk [vmem:[#allocation3 + $0x198] sm:$0xff] %vm1338, %v1277
        %1357 = vst.msk [vmem:[#allocation3 + $0x1b0] sm:$0xff] %vm1338, %v1279
        %1358 = vst.msk [vmem:[#allocation3 + $0x1c8] sm:$0xff] %vm1338, %v1281
        %1359 = vst.msk [vmem:[#allocation3 + $0x1e0] sm:$0xff] %vm1338, %v1283
        %1360 = vst.msk [vmem:[#allocation3 + $0x1f8] sm:$0xff] %vm1338, %v1285
        %1361 = vst.msk [vmem:[#allocation3 + $0x210] sm:$0xff] %vm1338, %v1287
        %1362 = vst.msk [vmem:[#allocation3 + $0x228] sm:$0xff] %vm1338, %v1289
        %1363 = vst.msk [vmem:[#allocation3 + $0x240] sm:$0xff] %vm1338, %v1291
        %1364 = vst.msk [vmem:[#allocation3 + $0x258] sm:$0xff] %vm1338, %v1293
        %1365 = vst.msk [vmem:[#allocation3 + $0x270] sm:$0xff] %vm1338, %v1295
        %1366 = vst.msk [vmem:[#allocation3 + $0x288] sm:$0xff] %vm1338, %v1297
        %1367 = vst.msk [vmem:[#allocation3 + $0x2a0] sm:$0xff] %vm1338, %v1299
        %1368 = vst.msk [vmem:[#allocation3 + $0x2b8] sm:$0xff] %vm1338, %v1301
        %1369 = vst.msk [vmem:[#allocation3 + $0x2d0] sm:$0xff] %vm1338, %v1303
        %1370 = vst.msk [vmem:[#allocation3 + $0x2e8] sm:$0xff] %vm1338, %v1305
        %v1371 = vrot.slane %v599, 2
        %v1372 = vrot.slane %v600, 2
        %v1373 = vsel %vm895, %v1371, %v1372
        %v1374 = vrot.slane %v601, 2
        %v1375 = vsel %vm895, %v1372, %v1374
        %1376 = vrot.lane.b32.xlu0 %v903, 20
        %v1377 = vpop.permute.xlu0 %1376
        %1378 = vrot.lane.b32.xlu0 %v905, 20
        %v1379 = vpop.permute.xlu0 %1378
        %1380 = vrot.lane.b32.xlu0 %v908, 20
        %v1381 = vpop.permute.xlu0 %1380
        %1382 = vrot.lane.b32.xlu0 %v910, 20
        %v1383 = vpop.permute.xlu0 %1382
        %1384 = vrot.lane.b32.xlu0 %v913, 20
        %v1385 = vpop.permute.xlu0 %1384
        %1386 = vrot.lane.b32.xlu0 %v915, 20
        %v1387 = vpop.permute.xlu0 %1386
        %1388 = vrot.lane.b32.xlu0 %v918, 20
        %v1389 = vpop.permute.xlu0 %1388
        %1390 = vrot.lane.b32.xlu0 %v920, 20
        %v1391 = vpop.permute.xlu0 %1390
        %1392 = vrot.lane.b32.xlu0 %v923, 20
        %v1393 = vpop.permute.xlu0 %1392
        %1394 = vrot.lane.b32.xlu0 %v925, 20
        %v1395 = vpop.permute.xlu0 %1394
        %1396 = vrot.lane.b32.xlu0 %v928, 20
        %v1397 = vpop.permute.xlu0 %1396
        %1398 = vrot.lane.b32.xlu0 %v930, 20
        %v1399 = vpop.permute.xlu0 %1398
        %1400 = vrot.lane.b32.xlu0 %v933, 20
        %v1401 = vpop.permute.xlu0 %1400
        %1402 = vrot.lane.b32.xlu0 %v935, 20
        %v1403 = vpop.permute.xlu0 %1402
        %1404 = vrot.lane.b32.xlu0 %v938, 20
        %v1405 = vpop.permute.xlu0 %1404
        %1406 = vrot.lane.b32.xlu0 %v940, 20
        %v1407 = vpop.permute.xlu0 %1406
        %1408 = vrot.lane.b32.xlu0 %v943, 20
        %v1409 = vpop.permute.xlu0 %1408
        %1410 = vrot.lane.b32.xlu0 %v945, 20
        %v1411 = vpop.permute.xlu0 %1410
        %1412 = vrot.lane.b32.xlu0 %v948, 20
        %v1413 = vpop.permute.xlu0 %1412
        %1414 = vrot.lane.b32.xlu0 %v950, 20
        %v1415 = vpop.permute.xlu0 %1414
        %1416 = vrot.lane.b32.xlu0 %v953, 20
        %v1417 = vpop.permute.xlu0 %1416
        %1418 = vrot.lane.b32.xlu0 %v955, 20
        %v1419 = vpop.permute.xlu0 %1418
        %1420 = vrot.lane.b32.xlu0 %v958, 20
        %v1421 = vpop.permute.xlu0 %1420
        %1422 = vrot.lane.b32.xlu0 %v960, 20
        %v1423 = vpop.permute.xlu0 %1422
        %1424 = vrot.lane.b32.xlu0 %v963, 20
        %v1425 = vpop.permute.xlu0 %1424
        %1426 = vrot.lane.b32.xlu0 %v965, 20
        %v1427 = vpop.permute.xlu0 %1426
        %1428 = vrot.lane.b32.xlu0 %v968, 20
        %v1429 = vpop.permute.xlu0 %1428
        %1430 = vrot.lane.b32.xlu0 %v970, 20
        %v1431 = vpop.permute.xlu0 %1430
        %1432 = vrot.lane.b32.xlu0 %v973, 20
        %v1433 = vpop.permute.xlu0 %1432
        %1434 = vrot.lane.b32.xlu0 %v975, 20
        %v1435 = vpop.permute.xlu0 %1434
        %1436 = vrot.lane.b32.xlu0 %v1373, 20
        %v1437 = vpop.permute.xlu0 %1436
        %1438 = vrot.lane.b32.xlu0 %v1375, 20
        %v1439 = vpop.permute.xlu0 %1438
        %vm1472 = vcmask 195744
        %1473 = vst.msk [vmem:[#allocation3] sm:$0xff] %vm1472, %v1377
        %1474 = vst.msk [vmem:[#allocation3 + $0x18] sm:$0xff] %vm1472, %v1379
        %1475 = vst.msk [vmem:[#allocation3 + $0x30] sm:$0xff] %vm1472, %v1381
        %1476 = vst.msk [vmem:[#allocation3 + $0x48] sm:$0xff] %vm1472, %v1383
        %1477 = vst.msk [vmem:[#allocation3 + $0x60] sm:$0xff] %vm1472, %v1385
        %1478 = vst.msk [vmem:[#allocation3 + $0x78] sm:$0xff] %vm1472, %v1387
        %1479 = vst.msk [vmem:[#allocation3 + $0x90] sm:$0xff] %vm1472, %v1389
        %1480 = vst.msk [vmem:[#allocation3 + $0xa8] sm:$0xff] %vm1472, %v1391
        %1481 = vst.msk [vmem:[#allocation3 + $0xc0] sm:$0xff] %vm1472, %v1393
        %1482 = vst.msk [vmem:[#allocation3 + $0xd8] sm:$0xff] %vm1472, %v1395
        %1483 = vst.msk [vmem:[#allocation3 + $0xf0] sm:$0xff] %vm1472, %v1397
        %1484 = vst.msk [vmem:[#allocation3 + $0x108] sm:$0xff] %vm1472, %v1399
        %1485 = vst.msk [vmem:[#allocation3 + $0x120] sm:$0xff] %vm1472, %v1401
        %1486 = vst.msk [vmem:[#allocation3 + $0x138] sm:$0xff] %vm1472, %v1403
        %1487 = vst.msk [vmem:[#allocation3 + $0x150] sm:$0xff] %vm1472, %v1405
        %1488 = vst.msk [vmem:[#allocation3 + $0x168] sm:$0xff] %vm1472, %v1407
        %1489 = vst.msk [vmem:[#allocation3 + $0x180] sm:$0xff] %vm1472, %v1409
        %1490 = vst.msk [vmem:[#allocation3 + $0x198] sm:$0xff] %vm1472, %v1411
        %1491 = vst.msk [vmem:[#allocation3 + $0x1b0] sm:$0xff] %vm1472, %v1413
        %1492 = vst.msk [vmem:[#allocation3 + $0x1c8] sm:$0xff] %vm1472, %v1415
        %1493 = vst.msk [vmem:[#allocation3 + $0x1e0] sm:$0xff] %vm1472, %v1417
        %1494 = vst.msk [vmem:[#allocation3 + $0x1f8] sm:$0xff] %vm1472, %v1419
        %1495 = vst.msk [vmem:[#allocation3 + $0x210] sm:$0xff] %vm1472, %v1421
        %1496 = vst.msk [vmem:[#allocation3 + $0x228] sm:$0xff] %vm1472, %v1423
        %1497 = vst.msk [vmem:[#allocation3 + $0x240] sm:$0xff] %vm1472, %v1425
        %1498 = vst.msk [vmem:[#allocation3 + $0x258] sm:$0xff] %vm1472, %v1427
        %1499 = vst.msk [vmem:[#allocation3 + $0x270] sm:$0xff] %vm1472, %v1429
        %1500 = vst.msk [vmem:[#allocation3 + $0x288] sm:$0xff] %vm1472, %v1431
        %1501 = vst.msk [vmem:[#allocation3 + $0x2a0] sm:$0xff] %vm1472, %v1433
        %1502 = vst.msk [vmem:[#allocation3 + $0x2b8] sm:$0xff] %vm1472, %v1435
        %1503 = vst.msk [vmem:[#allocation3 + $0x2d0] sm:$0xff] %vm1472, %v1437
        %1504 = vst.msk [vmem:[#allocation3 + $0x2e8] sm:$0xff] %vm1472, %v1439
        %1507 = vrot.lane.b32.xlu0 %v557, 24
        %v1508 = vpop.permute.xlu0 %1507
        %1509 = vrot.lane.b32.xlu0 %v558, 24
        %v1510 = vpop.permute.xlu0 %1509
        %1511 = vrot.lane.b32.xlu0 %v560, 24
        %v1512 = vpop.permute.xlu0 %1511
        %1513 = vrot.lane.b32.xlu0 %v561, 24
        %v1514 = vpop.permute.xlu0 %1513
        %1515 = vrot.lane.b32.xlu0 %v563, 24
        %v1516 = vpop.permute.xlu0 %1515
        %1517 = vrot.lane.b32.xlu0 %v564, 24
        %v1518 = vpop.permute.xlu0 %1517
        %1519 = vrot.lane.b32.xlu0 %v566, 24
        %v1520 = vpop.permute.xlu0 %1519
        %1521 = vrot.lane.b32.xlu0 %v567, 24
        %v1522 = vpop.permute.xlu0 %1521
        %1523 = vrot.lane.b32.xlu0 %v569, 24
        %v1524 = vpop.permute.xlu0 %1523
        %1525 = vrot.lane.b32.xlu0 %v570, 24
        %v1526 = vpop.permute.xlu0 %1525
        %1527 = vrot.lane.b32.xlu0 %v572, 24
        %v1528 = vpop.permute.xlu0 %1527
        %1529 = vrot.lane.b32.xlu0 %v573, 24
        %v1530 = vpop.permute.xlu0 %1529
        %1531 = vrot.lane.b32.xlu0 %v575, 24
        %v1532 = vpop.permute.xlu0 %1531
        %1533 = vrot.lane.b32.xlu0 %v576, 24
        %v1534 = vpop.permute.xlu0 %1533
        %1535 = vrot.lane.b32.xlu0 %v578, 24
        %v1536 = vpop.permute.xlu0 %1535
        %1537 = vrot.lane.b32.xlu0 %v579, 24
        %v1538 = vpop.permute.xlu0 %1537
        %1539 = vrot.lane.b32.xlu0 %v581, 24
        %v1540 = vpop.permute.xlu0 %1539
        %1541 = vrot.lane.b32.xlu0 %v582, 24
        %v1542 = vpop.permute.xlu0 %1541
        %1543 = vrot.lane.b32.xlu0 %v584, 24
        %v1544 = vpop.permute.xlu0 %1543
        %1545 = vrot.lane.b32.xlu0 %v585, 24
        %v1546 = vpop.permute.xlu0 %1545
        %1547 = vrot.lane.b32.xlu0 %v587, 24
        %v1548 = vpop.permute.xlu0 %1547
        %1549 = vrot.lane.b32.xlu0 %v588, 24
        %v1550 = vpop.permute.xlu0 %1549
        %1551 = vrot.lane.b32.xlu0 %v590, 24
        %v1552 = vpop.permute.xlu0 %1551
        %1553 = vrot.lane.b32.xlu0 %v591, 24
        %v1554 = vpop.permute.xlu0 %1553
        %1555 = vrot.lane.b32.xlu0 %v593, 24
        %v1556 = vpop.permute.xlu0 %1555
        %1557 = vrot.lane.b32.xlu0 %v594, 24
        %v1558 = vpop.permute.xlu0 %1557
        %1559 = vrot.lane.b32.xlu0 %v596, 24
        %v1560 = vpop.permute.xlu0 %1559
        %1561 = vrot.lane.b32.xlu0 %v597, 24
        %v1562 = vpop.permute.xlu0 %1561
        %1563 = vrot.lane.b32.xlu0 %v599, 24
        %v1564 = vpop.permute.xlu0 %1563
        %1565 = vrot.lane.b32.xlu0 %v600, 24
        %v1566 = vpop.permute.xlu0 %1565
        %1567 = vrot.lane.b32.xlu0 %v602, 24
        %v1568 = vpop.permute.xlu0 %1567
        %1569 = vrot.lane.b32.xlu0 %v603, 24
        %v1570 = vpop.permute.xlu0 %1569
        %vm1603 = vcmask 228544
        %1604 = vst.msk [vmem:[#allocation3] sm:$0xff] %vm1603, %v1508
        %1605 = vst.msk [vmem:[#allocation3 + $0x18] sm:$0xff] %vm1603, %v1510
        %1606 = vst.msk [vmem:[#allocation3 + $0x30] sm:$0xff] %vm1603, %v1512
        %1607 = vst.msk [vmem:[#allocation3 + $0x48] sm:$0xff] %vm1603, %v1514
        %1608 = vst.msk [vmem:[#allocation3 + $0x60] sm:$0xff] %vm1603, %v1516
        %1609 = vst.msk [vmem:[#allocation3 + $0x78] sm:$0xff] %vm1603, %v1518
        %1610 = vst.msk [vmem:[#allocation3 + $0x90] sm:$0xff] %vm1603, %v1520
        %1611 = vst.msk [vmem:[#allocation3 + $0xa8] sm:$0xff] %vm1603, %v1522
        %1612 = vst.msk [vmem:[#allocation3 + $0xc0] sm:$0xff] %vm1603, %v1524
        %1613 = vst.msk [vmem:[#allocation3 + $0xd8] sm:$0xff] %vm1603, %v1526
        %1614 = vst.msk [vmem:[#allocation3 + $0xf0] sm:$0xff] %vm1603, %v1528
        %1615 = vst.msk [vmem:[#allocation3 + $0x108] sm:$0xff] %vm1603, %v1530
        %1616 = vst.msk [vmem:[#allocation3 + $0x120] sm:$0xff] %vm1603, %v1532
        %1617 = vst.msk [vmem:[#allocation3 + $0x138] sm:$0xff] %vm1603, %v1534
        %1618 = vst.msk [vmem:[#allocation3 + $0x150] sm:$0xff] %vm1603, %v1536
        %1619 = vst.msk [vmem:[#allocation3 + $0x168] sm:$0xff] %vm1603, %v1538
        %1620 = vst.msk [vmem:[#allocation3 + $0x180] sm:$0xff] %vm1603, %v1540
        %1621 = vst.msk [vmem:[#allocation3 + $0x198] sm:$0xff] %vm1603, %v1542
        %1622 = vst.msk [vmem:[#allocation3 + $0x1b0] sm:$0xff] %vm1603, %v1544
        %1623 = vst.msk [vmem:[#allocation3 + $0x1c8] sm:$0xff] %vm1603, %v1546
        %1624 = vst.msk [vmem:[#allocation3 + $0x1e0] sm:$0xff] %vm1603, %v1548
        %1625 = vst.msk [vmem:[#allocation3 + $0x1f8] sm:$0xff] %vm1603, %v1550
        %1626 = vst.msk [vmem:[#allocation3 + $0x210] sm:$0xff] %vm1603, %v1552
        %1627 = vst.msk [vmem:[#allocation3 + $0x228] sm:$0xff] %vm1603, %v1554
        %1628 = vst.msk [vmem:[#allocation3 + $0x240] sm:$0xff] %vm1603, %v1556
        %1629 = vst.msk [vmem:[#allocation3 + $0x258] sm:$0xff] %vm1603, %v1558
        %1630 = vst.msk [vmem:[#allocation3 + $0x270] sm:$0xff] %vm1603, %v1560
        %1631 = vst.msk [vmem:[#allocation3 + $0x288] sm:$0xff] %vm1603, %v1562
        %1632 = vst.msk [vmem:[#allocation3 + $0x2a0] sm:$0xff] %vm1603, %v1564
        %1633 = vst.msk [vmem:[#allocation3 + $0x2b8] sm:$0xff] %vm1603, %v1566
        %1634 = vst.msk [vmem:[#allocation3 + $0x2d0] sm:$0xff] %vm1603, %v1568
        %1635 = vst.msk [vmem:[#allocation3 + $0x2e8] sm:$0xff] %vm1603, %v1570
        %v1637 = vrot.slane %v602, 1
        %v1638 = vrot.slane %v603, 1
        %v1639 = vsel %vm685, %v1637, %v1638
        %v1640 = vrot.slane %v604, 1
        %v1641 = vsel %vm685, %v1638, %v1640
        %1642 = vrot.lane.b32.xlu0 %v698, 28
        %v1643 = vpop.permute.xlu0 %1642
        %1644 = vrot.lane.b32.xlu0 %v700, 28
        %v1645 = vpop.permute.xlu0 %1644
        %1646 = vrot.lane.b32.xlu0 %v703, 28
        %v1647 = vpop.permute.xlu0 %1646
        %1648 = vrot.lane.b32.xlu0 %v705, 28
        %v1649 = vpop.permute.xlu0 %1648
        %1650 = vrot.lane.b32.xlu0 %v708, 28
        %v1651 = vpop.permute.xlu0 %1650
        %1652 = vrot.lane.b32.xlu0 %v710, 28
        %v1653 = vpop.permute.xlu0 %1652
        %1654 = vrot.lane.b32.xlu0 %v713, 28
        %v1655 = vpop.permute.xlu0 %1654
        %1656 = vrot.lane.b32.xlu0 %v715, 28
        %v1657 = vpop.permute.xlu0 %1656
        %1658 = vrot.lane.b32.xlu0 %v718, 28
        %v1659 = vpop.permute.xlu0 %1658
        %1660 = vrot.lane.b32.xlu0 %v720, 28
        %v1661 = vpop.permute.xlu0 %1660
        %1662 = vrot.lane.b32.xlu0 %v723, 28
        %v1663 = vpop.permute.xlu0 %1662
        %1664 = vrot.lane.b32.xlu0 %v725, 28
        %v1665 = vpop.permute.xlu0 %1664
        %1666 = vrot.lane.b32.xlu0 %v728, 28
        %v1667 = vpop.permute.xlu0 %1666
        %1668 = vrot.lane.b32.xlu0 %v730, 28
        %v1669 = vpop.permute.xlu0 %1668
        %1670 = vrot.lane.b32.xlu0 %v733, 28
        %v1671 = vpop.permute.xlu0 %1670
        %1672 = vrot.lane.b32.xlu0 %v735, 28
        %v1673 = vpop.permute.xlu0 %1672
        %1674 = vrot.lane.b32.xlu0 %v738, 28
        %v1675 = vpop.permute.xlu0 %1674
        %1676 = vrot.lane.b32.xlu0 %v740, 28
        %v1677 = vpop.permute.xlu0 %1676
        %1678 = vrot.lane.b32.xlu0 %v743, 28
        %v1679 = vpop.permute.xlu0 %1678
        %1680 = vrot.lane.b32.xlu0 %v745, 28
        %v1681 = vpop.permute.xlu0 %1680
        %1682 = vrot.lane.b32.xlu0 %v748, 28
        %v1683 = vpop.permute.xlu0 %1682
        %1684 = vrot.lane.b32.xlu0 %v750, 28
        %v1685 = vpop.permute.xlu0 %1684
        %1686 = vrot.lane.b32.xlu0 %v753, 28
        %v1687 = vpop.permute.xlu0 %1686
        %1688 = vrot.lane.b32.xlu0 %v755, 28
        %v1689 = vpop.permute.xlu0 %1688
        %1690 = vrot.lane.b32.xlu0 %v758, 28
        %v1691 = vpop.permute.xlu0 %1690
        %1692 = vrot.lane.b32.xlu0 %v760, 28
        %v1693 = vpop.permute.xlu0 %1692
        %1694 = vrot.lane.b32.xlu0 %v763, 28
        %v1695 = vpop.permute.xlu0 %1694
        %1696 = vrot.lane.b32.xlu0 %v765, 28
        %v1697 = vpop.permute.xlu0 %1696
        %1698 = vrot.lane.b32.xlu0 %v1239, 28
        %v1699 = vpop.permute.xlu0 %1698
        %1700 = vrot.lane.b32.xlu0 %v1241, 28
        %v1701 = vpop.permute.xlu0 %1700
        %1702 = vrot.lane.b32.xlu0 %v1639, 28
        %v1703 = vpop.permute.xlu0 %1702
        %1704 = vrot.lane.b32.xlu0 %v1641, 28
        %v1705 = vpop.permute.xlu0 %1704
        %vm1738 = vcmask 261344
        %1739 = vst.msk [vmem:[#allocation3] sm:$0xff] %vm1738, %v1643
        %1740 = vst.msk [vmem:[#allocation3 + $0x18] sm:$0xff] %vm1738, %v1645
        %1741 = vst.msk [vmem:[#allocation3 + $0x30] sm:$0xff] %vm1738, %v1647
        %1742 = vst.msk [vmem:[#allocation3 + $0x48] sm:$0xff] %vm1738, %v1649
        %1743 = vst.msk [vmem:[#allocation3 + $0x60] sm:$0xff] %vm1738, %v1651
        %1744 = vst.msk [vmem:[#allocation3 + $0x78] sm:$0xff] %vm1738, %v1653
        %1745 = vst.msk [vmem:[#allocation3 + $0x90] sm:$0xff] %vm1738, %v1655
        %1746 = vst.msk [vmem:[#allocation3 + $0xa8] sm:$0xff] %vm1738, %v1657
        %1747 = vst.msk [vmem:[#allocation3 + $0xc0] sm:$0xff] %vm1738, %v1659
        %1748 = vst.msk [vmem:[#allocation3 + $0xd8] sm:$0xff] %vm1738, %v1661
        %1749 = vst.msk [vmem:[#allocation3 + $0xf0] sm:$0xff] %vm1738, %v1663
        %1750 = vst.msk [vmem:[#allocation3 + $0x108] sm:$0xff] %vm1738, %v1665
        %1751 = vst.msk [vmem:[#allocation3 + $0x120] sm:$0xff] %vm1738, %v1667
        %1752 = vst.msk [vmem:[#allocation3 + $0x138] sm:$0xff] %vm1738, %v1669
        %1753 = vst.msk [vmem:[#allocation3 + $0x150] sm:$0xff] %vm1738, %v1671
        %1754 = vst.msk [vmem:[#allocation3 + $0x168] sm:$0xff] %vm1738, %v1673
        %1755 = vst.msk [vmem:[#allocation3 + $0x180] sm:$0xff] %vm1738, %v1675
        %1756 = vst.msk [vmem:[#allocation3 + $0x198] sm:$0xff] %vm1738, %v1677
        %1757 = vst.msk [vmem:[#allocation3 + $0x1b0] sm:$0xff] %vm1738, %v1679
        %1758 = vst.msk [vmem:[#allocation3 + $0x1c8] sm:$0xff] %vm1738, %v1681
        %1759 = vst.msk [vmem:[#allocation3 + $0x1e0] sm:$0xff] %vm1738, %v1683
        %1760 = vst.msk [vmem:[#allocation3 + $0x1f8] sm:$0xff] %vm1738, %v1685
        %1761 = vst.msk [vmem:[#allocation3 + $0x210] sm:$0xff] %vm1738, %v1687
        %1762 = vst.msk [vmem:[#allocation3 + $0x228] sm:$0xff] %vm1738, %v1689
        %1763 = vst.msk [vmem:[#allocation3 + $0x240] sm:$0xff] %vm1738, %v1691
        %1764 = vst.msk [vmem:[#allocation3 + $0x258] sm:$0xff] %vm1738, %v1693
        %1765 = vst.msk [vmem:[#allocation3 + $0x270] sm:$0xff] %vm1738, %v1695
        %1766 = vst.msk [vmem:[#allocation3 + $0x288] sm:$0xff] %vm1738, %v1697
        %1767 = vst.msk [vmem:[#allocation3 + $0x2a0] sm:$0xff] %vm1738, %v1699
        %1768 = vst.msk [vmem:[#allocation3 + $0x2b8] sm:$0xff] %vm1738, %v1701
        %1769 = vst.msk [vmem:[#allocation3 + $0x2d0] sm:$0xff] %vm1738, %v1703
        %1770 = vst.msk [vmem:[#allocation3 + $0x2e8] sm:$0xff] %vm1738, %v1705
        %v1771 = vrot.slane %v602, 2
        %v1772 = vrot.slane %v603, 2
        %v1773 = vsel %vm895, %v1771, %v1772
        %v1774 = vrot.slane %v604, 2
        %v1775 = vsel %vm895, %v1772, %v1774
        %1776 = vrot.lane.b32.xlu0 %v908, 32
        %v1777 = vpop.permute.xlu0 %1776
        %1778 = vrot.lane.b32.xlu0 %v910, 32
        %v1779 = vpop.permute.xlu0 %1778
        %1780 = vrot.lane.b32.xlu0 %v913, 32
        %v1781 = vpop.permute.xlu0 %1780
        %1782 = vrot.lane.b32.xlu0 %v915, 32
        %v1783 = vpop.permute.xlu0 %1782
        %1784 = vrot.lane.b32.xlu0 %v918, 32
        %v1785 = vpop.permute.xlu0 %1784
        %1786 = vrot.lane.b32.xlu0 %v920, 32
        %v1787 = vpop.permute.xlu0 %1786
        %1788 = vrot.lane.b32.xlu0 %v923, 32
        %v1789 = vpop.permute.xlu0 %1788
        %1790 = vrot.lane.b32.xlu0 %v925, 32
        %v1791 = vpop.permute.xlu0 %1790
        %1792 = vrot.lane.b32.xlu0 %v928, 32
        %v1793 = vpop.permute.xlu0 %1792
        %1794 = vrot.lane.b32.xlu0 %v930, 32
        %v1795 = vpop.permute.xlu0 %1794
        %1796 = vrot.lane.b32.xlu0 %v933, 32
        %v1797 = vpop.permute.xlu0 %1796
        %1798 = vrot.lane.b32.xlu0 %v935, 32
        %v1799 = vpop.permute.xlu0 %1798
        %1800 = vrot.lane.b32.xlu0 %v938, 32
        %v1801 = vpop.permute.xlu0 %1800
        %1802 = vrot.lane.b32.xlu0 %v940, 32
        %v1803 = vpop.permute.xlu0 %1802
        %1804 = vrot.lane.b32.xlu0 %v943, 32
        %v1805 = vpop.permute.xlu0 %1804
        %1806 = vrot.lane.b32.xlu0 %v945, 32
        %v1807 = vpop.permute.xlu0 %1806
        %1808 = vrot.lane.b32.xlu0 %v948, 32
        %v1809 = vpop.permute.xlu0 %1808
        %1810 = vrot.lane.b32.xlu0 %v950, 32
        %v1811 = vpop.permute.xlu0 %1810
        %1812 = vrot.lane.b32.xlu0 %v953, 32
        %v1813 = vpop.permute.xlu0 %1812
        %1814 = vrot.lane.b32.xlu0 %v955, 32
        %v1815 = vpop.permute.xlu0 %1814
        %1816 = vrot.lane.b32.xlu0 %v958, 32
        %v1817 = vpop.permute.xlu0 %1816
        %1818 = vrot.lane.b32.xlu0 %v960, 32
        %v1819 = vpop.permute.xlu0 %1818
        %1820 = vrot.lane.b32.xlu0 %v963, 32
        %v1821 = vpop.permute.xlu0 %1820
        %1822 = vrot.lane.b32.xlu0 %v965, 32
        %v1823 = vpop.permute.xlu0 %1822
        %1824 = vrot.lane.b32.xlu0 %v968, 32
        %v1825 = vpop.permute.xlu0 %1824
        %1826 = vrot.lane.b32.xlu0 %v970, 32
        %v1827 = vpop.permute.xlu0 %1826
        %1828 = vrot.lane.b32.xlu0 %v973, 32
        %v1829 = vpop.permute.xlu0 %1828
        %1830 = vrot.lane.b32.xlu0 %v975, 32
        %v1831 = vpop.permute.xlu0 %1830
        %1832 = vrot.lane.b32.xlu0 %v1373, 32
        %v1833 = vpop.permute.xlu0 %1832
        %1834 = vrot.lane.b32.xlu0 %v1375, 32
        %v1835 = vpop.permute.xlu0 %1834
        %1836 = vrot.lane.b32.xlu0 %v1773, 32
        %v1837 = vpop.permute.xlu0 %1836
        %1838 = vrot.lane.b32.xlu0 %v1775, 32
        %v1839 = vpop.permute.xlu0 %1838
        %vm1872 = vcmask 294144
        %1873 = vst.msk [vmem:[#allocation3] sm:$0xff] %vm1872, %v1777
        %1874 = vst.msk [vmem:[#allocation3 + $0x18] sm:$0xff] %vm1872, %v1779
        %1875 = vst.msk [vmem:[#allocation3 + $0x30] sm:$0xff] %vm1872, %v1781
        %1876 = vst.msk [vmem:[#allocation3 + $0x48] sm:$0xff] %vm1872, %v1783
        %1877 = vst.msk [vmem:[#allocation3 + $0x60] sm:$0xff] %vm1872, %v1785
        %1878 = vst.msk [vmem:[#allocation3 + $0x78] sm:$0xff] %vm1872, %v1787
        %1879 = vst.msk [vmem:[#allocation3 + $0x90] sm:$0xff] %vm1872, %v1789
        %1880 = vst.msk [vmem:[#allocation3 + $0xa8] sm:$0xff] %vm1872, %v1791
        %1881 = vst.msk [vmem:[#allocation3 + $0xc0] sm:$0xff] %vm1872, %v1793
        %1882 = vst.msk [vmem:[#allocation3 + $0xd8] sm:$0xff] %vm1872, %v1795
        %1883 = vst.msk [vmem:[#allocation3 + $0xf0] sm:$0xff] %vm1872, %v1797
        %1884 = vst.msk [vmem:[#allocation3 + $0x108] sm:$0xff] %vm1872, %v1799
        %1885 = vst.msk [vmem:[#allocation3 + $0x120] sm:$0xff] %vm1872, %v1801
        %1886 = vst.msk [vmem:[#allocation3 + $0x138] sm:$0xff] %vm1872, %v1803
        %1887 = vst.msk [vmem:[#allocation3 + $0x150] sm:$0xff] %vm1872, %v1805
        %1888 = vst.msk [vmem:[#allocation3 + $0x168] sm:$0xff] %vm1872, %v1807
        %1889 = vst.msk [vmem:[#allocation3 + $0x180] sm:$0xff] %vm1872, %v1809
        %1890 = vst.msk [vmem:[#allocation3 + $0x198] sm:$0xff] %vm1872, %v1811
        %1891 = vst.msk [vmem:[#allocation3 + $0x1b0] sm:$0xff] %vm1872, %v1813
        %1892 = vst.msk [vmem:[#allocation3 + $0x1c8] sm:$0xff] %vm1872, %v1815
        %1893 = vst.msk [vmem:[#allocation3 + $0x1e0] sm:$0xff] %vm1872, %v1817
        %1894 = vst.msk [vmem:[#allocation3 + $0x1f8] sm:$0xff] %vm1872, %v1819
        %1895 = vst.msk [vmem:[#allocation3 + $0x210] sm:$0xff] %vm1872, %v1821
        %1896 = vst.msk [vmem:[#allocation3 + $0x228] sm:$0xff] %vm1872, %v1823
        %1897 = vst.msk [vmem:[#allocation3 + $0x240] sm:$0xff] %vm1872, %v1825
        %1898 = vst.msk [vmem:[#allocation3 + $0x258] sm:$0xff] %vm1872, %v1827
        %1899 = vst.msk [vmem:[#allocation3 + $0x270] sm:$0xff] %vm1872, %v1829
        %1900 = vst.msk [vmem:[#allocation3 + $0x288] sm:$0xff] %vm1872, %v1831
        %1901 = vst.msk [vmem:[#allocation3 + $0x2a0] sm:$0xff] %vm1872, %v1833
        %1902 = vst.msk [vmem:[#allocation3 + $0x2b8] sm:$0xff] %vm1872, %v1835
        %1903 = vst.msk [vmem:[#allocation3 + $0x2d0] sm:$0xff] %vm1872, %v1837
        %1904 = vst.msk [vmem:[#allocation3 + $0x2e8] sm:$0xff] %vm1872, %v1839
        %v1905 = vld [vmem:[#allocation3] sm:$0xff]
        %v1906 = vld [vmem:[#allocation3 + $0x18] sm:$0xff]
        %v1907 = vld [vmem:[#allocation3 + $0x30] sm:$0xff]
        %v1908 = vld [vmem:[#allocation3 + $0x48] sm:$0xff]
        %v1909 = vld [vmem:[#allocation3 + $0x60] sm:$0xff]
        %v1910 = vld [vmem:[#allocation3 + $0x78] sm:$0xff]
        %v1911 = vld [vmem:[#allocation3 + $0x90] sm:$0xff]
        %v1912 = vld [vmem:[#allocation3 + $0xa8] sm:$0xff]
        %v1913 = vld [vmem:[#allocation3 + $0xc0] sm:$0xff]
        %v1914 = vld [vmem:[#allocation3 + $0xd8] sm:$0xff]
        %v1915 = vld [vmem:[#allocation3 + $0xf0] sm:$0xff]
        %v1916 = vld [vmem:[#allocation3 + $0x108] sm:$0xff]
        %v1917 = vld [vmem:[#allocation3 + $0x120] sm:$0xff]
        %v1918 = vld [vmem:[#allocation3 + $0x138] sm:$0xff]
        %v1919 = vld [vmem:[#allocation3 + $0x150] sm:$0xff]
        %v1920 = vld [vmem:[#allocation3 + $0x168] sm:$0xff]
        %v1921 = vld [vmem:[#allocation3 + $0x180] sm:$0xff]
        %v1922 = vld [vmem:[#allocation3 + $0x198] sm:$0xff]
        %v1923 = vld [vmem:[#allocation3 + $0x1b0] sm:$0xff]
        %v1924 = vld [vmem:[#allocation3 + $0x1c8] sm:$0xff]
        %v1925 = vld [vmem:[#allocation3 + $0x1e0] sm:$0xff]
        %v1926 = vld [vmem:[#allocation3 + $0x1f8] sm:$0xff]
        %v1927 = vld [vmem:[#allocation3 + $0x210] sm:$0xff]
        %v1928 = vld [vmem:[#allocation3 + $0x228] sm:$0xff]
        %v1929 = vld [vmem:[#allocation3 + $0x240] sm:$0xff]
        %v1930 = vld [vmem:[#allocation3 + $0x258] sm:$0xff]
        %v1931 = vld [vmem:[#allocation3 + $0x270] sm:$0xff]
        %v1932 = vld [vmem:[#allocation3 + $0x288] sm:$0xff]
        %v1933 = vld [vmem:[#allocation3 + $0x2a0] sm:$0xff]
        %v1934 = vld [vmem:[#allocation3 + $0x2b8] sm:$0xff]
        %v1935 = vld [vmem:[#allocation3 + $0x2d0] sm:$0xff]
        %v1936 = vld [vmem:[#allocation3 + $0x2e8] sm:$0xff]
        %v1937 = vld [vmem:[%s1] sm:$0xff]
        %v1938 = vld [vmem:[%s1 + $0x8] sm:$0xff]
        %v1939 = vld [vmem:[%s1 + $0x10] sm:$0xff]
        %v1940 = vld [vmem:[%s1 + $0x18] sm:$0xff]
        %v1941 = vld [vmem:[%s1 + $0x20] sm:$0xf]
        %vm1942 = vcmask 293888
        %v1944 = vsel %vm1942, %v1905, 0
        %v1947 = vsel %vm1942, %v1906, 0
        %v1950 = vsel %vm1942, %v1907, 0
        %v1953 = vsel %vm1942, %v1908, 0
        %v1956 = vsel %vm1942, %v1909, 0
        %v1959 = vsel %vm1942, %v1910, 0
        %v1962 = vsel %vm1942, %v1911, 0
        %v1965 = vsel %vm1942, %v1912, 0
        %v1968 = vsel %vm1942, %v1913, 0
        %v1971 = vsel %vm1942, %v1914, 0
        %v1974 = vsel %vm1942, %v1915, 0
        %v1977 = vsel %vm1942, %v1916, 0
        %v1980 = vsel %vm1942, %v1917, 0
        %v1983 = vsel %vm1942, %v1918, 0
        %v1986 = vsel %vm1942, %v1919, 0
        %v1989 = vsel %vm1942, %v1920, 0
        %v1992 = vsel %vm1942, %v1921, 0
        %v1995 = vsel %vm1942, %v1922, 0
        %v1998 = vsel %vm1942, %v1923, 0
        %v2001 = vsel %vm1942, %v1924, 0
        %v2004 = vsel %vm1942, %v1925, 0
        %v2007 = vsel %vm1942, %v1926, 0
        %v2010 = vsel %vm1942, %v1927, 0
        %v2013 = vsel %vm1942, %v1928, 0
        %v2016 = vsel %vm1942, %v1929, 0
        %v2019 = vsel %vm1942, %v1930, 0
        %v2022 = vsel %vm1942, %v1931, 0
        %v2025 = vsel %vm1942, %v1932, 0
        %v2028 = vsel %vm1942, %v1933, 0
        %v2031 = vsel %vm1942, %v1934, 0
        %v2034 = vsel %vm1942, %v1935, 0
        %v2037 = vsel %vm1942, %v1936, 0
        %vm2039 = vcmask 1043456
        %v2041 = vsel %vm2039, %v1941, 0
        %2043 = vmatprep.subr.mxu0 0.0
        %2044 = vmatpush1.msra.mxu0 %v1937
        %2045 = vmatprep.subr.mxu0 0.0
        %2046 = vmatpush1.msra.mxu0 %v1938
        %2047 = vmatprep.subr.mxu0 0.0
        %2048 = vmatpush1.msra.mxu0 %v1939
        %2049 = vmatprep.subr.mxu0 0.0
        %2050 = vmatpush1.msra.mxu0 %v1940
        %2051 = vmatprep.subr.mxu0 0.0
        %2052 = vmatpush1.msra.mxu0 %v2041
        %2053 = vmatprep.subr.mxu0 0.0
        %2054 = vmatpush1.msra.mxu0 0.0
        %2055 = vmatprep.subr.mxu0 0.0
        %2056 = vmatpush1.msra.mxu0 0.0
        %2057 = vmatprep.subr.mxu0 0.0
        %2058 = vmatpush1.msra.mxu0 0.0
        %2059 = vmatprep.subr.mxu0 0.0
        %2060 = vmatpush1.msra.mxu0 0.0
        %2061 = vmatprep.subr.mxu0 0.0
        %2062 = vmatpush1.msra.mxu0 0.0
        %2063 = vmatprep.subr.mxu0 0.0
        %2064 = vmatpush1.msra.mxu0 0.0
        %2065 = vmatprep.subr.mxu0 0.0
        %2066 = vmatpush1.msra.mxu0 0.0
        %2067 = vmatprep.subr.mxu0 0.0
        %2068 = vmatpush1.msra.mxu0 0.0
        %2069 = vmatprep.subr.mxu0 0.0
        %2070 = vmatpush1.msra.mxu0 0.0
        %2071 = vmatprep.subr.mxu0 0.0
        %2072 = vmatpush1.msra.mxu0 0.0
        %2073 = vmatprep.subr.mxu0 0.0
        %2074 = vmatpush1.msra.mxu0 0.0
        %2075 = vmatprep.subr.mxu0 0.0
        %2076 = vmatpush1.msra.mxu0 0.0
        %2077 = vmatprep.subr.mxu0 0.0
        %2078 = vmatpush1.msra.mxu0 0.0
        %2079 = vmatprep.subr.mxu0 0.0
        %2080 = vmatpush1.msra.mxu0 0.0
        %2081 = vmatprep.subr.mxu0 0.0
        %2082 = vmatpush1.msra.mxu0 0.0
        %2083 = vmatprep.subr.mxu0 0.0
        %2084 = vmatpush1.msra.mxu0 0.0
        %2085 = vmatprep.subr.mxu0 0.0
        %2086 = vmatpush1.msra.mxu0 0.0
        %2087 = vmatprep.subr.mxu0 0.0
        %2088 = vmatpush1.msra.mxu0 0.0
        %2089 = vmatprep.subr.mxu0 0.0
        %2090 = vmatpush1.msra.mxu0 0.0
        %2091 = vmatprep.subr.mxu0 0.0
        %2092 = vmatpush1.msra.mxu0 0.0
        %2093 = vmatprep.subr.mxu0 0.0
        %2094 = vmatpush1.msra.mxu0 0.0
        %2095 = vmatprep.subr.mxu0 0.0
        %2096 = vmatpush1.msra.mxu0 0.0
        %2097 = vmatprep.subr.mxu0 0.0
        %2098 = vmatpush1.msra.mxu0 0.0
        %2099 = vmatprep.subr.mxu0 0.0
        %2100 = vmatpush1.msra.mxu0 0.0
        %2101 = vmatprep.subr.mxu0 0.0
        %2102 = vmatpush1.msra.mxu0 0.0
        %2103 = vmatprep.subr.mxu0 0.0
        %2104 = vmatpush1.msra.mxu0 0.0
        %2105 = vmatprep.subr.mxu0 0.0
        %2106 = vmatpush1.msra.mxu0 0.0
        %2107 = vmatprep.mubr.f32.mxu0 0.0
        %2108 = vmatmul.mubr.f32.gmra.mrb[0].mxu0 %v1944
        %v2109 = vpop.f32.mrb[0].mxu0
        %v2110 = vadd.f32 0.0, %v2109
        %v2111 = vpop.f32.mrb[0].mxu0
        %2112 = vmatprep.mubr.f32.mxu0 0.0
        %2113 = vmatmul.mubr.f32.gmra.mrb[0].mxu0 %v1947
        %v2114 = vpop.f32.mrb[0].mxu0
        %v2115 = vadd.f32 0.0, %v2114
        %v2116 = vpop.f32.mrb[0].mxu0
        %2117 = vmatprep.mubr.f32.mxu0 0.0
        %2118 = vmatmul.mubr.f32.gmra.mrb[0].mxu0 %v1950
        %v2119 = vpop.f32.mrb[0].mxu0
        %v2120 = vadd.f32 0.0, %v2119
        %v2121 = vpop.f32.mrb[0].mxu0
        %2122 = vmatprep.mubr.f32.mxu0 0.0
        %2123 = vmatmul.mubr.f32.gmra.mrb[0].mxu0 %v1953
        %v2124 = vpop.f32.mrb[0].mxu0
        %v2125 = vadd.f32 0.0, %v2124
        %v2126 = vpop.f32.mrb[0].mxu0
        %2127 = vmatprep.mubr.f32.mxu0 0.0
        %2128 = vmatmul.mubr.f32.gmra.mrb[0].mxu0 %v1956
        %v2129 = vpop.f32.mrb[0].mxu0
        %v2130 = vadd.f32 0.0, %v2129
        %v2131 = vpop.f32.mrb[0].mxu0
        %2132 = vmatprep.mubr.f32.mxu0 0.0
        %2133 = vmatmul.mubr.f32.gmra.mrb[0].mxu0 %v1959
        %v2134 = vpop.f32.mrb[0].mxu0
        %v2135 = vadd.f32 0.0, %v2134
        %v2136 = vpop.f32.mrb[0].mxu0
        %2137 = vmatprep.mubr.f32.mxu0 0.0
        %2138 = vmatmul.mubr.f32.gmra.mrb[0].mxu0 %v1962
        %v2139 = vpop.f32.mrb[0].mxu0
        %v2140 = vadd.f32 0.0, %v2139
        %v2141 = vpop.f32.mrb[0].mxu0
        %2142 = vmatprep.mubr.f32.mxu0 0.0
        %2143 = vmatmul.mubr.f32.gmra.mrb[0].mxu0 %v1965
        %v2144 = vpop.f32.mrb[0].mxu0
        %v2145 = vadd.f32 0.0, %v2144
        %v2146 = vpop.f32.mrb[0].mxu0
        %2147 = vmatprep.mubr.f32.mxu0 0.0
        %2148 = vmatmul.mubr.f32.gmra.mrb[0].mxu0 %v1968
        %v2149 = vpop.f32.mrb[0].mxu0
        %v2150 = vadd.f32 0.0, %v2149
        %v2151 = vpop.f32.mrb[0].mxu0
        %2152 = vmatprep.mubr.f32.mxu0 0.0
        %2153 = vmatmul.mubr.f32.gmra.mrb[0].mxu0 %v1971
        %v2154 = vpop.f32.mrb[0].mxu0
        %v2155 = vadd.f32 0.0, %v2154
        %v2156 = vpop.f32.mrb[0].mxu0
        %2157 = vmatprep.mubr.f32.mxu0 0.0
        %2158 = vmatmul.mubr.f32.gmra.mrb[0].mxu0 %v1974
        %v2159 = vpop.f32.mrb[0].mxu0
        %v2160 = vadd.f32 0.0, %v2159
        %v2161 = vpop.f32.mrb[0].mxu0
        %2162 = vmatprep.mubr.f32.mxu0 0.0
        %2163 = vmatmul.mubr.f32.gmra.mrb[0].mxu0 %v1977
        %v2164 = vpop.f32.mrb[0].mxu0
        %v2165 = vadd.f32 0.0, %v2164
        %v2166 = vpop.f32.mrb[0].mxu0
        %2167 = vmatprep.mubr.f32.mxu0 0.0
        %2168 = vmatmul.mubr.f32.gmra.mrb[0].mxu0 %v1980
        %v2169 = vpop.f32.mrb[0].mxu0
        %v2170 = vadd.f32 0.0, %v2169
        %v2171 = vpop.f32.mrb[0].mxu0
        %2172 = vmatprep.mubr.f32.mxu0 0.0
        %2173 = vmatmul.mubr.f32.gmra.mrb[0].mxu0 %v1983
        %v2174 = vpop.f32.mrb[0].mxu0
        %v2175 = vadd.f32 0.0, %v2174
        %v2176 = vpop.f32.mrb[0].mxu0
        %2177 = vmatprep.mubr.f32.mxu0 0.0
        %2178 = vmatmul.mubr.f32.gmra.mrb[0].mxu0 %v1986
        %v2179 = vpop.f32.mrb[0].mxu0
        %v2180 = vadd.f32 0.0, %v2179
        %v2181 = vpop.f32.mrb[0].mxu0
        %2182 = vmatprep.mubr.f32.mxu0 0.0
        %2183 = vmatmul.mubr.f32.gmra.mrb[0].mxu0 %v1989
        %v2184 = vpop.f32.mrb[0].mxu0
        %v2185 = vadd.f32 0.0, %v2184
        %v2186 = vpop.f32.mrb[0].mxu0
        %2187 = vmatprep.mubr.f32.mxu0 0.0
        %2188 = vmatmul.mubr.f32.gmra.mrb[0].mxu0 %v1992
        %v2189 = vpop.f32.mrb[0].mxu0
        %v2190 = vadd.f32 0.0, %v2189
        %v2191 = vpop.f32.mrb[0].mxu0
        %2192 = vmatprep.mubr.f32.mxu0 0.0
        %2193 = vmatmul.mubr.f32.gmra.mrb[0].mxu0 %v1995
        %v2194 = vpop.f32.mrb[0].mxu0
        %v2195 = vadd.f32 0.0, %v2194
        %v2196 = vpop.f32.mrb[0].mxu0
        %2197 = vmatprep.mubr.f32.mxu0 0.0
        %2198 = vmatmul.mubr.f32.gmra.mrb[0].mxu0 %v1998
        %v2199 = vpop.f32.mrb[0].mxu0
        %v2200 = vadd.f32 0.0, %v2199
        %v2201 = vpop.f32.mrb[0].mxu0
        %2202 = vmatprep.mubr.f32.mxu0 0.0
        %2203 = vmatmul.mubr.f32.gmra.mrb[0].mxu0 %v2001
        %v2204 = vpop.f32.mrb[0].mxu0
        %v2205 = vadd.f32 0.0, %v2204
        %v2206 = vpop.f32.mrb[0].mxu0
        %2207 = vmatprep.mubr.f32.mxu0 0.0
        %2208 = vmatmul.mubr.f32.gmra.mrb[0].mxu0 %v2004
        %v2209 = vpop.f32.mrb[0].mxu0
        %v2210 = vadd.f32 0.0, %v2209
        %v2211 = vpop.f32.mrb[0].mxu0
        %2212 = vmatprep.mubr.f32.mxu0 0.0
        %2213 = vmatmul.mubr.f32.gmra.mrb[0].mxu0 %v2007
        %v2214 = vpop.f32.mrb[0].mxu0
        %v2215 = vadd.f32 0.0, %v2214
        %v2216 = vpop.f32.mrb[0].mxu0
        %2217 = vmatprep.mubr.f32.mxu0 0.0
        %2218 = vmatmul.mubr.f32.gmra.mrb[0].mxu0 %v2010
        %v2219 = vpop.f32.mrb[0].mxu0
        %v2220 = vadd.f32 0.0, %v2219
        %v2221 = vpop.f32.mrb[0].mxu0
        %2222 = vmatprep.mubr.f32.mxu0 0.0
        %2223 = vmatmul.mubr.f32.gmra.mrb[0].mxu0 %v2013
        %v2224 = vpop.f32.mrb[0].mxu0
        %v2225 = vadd.f32 0.0, %v2224
        %v2226 = vpop.f32.mrb[0].mxu0
        %2227 = vmatprep.mubr.f32.mxu0 0.0
        %2228 = vmatmul.mubr.f32.gmra.mrb[0].mxu0 %v2016
        %v2229 = vpop.f32.mrb[0].mxu0
        %v2230 = vadd.f32 0.0, %v2229
        %v2231 = vpop.f32.mrb[0].mxu0
        %2232 = vmatprep.mubr.f32.mxu0 0.0
        %2233 = vmatmul.mubr.f32.gmra.mrb[0].mxu0 %v2019
        %v2234 = vpop.f32.mrb[0].mxu0
        %v2235 = vadd.f32 0.0, %v2234
        %v2236 = vpop.f32.mrb[0].mxu0
        %2237 = vmatprep.mubr.f32.mxu0 0.0
        %2238 = vmatmul.mubr.f32.gmra.mrb[0].mxu0 %v2022
        %v2239 = vpop.f32.mrb[0].mxu0
        %v2240 = vadd.f32 0.0, %v2239
        %v2241 = vpop.f32.mrb[0].mxu0
        %2242 = vmatprep.mubr.f32.mxu0 0.0
        %2243 = vmatmul.mubr.f32.gmra.mrb[0].mxu0 %v2025
        %v2244 = vpop.f32.mrb[0].mxu0
        %v2245 = vadd.f32 0.0, %v2244
        %v2246 = vpop.f32.mrb[0].mxu0
        %2247 = vmatprep.mubr.f32.mxu0 0.0
        %2248 = vmatmul.mubr.f32.gmra.mrb[0].mxu0 %v2028
        %v2249 = vpop.f32.mrb[0].mxu0
        %v2250 = vadd.f32 0.0, %v2249
        %v2251 = vpop.f32.mrb[0].mxu0
        %2252 = vmatprep.mubr.f32.mxu0 0.0
        %2253 = vmatmul.mubr.f32.gmra.mrb[0].mxu0 %v2031
        %v2254 = vpop.f32.mrb[0].mxu0
        %v2255 = vadd.f32 0.0, %v2254
        %v2256 = vpop.f32.mrb[0].mxu0
        %2257 = vmatprep.mubr.f32.mxu0 0.0
        %2258 = vmatmul.mubr.f32.gmra.mrb[0].mxu0 %v2034
        %v2259 = vpop.f32.mrb[0].mxu0
        %v2260 = vadd.f32 0.0, %v2259
        %v2261 = vpop.f32.mrb[0].mxu0
        %2262 = vmatprep.mubr.f32.mxu0 0.0
        %2263 = vmatmul.mubr.f32.gmra.mrb[0].mxu0 %v2037
        %v2264 = vpop.f32.mrb[0].mxu0
        %v2265 = vadd.f32 0.0, %v2264
        %v2266 = vpop.f32.mrb[0].mxu0
        %2267 = vdwg.mxu0
        %v2268 = vsel %vm429, %v2110, 0.0
        %v2269 = vsel %vm429, %v2115, 0.0
        %v2270 = vadd.f32 %v2268, %v2269
        %v2271 = vsel %vm429, %v2120, 0.0
        %v2272 = vadd.f32 %v2270, %v2271
        %v2273 = vsel %vm429, %v2125, 0.0
        %v2274 = vadd.f32 %v2272, %v2273
        %v2275 = vsel %vm429, %v2130, 0.0
        %v2276 = vadd.f32 %v2274, %v2275
        %v2277 = vsel %vm429, %v2135, 0.0
        %v2278 = vadd.f32 %v2276, %v2277
        %v2279 = vsel %vm429, %v2140, 0.0
        %v2280 = vadd.f32 %v2278, %v2279
        %v2281 = vsel %vm429, %v2145, 0.0
        %v2282 = vadd.f32 %v2280, %v2281
        %v2283 = vsel %vm429, %v2150, 0.0
        %v2284 = vadd.f32 %v2282, %v2283
        %v2285 = vsel %vm429, %v2155, 0.0
        %v2286 = vadd.f32 %v2284, %v2285
        %v2287 = vsel %vm429, %v2160, 0.0
        %v2288 = vadd.f32 %v2286, %v2287
        %v2289 = vsel %vm429, %v2165, 0.0
        %v2290 = vadd.f32 %v2288, %v2289
        %v2291 = vsel %vm429, %v2170, 0.0
        %v2292 = vadd.f32 %v2290, %v2291
        %v2293 = vsel %vm429, %v2175, 0.0
        %v2294 = vadd.f32 %v2292, %v2293
        %v2295 = vsel %vm429, %v2180, 0.0
        %v2296 = vadd.f32 %v2294, %v2295
        %v2297 = vsel %vm429, %v2185, 0.0
        %v2298 = vadd.f32 %v2296, %v2297
        %v2299 = vsel %vm429, %v2190, 0.0
        %v2300 = vadd.f32 %v2298, %v2299
        %v2301 = vsel %vm429, %v2195, 0.0
        %v2302 = vadd.f32 %v2300, %v2301
        %v2303 = vsel %vm429, %v2200, 0.0
        %v2304 = vadd.f32 %v2302, %v2303
        %v2305 = vsel %vm429, %v2205, 0.0
        %v2306 = vadd.f32 %v2304, %v2305
        %v2307 = vsel %vm429, %v2210, 0.0
        %v2308 = vadd.f32 %v2306, %v2307
        %v2309 = vsel %vm429, %v2215, 0.0
        %v2310 = vadd.f32 %v2308, %v2309
        %v2311 = vsel %vm429, %v2220, 0.0
        %v2312 = vadd.f32 %v2310, %v2311
        %v2313 = vsel %vm429, %v2225, 0.0
        %v2314 = vadd.f32 %v2312, %v2313
        %v2315 = vsel %vm429, %v2230, 0.0
        %v2316 = vadd.f32 %v2314, %v2315
        %v2317 = vsel %vm429, %v2235, 0.0
        %v2318 = vadd.f32 %v2316, %v2317
        %v2319 = vsel %vm429, %v2240, 0.0
        %v2320 = vadd.f32 %v2318, %v2319
        %v2321 = vsel %vm429, %v2245, 0.0
        %v2322 = vadd.f32 %v2320, %v2321
        %v2323 = vsel %vm429, %v2250, 0.0
        %v2324 = vadd.f32 %v2322, %v2323
        %v2325 = vsel %vm429, %v2255, 0.0
        %v2326 = vadd.f32 %v2324, %v2325
        %v2327 = vsel %vm429, %v2260, 0.0
        %v2328 = vadd.f32 %v2326, %v2327
        %v2329 = vsel %vm429, %v2265, 0.0
        %v2330 = vadd.f32 %v2328, %v2329
        %v2331 = vrot.slane %v2330, 4
        %v2332 = vadd.f32 %v2330, %v2331
        %v2333 = vrot.slane %v2332, 2
        %v2334 = vadd.f32 %v2332, %v2333
        %v2335 = vrot.slane %v2334, 1
        %v2336 = vadd.f32 %v2334, %v2335
        %v2337 = vmul.f32 %v2336, 0.00390625
        %v2338 = vmul.f32 %v2110, %v2110
        %v2339 = vmul.f32 %v2115, %v2115
        %v2340 = vmul.f32 %v2120, %v2120
        %v2341 = vmul.f32 %v2125, %v2125
        %v2342 = vmul.f32 %v2130, %v2130
        %v2343 = vmul.f32 %v2135, %v2135
        %v2344 = vmul.f32 %v2140, %v2140
        %v2345 = vmul.f32 %v2145, %v2145
        %v2346 = vmul.f32 %v2150, %v2150
        %v2347 = vmul.f32 %v2155, %v2155
        %v2348 = vmul.f32 %v2160, %v2160
        %v2349 = vmul.f32 %v2165, %v2165
        %v2350 = vmul.f32 %v2170, %v2170
        %v2351 = vmul.f32 %v2175, %v2175
        %v2352 = vmul.f32 %v2180, %v2180
        %v2353 = vmul.f32 %v2185, %v2185
        %v2354 = vmul.f32 %v2190, %v2190
        %v2355 = vmul.f32 %v2195, %v2195
        %v2356 = vmul.f32 %v2200, %v2200
        %v2357 = vmul.f32 %v2205, %v2205
        %v2358 = vmul.f32 %v2210, %v2210
        %v2359 = vmul.f32 %v2215, %v2215
        %v2360 = vmul.f32 %v2220, %v2220
        %v2361 = vmul.f32 %v2225, %v2225
        %v2362 = vmul.f32 %v2230, %v2230
        %v2363 = vmul.f32 %v2235, %v2235
        %v2364 = vmul.f32 %v2240, %v2240
        %v2365 = vmul.f32 %v2245, %v2245
        %v2366 = vmul.f32 %v2250, %v2250
        %v2367 = vmul.f32 %v2255, %v2255
        %v2368 = vmul.f32 %v2260, %v2260
        %v2369 = vmul.f32 %v2265, %v2265
        %v2370 = vsel %vm429, %v2338, 0.0
        %v2371 = vsel %vm429, %v2339, 0.0
        %v2372 = vadd.f32 %v2370, %v2371
        %v2373 = vsel %vm429, %v2340, 0.0
        %v2374 = vadd.f32 %v2372, %v2373
        %v2375 = vsel %vm429, %v2341, 0.0
        %v2376 = vadd.f32 %v2374, %v2375
        %v2377 = vsel %vm429, %v2342, 0.0
        %v2378 = vadd.f32 %v2376, %v2377
        %v2379 = vsel %vm429, %v2343, 0.0
        %v2380 = vadd.f32 %v2378, %v2379
        %v2381 = vsel %vm429, %v2344, 0.0
        %v2382 = vadd.f32 %v2380, %v2381
        %v2383 = vsel %vm429, %v2345, 0.0
        %v2384 = vadd.f32 %v2382, %v2383
        %v2385 = vsel %vm429, %v2346, 0.0
        %v2386 = vadd.f32 %v2384, %v2385
        %v2387 = vsel %vm429, %v2347, 0.0
        %v2388 = vadd.f32 %v2386, %v2387
        %v2389 = vsel %vm429, %v2348, 0.0
        %v2390 = vadd.f32 %v2388, %v2389
        %v2391 = vsel %vm429, %v2349, 0.0
        %v2392 = vadd.f32 %v2390, %v2391
        %v2393 = vsel %vm429, %v2350, 0.0
        %v2394 = vadd.f32 %v2392, %v2393
        %v2395 = vsel %vm429, %v2351, 0.0
        %v2396 = vadd.f32 %v2394, %v2395
        %v2397 = vsel %vm429, %v2352, 0.0
        %v2398 = vadd.f32 %v2396, %v2397
        %v2399 = vsel %vm429, %v2353, 0.0
        %v2400 = vadd.f32 %v2398, %v2399
        %v2401 = vsel %vm429, %v2354, 0.0
        %v2402 = vadd.f32 %v2400, %v2401
        %v2403 = vsel %vm429, %v2355, 0.0
        %v2404 = vadd.f32 %v2402, %v2403
        %v2405 = vsel %vm429, %v2356, 0.0
        %v2406 = vadd.f32 %v2404, %v2405
        %v2407 = vsel %vm429, %v2357, 0.0
        %v2408 = vadd.f32 %v2406, %v2407
        %v2409 = vsel %vm429, %v2358, 0.0
        %v2410 = vadd.f32 %v2408, %v2409
        %v2411 = vsel %vm429, %v2359, 0.0
        %v2412 = vadd.f32 %v2410, %v2411
        %v2413 = vsel %vm429, %v2360, 0.0
        %v2414 = vadd.f32 %v2412, %v2413
        %v2415 = vsel %vm429, %v2361, 0.0
        %v2416 = vadd.f32 %v2414, %v2415
        %v2417 = vsel %vm429, %v2362, 0.0
        %v2418 = vadd.f32 %v2416, %v2417
        %v2419 = vsel %vm429, %v2363, 0.0
        %v2420 = vadd.f32 %v2418, %v2419
        %v2421 = vsel %vm429, %v2364, 0.0
        %v2422 = vadd.f32 %v2420, %v2421
        %v2423 = vsel %vm429, %v2365, 0.0
        %v2424 = vadd.f32 %v2422, %v2423
        %v2425 = vsel %vm429, %v2366, 0.0
        %v2426 = vadd.f32 %v2424, %v2425
        %v2427 = vsel %vm429, %v2367, 0.0
        %v2428 = vadd.f32 %v2426, %v2427
        %v2429 = vsel %vm429, %v2368, 0.0
        %v2430 = vadd.f32 %v2428, %v2429
        %v2431 = vsel %vm429, %v2369, 0.0
        %v2432 = vadd.f32 %v2430, %v2431
        %v2433 = vrot.slane %v2432, 4
        %v2434 = vadd.f32 %v2432, %v2433
        %v2435 = vrot.slane %v2434, 2
        %v2436 = vadd.f32 %v2434, %v2435
        %v2437 = vrot.slane %v2436, 1
        %v2438 = vadd.f32 %v2436, %v2437
        %v2439 = vmul.f32 %v2438, 0.00390625
        %v2440 = vmul.f32 %v2337, %v2337
        %v2441 = vsub.f32 %v2439, %v2440
        %v2442 = vmax.f32 %v2441, 0.0
        %v2443 = vsub.f32 %v2110, %v2337
        %v2444 = vsub.f32 %v2115, %v2337
        %v2445 = vsub.f32 %v2120, %v2337
        %v2446 = vsub.f32 %v2125, %v2337
        %v2447 = vsub.f32 %v2130, %v2337
        %v2448 = vsub.f32 %v2135, %v2337
        %v2449 = vsub.f32 %v2140, %v2337
        %v2450 = vsub.f32 %v2145, %v2337
        %v2451 = vsub.f32 %v2150, %v2337
        %v2452 = vsub.f32 %v2155, %v2337
        %v2453 = vsub.f32 %v2160, %v2337
        %v2454 = vsub.f32 %v2165, %v2337
        %v2455 = vsub.f32 %v2170, %v2337
        %v2456 = vsub.f32 %v2175, %v2337
        %v2457 = vsub.f32 %v2180, %v2337
        %v2458 = vsub.f32 %v2185, %v2337
        %v2459 = vsub.f32 %v2190, %v2337
        %v2460 = vsub.f32 %v2195, %v2337
        %v2461 = vsub.f32 %v2200, %v2337
        %v2462 = vsub.f32 %v2205, %v2337
        %v2463 = vsub.f32 %v2210, %v2337
        %v2464 = vsub.f32 %v2215, %v2337
        %v2465 = vsub.f32 %v2220, %v2337
        %v2466 = vsub.f32 %v2225, %v2337
        %v2467 = vsub.f32 %v2230, %v2337
        %v2468 = vsub.f32 %v2235, %v2337
        %v2469 = vsub.f32 %v2240, %v2337
        %v2470 = vsub.f32 %v2245, %v2337
        %v2471 = vsub.f32 %v2250, %v2337
        %v2472 = vsub.f32 %v2255, %v2337
        %v2473 = vsub.f32 %v2260, %v2337
        %v2474 = vsub.f32 %v2265, %v2337
        %v2475 = vadd.f32 %v2442, 1e-05
        %v2476 = vrsqrt.pop %v2475
        %v2477 = vld [vmem:[%s2] sm:$0x1]
        %v2478 = vmul.f32 %v2476, %v2477
        %v2479 = vlaneseq
        %v2480 = vshrl.u32 %v2479, 7
        %v2481 = vsub.s32 0, %v2480
        %v2482 = vrot.slane %v2478, %v2481
        %v2483 = vmul.f32 %v2443, %v2482
        %v2484 = vmul.f32 %v2444, %v2482
        %v2485 = vmul.f32 %v2445, %v2482
        %v2486 = vmul.f32 %v2446, %v2482
        %v2487 = vmul.f32 %v2447, %v2482
        %v2488 = vmul.f32 %v2448, %v2482
        %v2489 = vmul.f32 %v2449, %v2482
        %v2490 = vmul.f32 %v2450, %v2482
        %v2491 = vmul.f32 %v2451, %v2482
        %v2492 = vmul.f32 %v2452, %v2482
        %v2493 = vmul.f32 %v2453, %v2482
        %v2494 = vmul.f32 %v2454, %v2482
        %v2495 = vmul.f32 %v2455, %v2482
        %v2496 = vmul.f32 %v2456, %v2482
        %v2497 = vmul.f32 %v2457, %v2482
        %v2498 = vmul.f32 %v2458, %v2482
        %v2499 = vmul.f32 %v2459, %v2482
        %v2500 = vmul.f32 %v2460, %v2482
        %v2501 = vmul.f32 %v2461, %v2482
        %v2502 = vmul.f32 %v2462, %v2482
        %v2503 = vmul.f32 %v2463, %v2482
        %v2504 = vmul.f32 %v2464, %v2482
        %v2505 = vmul.f32 %v2465, %v2482
        %v2506 = vmul.f32 %v2466, %v2482
        %v2507 = vmul.f32 %v2467, %v2482
        %v2508 = vmul.f32 %v2468, %v2482
        %v2509 = vmul.f32 %v2469, %v2482
        %v2510 = vmul.f32 %v2470, %v2482
        %v2511 = vmul.f32 %v2471, %v2482
        %v2512 = vmul.f32 %v2472, %v2482
        %v2513 = vmul.f32 %v2473, %v2482
        %v2514 = vmul.f32 %v2474, %v2482
        %v2515 = vld [vmem:[%s3] sm:$0x1]
        %v2517 = vlaneseq
        %v2518 = vshrl.u32 %v2517, 7
        %v2519 = vsub.s32 0, %v2518
        %v2520 = vrot.slane %v2515, %v2519
        %v2522 = vadd.f32 %v2483, %v2520
        %v2523 = vadd.f32 %v2484, %v2520
        %v2524 = vadd.f32 %v2485, %v2520
        %v2525 = vadd.f32 %v2486, %v2520
        %v2526 = vadd.f32 %v2487, %v2520
        %v2527 = vadd.f32 %v2488, %v2520
        %v2528 = vadd.f32 %v2489, %v2520
        %v2529 = vadd.f32 %v2490, %v2520
        %v2530 = vadd.f32 %v2491, %v2520
        %v2531 = vadd.f32 %v2492, %v2520
        %v2532 = vadd.f32 %v2493, %v2520
        %v2533 = vadd.f32 %v2494, %v2520
        %v2534 = vadd.f32 %v2495, %v2520
        %v2535 = vadd.f32 %v2496, %v2520
        %v2536 = vadd.f32 %v2497, %v2520
        %v2537 = vadd.f32 %v2498, %v2520
        %v2538 = vadd.f32 %v2499, %v2520
        %v2539 = vadd.f32 %v2500, %v2520
        %v2540 = vadd.f32 %v2501, %v2520
        %v2541 = vadd.f32 %v2502, %v2520
        %v2542 = vadd.f32 %v2503, %v2520
        %v2543 = vadd.f32 %v2504, %v2520
        %v2544 = vadd.f32 %v2505, %v2520
        %v2545 = vadd.f32 %v2506, %v2520
        %v2546 = vadd.f32 %v2507, %v2520
        %v2547 = vadd.f32 %v2508, %v2520
        %v2548 = vadd.f32 %v2509, %v2520
        %v2549 = vadd.f32 %v2510, %v2520
        %v2550 = vadd.f32 %v2511, %v2520
        %v2551 = vadd.f32 %v2512, %v2520
        %v2552 = vadd.f32 %v2513, %v2520
        %v2553 = vadd.f32 %v2514, %v2520
        %v2554 = vmax.f32 %v2522, 0.0
        %v2555 = vmax.f32 %v2523, 0.0
        %v2556 = vmax.f32 %v2524, 0.0
        %v2557 = vmax.f32 %v2525, 0.0
        %v2558 = vmax.f32 %v2526, 0.0
        %v2559 = vmax.f32 %v2527, 0.0
        %v2560 = vmax.f32 %v2528, 0.0
        %v2561 = vmax.f32 %v2529, 0.0
        %v2562 = vmax.f32 %v2530, 0.0
        %v2563 = vmax.f32 %v2531, 0.0
        %v2564 = vmax.f32 %v2532, 0.0
        %v2565 = vmax.f32 %v2533, 0.0
        %v2566 = vmax.f32 %v2534, 0.0
        %v2567 = vmax.f32 %v2535, 0.0
        %v2568 = vmax.f32 %v2536, 0.0
        %v2569 = vmax.f32 %v2537, 0.0
        %v2570 = vmax.f32 %v2538, 0.0
        %v2571 = vmax.f32 %v2539, 0.0
        %v2572 = vmax.f32 %v2540, 0.0
        %v2573 = vmax.f32 %v2541, 0.0
        %v2574 = vmax.f32 %v2542, 0.0
        %v2575 = vmax.f32 %v2543, 0.0
        %v2576 = vmax.f32 %v2544, 0.0
        %v2577 = vmax.f32 %v2545, 0.0
        %v2578 = vmax.f32 %v2546, 0.0
        %v2579 = vmax.f32 %v2547, 0.0
        %v2580 = vmax.f32 %v2548, 0.0
        %v2581 = vmax.f32 %v2549, 0.0
        %v2582 = vmax.f32 %v2550, 0.0
        %v2583 = vmax.f32 %v2551, 0.0
        %v2584 = vmax.f32 %v2552, 0.0
        %v2585 = vmax.f32 %v2553, 0.0
        %2586 = vst.msk [vmem:[%s517 + $0x1] sm:$0xff] %vm429, %v2554
        %2587 = vst.msk [vmem:[%s517 + $0x9] sm:$0xff] %vm429, %v2555
        %2588 = vst.msk [vmem:[%s517 + $0x19] sm:$0xff] %vm429, %v2556
        %2589 = vst.msk [vmem:[%s517 + $0x21] sm:$0xff] %vm429, %v2557
        %2590 = vst.msk [vmem:[%s517 + $0x31] sm:$0xff] %vm429, %v2558
        %2591 = vst.msk [vmem:[%s517 + $0x39] sm:$0xff] %vm429, %v2559
        %2592 = vst.msk [vmem:[%s517 + $0x49] sm:$0xff] %vm429, %v2560
        %2593 = vst.msk [vmem:[%s517 + $0x51] sm:$0xff] %vm429, %v2561
        %2594 = vst.msk [vmem:[%s517 + $0x61] sm:$0xff] %vm429, %v2562
        %2595 = vst.msk [vmem:[%s517 + $0x69] sm:$0xff] %vm429, %v2563
        %2596 = vst.msk [vmem:[%s517 + $0x79] sm:$0xff] %vm429, %v2564
        %2597 = vst.msk [vmem:[%s517 + $0x81] sm:$0xff] %vm429, %v2565
        %2598 = vst.msk [vmem:[%s517 + $0x91] sm:$0xff] %vm429, %v2566
        %2599 = vst.msk [vmem:[%s517 + $0x99] sm:$0xff] %vm429, %v2567
        %2600 = vst.msk [vmem:[%s517 + $0xa9] sm:$0xff] %vm429, %v2568
        %2601 = vst.msk [vmem:[%s517 + $0xb1] sm:$0xff] %vm429, %v2569
        %2602 = vst.msk [vmem:[%s517 + $0xc1] sm:$0xff] %vm429, %v2570
        %2603 = vst.msk [vmem:[%s517 + $0xc9] sm:$0xff] %vm429, %v2571
        %2604 = vst.msk [vmem:[%s517 + $0xd9] sm:$0xff] %vm429, %v2572
        %2605 = vst.msk [vmem:[%s517 + $0xe1] sm:$0xff] %vm429, %v2573
        %2606 = vst.msk [vmem:[%s517 + $0xf1] sm:$0xff] %vm429, %v2574
        %2607 = vst.msk [vmem:[%s517 + $0xf9] sm:$0xff] %vm429, %v2575
        %2608 = vst.msk [vmem:[%s517 + $0x109] sm:$0xff] %vm429, %v2576
        %2609 = vst.msk [vmem:[%s517 + $0x111] sm:$0xff] %vm429, %v2577
        %2610 = vst.msk [vmem:[%s517 + $0x121] sm:$0xff] %vm429, %v2578
        %2611 = vst.msk [vmem:[%s517 + $0x129] sm:$0xff] %vm429, %v2579
        %2612 = vst.msk [vmem:[%s517 + $0x139] sm:$0xff] %vm429, %v2580
        %2613 = vst.msk [vmem:[%s517 + $0x141] sm:$0xff] %vm429, %v2581
        %2614 = vst.msk [vmem:[%s517 + $0x151] sm:$0xff] %vm429, %v2582
        %2615 = vst.msk [vmem:[%s517 + $0x159] sm:$0xff] %vm429, %v2583
        %2616 = vst.msk [vmem:[%s517 + $0x169] sm:$0xff] %vm429, %v2584
        %2617 = vst.msk [vmem:[%s517 + $0x171] sm:$0xff] %vm429, %v2585
        %v2618 = vld [vmem:[#allocation2] sm:$0xff]
        %v2619 = vld [vmem:[#allocation2 + $0x8] sm:$0xff]
        %v2620 = vld [vmem:[#allocation2 + $0x10] sm:$0x3]
        %v2621 = vld [vmem:[#allocation2 + $0x18] sm:$0xff]
        %v2622 = vld [vmem:[#allocation2 + $0x20] sm:$0xff]
        %v2623 = vld [vmem:[#allocation2 + $0x28] sm:$0x3]
        %v2624 = vld [vmem:[#allocation2 + $0x30] sm:$0xff]
        %v2625 = vld [vmem:[#allocation2 + $0x38] sm:$0xff]
        %v2626 = vld [vmem:[#allocation2 + $0x40] sm:$0x3]
        %v2627 = vld [vmem:[#allocation2 + $0x48] sm:$0xff]
        %v2628 = vld [vmem:[#allocation2 + $0x50] sm:$0xff]
        %v2629 = vld [vmem:[#allocation2 + $0x58] sm:$0x3]
        %v2630 = vld [vmem:[#allocation2 + $0x60] sm:$0xff]
        %v2631 = vld [vmem:[#allocation2 + $0x68] sm:$0xff]
        %v2632 = vld [vmem:[#allocation2 + $0x70] sm:$0x3]
        %v2633 = vld [vmem:[#allocation2 + $0x78] sm:$0xff]
        %v2634 = vld [vmem:[#allocation2 + $0x80] sm:$0xff]
        %v2635 = vld [vmem:[#allocation2 + $0x88] sm:$0x3]
        %v2636 = vld [vmem:[#allocation2 + $0x90] sm:$0xff]
        %v2637 = vld [vmem:[#allocation2 + $0x98] sm:$0xff]
        %v2638 = vld [vmem:[#allocation2 + $0xa0] sm:$0x3]
        %v2639 = vld [vmem:[#allocation2 + $0xa8] sm:$0xff]
        %v2640 = vld [vmem:[#allocation2 + $0xb0] sm:$0xff]
        %v2641 = vld [vmem:[#allocation2 + $0xb8] sm:$0x3]
        %v2642 = vld [vmem:[#allocation2 + $0xc0] sm:$0xff]
        %v2643 = vld [vmem:[#allocation2 + $0xc8] sm:$0xff]
        %v2644 = vld [vmem:[#allocation2 + $0xd0] sm:$0x3]
        %v2645 = vld [vmem:[#allocation2 + $0xd8] sm:$0xff]
        %v2646 = vld [vmem:[#allocation2 + $0xe0] sm:$0xff]
        %v2647 = vld [vmem:[#allocation2 + $0xe8] sm:$0x3]
        %v2648 = vld [vmem:[#allocation2 + $0xf0] sm:$0xff]
        %v2649 = vld [vmem:[#allocation2 + $0xf8] sm:$0xff]
        %v2650 = vld [vmem:[#allocation2 + $0x100] sm:$0x3]
        %v2651 = vld [vmem:[#allocation2 + $0x108] sm:$0xff]
        %v2652 = vld [vmem:[#allocation2 + $0x110] sm:$0xff]
        %v2653 = vld [vmem:[#allocation2 + $0x118] sm:$0x3]
        %v2654 = vld [vmem:[#allocation2 + $0x120] sm:$0xff]
        %v2655 = vld [vmem:[#allocation2 + $0x128] sm:$0xff]
        %v2656 = vld [vmem:[#allocation2 + $0x130] sm:$0x3]
        %v2657 = vld [vmem:[#allocation2 + $0x138] sm:$0xff]
        %v2658 = vld [vmem:[#allocation2 + $0x140] sm:$0xff]
        %v2659 = vld [vmem:[#allocation2 + $0x148] sm:$0x3]
        %v2660 = vld [vmem:[#allocation2 + $0x150] sm:$0xff]
        %v2661 = vld [vmem:[#allocation2 + $0x158] sm:$0xff]
        %v2662 = vld [vmem:[#allocation2 + $0x160] sm:$0x3]
        %v2663 = vld [vmem:[#allocation2 + $0x168] sm:$0xff]
        %v2664 = vld [vmem:[#allocation2 + $0x170] sm:$0xff]
        %v2665 = vld [vmem:[#allocation2 + $0x178] sm:$0x3]
        %v2666 = vld [vmem:[#allocation2 + $0x180] sm:$0xff]
        %v2667 = vld [vmem:[#allocation2 + $0x188] sm:$0xff]
        %v2668 = vld [vmem:[#allocation2 + $0x190] sm:$0x3]
        %v2669 = vld [vmem:[#allocation2 + $0x198] sm:$0xff]
        %v2670 = vld [vmem:[#allocation2 + $0x1a0] sm:$0xff]
        %v2671 = vld [vmem:[#allocation2 + $0x1a8] sm:$0x3]
        %2672 = vst.msk [vmem:[#allocation3] sm:$0xff] %vm429, %v2618
        %2673 = vst.msk [vmem:[#allocation3 + $0x18] sm:$0xff] %vm429, %v2619
        %2674 = vst.msk [vmem:[#allocation3 + $0x30] sm:$0xff] %vm429, %v2621
        %2675 = vst.msk [vmem:[#allocation3 + $0x48] sm:$0xff] %vm429, %v2622
        %2676 = vst.msk [vmem:[#allocation3 + $0x60] sm:$0xff] %vm429, %v2624
        %2677 = vst.msk [vmem:[#allocation3 + $0x78] sm:$0xff] %vm429, %v2625
        %2678 = vst.msk [vmem:[#allocation3 + $0x90] sm:$0xff] %vm429, %v2627
        %2679 = vst.msk [vmem:[#allocation3 + $0xa8] sm:$0xff] %vm429, %v2628
        %2680 = vst.msk [vmem:[#allocation3 + $0xc0] sm:$0xff] %vm429, %v2630
        %2681 = vst.msk [vmem:[#allocation3 + $0xd8] sm:$0xff] %vm429, %v2631
        %2682 = vst.msk [vmem:[#allocation3 + $0xf0] sm:$0xff] %vm429, %v2633
        %2683 = vst.msk [vmem:[#allocation3 + $0x108] sm:$0xff] %vm429, %v2634
        %2684 = vst.msk [vmem:[#allocation3 + $0x120] sm:$0xff] %vm429, %v2636
        %2685 = vst.msk [vmem:[#allocation3 + $0x138] sm:$0xff] %vm429, %v2637
        %2686 = vst.msk [vmem:[#allocation3 + $0x150] sm:$0xff] %vm429, %v2639
        %2687 = vst.msk [vmem:[#allocation3 + $0x168] sm:$0xff] %vm429, %v2640
        %2688 = vst.msk [vmem:[#allocation3 + $0x180] sm:$0xff] %vm429, %v2642
        %2689 = vst.msk [vmem:[#allocation3 + $0x198] sm:$0xff] %vm429, %v2643
        %2690 = vst.msk [vmem:[#allocation3 + $0x1b0] sm:$0xff] %vm429, %v2645
        %2691 = vst.msk [vmem:[#allocation3 + $0x1c8] sm:$0xff] %vm429, %v2646
        %2692 = vst.msk [vmem:[#allocation3 + $0x1e0] sm:$0xff] %vm429, %v2648
        %2693 = vst.msk [vmem:[#allocation3 + $0x1f8] sm:$0xff] %vm429, %v2649
        %2694 = vst.msk [vmem:[#allocation3 + $0x210] sm:$0xff] %vm429, %v2651
        %2695 = vst.msk [vmem:[#allocation3 + $0x228] sm:$0xff] %vm429, %v2652
        %2696 = vst.msk [vmem:[#allocation3 + $0x240] sm:$0xff] %vm429, %v2654
        %2697 = vst.msk [vmem:[#allocation3 + $0x258] sm:$0xff] %vm429, %v2655
        %2698 = vst.msk [vmem:[#allocation3 + $0x270] sm:$0xff] %vm429, %v2657
        %2699 = vst.msk [vmem:[#allocation3 + $0x288] sm:$0xff] %vm429, %v2658
        %2700 = vst.msk [vmem:[#allocation3 + $0x2a0] sm:$0xff] %vm429, %v2660
        %2701 = vst.msk [vmem:[#allocation3 + $0x2b8] sm:$0xff] %vm429, %v2661
        %2702 = vst.msk [vmem:[#allocation3 + $0x2d0] sm:$0xff] %vm429, %v2663
        %2703 = vst.msk [vmem:[#allocation3 + $0x2e8] sm:$0xff] %vm429, %v2664
        %v2752 = vrot.slane %v2618, 1
        %v2753 = vrot.slane %v2619, 1
        %v2754 = vsel %vm685, %v2752, %v2753
        %v2755 = vrot.slane %v2620, 1
        %v2756 = vsel %vm685, %v2753, %v2755
        %v2757 = vrot.slane %v2621, 1
        %v2758 = vrot.slane %v2622, 1
        %v2759 = vsel %vm685, %v2757, %v2758
        %v2760 = vrot.slane %v2623, 1
        %v2761 = vsel %vm685, %v2758, %v2760
        %v2762 = vrot.slane %v2624, 1
        %v2763 = vrot.slane %v2625, 1
        %v2764 = vsel %vm685, %v2762, %v2763
        %v2765 = vrot.slane %v2626, 1
        %v2766 = vsel %vm685, %v2763, %v2765
        %v2767 = vrot.slane %v2627, 1
        %v2768 = vrot.slane %v2628, 1
        %v2769 = vsel %vm685, %v2767, %v2768
        %v2770 = vrot.slane %v2629, 1
        %v2771 = vsel %vm685, %v2768, %v2770
        %v2772 = vrot.slane %v2630, 1
        %v2773 = vrot.slane %v2631, 1
        %v2774 = vsel %vm685, %v2772, %v2773
        %v2775 = vrot.slane %v2632, 1
        %v2776 = vsel %vm685, %v2773, %v2775
        %v2777 = vrot.slane %v2633, 1
        %v2778 = vrot.slane %v2634, 1
        %v2779 = vsel %vm685, %v2777, %v2778
        %v2780 = vrot.slane %v2635, 1
        %v2781 = vsel %vm685, %v2778, %v2780
        %v2782 = vrot.slane %v2636, 1
        %v2783 = vrot.slane %v2637, 1
        %v2784 = vsel %vm685, %v2782, %v2783
        %v2785 = vrot.slane %v2638, 1
        %v2786 = vsel %vm685, %v2783, %v2785
        %v2787 = vrot.slane %v2639, 1
        %v2788 = vrot.slane %v2640, 1
        %v2789 = vsel %vm685, %v2787, %v2788
        %v2790 = vrot.slane %v2641, 1
        %v2791 = vsel %vm685, %v2788, %v2790
        %v2792 = vrot.slane %v2642, 1
        %v2793 = vrot.slane %v2643, 1
        %v2794 = vsel %vm685, %v2792, %v2793
        %v2795 = vrot.slane %v2644, 1
        %v2796 = vsel %vm685, %v2793, %v2795
        %v2797 = vrot.slane %v2645, 1
        %v2798 = vrot.slane %v2646, 1
        %v2799 = vsel %vm685, %v2797, %v2798
        %v2800 = vrot.slane %v2647, 1
        %v2801 = vsel %vm685, %v2798, %v2800
        %v2802 = vrot.slane %v2648, 1
        %v2803 = vrot.slane %v2649, 1
        %v2804 = vsel %vm685, %v2802, %v2803
        %v2805 = vrot.slane %v2650, 1
        %v2806 = vsel %vm685, %v2803, %v2805
        %v2807 = vrot.slane %v2651, 1
        %v2808 = vrot.slane %v2652, 1
        %v2809 = vsel %vm685, %v2807, %v2808
        %v2810 = vrot.slane %v2653, 1
        %v2811 = vsel %vm685, %v2808, %v2810
        %v2812 = vrot.slane %v2654, 1
        %v2813 = vrot.slane %v2655, 1
        %v2814 = vsel %vm685, %v2812, %v2813
        %v2815 = vrot.slane %v2656, 1
        %v2816 = vsel %vm685, %v2813, %v2815
        %v2817 = vrot.slane %v2657, 1
        %v2818 = vrot.slane %v2658, 1
        %v2819 = vsel %vm685, %v2817, %v2818
        %v2820 = vrot.slane %v2659, 1
        %v2821 = vsel %vm685, %v2818, %v2820
        %v2822 = vrot.slane %v2660, 1
        %v2823 = vrot.slane %v2661, 1
        %v2824 = vsel %vm685, %v2822, %v2823
        %v2825 = vrot.slane %v2662, 1
        %v2826 = vsel %vm685, %v2823, %v2825
        %v2827 = vrot.slane %v2663, 1
        %v2828 = vrot.slane %v2664, 1
        %v2829 = vsel %vm685, %v2827, %v2828
        %v2830 = vrot.slane %v2665, 1
        %v2831 = vsel %vm685, %v2828, %v2830
        %2832 = vrot.lane.b32.xlu0 %v2754, 32
        %v2833 = vpop.permute.xlu0 %2832
        %2834 = vrot.lane.b32.xlu0 %v2756, 32
        %v2835 = vpop.permute.xlu0 %2834
        %2836 = vrot.lane.b32.xlu0 %v2759, 32
        %v2837 = vpop.permute.xlu0 %2836
        %2838 = vrot.lane.b32.xlu0 %v2761, 32
        %v2839 = vpop.permute.xlu0 %2838
        %2840 = vrot.lane.b32.xlu0 %v2764, 32
        %v2841 = vpop.permute.xlu0 %2840
        %2842 = vrot.lane.b32.xlu0 %v2766, 32
        %v2843 = vpop.permute.xlu0 %2842
        %2844 = vrot.lane.b32.xlu0 %v2769, 32
        %v2845 = vpop.permute.xlu0 %2844
        %2846 = vrot.lane.b32.xlu0 %v2771, 32
        %v2847 = vpop.permute.xlu0 %2846
        %2848 = vrot.lane.b32.xlu0 %v2774, 32
        %v2849 = vpop.permute.xlu0 %2848
        %2850 = vrot.lane.b32.xlu0 %v2776, 32
        %v2851 = vpop.permute.xlu0 %2850
        %2852 = vrot.lane.b32.xlu0 %v2779, 32
        %v2853 = vpop.permute.xlu0 %2852
        %2854 = vrot.lane.b32.xlu0 %v2781, 32
        %v2855 = vpop.permute.xlu0 %2854
        %2856 = vrot.lane.b32.xlu0 %v2784, 32
        %v2857 = vpop.permute.xlu0 %2856
        %2858 = vrot.lane.b32.xlu0 %v2786, 32
        %v2859 = vpop.permute.xlu0 %2858
        %2860 = vrot.lane.b32.xlu0 %v2789, 32
        %v2861 = vpop.permute.xlu0 %2860
        %2862 = vrot.lane.b32.xlu0 %v2791, 32
        %v2863 = vpop.permute.xlu0 %2862
        %2864 = vrot.lane.b32.xlu0 %v2794, 32
        %v2865 = vpop.permute.xlu0 %2864
        %2866 = vrot.lane.b32.xlu0 %v2796, 32
        %v2867 = vpop.permute.xlu0 %2866
        %2868 = vrot.lane.b32.xlu0 %v2799, 32
        %v2869 = vpop.permute.xlu0 %2868
        %2870 = vrot.lane.b32.xlu0 %v2801, 32
        %v2871 = vpop.permute.xlu0 %2870
        %2872 = vrot.lane.b32.xlu0 %v2804, 32
        %v2873 = vpop.permute.xlu0 %2872
        %2874 = vrot.lane.b32.xlu0 %v2806, 32
        %v2875 = vpop.permute.xlu0 %2874
        %2876 = vrot.lane.b32.xlu0 %v2809, 32
        %v2877 = vpop.permute.xlu0 %2876
        %2878 = vrot.lane.b32.xlu0 %v2811, 32
        %v2879 = vpop.permute.xlu0 %2878
        %2880 = vrot.lane.b32.xlu0 %v2814, 32
        %v2881 = vpop.permute.xlu0 %2880
        %2882 = vrot.lane.b32.xlu0 %v2816, 32
        %v2883 = vpop.permute.xlu0 %2882
        %2884 = vrot.lane.b32.xlu0 %v2819, 32
        %v2885 = vpop.permute.xlu0 %2884
        %2886 = vrot.lane.b32.xlu0 %v2821, 32
        %v2887 = vpop.permute.xlu0 %2886
        %2888 = vrot.lane.b32.xlu0 %v2824, 32
        %v2889 = vpop.permute.xlu0 %2888
        %2890 = vrot.lane.b32.xlu0 %v2826, 32
        %v2891 = vpop.permute.xlu0 %2890
        %2892 = vrot.lane.b32.xlu0 %v2829, 32
        %v2893 = vpop.permute.xlu0 %2892
        %2894 = vrot.lane.b32.xlu0 %v2831, 32
        %v2895 = vpop.permute.xlu0 %2894
        %vm2928 = vcmask 523520
        %2929 = vst.msk [vmem:[#allocation3] sm:$0xff] %vm2928, %v2833
        %2930 = vst.msk [vmem:[#allocation3 + $0x18] sm:$0xff] %vm2928, %v2835
        %2931 = vst.msk [vmem:[#allocation3 + $0x30] sm:$0xff] %vm2928, %v2837
        %2932 = vst.msk [vmem:[#allocation3 + $0x48] sm:$0xff] %vm2928, %v2839
        %2933 = vst.msk [vmem:[#allocation3 + $0x60] sm:$0xff] %vm2928, %v2841
        %2934 = vst.msk [vmem:[#allocation3 + $0x78] sm:$0xff] %vm2928, %v2843
        %2935 = vst.msk [vmem:[#allocation3 + $0x90] sm:$0xff] %vm2928, %v2845
        %2936 = vst.msk [vmem:[#allocation3 + $0xa8] sm:$0xff] %vm2928, %v2847
        %2937 = vst.msk [vmem:[#allocation3 + $0xc0] sm:$0xff] %vm2928, %v2849
        %2938 = vst.msk [vmem:[#allocation3 + $0xd8] sm:$0xff] %vm2928, %v2851
        %2939 = vst.msk [vmem:[#allocation3 + $0xf0] sm:$0xff] %vm2928, %v2853
        %2940 = vst.msk [vmem:[#allocation3 + $0x108] sm:$0xff] %vm2928, %v2855
        %2941 = vst.msk [vmem:[#allocation3 + $0x120] sm:$0xff] %vm2928, %v2857
        %2942 = vst.msk [vmem:[#allocation3 + $0x138] sm:$0xff] %vm2928, %v2859
        %2943 = vst.msk [vmem:[#allocation3 + $0x150] sm:$0xff] %vm2928, %v2861
        %2944 = vst.msk [vmem:[#allocation3 + $0x168] sm:$0xff] %vm2928, %v2863
        %2945 = vst.msk [vmem:[#allocation3 + $0x180] sm:$0xff] %vm2928, %v2865
        %2946 = vst.msk [vmem:[#allocation3 + $0x198] sm:$0xff] %vm2928, %v2867
        %2947 = vst.msk [vmem:[#allocation3 + $0x1b0] sm:$0xff] %vm2928, %v2869
        %2948 = vst.msk [vmem:[#allocation3 + $0x1c8] sm:$0xff] %vm2928, %v2871
        %2949 = vst.msk [vmem:[#allocation3 + $0x1e0] sm:$0xff] %vm2928, %v2873
        %2950 = vst.msk [vmem:[#allocation3 + $0x1f8] sm:$0xff] %vm2928, %v2875
        %2951 = vst.msk [vmem:[#allocation3 + $0x210] sm:$0xff] %vm2928, %v2877
        %2952 = vst.msk [vmem:[#allocation3 + $0x228] sm:$0xff] %vm2928, %v2879
        %2953 = vst.msk [vmem:[#allocation3 + $0x240] sm:$0xff] %vm2928, %v2881
        %2954 = vst.msk [vmem:[#allocation3 + $0x258] sm:$0xff] %vm2928, %v2883
        %2955 = vst.msk [vmem:[#allocation3 + $0x270] sm:$0xff] %vm2928, %v2885
        %2956 = vst.msk [vmem:[#allocation3 + $0x288] sm:$0xff] %vm2928, %v2887
        %2957 = vst.msk [vmem:[#allocation3 + $0x2a0] sm:$0xff] %vm2928, %v2889
        %2958 = vst.msk [vmem:[#allocation3 + $0x2b8] sm:$0xff] %vm2928, %v2891
        %2959 = vst.msk [vmem:[#allocation3 + $0x2d0] sm:$0xff] %vm2928, %v2893
        %2960 = vst.msk [vmem:[#allocation3 + $0x2e8] sm:$0xff] %vm2928, %v2895
        %v2961 = vrot.slane %v2618, 2
        %v2962 = vrot.slane %v2619, 2
        %v2963 = vsel %vm895, %v2961, %v2962
        %v2964 = vrot.slane %v2620, 2
        %v2965 = vsel %vm895, %v2962, %v2964
        %v2966 = vrot.slane %v2621, 2
        %v2967 = vrot.slane %v2622, 2
        %v2968 = vsel %vm895, %v2966, %v2967
        %v2969 = vrot.slane %v2623, 2
        %v2970 = vsel %vm895, %v2967, %v2969
        %v2971 = vrot.slane %v2624, 2
        %v2972 = vrot.slane %v2625, 2
        %v2973 = vsel %vm895, %v2971, %v2972
        %v2974 = vrot.slane %v2626, 2
        %v2975 = vsel %vm895, %v2972, %v2974
        %v2976 = vrot.slane %v2627, 2
        %v2977 = vrot.slane %v2628, 2
        %v2978 = vsel %vm895, %v2976, %v2977
        %v2979 = vrot.slane %v2629, 2
        %v2980 = vsel %vm895, %v2977, %v2979
        %v2981 = vrot.slane %v2630, 2
        %v2982 = vrot.slane %v2631, 2
        %v2983 = vsel %vm895, %v2981, %v2982
        %v2984 = vrot.slane %v2632, 2
        %v2985 = vsel %vm895, %v2982, %v2984
        %v2986 = vrot.slane %v2633, 2
        %v2987 = vrot.slane %v2634, 2
        %v2988 = vsel %vm895, %v2986, %v2987
        %v2989 = vrot.slane %v2635, 2
        %v2990 = vsel %vm895, %v2987, %v2989
        %v2991 = vrot.slane %v2636, 2
        %v2992 = vrot.slane %v2637, 2
        %v2993 = vsel %vm895, %v2991, %v2992
        %v2994 = vrot.slane %v2638, 2
        %v2995 = vsel %vm895, %v2992, %v2994
        %v2996 = vrot.slane %v2639, 2
        %v2997 = vrot.slane %v2640, 2
        %v2998 = vsel %vm895, %v2996, %v2997
        %v2999 = vrot.slane %v2641, 2
        %v3000 = vsel %vm895, %v2997, %v2999
        %v3001 = vrot.slane %v2642, 2
        %v3002 = vrot.slane %v2643, 2
        %v3003 = vsel %vm895, %v3001, %v3002
        %v3004 = vrot.slane %v2644, 2
        %v3005 = vsel %vm895, %v3002, %v3004
        %v3006 = vrot.slane %v2645, 2
        %v3007 = vrot.slane %v2646, 2
        %v3008 = vsel %vm895, %v3006, %v3007
        %v3009 = vrot.slane %v2647, 2
        %v3010 = vsel %vm895, %v3007, %v3009
        %v3011 = vrot.slane %v2648, 2
        %v3012 = vrot.slane %v2649, 2
        %v3013 = vsel %vm895, %v3011, %v3012
        %v3014 = vrot.slane %v2650, 2
        %v3015 = vsel %vm895, %v3012, %v3014
        %v3016 = vrot.slane %v2651, 2
        %v3017 = vrot.slane %v2652, 2
        %v3018 = vsel %vm895, %v3016, %v3017
        %v3019 = vrot.slane %v2653, 2
        %v3020 = vsel %vm895, %v3017, %v3019
        %v3021 = vrot.slane %v2654, 2
        %v3022 = vrot.slane %v2655, 2
        %v3023 = vsel %vm895, %v3021, %v3022
        %v3024 = vrot.slane %v2656, 2
        %v3025 = vsel %vm895, %v3022, %v3024
        %v3026 = vrot.slane %v2657, 2
        %v3027 = vrot.slane %v2658, 2
        %v3028 = vsel %vm895, %v3026, %v3027
        %v3029 = vrot.slane %v2659, 2
        %v3030 = vsel %vm895, %v3027, %v3029
        %v3031 = vrot.slane %v2660, 2
        %v3032 = vrot.slane %v2661, 2
        %v3033 = vsel %vm895, %v3031, %v3032
        %v3034 = vrot.slane %v2662, 2
        %v3035 = vsel %vm895, %v3032, %v3034
        %v3036 = vrot.slane %v2663, 2
        %v3037 = vrot.slane %v2664, 2
        %v3038 = vsel %vm895, %v3036, %v3037
        %v3039 = vrot.slane %v2665, 2
        %v3040 = vsel %vm895, %v3037, %v3039
        %3041 = vrot.lane.b32.xlu0 %v2963, 64
        %v3042 = vpop.permute.xlu0 %3041
        %3043 = vrot.lane.b32.xlu0 %v2965, 64
        %v3044 = vpop.permute.xlu0 %3043
        %3045 = vrot.lane.b32.xlu0 %v2968, 64
        %v3046 = vpop.permute.xlu0 %3045
        %3047 = vrot.lane.b32.xlu0 %v2970, 64
        %v3048 = vpop.permute.xlu0 %3047
        %3049 = vrot.lane.b32.xlu0 %v2973, 64
        %v3050 = vpop.permute.xlu0 %3049
        %3051 = vrot.lane.b32.xlu0 %v2975, 64
        %v3052 = vpop.permute.xlu0 %3051
        %3053 = vrot.lane.b32.xlu0 %v2978, 64
        %v3054 = vpop.permute.xlu0 %3053
        %3055 = vrot.lane.b32.xlu0 %v2980, 64
        %v3056 = vpop.permute.xlu0 %3055
        %3057 = vrot.lane.b32.xlu0 %v2983, 64
        %v3058 = vpop.permute.xlu0 %3057
        %3059 = vrot.lane.b32.xlu0 %v2985, 64
        %v3060 = vpop.permute.xlu0 %3059
        %3061 = vrot.lane.b32.xlu0 %v2988, 64
        %v3062 = vpop.permute.xlu0 %3061
        %3063 = vrot.lane.b32.xlu0 %v2990, 64
        %v3064 = vpop.permute.xlu0 %3063
        %3065 = vrot.lane.b32.xlu0 %v2993, 64
        %v3066 = vpop.permute.xlu0 %3065
        %3067 = vrot.lane.b32.xlu0 %v2995, 64
        %v3068 = vpop.permute.xlu0 %3067
        %3069 = vrot.lane.b32.xlu0 %v2998, 64
        %v3070 = vpop.permute.xlu0 %3069
        %3071 = vrot.lane.b32.xlu0 %v3000, 64
        %v3072 = vpop.permute.xlu0 %3071
        %3073 = vrot.lane.b32.xlu0 %v3003, 64
        %v3074 = vpop.permute.xlu0 %3073
        %3075 = vrot.lane.b32.xlu0 %v3005, 64
        %v3076 = vpop.permute.xlu0 %3075
        %3077 = vrot.lane.b32.xlu0 %v3008, 64
        %v3078 = vpop.permute.xlu0 %3077
        %3079 = vrot.lane.b32.xlu0 %v3010, 64
        %v3080 = vpop.permute.xlu0 %3079
        %3081 = vrot.lane.b32.xlu0 %v3013, 64
        %v3082 = vpop.permute.xlu0 %3081
        %3083 = vrot.lane.b32.xlu0 %v3015, 64
        %v3084 = vpop.permute.xlu0 %3083
        %3085 = vrot.lane.b32.xlu0 %v3018, 64
        %v3086 = vpop.permute.xlu0 %3085
        %3087 = vrot.lane.b32.xlu0 %v3020, 64
        %v3088 = vpop.permute.xlu0 %3087
        %3089 = vrot.lane.b32.xlu0 %v3023, 64
        %v3090 = vpop.permute.xlu0 %3089
        %3091 = vrot.lane.b32.xlu0 %v3025, 64
        %v3092 = vpop.permute.xlu0 %3091
        %3093 = vrot.lane.b32.xlu0 %v3028, 64
        %v3094 = vpop.permute.xlu0 %3093
        %3095 = vrot.lane.b32.xlu0 %v3030, 64
        %v3096 = vpop.permute.xlu0 %3095
        %3097 = vrot.lane.b32.xlu0 %v3033, 64
        %v3098 = vpop.permute.xlu0 %3097
        %3099 = vrot.lane.b32.xlu0 %v3035, 64
        %v3100 = vpop.permute.xlu0 %3099
        %3101 = vrot.lane.b32.xlu0 %v3038, 64
        %v3102 = vpop.permute.xlu0 %3101
        %3103 = vrot.lane.b32.xlu0 %v3040, 64
        %v3104 = vpop.permute.xlu0 %3103
        %vm3137 = vcmask 785920
        %3138 = vst.msk [vmem:[#allocation3] sm:$0xff] %vm3137, %v3042
        %3139 = vst.msk [vmem:[#allocation3 + $0x18] sm:$0xff] %vm3137, %v3044
        %3140 = vst.msk [vmem:[#allocation3 + $0x30] sm:$0xff] %vm3137, %v3046
        %3141 = vst.msk [vmem:[#allocation3 + $0x48] sm:$0xff] %vm3137, %v3048
        %3142 = vst.msk [vmem:[#allocation3 + $0x60] sm:$0xff] %vm3137, %v3050
        %3143 = vst.msk [vmem:[#allocation3 + $0x78] sm:$0xff] %vm3137, %v3052
        %3144 = vst.msk [vmem:[#allocation3 + $0x90] sm:$0xff] %vm3137, %v3054
        %3145 = vst.msk [vmem:[#allocation3 + $0xa8] sm:$0xff] %vm3137, %v3056
        %3146 = vst.msk [vmem:[#allocation3 + $0xc0] sm:$0xff] %vm3137, %v3058
        %3147 = vst.msk [vmem:[#allocation3 + $0xd8] sm:$0xff] %vm3137, %v3060
        %3148 = vst.msk [vmem:[#allocation3 + $0xf0] sm:$0xff] %vm3137, %v3062
        %3149 = vst.msk [vmem:[#allocation3 + $0x108] sm:$0xff] %vm3137, %v3064
        %3150 = vst.msk [vmem:[#allocation3 + $0x120] sm:$0xff] %vm3137, %v3066
        %3151 = vst.msk [vmem:[#allocation3 + $0x138] sm:$0xff] %vm3137, %v3068
        %3152 = vst.msk [vmem:[#allocation3 + $0x150] sm:$0xff] %vm3137, %v3070
        %3153 = vst.msk [vmem:[#allocation3 + $0x168] sm:$0xff] %vm3137, %v3072
        %3154 = vst.msk [vmem:[#allocation3 + $0x180] sm:$0xff] %vm3137, %v3074
        %3155 = vst.msk [vmem:[#allocation3 + $0x198] sm:$0xff] %vm3137, %v3076
        %3156 = vst.msk [vmem:[#allocation3 + $0x1b0] sm:$0xff] %vm3137, %v3078
        %3157 = vst.msk [vmem:[#allocation3 + $0x1c8] sm:$0xff] %vm3137, %v3080
        %3158 = vst.msk [vmem:[#allocation3 + $0x1e0] sm:$0xff] %vm3137, %v3082
        %3159 = vst.msk [vmem:[#allocation3 + $0x1f8] sm:$0xff] %vm3137, %v3084
        %3160 = vst.msk [vmem:[#allocation3 + $0x210] sm:$0xff] %vm3137, %v3086
        %3161 = vst.msk [vmem:[#allocation3 + $0x228] sm:$0xff] %vm3137, %v3088
        %3162 = vst.msk [vmem:[#allocation3 + $0x240] sm:$0xff] %vm3137, %v3090
        %3163 = vst.msk [vmem:[#allocation3 + $0x258] sm:$0xff] %vm3137, %v3092
        %3164 = vst.msk [vmem:[#allocation3 + $0x270] sm:$0xff] %vm3137, %v3094
        %3165 = vst.msk [vmem:[#allocation3 + $0x288] sm:$0xff] %vm3137, %v3096
        %3166 = vst.msk [vmem:[#allocation3 + $0x2a0] sm:$0xff] %vm3137, %v3098
        %3167 = vst.msk [vmem:[#allocation3 + $0x2b8] sm:$0xff] %vm3137, %v3100
        %3168 = vst.msk [vmem:[#allocation3 + $0x2d0] sm:$0xff] %vm3137, %v3102
        %3169 = vst.msk [vmem:[#allocation3 + $0x2e8] sm:$0xff] %vm3137, %v3104
        %3172 = vrot.lane.b32.xlu0 %v2621, 96
        %v3173 = vpop.permute.xlu0 %3172
        %3174 = vrot.lane.b32.xlu0 %v2622, 96
        %v3175 = vpop.permute.xlu0 %3174
        %3176 = vrot.lane.b32.xlu0 %v2624, 96
        %v3177 = vpop.permute.xlu0 %3176
        %3178 = vrot.lane.b32.xlu0 %v2625, 96
        %v3179 = vpop.permute.xlu0 %3178
        %3180 = vrot.lane.b32.xlu0 %v2627, 96
        %v3181 = vpop.permute.xlu0 %3180
        %3182 = vrot.lane.b32.xlu0 %v2628, 96
        %v3183 = vpop.permute.xlu0 %3182
        %3184 = vrot.lane.b32.xlu0 %v2630, 96
        %v3185 = vpop.permute.xlu0 %3184
        %3186 = vrot.lane.b32.xlu0 %v2631, 96
        %v3187 = vpop.permute.xlu0 %3186
        %3188 = vrot.lane.b32.xlu0 %v2633, 96
        %v3189 = vpop.permute.xlu0 %3188
        %3190 = vrot.lane.b32.xlu0 %v2634, 96
        %v3191 = vpop.permute.xlu0 %3190
        %3192 = vrot.lane.b32.xlu0 %v2636, 96
        %v3193 = vpop.permute.xlu0 %3192
        %3194 = vrot.lane.b32.xlu0 %v2637, 96
        %v3195 = vpop.permute.xlu0 %3194
        %3196 = vrot.lane.b32.xlu0 %v2639, 96
        %v3197 = vpop.permute.xlu0 %3196
        %3198 = vrot.lane.b32.xlu0 %v2640, 96
        %v3199 = vpop.permute.xlu0 %3198
        %3200 = vrot.lane.b32.xlu0 %v2642, 96
        %v3201 = vpop.permute.xlu0 %3200
        %3202 = vrot.lane.b32.xlu0 %v2643, 96
        %v3203 = vpop.permute.xlu0 %3202
        %3204 = vrot.lane.b32.xlu0 %v2645, 96
        %v3205 = vpop.permute.xlu0 %3204
        %3206 = vrot.lane.b32.xlu0 %v2646, 96
        %v3207 = vpop.permute.xlu0 %3206
        %3208 = vrot.lane.b32.xlu0 %v2648, 96
        %v3209 = vpop.permute.xlu0 %3208
        %3210 = vrot.lane.b32.xlu0 %v2649, 96
        %v3211 = vpop.permute.xlu0 %3210
        %3212 = vrot.lane.b32.xlu0 %v2651, 96
        %v3213 = vpop.permute.xlu0 %3212
        %3214 = vrot.lane.b32.xlu0 %v2652, 96
        %v3215 = vpop.permute.xlu0 %3214
        %3216 = vrot.lane.b32.xlu0 %v2654, 96
        %v3217 = vpop.permute.xlu0 %3216
        %3218 = vrot.lane.b32.xlu0 %v2655, 96
        %v3219 = vpop.permute.xlu0 %3218
        %3220 = vrot.lane.b32.xlu0 %v2657, 96
        %v3221 = vpop.permute.xlu0 %3220
        %3222 = vrot.lane.b32.xlu0 %v2658, 96
        %v3223 = vpop.permute.xlu0 %3222
        %3224 = vrot.lane.b32.xlu0 %v2660, 96
        %v3225 = vpop.permute.xlu0 %3224
        %3226 = vrot.lane.b32.xlu0 %v2661, 96
        %v3227 = vpop.permute.xlu0 %3226
        %3228 = vrot.lane.b32.xlu0 %v2663, 96
        %v3229 = vpop.permute.xlu0 %3228
        %3230 = vrot.lane.b32.xlu0 %v2664, 96
        %v3231 = vpop.permute.xlu0 %3230
        %3232 = vrot.lane.b32.xlu0 %v2666, 96
        %v3233 = vpop.permute.xlu0 %3232
        %3234 = vrot.lane.b32.xlu0 %v2667, 96
        %v3235 = vpop.permute.xlu0 %3234
        %vm3268 = vcmask 1048320
        %3269 = vst.msk [vmem:[#allocation3] sm:$0xff] %vm3268, %v3173
        %3270 = vst.msk [vmem:[#allocation3 + $0x18] sm:$0xff] %vm3268, %v3175
        %3271 = vst.msk [vmem:[#allocation3 + $0x30] sm:$0xff] %vm3268, %v3177
        %3272 = vst.msk [vmem:[#allocation3 + $0x48] sm:$0xff] %vm3268, %v3179
        %3273 = vst.msk [vmem:[#allocation3 + $0x60] sm:$0xff] %vm3268, %v3181
        %3274 = vst.msk [vmem:[#allocation3 + $0x78] sm:$0xff] %vm3268, %v3183
        %3275 = vst.msk [vmem:[#allocation3 + $0x90] sm:$0xff] %vm3268, %v3185
        %3276 = vst.msk [vmem:[#allocation3 + $0xa8] sm:$0xff] %vm3268, %v3187
        %3277 = vst.msk [vmem:[#allocation3 + $0xc0] sm:$0xff] %vm3268, %v3189
        %3278 = vst.msk [vmem:[#allocation3 + $0xd8] sm:$0xff] %vm3268, %v3191
        %3279 = vst.msk [vmem:[#allocation3 + $0xf0] sm:$0xff] %vm3268, %v3193
        %3280 = vst.msk [vmem:[#allocation3 + $0x108] sm:$0xff] %vm3268, %v3195
        %3281 = vst.msk [vmem:[#allocation3 + $0x120] sm:$0xff] %vm3268, %v3197
        %3282 = vst.msk [vmem:[#allocation3 + $0x138] sm:$0xff] %vm3268, %v3199
        %3283 = vst.msk [vmem:[#allocation3 + $0x150] sm:$0xff] %vm3268, %v3201
        %3284 = vst.msk [vmem:[#allocation3 + $0x168] sm:$0xff] %vm3268, %v3203
        %3285 = vst.msk [vmem:[#allocation3 + $0x180] sm:$0xff] %vm3268, %v3205
        %3286 = vst.msk [vmem:[#allocation3 + $0x198] sm:$0xff] %vm3268, %v3207
        %3287 = vst.msk [vmem:[#allocation3 + $0x1b0] sm:$0xff] %vm3268, %v3209
        %3288 = vst.msk [vmem:[#allocation3 + $0x1c8] sm:$0xff] %vm3268, %v3211
        %3289 = vst.msk [vmem:[#allocation3 + $0x1e0] sm:$0xff] %vm3268, %v3213
        %3290 = vst.msk [vmem:[#allocation3 + $0x1f8] sm:$0xff] %vm3268, %v3215
        %3291 = vst.msk [vmem:[#allocation3 + $0x210] sm:$0xff] %vm3268, %v3217
        %3292 = vst.msk [vmem:[#allocation3 + $0x228] sm:$0xff] %vm3268, %v3219
        %3293 = vst.msk [vmem:[#allocation3 + $0x240] sm:$0xff] %vm3268, %v3221
        %3294 = vst.msk [vmem:[#allocation3 + $0x258] sm:$0xff] %vm3268, %v3223
        %3295 = vst.msk [vmem:[#allocation3 + $0x270] sm:$0xff] %vm3268, %v3225
        %3296 = vst.msk [vmem:[#allocation3 + $0x288] sm:$0xff] %vm3268, %v3227
        %3297 = vst.msk [vmem:[#allocation3 + $0x2a0] sm:$0xff] %vm3268, %v3229
        %3298 = vst.msk [vmem:[#allocation3 + $0x2b8] sm:$0xff] %vm3268, %v3231
        %3299 = vst.msk [vmem:[#allocation3 + $0x2d0] sm:$0xff] %vm3268, %v3233
        %3300 = vst.msk [vmem:[#allocation3 + $0x2e8] sm:$0xff] %vm3268, %v3235
        %v3302 = vrot.slane %v2666, 1
        %v3303 = vrot.slane %v2667, 1
        %v3304 = vsel %vm685, %v3302, %v3303
        %v3305 = vrot.slane %v2668, 1
        %v3306 = vsel %vm685, %v3303, %v3305
        %3339 = vst.msk [vmem:[#allocation3 + $0x8] sm:$0xff] %vm429, %v2759
        %3340 = vst.msk [vmem:[#allocation3 + $0x20] sm:$0xff] %vm429, %v2761
        %3341 = vst.msk [vmem:[#allocation3 + $0x38] sm:$0xff] %vm429, %v2764
        %3342 = vst.msk [vmem:[#allocation3 + $0x50] sm:$0xff] %vm429, %v2766
        %3343 = vst.msk [vmem:[#allocation3 + $0x68] sm:$0xff] %vm429, %v2769
        %3344 = vst.msk [vmem:[#allocation3 + $0x80] sm:$0xff] %vm429, %v2771
        %3345 = vst.msk [vmem:[#allocation3 + $0x98] sm:$0xff] %vm429, %v2774
        %3346 = vst.msk [vmem:[#allocation3 + $0xb0] sm:$0xff] %vm429, %v2776
        %3347 = vst.msk [vmem:[#allocation3 + $0xc8] sm:$0xff] %vm429, %v2779
        %3348 = vst.msk [vmem:[#allocation3 + $0xe0] sm:$0xff] %vm429, %v2781
        %3349 = vst.msk [vmem:[#allocation3 + $0xf8] sm:$0xff] %vm429, %v2784
        %3350 = vst.msk [vmem:[#allocation3 + $0x110] sm:$0xff] %vm429, %v2786
        %3351 = vst.msk [vmem:[#allocation3 + $0x128] sm:$0xff] %vm429, %v2789
        %3352 = vst.msk [vmem:[#allocation3 + $0x140] sm:$0xff] %vm429, %v2791
        %3353 = vst.msk [vmem:[#allocation3 + $0x158] sm:$0xff] %vm429, %v2794
        %3354 = vst.msk [vmem:[#allocation3 + $0x170] sm:$0xff] %vm429, %v2796
        %3355 = vst.msk [vmem:[#allocation3 + $0x188] sm:$0xff] %vm429, %v2799
        %3356 = vst.msk [vmem:[#allocation3 + $0x1a0] sm:$0xff] %vm429, %v2801
        %3357 = vst.msk [vmem:[#allocation3 + $0x1b8] sm:$0xff] %vm429, %v2804
        %3358 = vst.msk [vmem:[#allocation3 + $0x1d0] sm:$0xff] %vm429, %v2806
        %3359 = vst.msk [vmem:[#allocation3 + $0x1e8] sm:$0xff] %vm429, %v2809
        %3360 = vst.msk [vmem:[#allocation3 + $0x200] sm:$0xff] %vm429, %v2811
        %3361 = vst.msk [vmem:[#allocation3 + $0x218] sm:$0xff] %vm429, %v2814
        %3362 = vst.msk [vmem:[#allocation3 + $0x230] sm:$0xff] %vm429, %v2816
        %3363 = vst.msk [vmem:[#allocation3 + $0x248] sm:$0xff] %vm429, %v2819
        %3364 = vst.msk [vmem:[#allocation3 + $0x260] sm:$0xff] %vm429, %v2821
        %3365 = vst.msk [vmem:[#allocation3 + $0x278] sm:$0xff] %vm429, %v2824
        %3366 = vst.msk [vmem:[#allocation3 + $0x290] sm:$0xff] %vm429, %v2826
        %3367 = vst.msk [vmem:[#allocation3 + $0x2a8] sm:$0xff] %vm429, %v2829
        %3368 = vst.msk [vmem:[#allocation3 + $0x2c0] sm:$0xff] %vm429, %v2831
        %3369 = vst.msk [vmem:[#allocation3 + $0x2d8] sm:$0xff] %vm429, %v3304
        %3370 = vst.msk [vmem:[#allocation3 + $0x2f0] sm:$0xff] %vm429, %v3306
        %v3371 = vrot.slane %v2666, 2
        %v3372 = vrot.slane %v2667, 2
        %v3373 = vsel %vm895, %v3371, %v3372
        %v3374 = vrot.slane %v2668, 2
        %v3375 = vsel %vm895, %v3372, %v3374
        %3376 = vrot.lane.b32.xlu0 %v2968, 32
        %v3377 = vpop.permute.xlu0 %3376
        %3378 = vrot.lane.b32.xlu0 %v2970, 32
        %v3379 = vpop.permute.xlu0 %3378
        %3380 = vrot.lane.b32.xlu0 %v2973, 32
        %v3381 = vpop.permute.xlu0 %3380
        %3382 = vrot.lane.b32.xlu0 %v2975, 32
        %v3383 = vpop.permute.xlu0 %3382
        %3384 = vrot.lane.b32.xlu0 %v2978, 32
        %v3385 = vpop.permute.xlu0 %3384
        %3386 = vrot.lane.b32.xlu0 %v2980, 32
        %v3387 = vpop.permute.xlu0 %3386
        %3388 = vrot.lane.b32.xlu0 %v2983, 32
        %v3389 = vpop.permute.xlu0 %3388
        %3390 = vrot.lane.b32.xlu0 %v2985, 32
        %v3391 = vpop.permute.xlu0 %3390
        %3392 = vrot.lane.b32.xlu0 %v2988, 32
        %v3393 = vpop.permute.xlu0 %3392
        %3394 = vrot.lane.b32.xlu0 %v2990, 32
        %v3395 = vpop.permute.xlu0 %3394
        %3396 = vrot.lane.b32.xlu0 %v2993, 32
        %v3397 = vpop.permute.xlu0 %3396
        %3398 = vrot.lane.b32.xlu0 %v2995, 32
        %v3399 = vpop.permute.xlu0 %3398
        %3400 = vrot.lane.b32.xlu0 %v2998, 32
        %v3401 = vpop.permute.xlu0 %3400
        %3402 = vrot.lane.b32.xlu0 %v3000, 32
        %v3403 = vpop.permute.xlu0 %3402
        %3404 = vrot.lane.b32.xlu0 %v3003, 32
        %v3405 = vpop.permute.xlu0 %3404
        %3406 = vrot.lane.b32.xlu0 %v3005, 32
        %v3407 = vpop.permute.xlu0 %3406
        %3408 = vrot.lane.b32.xlu0 %v3008, 32
        %v3409 = vpop.permute.xlu0 %3408
        %3410 = vrot.lane.b32.xlu0 %v3010, 32
        %v3411 = vpop.permute.xlu0 %3410
        %3412 = vrot.lane.b32.xlu0 %v3013, 32
        %v3413 = vpop.permute.xlu0 %3412
        %3414 = vrot.lane.b32.xlu0 %v3015, 32
        %v3415 = vpop.permute.xlu0 %3414
        %3416 = vrot.lane.b32.xlu0 %v3018, 32
        %v3417 = vpop.permute.xlu0 %3416
        %3418 = vrot.lane.b32.xlu0 %v3020, 32
        %v3419 = vpop.permute.xlu0 %3418
        %3420 = vrot.lane.b32.xlu0 %v3023, 32
        %v3421 = vpop.permute.xlu0 %3420
        %3422 = vrot.lane.b32.xlu0 %v3025, 32
        %v3423 = vpop.permute.xlu0 %3422
        %3424 = vrot.lane.b32.xlu0 %v3028, 32
        %v3425 = vpop.permute.xlu0 %3424
        %3426 = vrot.lane.b32.xlu0 %v3030, 32
        %v3427 = vpop.permute.xlu0 %3426
        %3428 = vrot.lane.b32.xlu0 %v3033, 32
        %v3429 = vpop.permute.xlu0 %3428
        %3430 = vrot.lane.b32.xlu0 %v3035, 32
        %v3431 = vpop.permute.xlu0 %3430
        %3432 = vrot.lane.b32.xlu0 %v3038, 32
        %v3433 = vpop.permute.xlu0 %3432
        %3434 = vrot.lane.b32.xlu0 %v3040, 32
        %v3435 = vpop.permute.xlu0 %3434
        %3436 = vrot.lane.b32.xlu0 %v3373, 32
        %v3437 = vpop.permute.xlu0 %3436
        %3438 = vrot.lane.b32.xlu0 %v3375, 32
        %v3439 = vpop.permute.xlu0 %3438
        %3472 = vst.msk [vmem:[#allocation3 + $0x8] sm:$0xff] %vm2928, %v3377
        %3473 = vst.msk [vmem:[#allocation3 + $0x20] sm:$0xff] %vm2928, %v3379
        %3474 = vst.msk [vmem:[#allocation3 + $0x38] sm:$0xff] %vm2928, %v3381
        %3475 = vst.msk [vmem:[#allocation3 + $0x50] sm:$0xff] %vm2928, %v3383
        %3476 = vst.msk [vmem:[#allocation3 + $0x68] sm:$0xff] %vm2928, %v3385
        %3477 = vst.msk [vmem:[#allocation3 + $0x80] sm:$0xff] %vm2928, %v3387
        %3478 = vst.msk [vmem:[#allocation3 + $0x98] sm:$0xff] %vm2928, %v3389
        %3479 = vst.msk [vmem:[#allocation3 + $0xb0] sm:$0xff] %vm2928, %v3391
        %3480 = vst.msk [vmem:[#allocation3 + $0xc8] sm:$0xff] %vm2928, %v3393
        %3481 = vst.msk [vmem:[#allocation3 + $0xe0] sm:$0xff] %vm2928, %v3395
        %3482 = vst.msk [vmem:[#allocation3 + $0xf8] sm:$0xff] %vm2928, %v3397
        %3483 = vst.msk [vmem:[#allocation3 + $0x110] sm:$0xff] %vm2928, %v3399
        %3484 = vst.msk [vmem:[#allocation3 + $0x128] sm:$0xff] %vm2928, %v3401
        %3485 = vst.msk [vmem:[#allocation3 + $0x140] sm:$0xff] %vm2928, %v3403
        %3486 = vst.msk [vmem:[#allocation3 + $0x158] sm:$0xff] %vm2928, %v3405
        %3487 = vst.msk [vmem:[#allocation3 + $0x170] sm:$0xff] %vm2928, %v3407
        %3488 = vst.msk [vmem:[#allocation3 + $0x188] sm:$0xff] %vm2928, %v3409
        %3489 = vst.msk [vmem:[#allocation3 + $0x1a0] sm:$0xff] %vm2928, %v3411
        %3490 = vst.msk [vmem:[#allocation3 + $0x1b8] sm:$0xff] %vm2928, %v3413
        %3491 = vst.msk [vmem:[#allocation3 + $0x1d0] sm:$0xff] %vm2928, %v3415
        %3492 = vst.msk [vmem:[#allocation3 + $0x1e8] sm:$0xff] %vm2928, %v3417
        %3493 = vst.msk [vmem:[#allocation3 + $0x200] sm:$0xff] %vm2928, %v3419
        %3494 = vst.msk [vmem:[#allocation3 + $0x218] sm:$0xff] %vm2928, %v3421
        %3495 = vst.msk [vmem:[#allocation3 + $0x230] sm:$0xff] %vm2928, %v3423
        %3496 = vst.msk [vmem:[#allocation3 + $0x248] sm:$0xff] %vm2928, %v3425
        %3497 = vst.msk [vmem:[#allocation3 + $0x260] sm:$0xff] %vm2928, %v3427
        %3498 = vst.msk [vmem:[#allocation3 + $0x278] sm:$0xff] %vm2928, %v3429
        %3499 = vst.msk [vmem:[#allocation3 + $0x290] sm:$0xff] %vm2928, %v3431
        %3500 = vst.msk [vmem:[#allocation3 + $0x2a8] sm:$0xff] %vm2928, %v3433
        %3501 = vst.msk [vmem:[#allocation3 + $0x2c0] sm:$0xff] %vm2928, %v3435
        %3502 = vst.msk [vmem:[#allocation3 + $0x2d8] sm:$0xff] %vm2928, %v3437
        %3503 = vst.msk [vmem:[#allocation3 + $0x2f0] sm:$0xff] %vm2928, %v3439
        %3506 = vrot.lane.b32.xlu0 %v2624, 64
        %v3507 = vpop.permute.xlu0 %3506
        %3508 = vrot.lane.b32.xlu0 %v2625, 64
        %v3509 = vpop.permute.xlu0 %3508
        %3510 = vrot.lane.b32.xlu0 %v2627, 64
        %v3511 = vpop.permute.xlu0 %3510
        %3512 = vrot.lane.b32.xlu0 %v2628, 64
        %v3513 = vpop.permute.xlu0 %3512
        %3514 = vrot.lane.b32.xlu0 %v2630, 64
        %v3515 = vpop.permute.xlu0 %3514
        %3516 = vrot.lane.b32.xlu0 %v2631, 64
        %v3517 = vpop.permute.xlu0 %3516
        %3518 = vrot.lane.b32.xlu0 %v2633, 64
        %v3519 = vpop.permute.xlu0 %3518
        %3520 = vrot.lane.b32.xlu0 %v2634, 64
        %v3521 = vpop.permute.xlu0 %3520
        %3522 = vrot.lane.b32.xlu0 %v2636, 64
        %v3523 = vpop.permute.xlu0 %3522
        %3524 = vrot.lane.b32.xlu0 %v2637, 64
        %v3525 = vpop.permute.xlu0 %3524
        %3526 = vrot.lane.b32.xlu0 %v2639, 64
        %v3527 = vpop.permute.xlu0 %3526
        %3528 = vrot.lane.b32.xlu0 %v2640, 64
        %v3529 = vpop.permute.xlu0 %3528
        %3530 = vrot.lane.b32.xlu0 %v2642, 64
        %v3531 = vpop.permute.xlu0 %3530
        %3532 = vrot.lane.b32.xlu0 %v2643, 64
        %v3533 = vpop.permute.xlu0 %3532
        %3534 = vrot.lane.b32.xlu0 %v2645, 64
        %v3535 = vpop.permute.xlu0 %3534
        %3536 = vrot.lane.b32.xlu0 %v2646, 64
        %v3537 = vpop.permute.xlu0 %3536
        %3538 = vrot.lane.b32.xlu0 %v2648, 64
        %v3539 = vpop.permute.xlu0 %3538
        %3540 = vrot.lane.b32.xlu0 %v2649, 64
        %v3541 = vpop.permute.xlu0 %3540
        %3542 = vrot.lane.b32.xlu0 %v2651, 64
        %v3543 = vpop.permute.xlu0 %3542
        %3544 = vrot.lane.b32.xlu0 %v2652, 64
        %v3545 = vpop.permute.xlu0 %3544
        %3546 = vrot.lane.b32.xlu0 %v2654, 64
        %v3547 = vpop.permute.xlu0 %3546
        %3548 = vrot.lane.b32.xlu0 %v2655, 64
        %v3549 = vpop.permute.xlu0 %3548
        %3550 = vrot.lane.b32.xlu0 %v2657, 64
        %v3551 = vpop.permute.xlu0 %3550
        %3552 = vrot.lane.b32.xlu0 %v2658, 64
        %v3553 = vpop.permute.xlu0 %3552
        %3554 = vrot.lane.b32.xlu0 %v2660, 64
        %v3555 = vpop.permute.xlu0 %3554
        %3556 = vrot.lane.b32.xlu0 %v2661, 64
        %v3557 = vpop.permute.xlu0 %3556
        %3558 = vrot.lane.b32.xlu0 %v2663, 64
        %v3559 = vpop.permute.xlu0 %3558
        %3560 = vrot.lane.b32.xlu0 %v2664, 64
        %v3561 = vpop.permute.xlu0 %3560
        %3562 = vrot.lane.b32.xlu0 %v2666, 64
        %v3563 = vpop.permute.xlu0 %3562
        %3564 = vrot.lane.b32.xlu0 %v2667, 64
        %v3565 = vpop.permute.xlu0 %3564
        %3566 = vrot.lane.b32.xlu0 %v2669, 64
        %v3567 = vpop.permute.xlu0 %3566
        %3568 = vrot.lane.b32.xlu0 %v2670, 64
        %v3569 = vpop.permute.xlu0 %3568
        %3602 = vst.msk [vmem:[#allocation3 + $0x8] sm:$0xff] %vm3137, %v3507
        %3603 = vst.msk [vmem:[#allocation3 + $0x20] sm:$0xff] %vm3137, %v3509
        %3604 = vst.msk [vmem:[#allocation3 + $0x38] sm:$0xff] %vm3137, %v3511
        %3605 = vst.msk [vmem:[#allocation3 + $0x50] sm:$0xff] %vm3137, %v3513
        %3606 = vst.msk [vmem:[#allocation3 + $0x68] sm:$0xff] %vm3137, %v3515
        %3607 = vst.msk [vmem:[#allocation3 + $0x80] sm:$0xff] %vm3137, %v3517
        %3608 = vst.msk [vmem:[#allocation3 + $0x98] sm:$0xff] %vm3137, %v3519
        %3609 = vst.msk [vmem:[#allocation3 + $0xb0] sm:$0xff] %vm3137, %v3521
        %3610 = vst.msk [vmem:[#allocation3 + $0xc8] sm:$0xff] %vm3137, %v3523
        %3611 = vst.msk [vmem:[#allocation3 + $0xe0] sm:$0xff] %vm3137, %v3525
        %3612 = vst.msk [vmem:[#allocation3 + $0xf8] sm:$0xff] %vm3137, %v3527
        %3613 = vst.msk [vmem:[#allocation3 + $0x110] sm:$0xff] %vm3137, %v3529
        %3614 = vst.msk [vmem:[#allocation3 + $0x128] sm:$0xff] %vm3137, %v3531
        %3615 = vst.msk [vmem:[#allocation3 + $0x140] sm:$0xff] %vm3137, %v3533
        %3616 = vst.msk [vmem:[#allocation3 + $0x158] sm:$0xff] %vm3137, %v3535
        %3617 = vst.msk [vmem:[#allocation3 + $0x170] sm:$0xff] %vm3137, %v3537
        %3618 = vst.msk [vmem:[#allocation3 + $0x188] sm:$0xff] %vm3137, %v3539
        %3619 = vst.msk [vmem:[#allocation3 + $0x1a0] sm:$0xff] %vm3137, %v3541
        %3620 = vst.msk [vmem:[#allocation3 + $0x1b8] sm:$0xff] %vm3137, %v3543
        %3621 = vst.msk [vmem:[#allocation3 + $0x1d0] sm:$0xff] %vm3137, %v3545
        %3622 = vst.msk [vmem:[#allocation3 + $0x1e8] sm:$0xff] %vm3137, %v3547
        %3623 = vst.msk [vmem:[#allocation3 + $0x200] sm:$0xff] %vm3137, %v3549
        %3624 = vst.msk [vmem:[#allocation3 + $0x218] sm:$0xff] %vm3137, %v3551
        %3625 = vst.msk [vmem:[#allocation3 + $0x230] sm:$0xff] %vm3137, %v3553
        %3626 = vst.msk [vmem:[#allocation3 + $0x248] sm:$0xff] %vm3137, %v3555
        %3627 = vst.msk [vmem:[#allocation3 + $0x260] sm:$0xff] %vm3137, %v3557
        %3628 = vst.msk [vmem:[#allocation3 + $0x278] sm:$0xff] %vm3137, %v3559
        %3629 = vst.msk [vmem:[#allocation3 + $0x290] sm:$0xff] %vm3137, %v3561
        %3630 = vst.msk [vmem:[#allocation3 + $0x2a8] sm:$0xff] %vm3137, %v3563
        %3631 = vst.msk [vmem:[#allocation3 + $0x2c0] sm:$0xff] %vm3137, %v3565
        %3632 = vst.msk [vmem:[#allocation3 + $0x2d8] sm:$0xff] %vm3137, %v3567
        %3633 = vst.msk [vmem:[#allocation3 + $0x2f0] sm:$0xff] %vm3137, %v3569
        %v3635 = vrot.slane %v2669, 1
        %v3636 = vrot.slane %v2670, 1
        %v3637 = vsel %vm685, %v3635, %v3636
        %v3638 = vrot.slane %v2671, 1
        %v3639 = vsel %vm685, %v3636, %v3638
        %3640 = vrot.lane.b32.xlu0 %v2764, 96
        %v3641 = vpop.permute.xlu0 %3640
        %3642 = vrot.lane.b32.xlu0 %v2766, 96
        %v3643 = vpop.permute.xlu0 %3642
        %3644 = vrot.lane.b32.xlu0 %v2769, 96
        %v3645 = vpop.permute.xlu0 %3644
        %3646 = vrot.lane.b32.xlu0 %v2771, 96
        %v3647 = vpop.permute.xlu0 %3646
        %3648 = vrot.lane.b32.xlu0 %v2774, 96
        %v3649 = vpop.permute.xlu0 %3648
        %3650 = vrot.lane.b32.xlu0 %v2776, 96
        %v3651 = vpop.permute.xlu0 %3650
        %3652 = vrot.lane.b32.xlu0 %v2779, 96
        %v3653 = vpop.permute.xlu0 %3652
        %3654 = vrot.lane.b32.xlu0 %v2781, 96
        %v3655 = vpop.permute.xlu0 %3654
        %3656 = vrot.lane.b32.xlu0 %v2784, 96
        %v3657 = vpop.permute.xlu0 %3656
        %3658 = vrot.lane.b32.xlu0 %v2786, 96
        %v3659 = vpop.permute.xlu0 %3658
        %3660 = vrot.lane.b32.xlu0 %v2789, 96
        %v3661 = vpop.permute.xlu0 %3660
        %3662 = vrot.lane.b32.xlu0 %v2791, 96
        %v3663 = vpop.permute.xlu0 %3662
        %3664 = vrot.lane.b32.xlu0 %v2794, 96
        %v3665 = vpop.permute.xlu0 %3664
        %3666 = vrot.lane.b32.xlu0 %v2796, 96
        %v3667 = vpop.permute.xlu0 %3666
        %3668 = vrot.lane.b32.xlu0 %v2799, 96
        %v3669 = vpop.permute.xlu0 %3668
        %3670 = vrot.lane.b32.xlu0 %v2801, 96
        %v3671 = vpop.permute.xlu0 %3670
        %3672 = vrot.lane.b32.xlu0 %v2804, 96
        %v3673 = vpop.permute.xlu0 %3672
        %3674 = vrot.lane.b32.xlu0 %v2806, 96
        %v3675 = vpop.permute.xlu0 %3674
        %3676 = vrot.lane.b32.xlu0 %v2809, 96
        %v3677 = vpop.permute.xlu0 %3676
        %3678 = vrot.lane.b32.xlu0 %v2811, 96
        %v3679 = vpop.permute.xlu0 %3678
        %3680 = vrot.lane.b32.xlu0 %v2814, 96
        %v3681 = vpop.permute.xlu0 %3680
        %3682 = vrot.lane.b32.xlu0 %v2816, 96
        %v3683 = vpop.permute.xlu0 %3682
        %3684 = vrot.lane.b32.xlu0 %v2819, 96
        %v3685 = vpop.permute.xlu0 %3684
        %3686 = vrot.lane.b32.xlu0 %v2821, 96
        %v3687 = vpop.permute.xlu0 %3686
        %3688 = vrot.lane.b32.xlu0 %v2824, 96
        %v3689 = vpop.permute.xlu0 %3688
        %3690 = vrot.lane.b32.xlu0 %v2826, 96
        %v3691 = vpop.permute.xlu0 %3690
        %3692 = vrot.lane.b32.xlu0 %v2829, 96
        %v3693 = vpop.permute.xlu0 %3692
        %3694 = vrot.lane.b32.xlu0 %v2831, 96
        %v3695 = vpop.permute.xlu0 %3694
        %3696 = vrot.lane.b32.xlu0 %v3304, 96
        %v3697 = vpop.permute.xlu0 %3696
        %3698 = vrot.lane.b32.xlu0 %v3306, 96
        %v3699 = vpop.permute.xlu0 %3698
        %3700 = vrot.lane.b32.xlu0 %v3637, 96
        %v3701 = vpop.permute.xlu0 %3700
        %3702 = vrot.lane.b32.xlu0 %v3639, 96
        %v3703 = vpop.permute.xlu0 %3702
        %3736 = vst.msk [vmem:[#allocation3 + $0x8] sm:$0xff] %vm3268, %v3641
        %3737 = vst.msk [vmem:[#allocation3 + $0x20] sm:$0xff] %vm3268, %v3643
        %3738 = vst.msk [vmem:[#allocation3 + $0x38] sm:$0xff] %vm3268, %v3645
        %3739 = vst.msk [vmem:[#allocation3 + $0x50] sm:$0xff] %vm3268, %v3647
        %3740 = vst.msk [vmem:[#allocation3 + $0x68] sm:$0xff] %vm3268, %v3649
        %3741 = vst.msk [vmem:[#allocation3 + $0x80] sm:$0xff] %vm3268, %v3651
        %3742 = vst.msk [vmem:[#allocation3 + $0x98] sm:$0xff] %vm3268, %v3653
        %3743 = vst.msk [vmem:[#allocation3 + $0xb0] sm:$0xff] %vm3268, %v3655
        %3744 = vst.msk [vmem:[#allocation3 + $0xc8] sm:$0xff] %vm3268, %v3657
        %3745 = vst.msk [vmem:[#allocation3 + $0xe0] sm:$0xff] %vm3268, %v3659
        %3746 = vst.msk [vmem:[#allocation3 + $0xf8] sm:$0xff] %vm3268, %v3661
        %3747 = vst.msk [vmem:[#allocation3 + $0x110] sm:$0xff] %vm3268, %v3663
        %3748 = vst.msk [vmem:[#allocation3 + $0x128] sm:$0xff] %vm3268, %v3665
        %3749 = vst.msk [vmem:[#allocation3 + $0x140] sm:$0xff] %vm3268, %v3667
        %3750 = vst.msk [vmem:[#allocation3 + $0x158] sm:$0xff] %vm3268, %v3669
        %3751 = vst.msk [vmem:[#allocation3 + $0x170] sm:$0xff] %vm3268, %v3671
        %3752 = vst.msk [vmem:[#allocation3 + $0x188] sm:$0xff] %vm3268, %v3673
        %3753 = vst.msk [vmem:[#allocation3 + $0x1a0] sm:$0xff] %vm3268, %v3675
        %3754 = vst.msk [vmem:[#allocation3 + $0x1b8] sm:$0xff] %vm3268, %v3677
        %3755 = vst.msk [vmem:[#allocation3 + $0x1d0] sm:$0xff] %vm3268, %v3679
        %3756 = vst.msk [vmem:[#allocation3 + $0x1e8] sm:$0xff] %vm3268, %v3681
        %3757 = vst.msk [vmem:[#allocation3 + $0x200] sm:$0xff] %vm3268, %v3683
        %3758 = vst.msk [vmem:[#allocation3 + $0x218] sm:$0xff] %vm3268, %v3685
        %3759 = vst.msk [vmem:[#allocation3 + $0x230] sm:$0xff] %vm3268, %v3687
        %3760 = vst.msk [vmem:[#allocation3 + $0x248] sm:$0xff] %vm3268, %v3689
        %3761 = vst.msk [vmem:[#allocation3 + $0x260] sm:$0xff] %vm3268, %v3691
        %3762 = vst.msk [vmem:[#allocation3 + $0x278] sm:$0xff] %vm3268, %v3693
        %3763 = vst.msk [vmem:[#allocation3 + $0x290] sm:$0xff] %vm3268, %v3695
        %3764 = vst.msk [vmem:[#allocation3 + $0x2a8] sm:$0xff] %vm3268, %v3697
        %3765 = vst.msk [vmem:[#allocation3 + $0x2c0] sm:$0xff] %vm3268, %v3699
        %3766 = vst.msk [vmem:[#allocation3 + $0x2d8] sm:$0xff] %vm3268, %v3701
        %3767 = vst.msk [vmem:[#allocation3 + $0x2f0] sm:$0xff] %vm3268, %v3703
        %v3768 = vrot.slane %v2669, 2
        %v3769 = vrot.slane %v2670, 2
        %v3770 = vsel %vm895, %v3768, %v3769
        %v3771 = vrot.slane %v2671, 2
        %v3772 = vsel %vm895, %v3769, %v3771
        %3805 = vst.msk [vmem:[#allocation3 + $0x10] sm:$0xff] %vm429, %v2973
        %3806 = vst.msk [vmem:[#allocation3 + $0x28] sm:$0xff] %vm429, %v2975
        %3807 = vst.msk [vmem:[#allocation3 + $0x40] sm:$0xff] %vm429, %v2978
        %3808 = vst.msk [vmem:[#allocation3 + $0x58] sm:$0xff] %vm429, %v2980
        %3809 = vst.msk [vmem:[#allocation3 + $0x70] sm:$0xff] %vm429, %v2983
        %3810 = vst.msk [vmem:[#allocation3 + $0x88] sm:$0xff] %vm429, %v2985
        %3811 = vst.msk [vmem:[#allocation3 + $0xa0] sm:$0xff] %vm429, %v2988
        %3812 = vst.msk [vmem:[#allocation3 + $0xb8] sm:$0xff] %vm429, %v2990
        %3813 = vst.msk [vmem:[#allocation3 + $0xd0] sm:$0xff] %vm429, %v2993
        %3814 = vst.msk [vmem:[#allocation3 + $0xe8] sm:$0xff] %vm429, %v2995
        %3815 = vst.msk [vmem:[#allocation3 + $0x100] sm:$0xff] %vm429, %v2998
        %3816 = vst.msk [vmem:[#allocation3 + $0x118] sm:$0xff] %vm429, %v3000
        %3817 = vst.msk [vmem:[#allocation3 + $0x130] sm:$0xff] %vm429, %v3003
        %3818 = vst.msk [vmem:[#allocation3 + $0x148] sm:$0xff] %vm429, %v3005
        %3819 = vst.msk [vmem:[#allocation3 + $0x160] sm:$0xff] %vm429, %v3008
        %3820 = vst.msk [vmem:[#allocation3 + $0x178] sm:$0xff] %vm429, %v3010
        %3821 = vst.msk [vmem:[#allocation3 + $0x190] sm:$0xff] %vm429, %v3013
        %3822 = vst.msk [vmem:[#allocation3 + $0x1a8] sm:$0xff] %vm429, %v3015
        %3823 = vst.msk [vmem:[#allocation3 + $0x1c0] sm:$0xff] %vm429, %v3018
        %3824 = vst.msk [vmem:[#allocation3 + $0x1d8] sm:$0xff] %vm429, %v3020
        %3825 = vst.msk [vmem:[#allocation3 + $0x1f0] sm:$0xff] %vm429, %v3023
        %3826 = vst.msk [vmem:[#allocation3 + $0x208] sm:$0xff] %vm429, %v3025
        %3827 = vst.msk [vmem:[#allocation3 + $0x220] sm:$0xff] %vm429, %v3028
        %3828 = vst.msk [vmem:[#allocation3 + $0x238] sm:$0xff] %vm429, %v3030
        %3829 = vst.msk [vmem:[#allocation3 + $0x250] sm:$0xff] %vm429, %v3033
        %3830 = vst.msk [vmem:[#allocation3 + $0x268] sm:$0xff] %vm429, %v3035
        %3831 = vst.msk [vmem:[#allocation3 + $0x280] sm:$0xff] %vm429, %v3038
        %3832 = vst.msk [vmem:[#allocation3 + $0x298] sm:$0xff] %vm429, %v3040
        %3833 = vst.msk [vmem:[#allocation3 + $0x2b0] sm:$0xff] %vm429, %v3373
        %3834 = vst.msk [vmem:[#allocation3 + $0x2c8] sm:$0xff] %vm429, %v3375
        %3835 = vst.msk [vmem:[#allocation3 + $0x2e0] sm:$0xff] %vm429, %v3770
        %3836 = vst.msk [vmem:[#allocation3 + $0x2f8] sm:$0xff] %vm429, %v3772
        %v3837 = vld [vmem:[#allocation3] sm:$0xff]
        %v3838 = vld [vmem:[#allocation3 + $0x18] sm:$0xff]
        %v3839 = vld [vmem:[#allocation3 + $0x30] sm:$0xff]
        %v3840 = vld [vmem:[#allocation3 + $0x48] sm:$0xff]
        %v3841 = vld [vmem:[#allocation3 + $0x60] sm:$0xff]
        %v3842 = vld [vmem:[#allocation3 + $0x78] sm:$0xff]
        %v3843 = vld [vmem:[#allocation3 + $0x90] sm:$0xff]
        %v3844 = vld [vmem:[#allocation3 + $0xa8] sm:$0xff]
        %v3845 = vld [vmem:[#allocation3 + $0xc0] sm:$0xff]
        %v3846 = vld [vmem:[#allocation3 + $0xd8] sm:$0xff]
        %v3847 = vld [vmem:[#allocation3 + $0xf0] sm:$0xff]
        %v3848 = vld [vmem:[#allocation3 + $0x108] sm:$0xff]
        %v3849 = vld [vmem:[#allocation3 + $0x120] sm:$0xff]
        %v3850 = vld [vmem:[#allocation3 + $0x138] sm:$0xff]
        %v3851 = vld [vmem:[#allocation3 + $0x150] sm:$0xff]
        %v3852 = vld [vmem:[#allocation3 + $0x168] sm:$0xff]
        %v3853 = vld [vmem:[#allocation3 + $0x180] sm:$0xff]
        %v3854 = vld [vmem:[#allocation3 + $0x198] sm:$0xff]
        %v3855 = vld [vmem:[#allocation3 + $0x1b0] sm:$0xff]
        %v3856 = vld [vmem:[#allocation3 + $0x1c8] sm:$0xff]
        %v3857 = vld [vmem:[#allocation3 + $0x1e0] sm:$0xff]
        %v3858 = vld [vmem:[#allocation3 + $0x1f8] sm:$0xff]
        %v3859 = vld [vmem:[#allocation3 + $0x210] sm:$0xff]
        %v3860 = vld [vmem:[#allocation3 + $0x228] sm:$0xff]
        %v3861 = vld [vmem:[#allocation3 + $0x240] sm:$0xff]
        %v3862 = vld [vmem:[#allocation3 + $0x258] sm:$0xff]
        %v3863 = vld [vmem:[#allocation3 + $0x270] sm:$0xff]
        %v3864 = vld [vmem:[#allocation3 + $0x288] sm:$0xff]
        %v3865 = vld [vmem:[#allocation3 + $0x2a0] sm:$0xff]
        %v3866 = vld [vmem:[#allocation3 + $0x2b8] sm:$0xff]
        %v3867 = vld [vmem:[#allocation3 + $0x2d0] sm:$0xff]
        %v3868 = vld [vmem:[#allocation3 + $0x2e8] sm:$0xff]
        %v3869 = vld [vmem:[%s4] sm:$0xff]
        %v3870 = vld [vmem:[%s4 + $0x8] sm:$0xff]
        %v3871 = vld [vmem:[%s4 + $0x10] sm:$0xff]
        %v3872 = vld [vmem:[%s4 + $0x18] sm:$0xff]
        %v3873 = vld [vmem:[%s4 + $0x20] sm:$0xff]
        %v3874 = vld [vmem:[%s4 + $0x28] sm:$0xff]
        %v3875 = vld [vmem:[%s4 + $0x30] sm:$0xff]
        %v3876 = vld [vmem:[%s4 + $0x38] sm:$0xff]
        %v3877 = vld [vmem:[%s4 + $0x40] sm:$0xff]
        %v3878 = vld [vmem:[%s4 + $0x48] sm:$0xff]
        %v3879 = vld [vmem:[%s4 + $0x50] sm:$0xff]
        %v3880 = vld [vmem:[%s4 + $0x58] sm:$0xff]
        %v3881 = vld [vmem:[%s4 + $0x60] sm:$0xff]
        %v3882 = vld [vmem:[%s4 + $0x68] sm:$0xff]
        %v3883 = vld [vmem:[%s4 + $0x70] sm:$0xff]
        %v3884 = vld [vmem:[%s4 + $0x78] sm:$0xff]
        %v3885 = vld [vmem:[#allocation3 + $0x8] sm:$0xff]
        %v3886 = vld [vmem:[#allocation3 + $0x20] sm:$0xff]
        %v3887 = vld [vmem:[#allocation3 + $0x38] sm:$0xff]
        %v3888 = vld [vmem:[#allocation3 + $0x50] sm:$0xff]
        %v3889 = vld [vmem:[#allocation3 + $0x68] sm:$0xff]
        %v3890 = vld [vmem:[#allocation3 + $0x80] sm:$0xff]
        %v3891 = vld [vmem:[#allocation3 + $0x98] sm:$0xff]
        %v3892 = vld [vmem:[#allocation3 + $0xb0] sm:$0xff]
        %v3893 = vld [vmem:[#allocation3 + $0xc8] sm:$0xff]
        %v3894 = vld [vmem:[#allocation3 + $0xe0] sm:$0xff]
        %v3895 = vld [vmem:[#allocation3 + $0xf8] sm:$0xff]
        %v3896 = vld [vmem:[#allocation3 + $0x110] sm:$0xff]
        %v3897 = vld [vmem:[#allocation3 + $0x128] sm:$0xff]
        %v3898 = vld [vmem:[#allocation3 + $0x140] sm:$0xff]
        %v3899 = vld [vmem:[#allocation3 + $0x158] sm:$0xff]
        %v3900 = vld [vmem:[#allocation3 + $0x170] sm:$0xff]
        %v3901 = vld [vmem:[#allocation3 + $0x188] sm:$0xff]
        %v3902 = vld [vmem:[#allocation3 + $0x1a0] sm:$0xff]
        %v3903 = vld [vmem:[#allocation3 + $0x1b8] sm:$0xff]
        %v3904 = vld [vmem:[#allocation3 + $0x1d0] sm:$0xff]
        %v3905 = vld [vmem:[#allocation3 + $0x1e8] sm:$0xff]
        %v3906 = vld [vmem:[#allocation3 + $0x200] sm:$0xff]
        %v3907 = vld [vmem:[#allocation3 + $0x218] sm:$0xff]
        %v3908 = vld [vmem:[#allocation3 + $0x230] sm:$0xff]
        %v3909 = vld [vmem:[#allocation3 + $0x248] sm:$0xff]
        %v3910 = vld [vmem:[#allocation3 + $0x260] sm:$0xff]
        %v3911 = vld [vmem:[#allocation3 + $0x278] sm:$0xff]
        %v3912 = vld [vmem:[#allocation3 + $0x290] sm:$0xff]
        %v3913 = vld [vmem:[#allocation3 + $0x2a8] sm:$0xff]
        %v3914 = vld [vmem:[#allocation3 + $0x2c0] sm:$0xff]
        %v3915 = vld [vmem:[#allocation3 + $0x2d8] sm:$0xff]
        %v3916 = vld [vmem:[#allocation3 + $0x2f0] sm:$0xff]
        %v3917 = vld [vmem:[%s4 + $0x80] sm:$0xff]
        %v3918 = vld [vmem:[%s4 + $0x88] sm:$0xff]
        %v3919 = vld [vmem:[%s4 + $0x90] sm:$0xff]
        %v3920 = vld [vmem:[%s4 + $0x98] sm:$0xff]
        %v3921 = vld [vmem:[%s4 + $0xa0] sm:$0xff]
        %v3922 = vld [vmem:[%s4 + $0xa8] sm:$0xff]
        %v3923 = vld [vmem:[%s4 + $0xb0] sm:$0xff]
        %v3924 = vld [vmem:[%s4 + $0xb8] sm:$0xff]
        %v3925 = vld [vmem:[%s4 + $0xc0] sm:$0xff]
        %v3926 = vld [vmem:[%s4 + $0xc8] sm:$0xff]
        %v3927 = vld [vmem:[%s4 + $0xd0] sm:$0xff]
        %v3928 = vld [vmem:[%s4 + $0xd8] sm:$0xff]
        %v3929 = vld [vmem:[%s4 + $0xe0] sm:$0xff]
        %v3930 = vld [vmem:[%s4 + $0xe8] sm:$0xff]
        %v3931 = vld [vmem:[%s4 + $0xf0] sm:$0xff]
        %v3932 = vld [vmem:[%s4 + $0xf8] sm:$0xff]
        %3933 = vmatprep.subr.mxu0 0.0
        %3934 = vmatpush1.msra.mxu0 %v3917
        %3935 = vmatprep.subr.mxu0 0.0
        %3936 = vmatpush1.msra.mxu0 %v3918
        %3937 = vmatprep.subr.mxu0 0.0
        %3938 = vmatpush1.msra.mxu0 %v3919
        %3939 = vmatprep.subr.mxu0 0.0
        %3940 = vmatpush1.msra.mxu0 %v3920
        %3941 = vmatprep.subr.mxu0 0.0
        %3942 = vmatpush1.msra.mxu0 %v3921
        %3943 = vmatprep.subr.mxu0 0.0
        %3944 = vmatpush1.msra.mxu0 %v3922
        %3945 = vmatprep.subr.mxu0 0.0
        %3946 = vmatpush1.msra.mxu0 %v3923
        %3947 = vmatprep.subr.mxu0 0.0
        %3948 = vmatpush1.msra.mxu0 %v3924
        %3949 = vmatprep.subr.mxu0 0.0
        %3950 = vmatpush1.msra.mxu0 %v3925
        %3951 = vmatprep.subr.mxu0 0.0
        %3952 = vmatpush1.msra.mxu0 %v3926
        %3953 = vmatprep.subr.mxu0 0.0
        %3954 = vmatpush1.msra.mxu0 %v3927
        %3955 = vmatprep.subr.mxu0 0.0
        %3956 = vmatpush1.msra.mxu0 %v3928
        %3957 = vmatprep.subr.mxu0 0.0
        %3958 = vmatpush1.msra.mxu0 %v3929
        %3959 = vmatprep.subr.mxu0 0.0
        %3960 = vmatpush1.msra.mxu0 %v3930
        %3961 = vmatprep.subr.mxu0 0.0
        %3962 = vmatpush1.msra.mxu0 %v3931
        %3963 = vmatprep.subr.mxu0 0.0
        %3964 = vmatpush1.msra.mxu0 %v3932
        %3965 = vmatprep.subr.mxu0 0.0
        %3966 = vmatpush1.msra.mxu0 0.0
        %3967 = vmatprep.subr.mxu0 0.0
        %3968 = vmatpush1.msra.mxu0 0.0
        %3969 = vmatprep.subr.mxu0 0.0
        %3970 = vmatpush1.msra.mxu0 0.0
        %3971 = vmatprep.subr.mxu0 0.0
        %3972 = vmatpush1.msra.mxu0 0.0
        %3973 = vmatprep.subr.mxu0 0.0
        %3974 = vmatpush1.msra.mxu0 0.0
        %3975 = vmatprep.subr.mxu0 0.0
        %3976 = vmatpush1.msra.mxu0 0.0
        %3977 = vmatprep.subr.mxu0 0.0
        %3978 = vmatpush1.msra.mxu0 0.0
        %3979 = vmatprep.subr.mxu0 0.0
        %3980 = vmatpush1.msra.mxu0 0.0
        %3981 = vmatprep.subr.mxu0 0.0
        %3982 = vmatpush1.msra.mxu0 0.0
        %3983 = vmatprep.subr.mxu0 0.0
        %3984 = vmatpush1.msra.mxu0 0.0
        %3985 = vmatprep.subr.mxu0 0.0
        %3986 = vmatpush1.msra.mxu0 0.0
        %3987 = vmatprep.subr.mxu0 0.0
        %3988 = vmatpush1.msra.mxu0 0.0
        %3989 = vmatprep.subr.mxu0 0.0
        %3990 = vmatpush1.msra.mxu0 0.0
        %3991 = vmatprep.subr.mxu0 0.0
        %3992 = vmatpush1.msra.mxu0 0.0
        %3993 = vmatprep.subr.mxu0 0.0
        %3994 = vmatpush1.msra.mxu0 0.0
        %3995 = vmatprep.subr.mxu0 0.0
        %3996 = vmatpush1.msra.mxu0 0.0
        %3997 = vmatprep.mubr.f32.mxu0 0.0
        %3998 = vmatmul.mubr.f32.gmra.mrb[0].mxu0 %v3885
        %v3999 = vpop.f32.mrb[0].mxu0
        %v4000 = vadd.f32 0.0, %v3999
        %v4001 = vpop.f32.mrb[0].mxu0
        %4002 = vmatprep.mubr.f32.mxu0 0.0
        %4003 = vmatmul.mubr.f32.gmra.mrb[0].mxu0 %v3886
        %v4004 = vpop.f32.mrb[0].mxu0
        %v4005 = vadd.f32 0.0, %v4004
        %v4006 = vpop.f32.mrb[0].mxu0
        %4007 = vmatprep.mubr.f32.mxu0 0.0
        %4008 = vmatmul.mubr.f32.gmra.mrb[0].mxu0 %v3887
        %v4009 = vpop.f32.mrb[0].mxu0
        %v4010 = vadd.f32 0.0, %v4009
        %v4011 = vpop.f32.mrb[0].mxu0
        %4012 = vmatprep.mubr.f32.mxu0 0.0
        %4013 = vmatmul.mubr.f32.gmra.mrb[0].mxu0 %v3888
        %v4014 = vpop.f32.mrb[0].mxu0
        %v4015 = vadd.f32 0.0, %v4014
        %v4016 = vpop.f32.mrb[0].mxu0
        %4017 = vmatprep.mubr.f32.mxu0 0.0
        %4018 = vmatmul.mubr.f32.gmra.mrb[0].mxu0 %v3889
        %v4019 = vpop.f32.mrb[0].mxu0
        %v4020 = vadd.f32 0.0, %v4019
        %v4021 = vpop.f32.mrb[0].mxu0
        %4022 = vmatprep.mubr.f32.mxu0 0.0
        %4023 = vmatmul.mubr.f32.gmra.mrb[0].mxu0 %v3890
        %v4024 = vpop.f32.mrb[0].mxu0
        %v4025 = vadd.f32 0.0, %v4024
        %v4026 = vpop.f32.mrb[0].mxu0
        %4027 = vmatprep.mubr.f32.mxu0 0.0
        %4028 = vmatmul.mubr.f32.gmra.mrb[0].mxu0 %v3891
        %v4029 = vpop.f32.mrb[0].mxu0
        %v4030 = vadd.f32 0.0, %v4029
        %v4031 = vpop.f32.mrb[0].mxu0
        %4032 = vmatprep.mubr.f32.mxu0 0.0
        %4033 = vmatmul.mubr.f32.gmra.mrb[0].mxu0 %v3892
        %v4034 = vpop.f32.mrb[0].mxu0
        %v4035 = vadd.f32 0.0, %v4034
        %v4036 = vpop.f32.mrb[0].mxu0
        %4037 = vmatprep.mubr.f32.mxu0 0.0
        %4038 = vmatmul.mubr.f32.gmra.mrb[0].mxu0 %v3893
        %v4039 = vpop.f32.mrb[0].mxu0
        %v4040 = vadd.f32 0.0, %v4039
        %v4041 = vpop.f32.mrb[0].mxu0
        %4042 = vmatprep.mubr.f32.mxu0 0.0
        %4043 = vmatmul.mubr.f32.gmra.mrb[0].mxu0 %v3894
        %v4044 = vpop.f32.mrb[0].mxu0
        %v4045 = vadd.f32 0.0, %v4044
        %v4046 = vpop.f32.mrb[0].mxu0
        %4047 = vmatprep.mubr.f32.mxu0 0.0
        %4048 = vmatmul.mubr.f32.gmra.mrb[0].mxu0 %v3895
        %v4049 = vpop.f32.mrb[0].mxu0
        %v4050 = vadd.f32 0.0, %v4049
        %v4051 = vpop.f32.mrb[0].mxu0
        %4052 = vmatprep.mubr.f32.mxu0 0.0
        %4053 = vmatmul.mubr.f32.gmra.mrb[0].mxu0 %v3896
        %v4054 = vpop.f32.mrb[0].mxu0
        %v4055 = vadd.f32 0.0, %v4054
        %v4056 = vpop.f32.mrb[0].mxu0
        %4057 = vmatprep.mubr.f32.mxu0 0.0
        %4058 = vmatmul.mubr.f32.gmra.mrb[0].mxu0 %v3897
        %v4059 = vpop.f32.mrb[0].mxu0
        %v4060 = vadd.f32 0.0, %v4059
        %v4061 = vpop.f32.mrb[0].mxu0
        %4062 = vmatprep.mubr.f32.mxu0 0.0
        %4063 = vmatmul.mubr.f32.gmra.mrb[0].mxu0 %v3898
        %v4064 = vpop.f32.mrb[0].mxu0
        %v4065 = vadd.f32 0.0, %v4064
        %v4066 = vpop.f32.mrb[0].mxu0
        %4067 = vmatprep.mubr.f32.mxu0 0.0
        %4068 = vmatmul.mubr.f32.gmra.mrb[0].mxu0 %v3899
        %v4069 = vpop.f32.mrb[0].mxu0
        %v4070 = vadd.f32 0.0, %v4069
        %v4071 = vpop.f32.mrb[0].mxu0
        %4072 = vmatprep.mubr.f32.mxu0 0.0
        %4073 = vmatmul.mubr.f32.gmra.mrb[0].mxu0 %v3900
        %v4074 = vpop.f32.mrb[0].mxu0
        %v4075 = vadd.f32 0.0, %v4074
        %v4076 = vpop.f32.mrb[0].mxu0
        %4077 = vmatprep.mubr.f32.mxu0 0.0
        %4078 = vmatmul.mubr.f32.gmra.mrb[0].mxu0 %v3901
        %v4079 = vpop.f32.mrb[0].mxu0
        %v4080 = vadd.f32 0.0, %v4079
        %v4081 = vpop.f32.mrb[0].mxu0
        %4082 = vmatprep.mubr.f32.mxu0 0.0
        %4083 = vmatmul.mubr.f32.gmra.mrb[0].mxu0 %v3902
        %v4084 = vpop.f32.mrb[0].mxu0
        %v4085 = vadd.f32 0.0, %v4084
        %v4086 = vpop.f32.mrb[0].mxu0
        %4087 = vmatprep.mubr.f32.mxu0 0.0
        %4088 = vmatmul.mubr.f32.gmra.mrb[0].mxu0 %v3903
        %v4089 = vpop.f32.mrb[0].mxu0
        %v4090 = vadd.f32 0.0, %v4089
        %v4091 = vpop.f32.mrb[0].mxu0
        %4092 = vmatprep.mubr.f32.mxu0 0.0
        %4093 = vmatmul.mubr.f32.gmra.mrb[0].mxu0 %v3904
        %v4094 = vpop.f32.mrb[0].mxu0
        %v4095 = vadd.f32 0.0, %v4094
        %v4096 = vpop.f32.mrb[0].mxu0
        %4097 = vmatprep.mubr.f32.mxu0 0.0
        %4098 = vmatmul.mubr.f32.gmra.mrb[0].mxu0 %v3905
        %v4099 = vpop.f32.mrb[0].mxu0
        %v4100 = vadd.f32 0.0, %v4099
        %v4101 = vpop.f32.mrb[0].mxu0
        %4102 = vmatprep.mubr.f32.mxu0 0.0
        %4103 = vmatmul.mubr.f32.gmra.mrb[0].mxu0 %v3906
        %v4104 = vpop.f32.mrb[0].mxu0
        %v4105 = vadd.f32 0.0, %v4104
        %v4106 = vpop.f32.mrb[0].mxu0
        %4107 = vmatprep.mubr.f32.mxu0 0.0
        %4108 = vmatmul.mubr.f32.gmra.mrb[0].mxu0 %v3907
        %v4109 = vpop.f32.mrb[0].mxu0
        %v4110 = vadd.f32 0.0, %v4109
        %v4111 = vpop.f32.mrb[0].mxu0
        %4112 = vmatprep.mubr.f32.mxu0 0.0
        %4113 = vmatmul.mubr.f32.gmra.mrb[0].mxu0 %v3908
        %v4114 = vpop.f32.mrb[0].mxu0
        %v4115 = vadd.f32 0.0, %v4114
        %v4116 = vpop.f32.mrb[0].mxu0
        %4117 = vmatprep.mubr.f32.mxu0 0.0
        %4118 = vmatmul.mubr.f32.gmra.mrb[0].mxu0 %v3909
        %v4119 = vpop.f32.mrb[0].mxu0
        %v4120 = vadd.f32 0.0, %v4119
        %v4121 = vpop.f32.mrb[0].mxu0
        %4122 = vmatprep.mubr.f32.mxu0 0.0
        %4123 = vmatmul.mubr.f32.gmra.mrb[0].mxu0 %v3910
        %v4124 = vpop.f32.mrb[0].mxu0
        %v4125 = vadd.f32 0.0, %v4124
        %v4126 = vpop.f32.mrb[0].mxu0
        %4127 = vmatprep.mubr.f32.mxu0 0.0
        %4128 = vmatmul.mubr.f32.gmra.mrb[0].mxu0 %v3911
        %v4129 = vpop.f32.mrb[0].mxu0
        %v4130 = vadd.f32 0.0, %v4129
        %v4131 = vpop.f32.mrb[0].mxu0
        %4132 = vmatprep.mubr.f32.mxu0 0.0
        %4133 = vmatmul.mubr.f32.gmra.mrb[0].mxu0 %v3912
        %v4134 = vpop.f32.mrb[0].mxu0
        %v4135 = vadd.f32 0.0, %v4134
        %v4136 = vpop.f32.mrb[0].mxu0
        %4137 = vmatprep.mubr.f32.mxu0 0.0
        %4138 = vmatmul.mubr.f32.gmra.mrb[0].mxu0 %v3913
        %v4139 = vpop.f32.mrb[0].mxu0
        %v4140 = vadd.f32 0.0, %v4139
        %v4141 = vpop.f32.mrb[0].mxu0
        %4142 = vmatprep.mubr.f32.mxu0 0.0
        %4143 = vmatmul.mubr.f32.gmra.mrb[0].mxu0 %v3914
        %v4144 = vpop.f32.mrb[0].mxu0
        %v4145 = vadd.f32 0.0, %v4144
        %v4146 = vpop.f32.mrb[0].mxu0
        %4147 = vmatprep.mubr.f32.mxu0 0.0
        %4148 = vmatmul.mubr.f32.gmra.mrb[0].mxu0 %v3915
        %v4149 = vpop.f32.mrb[0].mxu0
        %v4150 = vadd.f32 0.0, %v4149
        %v4151 = vpop.f32.mrb[0].mxu0
        %4152 = vmatprep.mubr.f32.mxu0 0.0
        %4153 = vmatmul.mubr.f32.gmra.mrb[0].mxu0 %v3916
        %v4154 = vpop.f32.mrb[0].mxu0
        %v4155 = vadd.f32 0.0, %v4154
        %v4156 = vpop.f32.mrb[0].mxu0
        %4157 = vdwg.mxu0
        %4158 = vmatprep.subr.mxu0 0.0
        %4159 = vmatpush1.msra.mxu0 %v3869
        %4160 = vmatprep.subr.mxu0 0.0
        %4161 = vmatpush1.msra.mxu0 %v3870
        %4162 = vmatprep.subr.mxu0 0.0
        %4163 = vmatpush1.msra.mxu0 %v3871
        %4164 = vmatprep.subr.mxu0 0.0
        %4165 = vmatpush1.msra.mxu0 %v3872
        %4166 = vmatprep.subr.mxu0 0.0
        %4167 = vmatpush1.msra.mxu0 %v3873
        %4168 = vmatprep.subr.mxu0 0.0
        %4169 = vmatpush1.msra.mxu0 %v3874
        %4170 = vmatprep.subr.mxu0 0.0
        %4171 = vmatpush1.msra.mxu0 %v3875
        %4172 = vmatprep.subr.mxu0 0.0
        %4173 = vmatpush1.msra.mxu0 %v3876
        %4174 = vmatprep.subr.mxu0 0.0
        %4175 = vmatpush1.msra.mxu0 %v3877
        %4176 = vmatprep.subr.mxu0 0.0
        %4177 = vmatpush1.msra.mxu0 %v3878
        %4178 = vmatprep.subr.mxu0 0.0
        %4179 = vmatpush1.msra.mxu0 %v3879
        %4180 = vmatprep.subr.mxu0 0.0
        %4181 = vmatpush1.msra.mxu0 %v3880
        %4182 = vmatprep.subr.mxu0 0.0
        %4183 = vmatpush1.msra.mxu0 %v3881
        %4184 = vmatprep.subr.mxu0 0.0
        %4185 = vmatpush1.msra.mxu0 %v3882
        %4186 = vmatprep.subr.mxu0 0.0
        %4187 = vmatpush1.msra.mxu0 %v3883
        %4188 = vmatprep.subr.mxu0 0.0
        %4189 = vmatpush1.msra.mxu0 %v3884
        %4190 = vmatprep.subr.mxu0 0.0
        %4191 = vmatpush1.msra.mxu0 0.0
        %4192 = vmatprep.subr.mxu0 0.0
        %4193 = vmatpush1.msra.mxu0 0.0
        %4194 = vmatprep.subr.mxu0 0.0
        %4195 = vmatpush1.msra.mxu0 0.0
        %4196 = vmatprep.subr.mxu0 0.0
        %4197 = vmatpush1.msra.mxu0 0.0
        %4198 = vmatprep.subr.mxu0 0.0
        %4199 = vmatpush1.msra.mxu0 0.0
        %4200 = vmatprep.subr.mxu0 0.0
        %4201 = vmatpush1.msra.mxu0 0.0
        %4202 = vmatprep.subr.mxu0 0.0
        %4203 = vmatpush1.msra.mxu0 0.0
        %4204 = vmatprep.subr.mxu0 0.0
        %4205 = vmatpush1.msra.mxu0 0.0
        %4206 = vmatprep.subr.mxu0 0.0
        %4207 = vmatpush1.msra.mxu0 0.0
        %4208 = vmatprep.subr.mxu0 0.0
        %4209 = vmatpush1.msra.mxu0 0.0
        %4210 = vmatprep.subr.mxu0 0.0
        %4211 = vmatpush1.msra.mxu0 0.0
        %4212 = vmatprep.subr.mxu0 0.0
        %4213 = vmatpush1.msra.mxu0 0.0
        %4214 = vmatprep.subr.mxu0 0.0
        %4215 = vmatpush1.msra.mxu0 0.0
        %4216 = vmatprep.subr.mxu0 0.0
        %4217 = vmatpush1.msra.mxu0 0.0
        %4218 = vmatprep.subr.mxu0 0.0
        %4219 = vmatpush1.msra.mxu0 0.0
        %4220 = vmatprep.subr.mxu0 0.0
        %4221 = vmatpush1.msra.mxu0 0.0
        %4222 = vmatprep.mubr.f32.mxu0 0.0
        %4223 = vmatmul.mubr.f32.gmra.mrb[0].mxu0 %v3837
        %v4224 = vpop.f32.mrb[0].mxu0
        %v4225 = vadd.f32 %v4000, %v4224
        %v4226 = vpop.f32.mrb[0].mxu0
        %4227 = vmatprep.mubr.f32.mxu0 0.0
        %4228 = vmatmul.mubr.f32.gmra.mrb[0].mxu0 %v3838
        %v4229 = vpop.f32.mrb[0].mxu0
        %v4230 = vadd.f32 %v4005, %v4229
        %v4231 = vpop.f32.mrb[0].mxu0
        %4232 = vmatprep.mubr.f32.mxu0 0.0
        %4233 = vmatmul.mubr.f32.gmra.mrb[0].mxu0 %v3839
        %v4234 = vpop.f32.mrb[0].mxu0
        %v4235 = vadd.f32 %v4010, %v4234
        %v4236 = vpop.f32.mrb[0].mxu0
        %4237 = vmatprep.mubr.f32.mxu0 0.0
        %4238 = vmatmul.mubr.f32.gmra.mrb[0].mxu0 %v3840
        %v4239 = vpop.f32.mrb[0].mxu0
        %v4240 = vadd.f32 %v4015, %v4239
        %v4241 = vpop.f32.mrb[0].mxu0
        %4242 = vmatprep.mubr.f32.mxu0 0.0
        %4243 = vmatmul.mubr.f32.gmra.mrb[0].mxu0 %v3841
        %v4244 = vpop.f32.mrb[0].mxu0
        %v4245 = vadd.f32 %v4020, %v4244
        %v4246 = vpop.f32.mrb[0].mxu0
        %4247 = vmatprep.mubr.f32.mxu0 0.0
        %4248 = vmatmul.mubr.f32.gmra.mrb[0].mxu0 %v3842
        %v4249 = vpop.f32.mrb[0].mxu0
        %v4250 = vadd.f32 %v4025, %v4249
        %v4251 = vpop.f32.mrb[0].mxu0
        %4252 = vmatprep.mubr.f32.mxu0 0.0
        %4253 = vmatmul.mubr.f32.gmra.mrb[0].mxu0 %v3843
        %v4254 = vpop.f32.mrb[0].mxu0
        %v4255 = vadd.f32 %v4030, %v4254
        %v4256 = vpop.f32.mrb[0].mxu0
        %4257 = vmatprep.mubr.f32.mxu0 0.0
        %4258 = vmatmul.mubr.f32.gmra.mrb[0].mxu0 %v3844
        %v4259 = vpop.f32.mrb[0].mxu0
        %v4260 = vadd.f32 %v4035, %v4259
        %v4261 = vpop.f32.mrb[0].mxu0
        %4262 = vmatprep.mubr.f32.mxu0 0.0
        %4263 = vmatmul.mubr.f32.gmra.mrb[0].mxu0 %v3845
        %v4264 = vpop.f32.mrb[0].mxu0
        %v4265 = vadd.f32 %v4040, %v4264
        %v4266 = vpop.f32.mrb[0].mxu0
        %4267 = vmatprep.mubr.f32.mxu0 0.0
        %4268 = vmatmul.mubr.f32.gmra.mrb[0].mxu0 %v3846
        %v4269 = vpop.f32.mrb[0].mxu0
        %v4270 = vadd.f32 %v4045, %v4269
        %v4271 = vpop.f32.mrb[0].mxu0
        %4272 = vmatprep.mubr.f32.mxu0 0.0
        %4273 = vmatmul.mubr.f32.gmra.mrb[0].mxu0 %v3847
        %v4274 = vpop.f32.mrb[0].mxu0
        %v4275 = vadd.f32 %v4050, %v4274
        %v4276 = vpop.f32.mrb[0].mxu0
        %4277 = vmatprep.mubr.f32.mxu0 0.0
        %4278 = vmatmul.mubr.f32.gmra.mrb[0].mxu0 %v3848
        %v4279 = vpop.f32.mrb[0].mxu0
        %v4280 = vadd.f32 %v4055, %v4279
        %v4281 = vpop.f32.mrb[0].mxu0
        %4282 = vmatprep.mubr.f32.mxu0 0.0
        %4283 = vmatmul.mubr.f32.gmra.mrb[0].mxu0 %v3849
        %v4284 = vpop.f32.mrb[0].mxu0
        %v4285 = vadd.f32 %v4060, %v4284
        %v4286 = vpop.f32.mrb[0].mxu0
        %4287 = vmatprep.mubr.f32.mxu0 0.0
        %4288 = vmatmul.mubr.f32.gmra.mrb[0].mxu0 %v3850
        %v4289 = vpop.f32.mrb[0].mxu0
        %v4290 = vadd.f32 %v4065, %v4289
        %v4291 = vpop.f32.mrb[0].mxu0
        %4292 = vmatprep.mubr.f32.mxu0 0.0
        %4293 = vmatmul.mubr.f32.gmra.mrb[0].mxu0 %v3851
        %v4294 = vpop.f32.mrb[0].mxu0
        %v4295 = vadd.f32 %v4070, %v4294
        %v4296 = vpop.f32.mrb[0].mxu0
        %4297 = vmatprep.mubr.f32.mxu0 0.0
        %4298 = vmatmul.mubr.f32.gmra.mrb[0].mxu0 %v3852
        %v4299 = vpop.f32.mrb[0].mxu0
        %v4300 = vadd.f32 %v4075, %v4299
        %v4301 = vpop.f32.mrb[0].mxu0
        %4302 = vmatprep.mubr.f32.mxu0 0.0
        %4303 = vmatmul.mubr.f32.gmra.mrb[0].mxu0 %v3853
        %v4304 = vpop.f32.mrb[0].mxu0
        %v4305 = vadd.f32 %v4080, %v4304
        %v4306 = vpop.f32.mrb[0].mxu0
        %4307 = vmatprep.mubr.f32.mxu0 0.0
        %4308 = vmatmul.mubr.f32.gmra.mrb[0].mxu0 %v3854
        %v4309 = vpop.f32.mrb[0].mxu0
        %v4310 = vadd.f32 %v4085, %v4309
        %v4311 = vpop.f32.mrb[0].mxu0
        %4312 = vmatprep.mubr.f32.mxu0 0.0
        %4313 = vmatmul.mubr.f32.gmra.mrb[0].mxu0 %v3855
        %v4314 = vpop.f32.mrb[0].mxu0
        %v4315 = vadd.f32 %v4090, %v4314
        %v4316 = vpop.f32.mrb[0].mxu0
        %4317 = vmatprep.mubr.f32.mxu0 0.0
        %4318 = vmatmul.mubr.f32.gmra.mrb[0].mxu0 %v3856
        %v4319 = vpop.f32.mrb[0].mxu0
        %v4320 = vadd.f32 %v4095, %v4319
        %v4321 = vpop.f32.mrb[0].mxu0
        %4322 = vmatprep.mubr.f32.mxu0 0.0
        %4323 = vmatmul.mubr.f32.gmra.mrb[0].mxu0 %v3857
        %v4324 = vpop.f32.mrb[0].mxu0
        %v4325 = vadd.f32 %v4100, %v4324
        %v4326 = vpop.f32.mrb[0].mxu0
        %4327 = vmatprep.mubr.f32.mxu0 0.0
        %4328 = vmatmul.mubr.f32.gmra.mrb[0].mxu0 %v3858
        %v4329 = vpop.f32.mrb[0].mxu0
        %v4330 = vadd.f32 %v4105, %v4329
        %v4331 = vpop.f32.mrb[0].mxu0
        %4332 = vmatprep.mubr.f32.mxu0 0.0
        %4333 = vmatmul.mubr.f32.gmra.mrb[0].mxu0 %v3859
        %v4334 = vpop.f32.mrb[0].mxu0
        %v4335 = vadd.f32 %v4110, %v4334
        %v4336 = vpop.f32.mrb[0].mxu0
        %4337 = vmatprep.mubr.f32.mxu0 0.0
        %4338 = vmatmul.mubr.f32.gmra.mrb[0].mxu0 %v3860
        %v4339 = vpop.f32.mrb[0].mxu0
        %v4340 = vadd.f32 %v4115, %v4339
        %v4341 = vpop.f32.mrb[0].mxu0
        %4342 = vmatprep.mubr.f32.mxu0 0.0
        %4343 = vmatmul.mubr.f32.gmra.mrb[0].mxu0 %v3861
        %v4344 = vpop.f32.mrb[0].mxu0
        %v4345 = vadd.f32 %v4120, %v4344
        %v4346 = vpop.f32.mrb[0].mxu0
        %4347 = vmatprep.mubr.f32.mxu0 0.0
        %4348 = vmatmul.mubr.f32.gmra.mrb[0].mxu0 %v3862
        %v4349 = vpop.f32.mrb[0].mxu0
        %v4350 = vadd.f32 %v4125, %v4349
        %v4351 = vpop.f32.mrb[0].mxu0
        %4352 = vmatprep.mubr.f32.mxu0 0.0
        %4353 = vmatmul.mubr.f32.gmra.mrb[0].mxu0 %v3863
        %v4354 = vpop.f32.mrb[0].mxu0
        %v4355 = vadd.f32 %v4130, %v4354
        %v4356 = vpop.f32.mrb[0].mxu0
        %4357 = vmatprep.mubr.f32.mxu0 0.0
        %4358 = vmatmul.mubr.f32.gmra.mrb[0].mxu0 %v3864
        %v4359 = vpop.f32.mrb[0].mxu0
        %v4360 = vadd.f32 %v4135, %v4359
        %v4361 = vpop.f32.mrb[0].mxu0
        %4362 = vmatprep.mubr.f32.mxu0 0.0
        %4363 = vmatmul.mubr.f32.gmra.mrb[0].mxu0 %v3865
        %v4364 = vpop.f32.mrb[0].mxu0
        %v4365 = vadd.f32 %v4140, %v4364
        %v4366 = vpop.f32.mrb[0].mxu0
        %4367 = vmatprep.mubr.f32.mxu0 0.0
        %4368 = vmatmul.mubr.f32.gmra.mrb[0].mxu0 %v3866
        %v4369 = vpop.f32.mrb[0].mxu0
        %v4370 = vadd.f32 %v4145, %v4369
        %v4371 = vpop.f32.mrb[0].mxu0
        %4372 = vmatprep.mubr.f32.mxu0 0.0
        %4373 = vmatmul.mubr.f32.gmra.mrb[0].mxu0 %v3867
        %v4374 = vpop.f32.mrb[0].mxu0
        %v4375 = vadd.f32 %v4150, %v4374
        %v4376 = vpop.f32.mrb[0].mxu0
        %4377 = vmatprep.mubr.f32.mxu0 0.0
        %4378 = vmatmul.mubr.f32.gmra.mrb[0].mxu0 %v3868
        %v4379 = vpop.f32.mrb[0].mxu0
        %v4380 = vadd.f32 %v4155, %v4379
        %v4381 = vpop.f32.mrb[0].mxu0
        %4382 = vdwg.mxu0
        %v4383 = vld [vmem:[#allocation3 + $0x10] sm:$0xff]
        %v4384 = vld [vmem:[#allocation3 + $0x28] sm:$0xff]
        %v4385 = vld [vmem:[#allocation3 + $0x40] sm:$0xff]
        %v4386 = vld [vmem:[#allocation3 + $0x58] sm:$0xff]
        %v4387 = vld [vmem:[#allocation3 + $0x70] sm:$0xff]
        %v4388 = vld [vmem:[#allocation3 + $0x88] sm:$0xff]
        %v4389 = vld [vmem:[#allocation3 + $0xa0] sm:$0xff]
        %v4390 = vld [vmem:[#allocation3 + $0xb8] sm:$0xff]
        %v4391 = vld [vmem:[#allocation3 + $0xd0] sm:$0xff]
        %v4392 = vld [vmem:[#allocation3 + $0xe8] sm:$0xff]
        %v4393 = vld [vmem:[#allocation3 + $0x100] sm:$0xff]
        %v4394 = vld [vmem:[#allocation3 + $0x118] sm:$0xff]
        %v4395 = vld [vmem:[#allocation3 + $0x130] sm:$0xff]
        %v4396 = vld [vmem:[#allocation3 + $0x148] sm:$0xff]
        %v4397 = vld [vmem:[#allocation3 + $0x160] sm:$0xff]
        %v4398 = vld [vmem:[#allocation3 + $0x178] sm:$0xff]
        %v4399 = vld [vmem:[#allocation3 + $0x190] sm:$0xff]
        %v4400 = vld [vmem:[#allocation3 + $0x1a8] sm:$0xff]
        %v4401 = vld [vmem:[#allocation3 + $0x1c0] sm:$0xff]
        %v4402 = vld [vmem:[#allocation3 + $0x1d8] sm:$0xff]
        %v4403 = vld [vmem:[#allocation3 + $0x1f0] sm:$0xff]
        %v4404 = vld [vmem:[#allocation3 + $0x208] sm:$0xff]
        %v4405 = vld [vmem:[#allocation3 + $0x220] sm:$0xff]
        %v4406 = vld [vmem:[#allocation3 + $0x238] sm:$0xff]
        %v4407 = vld [vmem:[#allocation3 + $0x250] sm:$0xff]
        %v4408 = vld [vmem:[#allocation3 + $0x268] sm:$0xff]
        %v4409 = vld [vmem:[#allocation3 + $0x280] sm:$0xff]
        %v4410 = vld [vmem:[#allocation3 + $0x298] sm:$0xff]
        %v4411 = vld [vmem:[#allocation3 + $0x2b0] sm:$0xff]
        %v4412 = vld [vmem:[#allocation3 + $0x2c8] sm:$0xff]
        %v4413 = vld [vmem:[#allocation3 + $0x2e0] sm:$0xff]
        %v4414 = vld [vmem:[#allocation3 + $0x2f8] sm:$0xff]
        %v4415 = vld [vmem:[%s4 + $0x100] sm:$0xff]
        %v4416 = vld [vmem:[%s4 + $0x108] sm:$0xff]
        %v4417 = vld [vmem:[%s4 + $0x110] sm:$0xff]
        %v4418 = vld [vmem:[%s4 + $0x118] sm:$0xff]
        %v4420 = vsel %vm429, %v4383, 0
        %v4423 = vsel %vm429, %v4384, 0
        %v4426 = vsel %vm429, %v4385, 0
        %v4429 = vsel %vm429, %v4386, 0
        %v4432 = vsel %vm429, %v4387, 0
        %v4435 = vsel %vm429, %v4388, 0
        %v4438 = vsel %vm429, %v4389, 0
        %v4441 = vsel %vm429, %v4390, 0
        %v4444 = vsel %vm429, %v4391, 0
        %v4447 = vsel %vm429, %v4392, 0
        %v4450 = vsel %vm429, %v4393, 0
        %v4453 = vsel %vm429, %v4394, 0
        %v4456 = vsel %vm429, %v4395, 0
        %v4459 = vsel %vm429, %v4396, 0
        %v4462 = vsel %vm429, %v4397, 0
        %v4465 = vsel %vm429, %v4398, 0
        %v4468 = vsel %vm429, %v4399, 0
        %v4471 = vsel %vm429, %v4400, 0
        %v4474 = vsel %vm429, %v4401, 0
        %v4477 = vsel %vm429, %v4402, 0
        %v4480 = vsel %vm429, %v4403, 0
        %v4483 = vsel %vm429, %v4404, 0
        %v4486 = vsel %vm429, %v4405, 0
        %v4489 = vsel %vm429, %v4406, 0
        %v4492 = vsel %vm429, %v4407, 0
        %v4495 = vsel %vm429, %v4408, 0
        %v4498 = vsel %vm429, %v4409, 0
        %v4501 = vsel %vm429, %v4410, 0
        %v4504 = vsel %vm429, %v4411, 0
        %v4507 = vsel %vm429, %v4412, 0
        %v4510 = vsel %vm429, %v4413, 0
        %v4513 = vsel %vm429, %v4414, 0
        %4515 = vmatprep.subr.mxu0 0.0
        %4516 = vmatpush1.msra.mxu0 %v4415
        %4517 = vmatprep.subr.mxu0 0.0
        %4518 = vmatpush1.msra.mxu0 %v4416
        %4519 = vmatprep.subr.mxu0 0.0
        %4520 = vmatpush1.msra.mxu0 %v4417
        %4521 = vmatprep.subr.mxu0 0.0
        %4522 = vmatpush1.msra.mxu0 %v4418
        %4523 = vmatprep.subr.mxu0 0.0
        %4524 = vmatpush1.msra.mxu0 0.0
        %4525 = vmatprep.subr.mxu0 0.0
        %4526 = vmatpush1.msra.mxu0 0.0
        %4527 = vmatprep.subr.mxu0 0.0
        %4528 = vmatpush1.msra.mxu0 0.0
        %4529 = vmatprep.subr.mxu0 0.0
        %4530 = vmatpush1.msra.mxu0 0.0
        %4531 = vmatprep.subr.mxu0 0.0
        %4532 = vmatpush1.msra.mxu0 0.0
        %4533 = vmatprep.subr.mxu0 0.0
        %4534 = vmatpush1.msra.mxu0 0.0
        %4535 = vmatprep.subr.mxu0 0.0
        %4536 = vmatpush1.msra.mxu0 0.0
        %4537 = vmatprep.subr.mxu0 0.0
        %4538 = vmatpush1.msra.mxu0 0.0
        %4539 = vmatprep.subr.mxu0 0.0
        %4540 = vmatpush1.msra.mxu0 0.0
        %4541 = vmatprep.subr.mxu0 0.0
        %4542 = vmatpush1.msra.mxu0 0.0
        %4543 = vmatprep.subr.mxu0 0.0
        %4544 = vmatpush1.msra.mxu0 0.0
        %4545 = vmatprep.subr.mxu0 0.0
        %4546 = vmatpush1.msra.mxu0 0.0
        %4547 = vmatprep.subr.mxu0 0.0
        %4548 = vmatpush1.msra.mxu0 0.0
        %4549 = vmatprep.subr.mxu0 0.0
        %4550 = vmatpush1.msra.mxu0 0.0
        %4551 = vmatprep.subr.mxu0 0.0
        %4552 = vmatpush1.msra.mxu0 0.0
        %4553 = vmatprep.subr.mxu0 0.0
        %4554 = vmatpush1.msra.mxu0 0.0
        %4555 = vmatprep.subr.mxu0 0.0
        %4556 = vmatpush1.msra.mxu0 0.0
        %4557 = vmatprep.subr.mxu0 0.0
        %4558 = vmatpush1.msra.mxu0 0.0
        %4559 = vmatprep.subr.mxu0 0.0
        %4560 = vmatpush1.msra.mxu0 0.0
        %4561 = vmatprep.subr.mxu0 0.0
        %4562 = vmatpush1.msra.mxu0 0.0
        %4563 = vmatprep.subr.mxu0 0.0
        %4564 = vmatpush1.msra.mxu0 0.0
        %4565 = vmatprep.subr.mxu0 0.0
        %4566 = vmatpush1.msra.mxu0 0.0
        %4567 = vmatprep.subr.mxu0 0.0
        %4568 = vmatpush1.msra.mxu0 0.0
        %4569 = vmatprep.subr.mxu0 0.0
        %4570 = vmatpush1.msra.mxu0 0.0
        %4571 = vmatprep.subr.mxu0 0.0
        %4572 = vmatpush1.msra.mxu0 0.0
        %4573 = vmatprep.subr.mxu0 0.0
        %4574 = vmatpush1.msra.mxu0 0.0
        %4575 = vmatprep.subr.mxu0 0.0
        %4576 = vmatpush1.msra.mxu0 0.0
        %4577 = vmatprep.subr.mxu0 0.0
        %4578 = vmatpush1.msra.mxu0 0.0
        %4579 = vmatprep.mubr.f32.mxu0 0.0
        %4580 = vmatmul.mubr.f32.gmra.mrb[0].mxu0 %v4420
        %v4581 = vpop.f32.mrb[0].mxu0
        %v4582 = vadd.f32 0.0, %v4581
        %v4583 = vpop.f32.mrb[0].mxu0
        %4584 = vmatprep.mubr.f32.mxu0 0.0
        %4585 = vmatmul.mubr.f32.gmra.mrb[0].mxu0 %v4423
        %v4586 = vpop.f32.mrb[0].mxu0
        %v4587 = vadd.f32 0.0, %v4586
        %v4588 = vpop.f32.mrb[0].mxu0
        %4589 = vmatprep.mubr.f32.mxu0 0.0
        %4590 = vmatmul.mubr.f32.gmra.mrb[0].mxu0 %v4426
        %v4591 = vpop.f32.mrb[0].mxu0
        %v4592 = vadd.f32 0.0, %v4591
        %v4593 = vpop.f32.mrb[0].mxu0
        %4594 = vmatprep.mubr.f32.mxu0 0.0
        %4595 = vmatmul.mubr.f32.gmra.mrb[0].mxu0 %v4429
        %v4596 = vpop.f32.mrb[0].mxu0
        %v4597 = vadd.f32 0.0, %v4596
        %v4598 = vpop.f32.mrb[0].mxu0
        %4599 = vmatprep.mubr.f32.mxu0 0.0
        %4600 = vmatmul.mubr.f32.gmra.mrb[0].mxu0 %v4432
        %v4601 = vpop.f32.mrb[0].mxu0
        %v4602 = vadd.f32 0.0, %v4601
        %v4603 = vpop.f32.mrb[0].mxu0
        %4604 = vmatprep.mubr.f32.mxu0 0.0
        %4605 = vmatmul.mubr.f32.gmra.mrb[0].mxu0 %v4435
        %v4606 = vpop.f32.mrb[0].mxu0
        %v4607 = vadd.f32 0.0, %v4606
        %v4608 = vpop.f32.mrb[0].mxu0
        %4609 = vmatprep.mubr.f32.mxu0 0.0
        %4610 = vmatmul.mubr.f32.gmra.mrb[0].mxu0 %v4438
        %v4611 = vpop.f32.mrb[0].mxu0
        %v4612 = vadd.f32 0.0, %v4611
        %v4613 = vpop.f32.mrb[0].mxu0
        %4614 = vmatprep.mubr.f32.mxu0 0.0
        %4615 = vmatmul.mubr.f32.gmra.mrb[0].mxu0 %v4441
        %v4616 = vpop.f32.mrb[0].mxu0
        %v4617 = vadd.f32 0.0, %v4616
        %v4618 = vpop.f32.mrb[0].mxu0
        %4619 = vmatprep.mubr.f32.mxu0 0.0
        %4620 = vmatmul.mubr.f32.gmra.mrb[0].mxu0 %v4444
        %v4621 = vpop.f32.mrb[0].mxu0
        %v4622 = vadd.f32 0.0, %v4621
        %v4623 = vpop.f32.mrb[0].mxu0
        %4624 = vmatprep.mubr.f32.mxu0 0.0
        %4625 = vmatmul.mubr.f32.gmra.mrb[0].mxu0 %v4447
        %v4626 = vpop.f32.mrb[0].mxu0
        %v4627 = vadd.f32 0.0, %v4626
        %v4628 = vpop.f32.mrb[0].mxu0
        %4629 = vmatprep.mubr.f32.mxu0 0.0
        %4630 = vmatmul.mubr.f32.gmra.mrb[0].mxu0 %v4450
        %v4631 = vpop.f32.mrb[0].mxu0
        %v4632 = vadd.f32 0.0, %v4631
        %v4633 = vpop.f32.mrb[0].mxu0
        %4634 = vmatprep.mubr.f32.mxu0 0.0
        %4635 = vmatmul.mubr.f32.gmra.mrb[0].mxu0 %v4453
        %v4636 = vpop.f32.mrb[0].mxu0
        %v4637 = vadd.f32 0.0, %v4636
        %v4638 = vpop.f32.mrb[0].mxu0
        %4639 = vmatprep.mubr.f32.mxu0 0.0
        %4640 = vmatmul.mubr.f32.gmra.mrb[0].mxu0 %v4456
        %v4641 = vpop.f32.mrb[0].mxu0
        %v4642 = vadd.f32 0.0, %v4641
        %v4643 = vpop.f32.mrb[0].mxu0
        %4644 = vmatprep.mubr.f32.mxu0 0.0
        %4645 = vmatmul.mubr.f32.gmra.mrb[0].mxu0 %v4459
        %v4646 = vpop.f32.mrb[0].mxu0
        %v4647 = vadd.f32 0.0, %v4646
        %v4648 = vpop.f32.mrb[0].mxu0
        %4649 = vmatprep.mubr.f32.mxu0 0.0
        %4650 = vmatmul.mubr.f32.gmra.mrb[0].mxu0 %v4462
        %v4651 = vpop.f32.mrb[0].mxu0
        %v4652 = vadd.f32 0.0, %v4651
        %v4653 = vpop.f32.mrb[0].mxu0
        %4654 = vmatprep.mubr.f32.mxu0 0.0
        %4655 = vmatmul.mubr.f32.gmra.mrb[0].mxu0 %v4465
        %v4656 = vpop.f32.mrb[0].mxu0
        %v4657 = vadd.f32 0.0, %v4656
        %v4658 = vpop.f32.mrb[0].mxu0
        %4659 = vmatprep.mubr.f32.mxu0 0.0
        %4660 = vmatmul.mubr.f32.gmra.mrb[0].mxu0 %v4468
        %v4661 = vpop.f32.mrb[0].mxu0
        %v4662 = vadd.f32 0.0, %v4661
        %v4663 = vpop.f32.mrb[0].mxu0
        %4664 = vmatprep.mubr.f32.mxu0 0.0
        %4665 = vmatmul.mubr.f32.gmra.mrb[0].mxu0 %v4471
        %v4666 = vpop.f32.mrb[0].mxu0
        %v4667 = vadd.f32 0.0, %v4666
        %v4668 = vpop.f32.mrb[0].mxu0
        %4669 = vmatprep.mubr.f32.mxu0 0.0
        %4670 = vmatmul.mubr.f32.gmra.mrb[0].mxu0 %v4474
        %v4671 = vpop.f32.mrb[0].mxu0
        %v4672 = vadd.f32 0.0, %v4671
        %v4673 = vpop.f32.mrb[0].mxu0
        %4674 = vmatprep.mubr.f32.mxu0 0.0
        %4675 = vmatmul.mubr.f32.gmra.mrb[0].mxu0 %v4477
        %v4676 = vpop.f32.mrb[0].mxu0
        %v4677 = vadd.f32 0.0, %v4676
        %v4678 = vpop.f32.mrb[0].mxu0
        %4679 = vmatprep.mubr.f32.mxu0 0.0
        %4680 = vmatmul.mubr.f32.gmra.mrb[0].mxu0 %v4480
        %v4681 = vpop.f32.mrb[0].mxu0
        %v4682 = vadd.f32 0.0, %v4681
        %v4683 = vpop.f32.mrb[0].mxu0
        %4684 = vmatprep.mubr.f32.mxu0 0.0
        %4685 = vmatmul.mubr.f32.gmra.mrb[0].mxu0 %v4483
        %v4686 = vpop.f32.mrb[0].mxu0
        %v4687 = vadd.f32 0.0, %v4686
        %v4688 = vpop.f32.mrb[0].mxu0
        %4689 = vmatprep.mubr.f32.mxu0 0.0
        %4690 = vmatmul.mubr.f32.gmra.mrb[0].mxu0 %v4486
        %v4691 = vpop.f32.mrb[0].mxu0
        %v4692 = vadd.f32 0.0, %v4691
        %v4693 = vpop.f32.mrb[0].mxu0
        %4694 = vmatprep.mubr.f32.mxu0 0.0
        %4695 = vmatmul.mubr.f32.gmra.mrb[0].mxu0 %v4489
        %v4696 = vpop.f32.mrb[0].mxu0
        %v4697 = vadd.f32 0.0, %v4696
        %v4698 = vpop.f32.mrb[0].mxu0
        %4699 = vmatprep.mubr.f32.mxu0 0.0
        %4700 = vmatmul.mubr.f32.gmra.mrb[0].mxu0 %v4492
        %v4701 = vpop.f32.mrb[0].mxu0
        %v4702 = vadd.f32 0.0, %v4701
        %v4703 = vpop.f32.mrb[0].mxu0
        %4704 = vmatprep.mubr.f32.mxu0 0.0
        %4705 = vmatmul.mubr.f32.gmra.mrb[0].mxu0 %v4495
        %v4706 = vpop.f32.mrb[0].mxu0
        %v4707 = vadd.f32 0.0, %v4706
        %v4708 = vpop.f32.mrb[0].mxu0
        %4709 = vmatprep.mubr.f32.mxu0 0.0
        %4710 = vmatmul.mubr.f32.gmra.mrb[0].mxu0 %v4498
        %v4711 = vpop.f32.mrb[0].mxu0
        %v4712 = vadd.f32 0.0, %v4711
        %v4713 = vpop.f32.mrb[0].mxu0
        %4714 = vmatprep.mubr.f32.mxu0 0.0
        %4715 = vmatmul.mubr.f32.gmra.mrb[0].mxu0 %v4501
        %v4716 = vpop.f32.mrb[0].mxu0
        %v4717 = vadd.f32 0.0, %v4716
        %v4718 = vpop.f32.mrb[0].mxu0
        %4719 = vmatprep.mubr.f32.mxu0 0.0
        %4720 = vmatmul.mubr.f32.gmra.mrb[0].mxu0 %v4504
        %v4721 = vpop.f32.mrb[0].mxu0
        %v4722 = vadd.f32 0.0, %v4721
        %v4723 = vpop.f32.mrb[0].mxu0
        %4724 = vmatprep.mubr.f32.mxu0 0.0
        %4725 = vmatmul.mubr.f32.gmra.mrb[0].mxu0 %v4507
        %v4726 = vpop.f32.mrb[0].mxu0
        %v4727 = vadd.f32 0.0, %v4726
        %v4728 = vpop.f32.mrb[0].mxu0
        %4729 = vmatprep.mubr.f32.mxu0 0.0
        %4730 = vmatmul.mubr.f32.gmra.mrb[0].mxu0 %v4510
        %v4731 = vpop.f32.mrb[0].mxu0
        %v4732 = vadd.f32 0.0, %v4731
        %v4733 = vpop.f32.mrb[0].mxu0
        %4734 = vmatprep.mubr.f32.mxu0 0.0
        %4735 = vmatmul.mubr.f32.gmra.mrb[0].mxu0 %v4513
        %v4736 = vpop.f32.mrb[0].mxu0
        %v4737 = vadd.f32 0.0, %v4736
        %v4738 = vpop.f32.mrb[0].mxu0
        %4739 = vdwg.mxu0
        %v4740 = vadd.f32 %v4225, %v4582
        %v4741 = vadd.f32 %v4230, %v4587
        %v4742 = vadd.f32 %v4235, %v4592
        %v4743 = vadd.f32 %v4240, %v4597
        %v4744 = vadd.f32 %v4245, %v4602
        %v4745 = vadd.f32 %v4250, %v4607
        %v4746 = vadd.f32 %v4255, %v4612
        %v4747 = vadd.f32 %v4260, %v4617
        %v4748 = vadd.f32 %v4265, %v4622
        %v4749 = vadd.f32 %v4270, %v4627
        %v4750 = vadd.f32 %v4275, %v4632
        %v4751 = vadd.f32 %v4280, %v4637
        %v4752 = vadd.f32 %v4285, %v4642
        %v4753 = vadd.f32 %v4290, %v4647
        %v4754 = vadd.f32 %v4295, %v4652
        %v4755 = vadd.f32 %v4300, %v4657
        %v4756 = vadd.f32 %v4305, %v4662
        %v4757 = vadd.f32 %v4310, %v4667
        %v4758 = vadd.f32 %v4315, %v4672
        %v4759 = vadd.f32 %v4320, %v4677
        %v4760 = vadd.f32 %v4325, %v4682
        %v4761 = vadd.f32 %v4330, %v4687
        %v4762 = vadd.f32 %v4335, %v4692
        %v4763 = vadd.f32 %v4340, %v4697
        %v4764 = vadd.f32 %v4345, %v4702
        %v4765 = vadd.f32 %v4350, %v4707
        %v4766 = vadd.f32 %v4355, %v4712
        %v4767 = vadd.f32 %v4360, %v4717
        %v4768 = vadd.f32 %v4365, %v4722
        %v4769 = vadd.f32 %v4370, %v4727
        %v4770 = vadd.f32 %v4375, %v4732
        %v4771 = vadd.f32 %v4380, %v4737
        %v4772 = vsel %vm429, %v4740, 0.0
        %v4773 = vsel %vm429, %v4741, 0.0
        %v4774 = vadd.f32 %v4772, %v4773
        %v4775 = vsel %vm429, %v4742, 0.0
        %v4776 = vadd.f32 %v4774, %v4775
        %v4777 = vsel %vm429, %v4743, 0.0
        %v4778 = vadd.f32 %v4776, %v4777
        %v4779 = vsel %vm429, %v4744, 0.0
        %v4780 = vadd.f32 %v4778, %v4779
        %v4781 = vsel %vm429, %v4745, 0.0
        %v4782 = vadd.f32 %v4780, %v4781
        %v4783 = vsel %vm429, %v4746, 0.0
        %v4784 = vadd.f32 %v4782, %v4783
        %v4785 = vsel %vm429, %v4747, 0.0
        %v4786 = vadd.f32 %v4784, %v4785
        %v4787 = vsel %vm429, %v4748, 0.0
        %v4788 = vadd.f32 %v4786, %v4787
        %v4789 = vsel %vm429, %v4749, 0.0
        %v4790 = vadd.f32 %v4788, %v4789
        %v4791 = vsel %vm429, %v4750, 0.0
        %v4792 = vadd.f32 %v4790, %v4791
        %v4793 = vsel %vm429, %v4751, 0.0
        %v4794 = vadd.f32 %v4792, %v4793
        %v4795 = vsel %vm429, %v4752, 0.0
        %v4796 = vadd.f32 %v4794, %v4795
        %v4797 = vsel %vm429, %v4753, 0.0
        %v4798 = vadd.f32 %v4796, %v4797
        %v4799 = vsel %vm429, %v4754, 0.0
        %v4800 = vadd.f32 %v4798, %v4799
        %v4801 = vsel %vm429, %v4755, 0.0
        %v4802 = vadd.f32 %v4800, %v4801
        %v4803 = vsel %vm429, %v4756, 0.0
        %v4804 = vadd.f32 %v4802, %v4803
        %v4805 = vsel %vm429, %v4757, 0.0
        %v4806 = vadd.f32 %v4804, %v4805
        %v4807 = vsel %vm429, %v4758, 0.0
        %v4808 = vadd.f32 %v4806, %v4807
        %v4809 = vsel %vm429, %v4759, 0.0
        %v4810 = vadd.f32 %v4808, %v4809
        %v4811 = vsel %vm429, %v4760, 0.0
        %v4812 = vadd.f32 %v4810, %v4811
        %v4813 = vsel %vm429, %v4761, 0.0
        %v4814 = vadd.f32 %v4812, %v4813
        %v4815 = vsel %vm429, %v4762, 0.0
        %v4816 = vadd.f32 %v4814, %v4815
        %v4817 = vsel %vm429, %v4763, 0.0
        %v4818 = vadd.f32 %v4816, %v4817
        %v4819 = vsel %vm429, %v4764, 0.0
        %v4820 = vadd.f32 %v4818, %v4819
        %v4821 = vsel %vm429, %v4765, 0.0
        %v4822 = vadd.f32 %v4820, %v4821
        %v4823 = vsel %vm429, %v4766, 0.0
        %v4824 = vadd.f32 %v4822, %v4823
        %v4825 = vsel %vm429, %v4767, 0.0
        %v4826 = vadd.f32 %v4824, %v4825
        %v4827 = vsel %vm429, %v4768, 0.0
        %v4828 = vadd.f32 %v4826, %v4827
        %v4829 = vsel %vm429, %v4769, 0.0
        %v4830 = vadd.f32 %v4828, %v4829
        %v4831 = vsel %vm429, %v4770, 0.0
        %v4832 = vadd.f32 %v4830, %v4831
        %v4833 = vsel %vm429, %v4771, 0.0
        %v4834 = vadd.f32 %v4832, %v4833
        %v4835 = vrot.slane %v4834, 4
        %v4836 = vadd.f32 %v4834, %v4835
        %v4837 = vrot.slane %v4836, 2
        %v4838 = vadd.f32 %v4836, %v4837
        %v4839 = vrot.slane %v4838, 1
        %v4840 = vadd.f32 %v4838, %v4839
        %v4841 = vmul.f32 %v4840, 0.00390625
        %v4842 = vmul.f32 %v4740, %v4740
        %v4843 = vmul.f32 %v4741, %v4741
        %v4844 = vmul.f32 %v4742, %v4742
        %v4845 = vmul.f32 %v4743, %v4743
        %v4846 = vmul.f32 %v4744, %v4744
        %v4847 = vmul.f32 %v4745, %v4745
        %v4848 = vmul.f32 %v4746, %v4746
        %v4849 = vmul.f32 %v4747, %v4747
        %v4850 = vmul.f32 %v4748, %v4748
        %v4851 = vmul.f32 %v4749, %v4749
        %v4852 = vmul.f32 %v4750, %v4750
        %v4853 = vmul.f32 %v4751, %v4751
        %v4854 = vmul.f32 %v4752, %v4752
        %v4855 = vmul.f32 %v4753, %v4753
        %v4856 = vmul.f32 %v4754, %v4754
        %v4857 = vmul.f32 %v4755, %v4755
        %v4858 = vmul.f32 %v4756, %v4756
        %v4859 = vmul.f32 %v4757, %v4757
        %v4860 = vmul.f32 %v4758, %v4758
        %v4861 = vmul.f32 %v4759, %v4759
        %v4862 = vmul.f32 %v4760, %v4760
        %v4863 = vmul.f32 %v4761, %v4761
        %v4864 = vmul.f32 %v4762, %v4762
        %v4865 = vmul.f32 %v4763, %v4763
        %v4866 = vmul.f32 %v4764, %v4764
        %v4867 = vmul.f32 %v4765, %v4765
        %v4868 = vmul.f32 %v4766, %v4766
        %v4869 = vmul.f32 %v4767, %v4767
        %v4870 = vmul.f32 %v4768, %v4768
        %v4871 = vmul.f32 %v4769, %v4769
        %v4872 = vmul.f32 %v4770, %v4770
        %v4873 = vmul.f32 %v4771, %v4771
        %v4874 = vsel %vm429, %v4842, 0.0
        %v4875 = vsel %vm429, %v4843, 0.0
        %v4876 = vadd.f32 %v4874, %v4875
        %v4877 = vsel %vm429, %v4844, 0.0
        %v4878 = vadd.f32 %v4876, %v4877
        %v4879 = vsel %vm429, %v4845, 0.0
        %v4880 = vadd.f32 %v4878, %v4879
        %v4881 = vsel %vm429, %v4846, 0.0
        %v4882 = vadd.f32 %v4880, %v4881
        %v4883 = vsel %vm429, %v4847, 0.0
        %v4884 = vadd.f32 %v4882, %v4883
        %v4885 = vsel %vm429, %v4848, 0.0
        %v4886 = vadd.f32 %v4884, %v4885
        %v4887 = vsel %vm429, %v4849, 0.0
        %v4888 = vadd.f32 %v4886, %v4887
        %v4889 = vsel %vm429, %v4850, 0.0
        %v4890 = vadd.f32 %v4888, %v4889
        %v4891 = vsel %vm429, %v4851, 0.0
        %v4892 = vadd.f32 %v4890, %v4891
        %v4893 = vsel %vm429, %v4852, 0.0
        %v4894 = vadd.f32 %v4892, %v4893
        %v4895 = vsel %vm429, %v4853, 0.0
        %v4896 = vadd.f32 %v4894, %v4895
        %v4897 = vsel %vm429, %v4854, 0.0
        %v4898 = vadd.f32 %v4896, %v4897
        %v4899 = vsel %vm429, %v4855, 0.0
        %v4900 = vadd.f32 %v4898, %v4899
        %v4901 = vsel %vm429, %v4856, 0.0
        %v4902 = vadd.f32 %v4900, %v4901
        %v4903 = vsel %vm429, %v4857, 0.0
        %v4904 = vadd.f32 %v4902, %v4903
        %v4905 = vsel %vm429, %v4858, 0.0
        %v4906 = vadd.f32 %v4904, %v4905
        %v4907 = vsel %vm429, %v4859, 0.0
        %v4908 = vadd.f32 %v4906, %v4907
        %v4909 = vsel %vm429, %v4860, 0.0
        %v4910 = vadd.f32 %v4908, %v4909
        %v4911 = vsel %vm429, %v4861, 0.0
        %v4912 = vadd.f32 %v4910, %v4911
        %v4913 = vsel %vm429, %v4862, 0.0
        %v4914 = vadd.f32 %v4912, %v4913
        %v4915 = vsel %vm429, %v4863, 0.0
        %v4916 = vadd.f32 %v4914, %v4915
        %v4917 = vsel %vm429, %v4864, 0.0
        %v4918 = vadd.f32 %v4916, %v4917
        %v4919 = vsel %vm429, %v4865, 0.0
        %v4920 = vadd.f32 %v4918, %v4919
        %v4921 = vsel %vm429, %v4866, 0.0
        %v4922 = vadd.f32 %v4920, %v4921
        %v4923 = vsel %vm429, %v4867, 0.0
        %v4924 = vadd.f32 %v4922, %v4923
        %v4925 = vsel %vm429, %v4868, 0.0
        %v4926 = vadd.f32 %v4924, %v4925
        %v4927 = vsel %vm429, %v4869, 0.0
        %v4928 = vadd.f32 %v4926, %v4927
        %v4929 = vsel %vm429, %v4870, 0.0
        %v4930 = vadd.f32 %v4928, %v4929
        %v4931 = vsel %vm429, %v4871, 0.0
        %v4932 = vadd.f32 %v4930, %v4931
        %v4933 = vsel %vm429, %v4872, 0.0
        %v4934 = vadd.f32 %v4932, %v4933
        %v4935 = vsel %vm429, %v4873, 0.0
        %v4936 = vadd.f32 %v4934, %v4935
        %v4937 = vrot.slane %v4936, 4
        %v4938 = vadd.f32 %v4936, %v4937
        %v4939 = vrot.slane %v4938, 2
        %v4940 = vadd.f32 %v4938, %v4939
        %v4941 = vrot.slane %v4940, 1
        %v4942 = vadd.f32 %v4940, %v4941
        %v4943 = vmul.f32 %v4942, 0.00390625
        %v4944 = vmul.f32 %v4841, %v4841
        %v4945 = vsub.f32 %v4943, %v4944
        %v4946 = vmax.f32 %v4945, 0.0
        %v4947 = vsub.f32 %v4740, %v4841
        %v4948 = vsub.f32 %v4741, %v4841
        %v4949 = vsub.f32 %v4742, %v4841
        %v4950 = vsub.f32 %v4743, %v4841
        %v4951 = vsub.f32 %v4744, %v4841
        %v4952 = vsub.f32 %v4745, %v4841
        %v4953 = vsub.f32 %v4746, %v4841
        %v4954 = vsub.f32 %v4747, %v4841
        %v4955 = vsub.f32 %v4748, %v4841
        %v4956 = vsub.f32 %v4749, %v4841
        %v4957 = vsub.f32 %v4750, %v4841
        %v4958 = vsub.f32 %v4751, %v4841
        %v4959 = vsub.f32 %v4752, %v4841
        %v4960 = vsub.f32 %v4753, %v4841
        %v4961 = vsub.f32 %v4754, %v4841
        %v4962 = vsub.f32 %v4755, %v4841
        %v4963 = vsub.f32 %v4756, %v4841
        %v4964 = vsub.f32 %v4757, %v4841
        %v4965 = vsub.f32 %v4758, %v4841
        %v4966 = vsub.f32 %v4759, %v4841
        %v4967 = vsub.f32 %v4760, %v4841
        %v4968 = vsub.f32 %v4761, %v4841
        %v4969 = vsub.f32 %v4762, %v4841
        %v4970 = vsub.f32 %v4763, %v4841
        %v4971 = vsub.f32 %v4764, %v4841
        %v4972 = vsub.f32 %v4765, %v4841
        %v4973 = vsub.f32 %v4766, %v4841
        %v4974 = vsub.f32 %v4767, %v4841
        %v4975 = vsub.f32 %v4768, %v4841
        %v4976 = vsub.f32 %v4769, %v4841
        %v4977 = vsub.f32 %v4770, %v4841
        %v4978 = vsub.f32 %v4771, %v4841
        %v4979 = vadd.f32 %v4946, 1e-05
        %v4980 = vrsqrt.pop %v4979
        %v4981 = vld [vmem:[%s5] sm:$0x1]
        %v4982 = vmul.f32 %v4980, %v4981
        %v4983 = vlaneseq
        %v4984 = vshrl.u32 %v4983, 7
        %v4985 = vsub.s32 0, %v4984
        %v4986 = vrot.slane %v4982, %v4985
        %v4987 = vmul.f32 %v4947, %v4986
        %v4988 = vmul.f32 %v4948, %v4986
        %v4989 = vmul.f32 %v4949, %v4986
        %v4990 = vmul.f32 %v4950, %v4986
        %v4991 = vmul.f32 %v4951, %v4986
        %v4992 = vmul.f32 %v4952, %v4986
        %v4993 = vmul.f32 %v4953, %v4986
        %v4994 = vmul.f32 %v4954, %v4986
        %v4995 = vmul.f32 %v4955, %v4986
        %v4996 = vmul.f32 %v4956, %v4986
        %v4997 = vmul.f32 %v4957, %v4986
        %v4998 = vmul.f32 %v4958, %v4986
        %v4999 = vmul.f32 %v4959, %v4986
        %v5000 = vmul.f32 %v4960, %v4986
        %v5001 = vmul.f32 %v4961, %v4986
        %v5002 = vmul.f32 %v4962, %v4986
        %v5003 = vmul.f32 %v4963, %v4986
        %v5004 = vmul.f32 %v4964, %v4986
        %v5005 = vmul.f32 %v4965, %v4986
        %v5006 = vmul.f32 %v4966, %v4986
        %v5007 = vmul.f32 %v4967, %v4986
        %v5008 = vmul.f32 %v4968, %v4986
        %v5009 = vmul.f32 %v4969, %v4986
        %v5010 = vmul.f32 %v4970, %v4986
        %v5011 = vmul.f32 %v4971, %v4986
        %v5012 = vmul.f32 %v4972, %v4986
        %v5013 = vmul.f32 %v4973, %v4986
        %v5014 = vmul.f32 %v4974, %v4986
        %v5015 = vmul.f32 %v4975, %v4986
        %v5016 = vmul.f32 %v4976, %v4986
        %v5017 = vmul.f32 %v4977, %v4986
        %v5018 = vmul.f32 %v4978, %v4986
        %v5019 = vld [vmem:[%s6] sm:$0x1]
        %v5021 = vlaneseq
        %v5022 = vshrl.u32 %v5021, 7
        %v5023 = vsub.s32 0, %v5022
        %v5024 = vrot.slane %v5019, %v5023
        %v5026 = vadd.f32 %v4987, %v5024
        %v5027 = vadd.f32 %v4988, %v5024
        %v5028 = vadd.f32 %v4989, %v5024
        %v5029 = vadd.f32 %v4990, %v5024
        %v5030 = vadd.f32 %v4991, %v5024
        %v5031 = vadd.f32 %v4992, %v5024
        %v5032 = vadd.f32 %v4993, %v5024
        %v5033 = vadd.f32 %v4994, %v5024
        %v5034 = vadd.f32 %v4995, %v5024
        %v5035 = vadd.f32 %v4996, %v5024
        %v5036 = vadd.f32 %v4997, %v5024
        %v5037 = vadd.f32 %v4998, %v5024
        %v5038 = vadd.f32 %v4999, %v5024
        %v5039 = vadd.f32 %v5000, %v5024
        %v5040 = vadd.f32 %v5001, %v5024
        %v5041 = vadd.f32 %v5002, %v5024
        %v5042 = vadd.f32 %v5003, %v5024
        %v5043 = vadd.f32 %v5004, %v5024
        %v5044 = vadd.f32 %v5005, %v5024
        %v5045 = vadd.f32 %v5006, %v5024
        %v5046 = vadd.f32 %v5007, %v5024
        %v5047 = vadd.f32 %v5008, %v5024
        %v5048 = vadd.f32 %v5009, %v5024
        %v5049 = vadd.f32 %v5010, %v5024
        %v5050 = vadd.f32 %v5011, %v5024
        %v5051 = vadd.f32 %v5012, %v5024
        %v5052 = vadd.f32 %v5013, %v5024
        %v5053 = vadd.f32 %v5014, %v5024
        %v5054 = vadd.f32 %v5015, %v5024
        %v5055 = vadd.f32 %v5016, %v5024
        %v5056 = vadd.f32 %v5017, %v5024
        %v5057 = vadd.f32 %v5018, %v5024
        %v5058 = vmax.f32 %v5026, 0.0
        %v5059 = vmax.f32 %v5027, 0.0
        %v5060 = vmax.f32 %v5028, 0.0
        %v5061 = vmax.f32 %v5029, 0.0
        %v5062 = vmax.f32 %v5030, 0.0
        %v5063 = vmax.f32 %v5031, 0.0
        %v5064 = vmax.f32 %v5032, 0.0
        %v5065 = vmax.f32 %v5033, 0.0
        %v5066 = vmax.f32 %v5034, 0.0
        %v5067 = vmax.f32 %v5035, 0.0
        %v5068 = vmax.f32 %v5036, 0.0
        %v5069 = vmax.f32 %v5037, 0.0
        %v5070 = vmax.f32 %v5038, 0.0
        %v5071 = vmax.f32 %v5039, 0.0
        %v5072 = vmax.f32 %v5040, 0.0
        %v5073 = vmax.f32 %v5041, 0.0
        %v5074 = vmax.f32 %v5042, 0.0
        %v5075 = vmax.f32 %v5043, 0.0
        %v5076 = vmax.f32 %v5044, 0.0
        %v5077 = vmax.f32 %v5045, 0.0
        %v5078 = vmax.f32 %v5046, 0.0
        %v5079 = vmax.f32 %v5047, 0.0
        %v5080 = vmax.f32 %v5048, 0.0
        %v5081 = vmax.f32 %v5049, 0.0
        %v5082 = vmax.f32 %v5050, 0.0
        %v5083 = vmax.f32 %v5051, 0.0
        %v5084 = vmax.f32 %v5052, 0.0
        %v5085 = vmax.f32 %v5053, 0.0
        %v5086 = vmax.f32 %v5054, 0.0
        %v5087 = vmax.f32 %v5055, 0.0
        %v5088 = vmax.f32 %v5056, 0.0
        %v5089 = vmax.f32 %v5057, 0.0
        %5090 = vst.msk [vmem:[%s517 + $0x1] sm:$0xff] %vm429, %v5058
        %5091 = vst.msk [vmem:[%s517 + $0x9] sm:$0xff] %vm429, %v5059
        %5092 = vst.msk [vmem:[%s517 + $0x19] sm:$0xff] %vm429, %v5060
        %5093 = vst.msk [vmem:[%s517 + $0x21] sm:$0xff] %vm429, %v5061
        %5094 = vst.msk [vmem:[%s517 + $0x31] sm:$0xff] %vm429, %v5062
        %5095 = vst.msk [vmem:[%s517 + $0x39] sm:$0xff] %vm429, %v5063
        %5096 = vst.msk [vmem:[%s517 + $0x49] sm:$0xff] %vm429, %v5064
        %5097 = vst.msk [vmem:[%s517 + $0x51] sm:$0xff] %vm429, %v5065
        %5098 = vst.msk [vmem:[%s517 + $0x61] sm:$0xff] %vm429, %v5066
        %5099 = vst.msk [vmem:[%s517 + $0x69] sm:$0xff] %vm429, %v5067
        %5100 = vst.msk [vmem:[%s517 + $0x79] sm:$0xff] %vm429, %v5068
        %5101 = vst.msk [vmem:[%s517 + $0x81] sm:$0xff] %vm429, %v5069
        %5102 = vst.msk [vmem:[%s517 + $0x91] sm:$0xff] %vm429, %v5070
        %5103 = vst.msk [vmem:[%s517 + $0x99] sm:$0xff] %vm429, %v5071
        %5104 = vst.msk [vmem:[%s517 + $0xa9] sm:$0xff] %vm429, %v5072
        %5105 = vst.msk [vmem:[%s517 + $0xb1] sm:$0xff] %vm429, %v5073
        %5106 = vst.msk [vmem:[%s517 + $0xc1] sm:$0xff] %vm429, %v5074
        %5107 = vst.msk [vmem:[%s517 + $0xc9] sm:$0xff] %vm429, %v5075
        %5108 = vst.msk [vmem:[%s517 + $0xd9] sm:$0xff] %vm429, %v5076
        %5109 = vst.msk [vmem:[%s517 + $0xe1] sm:$0xff] %vm429, %v5077
        %5110 = vst.msk [vmem:[%s517 + $0xf1] sm:$0xff] %vm429, %v5078
        %5111 = vst.msk [vmem:[%s517 + $0xf9] sm:$0xff] %vm429, %v5079
        %5112 = vst.msk [vmem:[%s517 + $0x109] sm:$0xff] %vm429, %v5080
        %5113 = vst.msk [vmem:[%s517 + $0x111] sm:$0xff] %vm429, %v5081
        %5114 = vst.msk [vmem:[%s517 + $0x121] sm:$0xff] %vm429, %v5082
        %5115 = vst.msk [vmem:[%s517 + $0x129] sm:$0xff] %vm429, %v5083
        %5116 = vst.msk [vmem:[%s517 + $0x139] sm:$0xff] %vm429, %v5084
        %5117 = vst.msk [vmem:[%s517 + $0x141] sm:$0xff] %vm429, %v5085
        %5118 = vst.msk [vmem:[%s517 + $0x151] sm:$0xff] %vm429, %v5086
        %5119 = vst.msk [vmem:[%s517 + $0x159] sm:$0xff] %vm429, %v5087
        %5120 = vst.msk [vmem:[%s517 + $0x169] sm:$0xff] %vm429, %v5088
        %5121 = vst.msk [vmem:[%s517 + $0x171] sm:$0xff] %vm429, %v5089
        %v5122 = vld [vmem:[#allocation2] sm:$0xff]
        %v5123 = vld [vmem:[#allocation2 + $0x8] sm:$0xff]
        %v5124 = vld [vmem:[#allocation2 + $0x10] sm:$0x3]
        %v5125 = vld [vmem:[#allocation2 + $0x18] sm:$0xff]
        %v5126 = vld [vmem:[#allocation2 + $0x20] sm:$0xff]
        %v5127 = vld [vmem:[#allocation2 + $0x28] sm:$0x3]
        %v5128 = vld [vmem:[#allocation2 + $0x30] sm:$0xff]
        %v5129 = vld [vmem:[#allocation2 + $0x38] sm:$0xff]
        %v5130 = vld [vmem:[#allocation2 + $0x40] sm:$0x3]
        %v5131 = vld [vmem:[#allocation2 + $0x48] sm:$0xff]
        %v5132 = vld [vmem:[#allocation2 + $0x50] sm:$0xff]
        %v5133 = vld [vmem:[#allocation2 + $0x58] sm:$0x3]
        %v5134 = vld [vmem:[#allocation2 + $0x60] sm:$0xff]
        %v5135 = vld [vmem:[#allocation2 + $0x68] sm:$0xff]
        %v5136 = vld [vmem:[#allocation2 + $0x70] sm:$0x3]
        %v5137 = vld [vmem:[#allocation2 + $0x78] sm:$0xff]
        %v5138 = vld [vmem:[#allocation2 + $0x80] sm:$0xff]
        %v5139 = vld [vmem:[#allocation2 + $0x88] sm:$0x3]
        %v5140 = vld [vmem:[#allocation2 + $0x90] sm:$0xff]
        %v5141 = vld [vmem:[#allocation2 + $0x98] sm:$0xff]
        %v5142 = vld [vmem:[#allocation2 + $0xa0] sm:$0x3]
        %v5143 = vld [vmem:[#allocation2 + $0xa8] sm:$0xff]
        %v5144 = vld [vmem:[#allocation2 + $0xb0] sm:$0xff]
        %v5145 = vld [vmem:[#allocation2 + $0xb8] sm:$0x3]
        %v5146 = vld [vmem:[#allocation2 + $0xc0] sm:$0xff]
        %v5147 = vld [vmem:[#allocation2 + $0xc8] sm:$0xff]
        %v5148 = vld [vmem:[#allocation2 + $0xd0] sm:$0x3]
        %v5149 = vld [vmem:[#allocation2 + $0xd8] sm:$0xff]
        %v5150 = vld [vmem:[#allocation2 + $0xe0] sm:$0xff]
        %v5151 = vld [vmem:[#allocation2 + $0xe8] sm:$0x3]
        %v5152 = vld [vmem:[#allocation2 + $0xf0] sm:$0xff]
        %v5153 = vld [vmem:[#allocation2 + $0xf8] sm:$0xff]
        %v5154 = vld [vmem:[#allocation2 + $0x100] sm:$0x3]
        %v5155 = vld [vmem:[#allocation2 + $0x108] sm:$0xff]
        %v5156 = vld [vmem:[#allocation2 + $0x110] sm:$0xff]
        %v5157 = vld [vmem:[#allocation2 + $0x118] sm:$0x3]
        %v5158 = vld [vmem:[#allocation2 + $0x120] sm:$0xff]
        %v5159 = vld [vmem:[#allocation2 + $0x128] sm:$0xff]
        %v5160 = vld [vmem:[#allocation2 + $0x130] sm:$0x3]
        %v5161 = vld [vmem:[#allocation2 + $0x138] sm:$0xff]
        %v5162 = vld [vmem:[#allocation2 + $0x140] sm:$0xff]
        %v5163 = vld [vmem:[#allocation2 + $0x148] sm:$0x3]
        %v5164 = vld [vmem:[#allocation2 + $0x150] sm:$0xff]
        %v5165 = vld [vmem:[#allocation2 + $0x158] sm:$0xff]
        %v5166 = vld [vmem:[#allocation2 + $0x160] sm:$0x3]
        %v5167 = vld [vmem:[#allocation2 + $0x168] sm:$0xff]
        %v5168 = vld [vmem:[#allocation2 + $0x170] sm:$0xff]
        %v5169 = vld [vmem:[#allocation2 + $0x178] sm:$0x3]
        %v5170 = vld [vmem:[#allocation2 + $0x180] sm:$0xff]
        %v5171 = vld [vmem:[#allocation2 + $0x188] sm:$0xff]
        %v5172 = vld [vmem:[#allocation2 + $0x190] sm:$0x3]
        %v5173 = vld [vmem:[#allocation2 + $0x198] sm:$0xff]
        %v5174 = vld [vmem:[#allocation2 + $0x1a0] sm:$0xff]
        %v5175 = vld [vmem:[#allocation2 + $0x1a8] sm:$0x3]
        %5176 = vst.msk [vmem:[#allocation3] sm:$0xff] %vm429, %v5122
        %5177 = vst.msk [vmem:[#allocation3 + $0x18] sm:$0xff] %vm429, %v5123
        %5178 = vst.msk [vmem:[#allocation3 + $0x30] sm:$0xff] %vm429, %v5125
        %5179 = vst.msk [vmem:[#allocation3 + $0x48] sm:$0xff] %vm429, %v5126
        %5180 = vst.msk [vmem:[#allocation3 + $0x60] sm:$0xff] %vm429, %v5128
        %5181 = vst.msk [vmem:[#allocation3 + $0x78] sm:$0xff] %vm429, %v5129
        %5182 = vst.msk [vmem:[#allocation3 + $0x90] sm:$0xff] %vm429, %v5131
        %5183 = vst.msk [vmem:[#allocation3 + $0xa8] sm:$0xff] %vm429, %v5132
        %5184 = vst.msk [vmem:[#allocation3 + $0xc0] sm:$0xff] %vm429, %v5134
        %5185 = vst.msk [vmem:[#allocation3 + $0xd8] sm:$0xff] %vm429, %v5135
        %5186 = vst.msk [vmem:[#allocation3 + $0xf0] sm:$0xff] %vm429, %v5137
        %5187 = vst.msk [vmem:[#allocation3 + $0x108] sm:$0xff] %vm429, %v5138
        %5188 = vst.msk [vmem:[#allocation3 + $0x120] sm:$0xff] %vm429, %v5140
        %5189 = vst.msk [vmem:[#allocation3 + $0x138] sm:$0xff] %vm429, %v5141
        %5190 = vst.msk [vmem:[#allocation3 + $0x150] sm:$0xff] %vm429, %v5143
        %5191 = vst.msk [vmem:[#allocation3 + $0x168] sm:$0xff] %vm429, %v5144
        %5192 = vst.msk [vmem:[#allocation3 + $0x180] sm:$0xff] %vm429, %v5146
        %5193 = vst.msk [vmem:[#allocation3 + $0x198] sm:$0xff] %vm429, %v5147
        %5194 = vst.msk [vmem:[#allocation3 + $0x1b0] sm:$0xff] %vm429, %v5149
        %5195 = vst.msk [vmem:[#allocation3 + $0x1c8] sm:$0xff] %vm429, %v5150
        %5196 = vst.msk [vmem:[#allocation3 + $0x1e0] sm:$0xff] %vm429, %v5152
        %5197 = vst.msk [vmem:[#allocation3 + $0x1f8] sm:$0xff] %vm429, %v5153
        %5198 = vst.msk [vmem:[#allocation3 + $0x210] sm:$0xff] %vm429, %v5155
        %5199 = vst.msk [vmem:[#allocation3 + $0x228] sm:$0xff] %vm429, %v5156
        %5200 = vst.msk [vmem:[#allocation3 + $0x240] sm:$0xff] %vm429, %v5158
        %5201 = vst.msk [vmem:[#allocation3 + $0x258] sm:$0xff] %vm429, %v5159
        %5202 = vst.msk [vmem:[#allocation3 + $0x270] sm:$0xff] %vm429, %v5161
        %5203 = vst.msk [vmem:[#allocation3 + $0x288] sm:$0xff] %vm429, %v5162
        %5204 = vst.msk [vmem:[#allocation3 + $0x2a0] sm:$0xff] %vm429, %v5164
        %5205 = vst.msk [vmem:[#allocation3 + $0x2b8] sm:$0xff] %vm429, %v5165
        %5206 = vst.msk [vmem:[#allocation3 + $0x2d0] sm:$0xff] %vm429, %v5167
        %5207 = vst.msk [vmem:[#allocation3 + $0x2e8] sm:$0xff] %vm429, %v5168
        %v5256 = vrot.slane %v5122, 1
        %v5257 = vrot.slane %v5123, 1
        %v5258 = vsel %vm685, %v5256, %v5257
        %v5259 = vrot.slane %v5124, 1
        %v5260 = vsel %vm685, %v5257, %v5259
        %v5261 = vrot.slane %v5125, 1
        %v5262 = vrot.slane %v5126, 1
        %v5263 = vsel %vm685, %v5261, %v5262
        %v5264 = vrot.slane %v5127, 1
        %v5265 = vsel %vm685, %v5262, %v5264
        %v5266 = vrot.slane %v5128, 1
        %v5267 = vrot.slane %v5129, 1
        %v5268 = vsel %vm685, %v5266, %v5267
        %v5269 = vrot.slane %v5130, 1
        %v5270 = vsel %vm685, %v5267, %v5269
        %v5271 = vrot.slane %v5131, 1
        %v5272 = vrot.slane %v5132, 1
        %v5273 = vsel %vm685, %v5271, %v5272
        %v5274 = vrot.slane %v5133, 1
        %v5275 = vsel %vm685, %v5272, %v5274
        %v5276 = vrot.slane %v5134, 1
        %v5277 = vrot.slane %v5135, 1
        %v5278 = vsel %vm685, %v5276, %v5277
        %v5279 = vrot.slane %v5136, 1
        %v5280 = vsel %vm685, %v5277, %v5279
        %v5281 = vrot.slane %v5137, 1
        %v5282 = vrot.slane %v5138, 1
        %v5283 = vsel %vm685, %v5281, %v5282
        %v5284 = vrot.slane %v5139, 1
        %v5285 = vsel %vm685, %v5282, %v5284
        %v5286 = vrot.slane %v5140, 1
        %v5287 = vrot.slane %v5141, 1
        %v5288 = vsel %vm685, %v5286, %v5287
        %v5289 = vrot.slane %v5142, 1
        %v5290 = vsel %vm685, %v5287, %v5289
        %v5291 = vrot.slane %v5143, 1
        %v5292 = vrot.slane %v5144, 1
        %v5293 = vsel %vm685, %v5291, %v5292
        %v5294 = vrot.slane %v5145, 1
        %v5295 = vsel %vm685, %v5292, %v5294
        %v5296 = vrot.slane %v5146, 1
        %v5297 = vrot.slane %v5147, 1
        %v5298 = vsel %vm685, %v5296, %v5297
        %v5299 = vrot.slane %v5148, 1
        %v5300 = vsel %vm685, %v5297, %v5299
        %v5301 = vrot.slane %v5149, 1
        %v5302 = vrot.slane %v5150, 1
        %v5303 = vsel %vm685, %v5301, %v5302
        %v5304 = vrot.slane %v5151, 1
        %v5305 = vsel %vm685, %v5302, %v5304
        %v5306 = vrot.slane %v5152, 1
        %v5307 = vrot.slane %v5153, 1
        %v5308 = vsel %vm685, %v5306, %v5307
        %v5309 = vrot.slane %v5154, 1
        %v5310 = vsel %vm685, %v5307, %v5309
        %v5311 = vrot.slane %v5155, 1
        %v5312 = vrot.slane %v5156, 1
        %v5313 = vsel %vm685, %v5311, %v5312
        %v5314 = vrot.slane %v5157, 1
        %v5315 = vsel %vm685, %v5312, %v5314
        %v5316 = vrot.slane %v5158, 1
        %v5317 = vrot.slane %v5159, 1
        %v5318 = vsel %vm685, %v5316, %v5317
        %v5319 = vrot.slane %v5160, 1
        %v5320 = vsel %vm685, %v5317, %v5319
        %v5321 = vrot.slane %v5161, 1
        %v5322 = vrot.slane %v5162, 1
        %v5323 = vsel %vm685, %v5321, %v5322
        %v5324 = vrot.slane %v5163, 1
        %v5325 = vsel %vm685, %v5322, %v5324
        %v5326 = vrot.slane %v5164, 1
        %v5327 = vrot.slane %v5165, 1
        %v5328 = vsel %vm685, %v5326, %v5327
        %v5329 = vrot.slane %v5166, 1
        %v5330 = vsel %vm685, %v5327, %v5329
        %v5331 = vrot.slane %v5167, 1
        %v5332 = vrot.slane %v5168, 1
        %v5333 = vsel %vm685, %v5331, %v5332
        %v5334 = vrot.slane %v5169, 1
        %v5335 = vsel %vm685, %v5332, %v5334
        %5336 = vrot.lane.b32.xlu0 %v5258, 32
        %v5337 = vpop.permute.xlu0 %5336
        %5338 = vrot.lane.b32.xlu0 %v5260, 32
        %v5339 = vpop.permute.xlu0 %5338
        %5340 = vrot.lane.b32.xlu0 %v5263, 32
        %v5341 = vpop.permute.xlu0 %5340
        %5342 = vrot.lane.b32.xlu0 %v5265, 32
        %v5343 = vpop.permute.xlu0 %5342
        %5344 = vrot.lane.b32.xlu0 %v5268, 32
        %v5345 = vpop.permute.xlu0 %5344
        %5346 = vrot.lane.b32.xlu0 %v5270, 32
        %v5347 = vpop.permute.xlu0 %5346
        %5348 = vrot.lane.b32.xlu0 %v5273, 32
        %v5349 = vpop.permute.xlu0 %5348
        %5350 = vrot.lane.b32.xlu0 %v5275, 32
        %v5351 = vpop.permute.xlu0 %5350
        %5352 = vrot.lane.b32.xlu0 %v5278, 32
        %v5353 = vpop.permute.xlu0 %5352
        %5354 = vrot.lane.b32.xlu0 %v5280, 32
        %v5355 = vpop.permute.xlu0 %5354
        %5356 = vrot.lane.b32.xlu0 %v5283, 32
        %v5357 = vpop.permute.xlu0 %5356
        %5358 = vrot.lane.b32.xlu0 %v5285, 32
        %v5359 = vpop.permute.xlu0 %5358
        %5360 = vrot.lane.b32.xlu0 %v5288, 32
        %v5361 = vpop.permute.xlu0 %5360
        %5362 = vrot.lane.b32.xlu0 %v5290, 32
        %v5363 = vpop.permute.xlu0 %5362
        %5364 = vrot.lane.b32.xlu0 %v5293, 32
        %v5365 = vpop.permute.xlu0 %5364
        %5366 = vrot.lane.b32.xlu0 %v5295, 32
        %v5367 = vpop.permute.xlu0 %5366
        %5368 = vrot.lane.b32.xlu0 %v5298, 32
        %v5369 = vpop.permute.xlu0 %5368
        %5370 = vrot.lane.b32.xlu0 %v5300, 32
        %v5371 = vpop.permute.xlu0 %5370
        %5372 = vrot.lane.b32.xlu0 %v5303, 32
        %v5373 = vpop.permute.xlu0 %5372
        %5374 = vrot.lane.b32.xlu0 %v5305, 32
        %v5375 = vpop.permute.xlu0 %5374
        %5376 = vrot.lane.b32.xlu0 %v5308, 32
        %v5377 = vpop.permute.xlu0 %5376
        %5378 = vrot.lane.b32.xlu0 %v5310, 32
        %v5379 = vpop.permute.xlu0 %5378
        %5380 = vrot.lane.b32.xlu0 %v5313, 32
        %v5381 = vpop.permute.xlu0 %5380
        %5382 = vrot.lane.b32.xlu0 %v5315, 32
        %v5383 = vpop.permute.xlu0 %5382
        %5384 = vrot.lane.b32.xlu0 %v5318, 32
        %v5385 = vpop.permute.xlu0 %5384
        %5386 = vrot.lane.b32.xlu0 %v5320, 32
        %v5387 = vpop.permute.xlu0 %5386
        %5388 = vrot.lane.b32.xlu0 %v5323, 32
        %v5389 = vpop.permute.xlu0 %5388
        %5390 = vrot.lane.b32.xlu0 %v5325, 32
        %v5391 = vpop.permute.xlu0 %5390
        %5392 = vrot.lane.b32.xlu0 %v5328, 32
        %v5393 = vpop.permute.xlu0 %5392
        %5394 = vrot.lane.b32.xlu0 %v5330, 32
        %v5395 = vpop.permute.xlu0 %5394
        %5396 = vrot.lane.b32.xlu0 %v5333, 32
        %v5397 = vpop.permute.xlu0 %5396
        %5398 = vrot.lane.b32.xlu0 %v5335, 32
        %v5399 = vpop.permute.xlu0 %5398
        %5432 = vst.msk [vmem:[#allocation3] sm:$0xff] %vm2928, %v5337
        %5433 = vst.msk [vmem:[#allocation3 + $0x18] sm:$0xff] %vm2928, %v5339
        %5434 = vst.msk [vmem:[#allocation3 + $0x30] sm:$0xff] %vm2928, %v5341
        %5435 = vst.msk [vmem:[#allocation3 + $0x48] sm:$0xff] %vm2928, %v5343
        %5436 = vst.msk [vmem:[#allocation3 + $0x60] sm:$0xff] %vm2928, %v5345
        %5437 = vst.msk [vmem:[#allocation3 + $0x78] sm:$0xff] %vm2928, %v5347
        %5438 = vst.msk [vmem:[#allocation3 + $0x90] sm:$0xff] %vm2928, %v5349
        %5439 = vst.msk [vmem:[#allocation3 + $0xa8] sm:$0xff] %vm2928, %v5351
        %5440 = vst.msk [vmem:[#allocation3 + $0xc0] sm:$0xff] %vm2928, %v5353
        %5441 = vst.msk [vmem:[#allocation3 + $0xd8] sm:$0xff] %vm2928, %v5355
        %5442 = vst.msk [vmem:[#allocation3 + $0xf0] sm:$0xff] %vm2928, %v5357
        %5443 = vst.msk [vmem:[#allocation3 + $0x108] sm:$0xff] %vm2928, %v5359
        %5444 = vst.msk [vmem:[#allocation3 + $0x120] sm:$0xff] %vm2928, %v5361
        %5445 = vst.msk [vmem:[#allocation3 + $0x138] sm:$0xff] %vm2928, %v5363
        %5446 = vst.msk [vmem:[#allocation3 + $0x150] sm:$0xff] %vm2928, %v5365
        %5447 = vst.msk [vmem:[#allocation3 + $0x168] sm:$0xff] %vm2928, %v5367
        %5448 = vst.msk [vmem:[#allocation3 + $0x180] sm:$0xff] %vm2928, %v5369
        %5449 = vst.msk [vmem:[#allocation3 + $0x198] sm:$0xff] %vm2928, %v5371
        %5450 = vst.msk [vmem:[#allocation3 + $0x1b0] sm:$0xff] %vm2928, %v5373
        %5451 = vst.msk [vmem:[#allocation3 + $0x1c8] sm:$0xff] %vm2928, %v5375
        %5452 = vst.msk [vmem:[#allocation3 + $0x1e0] sm:$0xff] %vm2928, %v5377
        %5453 = vst.msk [vmem:[#allocation3 + $0x1f8] sm:$0xff] %vm2928, %v5379
        %5454 = vst.msk [vmem:[#allocation3 + $0x210] sm:$0xff] %vm2928, %v5381
        %5455 = vst.msk [vmem:[#allocation3 + $0x228] sm:$0xff] %vm2928, %v5383
        %5456 = vst.msk [vmem:[#allocation3 + $0x240] sm:$0xff] %vm2928, %v5385
        %5457 = vst.msk [vmem:[#allocation3 + $0x258] sm:$0xff] %vm2928, %v5387
        %5458 = vst.msk [vmem:[#allocation3 + $0x270] sm:$0xff] %vm2928, %v5389
        %5459 = vst.msk [vmem:[#allocation3 + $0x288] sm:$0xff] %vm2928, %v5391
        %5460 = vst.msk [vmem:[#allocation3 + $0x2a0] sm:$0xff] %vm2928, %v5393
        %5461 = vst.msk [vmem:[#allocation3 + $0x2b8] sm:$0xff] %vm2928, %v5395
        %5462 = vst.msk [vmem:[#allocation3 + $0x2d0] sm:$0xff] %vm2928, %v5397
        %5463 = vst.msk [vmem:[#allocation3 + $0x2e8] sm:$0xff] %vm2928, %v5399
        %v5464 = vrot.slane %v5122, 2
        %v5465 = vrot.slane %v5123, 2
        %v5466 = vsel %vm895, %v5464, %v5465
        %v5467 = vrot.slane %v5124, 2
        %v5468 = vsel %vm895, %v5465, %v5467
        %v5469 = vrot.slane %v5125, 2
        %v5470 = vrot.slane %v5126, 2
        %v5471 = vsel %vm895, %v5469, %v5470
        %v5472 = vrot.slane %v5127, 2
        %v5473 = vsel %vm895, %v5470, %v5472
        %v5474 = vrot.slane %v5128, 2
        %v5475 = vrot.slane %v5129, 2
        %v5476 = vsel %vm895, %v5474, %v5475
        %v5477 = vrot.slane %v5130, 2
        %v5478 = vsel %vm895, %v5475, %v5477
        %v5479 = vrot.slane %v5131, 2
        %v5480 = vrot.slane %v5132, 2
        %v5481 = vsel %vm895, %v5479, %v5480
        %v5482 = vrot.slane %v5133, 2
        %v5483 = vsel %vm895, %v5480, %v5482
        %v5484 = vrot.slane %v5134, 2
        %v5485 = vrot.slane %v5135, 2
        %v5486 = vsel %vm895, %v5484, %v5485
        %v5487 = vrot.slane %v5136, 2
        %v5488 = vsel %vm895, %v5485, %v5487
        %v5489 = vrot.slane %v5137, 2
        %v5490 = vrot.slane %v5138, 2
        %v5491 = vsel %vm895, %v5489, %v5490
        %v5492 = vrot.slane %v5139, 2
        %v5493 = vsel %vm895, %v5490, %v5492
        %v5494 = vrot.slane %v5140, 2
        %v5495 = vrot.slane %v5141, 2
        %v5496 = vsel %vm895, %v5494, %v5495
        %v5497 = vrot.slane %v5142, 2
        %v5498 = vsel %vm895, %v5495, %v5497
        %v5499 = vrot.slane %v5143, 2
        %v5500 = vrot.slane %v5144, 2
        %v5501 = vsel %vm895, %v5499, %v5500
        %v5502 = vrot.slane %v5145, 2
        %v5503 = vsel %vm895, %v5500, %v5502
        %v5504 = vrot.slane %v5146, 2
        %v5505 = vrot.slane %v5147, 2
        %v5506 = vsel %vm895, %v5504, %v5505
        %v5507 = vrot.slane %v5148, 2
        %v5508 = vsel %vm895, %v5505, %v5507
        %v5509 = vrot.slane %v5149, 2
        %v5510 = vrot.slane %v5150, 2
        %v5511 = vsel %vm895, %v5509, %v5510
        %v5512 = vrot.slane %v5151, 2
        %v5513 = vsel %vm895, %v5510, %v5512
        %v5514 = vrot.slane %v5152, 2
        %v5515 = vrot.slane %v5153, 2
        %v5516 = vsel %vm895, %v5514, %v5515
        %v5517 = vrot.slane %v5154, 2
        %v5518 = vsel %vm895, %v5515, %v5517
        %v5519 = vrot.slane %v5155, 2
        %v5520 = vrot.slane %v5156, 2
        %v5521 = vsel %vm895, %v5519, %v5520
        %v5522 = vrot.slane %v5157, 2
        %v5523 = vsel %vm895, %v5520, %v5522
        %v5524 = vrot.slane %v5158, 2
        %v5525 = vrot.slane %v5159, 2
        %v5526 = vsel %vm895, %v5524, %v5525
        %v5527 = vrot.slane %v5160, 2
        %v5528 = vsel %vm895, %v5525, %v5527
        %v5529 = vrot.slane %v5161, 2
        %v5530 = vrot.slane %v5162, 2
        %v5531 = vsel %vm895, %v5529, %v5530
        %v5532 = vrot.slane %v5163, 2
        %v5533 = vsel %vm895, %v5530, %v5532
        %v5534 = vrot.slane %v5164, 2
        %v5535 = vrot.slane %v5165, 2
        %v5536 = vsel %vm895, %v5534, %v5535
        %v5537 = vrot.slane %v5166, 2
        %v5538 = vsel %vm895, %v5535, %v5537
        %v5539 = vrot.slane %v5167, 2
        %v5540 = vrot.slane %v5168, 2
        %v5541 = vsel %vm895, %v5539, %v5540
        %v5542 = vrot.slane %v5169, 2
        %v5543 = vsel %vm895, %v5540, %v5542
        %5544 = vrot.lane.b32.xlu0 %v5466, 64
        %v5545 = vpop.permute.xlu0 %5544
        %5546 = vrot.lane.b32.xlu0 %v5468, 64
        %v5547 = vpop.permute.xlu0 %5546
        %5548 = vrot.lane.b32.xlu0 %v5471, 64
        %v5549 = vpop.permute.xlu0 %5548
        %5550 = vrot.lane.b32.xlu0 %v5473, 64
        %v5551 = vpop.permute.xlu0 %5550
        %5552 = vrot.lane.b32.xlu0 %v5476, 64
        %v5553 = vpop.permute.xlu0 %5552
        %5554 = vrot.lane.b32.xlu0 %v5478, 64
        %v5555 = vpop.permute.xlu0 %5554
        %5556 = vrot.lane.b32.xlu0 %v5481, 64
        %v5557 = vpop.permute.xlu0 %5556
        %5558 = vrot.lane.b32.xlu0 %v5483, 64
        %v5559 = vpop.permute.xlu0 %5558
        %5560 = vrot.lane.b32.xlu0 %v5486, 64
        %v5561 = vpop.permute.xlu0 %5560
        %5562 = vrot.lane.b32.xlu0 %v5488, 64
        %v5563 = vpop.permute.xlu0 %5562
        %5564 = vrot.lane.b32.xlu0 %v5491, 64
        %v5565 = vpop.permute.xlu0 %5564
        %5566 = vrot.lane.b32.xlu0 %v5493, 64
        %v5567 = vpop.permute.xlu0 %5566
        %5568 = vrot.lane.b32.xlu0 %v5496, 64
        %v5569 = vpop.permute.xlu0 %5568
        %5570 = vrot.lane.b32.xlu0 %v5498, 64
        %v5571 = vpop.permute.xlu0 %5570
        %5572 = vrot.lane.b32.xlu0 %v5501, 64
        %v5573 = vpop.permute.xlu0 %5572
        %5574 = vrot.lane.b32.xlu0 %v5503, 64
        %v5575 = vpop.permute.xlu0 %5574
        %5576 = vrot.lane.b32.xlu0 %v5506, 64
        %v5577 = vpop.permute.xlu0 %5576
        %5578 = vrot.lane.b32.xlu0 %v5508, 64
        %v5579 = vpop.permute.xlu0 %5578
        %5580 = vrot.lane.b32.xlu0 %v5511, 64
        %v5581 = vpop.permute.xlu0 %5580
        %5582 = vrot.lane.b32.xlu0 %v5513, 64
        %v5583 = vpop.permute.xlu0 %5582
        %5584 = vrot.lane.b32.xlu0 %v5516, 64
        %v5585 = vpop.permute.xlu0 %5584
        %5586 = vrot.lane.b32.xlu0 %v5518, 64
        %v5587 = vpop.permute.xlu0 %5586
        %5588 = vrot.lane.b32.xlu0 %v5521, 64
        %v5589 = vpop.permute.xlu0 %5588
        %5590 = vrot.lane.b32.xlu0 %v5523, 64
        %v5591 = vpop.permute.xlu0 %5590
        %5592 = vrot.lane.b32.xlu0 %v5526, 64
        %v5593 = vpop.permute.xlu0 %5592
        %5594 = vrot.lane.b32.xlu0 %v5528, 64
        %v5595 = vpop.permute.xlu0 %5594
        %5596 = vrot.lane.b32.xlu0 %v5531, 64
        %v5597 = vpop.permute.xlu0 %5596
        %5598 = vrot.lane.b32.xlu0 %v5533, 64
        %v5599 = vpop.permute.xlu0 %5598
        %5600 = vrot.lane.b32.xlu0 %v5536, 64
        %v5601 = vpop.permute.xlu0 %5600
        %5602 = vrot.lane.b32.xlu0 %v5538, 64
        %v5603 = vpop.permute.xlu0 %5602
        %5604 = vrot.lane.b32.xlu0 %v5541, 64
        %v5605 = vpop.permute.xlu0 %5604
        %5606 = vrot.lane.b32.xlu0 %v5543, 64
        %v5607 = vpop.permute.xlu0 %5606
        %5640 = vst.msk [vmem:[#allocation3] sm:$0xff] %vm3137, %v5545
        %5641 = vst.msk [vmem:[#allocation3 + $0x18] sm:$0xff] %vm3137, %v5547
        %5642 = vst.msk [vmem:[#allocation3 + $0x30] sm:$0xff] %vm3137, %v5549
        %5643 = vst.msk [vmem:[#allocation3 + $0x48] sm:$0xff] %vm3137, %v5551
        %5644 = vst.msk [vmem:[#allocation3 + $0x60] sm:$0xff] %vm3137, %v5553
        %5645 = vst.msk [vmem:[#allocation3 + $0x78] sm:$0xff] %vm3137, %v5555
        %5646 = vst.msk [vmem:[#allocation3 + $0x90] sm:$0xff] %vm3137, %v5557
        %5647 = vst.msk [vmem:[#allocation3 + $0xa8] sm:$0xff] %vm3137, %v5559
        %5648 = vst.msk [vmem:[#allocation3 + $0xc0] sm:$0xff] %vm3137, %v5561
        %5649 = vst.msk [vmem:[#allocation3 + $0xd8] sm:$0xff] %vm3137, %v5563
        %5650 = vst.msk [vmem:[#allocation3 + $0xf0] sm:$0xff] %vm3137, %v5565
        %5651 = vst.msk [vmem:[#allocation3 + $0x108] sm:$0xff] %vm3137, %v5567
        %5652 = vst.msk [vmem:[#allocation3 + $0x120] sm:$0xff] %vm3137, %v5569
        %5653 = vst.msk [vmem:[#allocation3 + $0x138] sm:$0xff] %vm3137, %v5571
        %5654 = vst.msk [vmem:[#allocation3 + $0x150] sm:$0xff] %vm3137, %v5573
        %5655 = vst.msk [vmem:[#allocation3 + $0x168] sm:$0xff] %vm3137, %v5575
        %5656 = vst.msk [vmem:[#allocation3 + $0x180] sm:$0xff] %vm3137, %v5577
        %5657 = vst.msk [vmem:[#allocation3 + $0x198] sm:$0xff] %vm3137, %v5579
        %5658 = vst.msk [vmem:[#allocation3 + $0x1b0] sm:$0xff] %vm3137, %v5581
        %5659 = vst.msk [vmem:[#allocation3 + $0x1c8] sm:$0xff] %vm3137, %v5583
        %5660 = vst.msk [vmem:[#allocation3 + $0x1e0] sm:$0xff] %vm3137, %v5585
        %5661 = vst.msk [vmem:[#allocation3 + $0x1f8] sm:$0xff] %vm3137, %v5587
        %5662 = vst.msk [vmem:[#allocation3 + $0x210] sm:$0xff] %vm3137, %v5589
        %5663 = vst.msk [vmem:[#allocation3 + $0x228] sm:$0xff] %vm3137, %v5591
        %5664 = vst.msk [vmem:[#allocation3 + $0x240] sm:$0xff] %vm3137, %v5593
        %5665 = vst.msk [vmem:[#allocation3 + $0x258] sm:$0xff] %vm3137, %v5595
        %5666 = vst.msk [vmem:[#allocation3 + $0x270] sm:$0xff] %vm3137, %v5597
        %5667 = vst.msk [vmem:[#allocation3 + $0x288] sm:$0xff] %vm3137, %v5599
        %5668 = vst.msk [vmem:[#allocation3 + $0x2a0] sm:$0xff] %vm3137, %v5601
        %5669 = vst.msk [vmem:[#allocation3 + $0x2b8] sm:$0xff] %vm3137, %v5603
        %5670 = vst.msk [vmem:[#allocation3 + $0x2d0] sm:$0xff] %vm3137, %v5605
        %5671 = vst.msk [vmem:[#allocation3 + $0x2e8] sm:$0xff] %vm3137, %v5607
        %5674 = vrot.lane.b32.xlu0 %v5125, 96
        %v5675 = vpop.permute.xlu0 %5674
        %5676 = vrot.lane.b32.xlu0 %v5126, 96
        %v5677 = vpop.permute.xlu0 %5676
        %5678 = vrot.lane.b32.xlu0 %v5128, 96
        %v5679 = vpop.permute.xlu0 %5678
        %5680 = vrot.lane.b32.xlu0 %v5129, 96
        %v5681 = vpop.permute.xlu0 %5680
        %5682 = vrot.lane.b32.xlu0 %v5131, 96
        %v5683 = vpop.permute.xlu0 %5682
        %5684 = vrot.lane.b32.xlu0 %v5132, 96
        %v5685 = vpop.permute.xlu0 %5684
        %5686 = vrot.lane.b32.xlu0 %v5134, 96
        %v5687 = vpop.permute.xlu0 %5686
        %5688 = vrot.lane.b32.xlu0 %v5135, 96
        %v5689 = vpop.permute.xlu0 %5688
        %5690 = vrot.lane.b32.xlu0 %v5137, 96
        %v5691 = vpop.permute.xlu0 %5690
        %5692 = vrot.lane.b32.xlu0 %v5138, 96
        %v5693 = vpop.permute.xlu0 %5692
        %5694 = vrot.lane.b32.xlu0 %v5140, 96
        %v5695 = vpop.permute.xlu0 %5694
        %5696 = vrot.lane.b32.xlu0 %v5141, 96
        %v5697 = vpop.permute.xlu0 %5696
        %5698 = vrot.lane.b32.xlu0 %v5143, 96
        %v5699 = vpop.permute.xlu0 %5698
        %5700 = vrot.lane.b32.xlu0 %v5144, 96
        %v5701 = vpop.permute.xlu0 %5700
        %5702 = vrot.lane.b32.xlu0 %v5146, 96
        %v5703 = vpop.permute.xlu0 %5702
        %5704 = vrot.lane.b32.xlu0 %v5147, 96
        %v5705 = vpop.permute.xlu0 %5704
        %5706 = vrot.lane.b32.xlu0 %v5149, 96
        %v5707 = vpop.permute.xlu0 %5706
        %5708 = vrot.lane.b32.xlu0 %v5150, 96
        %v5709 = vpop.permute.xlu0 %5708
        %5710 = vrot.lane.b32.xlu0 %v5152, 96
        %v5711 = vpop.permute.xlu0 %5710
        %5712 = vrot.lane.b32.xlu0 %v5153, 96
        %v5713 = vpop.permute.xlu0 %5712
        %5714 = vrot.lane.b32.xlu0 %v5155, 96
        %v5715 = vpop.permute.xlu0 %5714
        %5716 = vrot.lane.b32.xlu0 %v5156, 96
        %v5717 = vpop.permute.xlu0 %5716
        %5718 = vrot.lane.b32.xlu0 %v5158, 96
        %v5719 = vpop.permute.xlu0 %5718
        %5720 = vrot.lane.b32.xlu0 %v5159, 96
        %v5721 = vpop.permute.xlu0 %5720
        %5722 = vrot.lane.b32.xlu0 %v5161, 96
        %v5723 = vpop.permute.xlu0 %5722
        %5724 = vrot.lane.b32.xlu0 %v5162, 96
        %v5725 = vpop.permute.xlu0 %5724
        %5726 = vrot.lane.b32.xlu0 %v5164, 96
        %v5727 = vpop.permute.xlu0 %5726
        %5728 = vrot.lane.b32.xlu0 %v5165, 96
        %v5729 = vpop.permute.xlu0 %5728
        %5730 = vrot.lane.b32.xlu0 %v5167, 96
        %v5731 = vpop.permute.xlu0 %5730
        %5732 = vrot.lane.b32.xlu0 %v5168, 96
        %v5733 = vpop.permute.xlu0 %5732
        %5734 = vrot.lane.b32.xlu0 %v5170, 96
        %v5735 = vpop.permute.xlu0 %5734
        %5736 = vrot.lane.b32.xlu0 %v5171, 96
        %v5737 = vpop.permute.xlu0 %5736
        %5770 = vst.msk [vmem:[#allocation3] sm:$0xff] %vm3268, %v5675
        %5771 = vst.msk [vmem:[#allocation3 + $0x18] sm:$0xff] %vm3268, %v5677
        %5772 = vst.msk [vmem:[#allocation3 + $0x30] sm:$0xff] %vm3268, %v5679
        %5773 = vst.msk [vmem:[#allocation3 + $0x48] sm:$0xff] %vm3268, %v5681
        %5774 = vst.msk [vmem:[#allocation3 + $0x60] sm:$0xff] %vm3268, %v5683
        %5775 = vst.msk [vmem:[#allocation3 + $0x78] sm:$0xff] %vm3268, %v5685
        %5776 = vst.msk [vmem:[#allocation3 + $0x90] sm:$0xff] %vm3268, %v5687
        %5777 = vst.msk [vmem:[#allocation3 + $0xa8] sm:$0xff] %vm3268, %v5689
        %5778 = vst.msk [vmem:[#allocation3 + $0xc0] sm:$0xff] %vm3268, %v5691
        %5779 = vst.msk [vmem:[#allocation3 + $0xd8] sm:$0xff] %vm3268, %v5693
        %5780 = vst.msk [vmem:[#allocation3 + $0xf0] sm:$0xff] %vm3268, %v5695
        %5781 = vst.msk [vmem:[#allocation3 + $0x108] sm:$0xff] %vm3268, %v5697
        %5782 = vst.msk [vmem:[#allocation3 + $0x120] sm:$0xff] %vm3268, %v5699
        %5783 = vst.msk [vmem:[#allocation3 + $0x138] sm:$0xff] %vm3268, %v5701
        %5784 = vst.msk [vmem:[#allocation3 + $0x150] sm:$0xff] %vm3268, %v5703
        %5785 = vst.msk [vmem:[#allocation3 + $0x168] sm:$0xff] %vm3268, %v5705
        %5786 = vst.msk [vmem:[#allocation3 + $0x180] sm:$0xff] %vm3268, %v5707
        %5787 = vst.msk [vmem:[#allocation3 + $0x198] sm:$0xff] %vm3268, %v5709
        %5788 = vst.msk [vmem:[#allocation3 + $0x1b0] sm:$0xff] %vm3268, %v5711
        %5789 = vst.msk [vmem:[#allocation3 + $0x1c8] sm:$0xff] %vm3268, %v5713
        %5790 = vst.msk [vmem:[#allocation3 + $0x1e0] sm:$0xff] %vm3268, %v5715
        %5791 = vst.msk [vmem:[#allocation3 + $0x1f8] sm:$0xff] %vm3268, %v5717
        %5792 = vst.msk [vmem:[#allocation3 + $0x210] sm:$0xff] %vm3268, %v5719
        %5793 = vst.msk [vmem:[#allocation3 + $0x228] sm:$0xff] %vm3268, %v5721
        %5794 = vst.msk [vmem:[#allocation3 + $0x240] sm:$0xff] %vm3268, %v5723
        %5795 = vst.msk [vmem:[#allocation3 + $0x258] sm:$0xff] %vm3268, %v5725
        %5796 = vst.msk [vmem:[#allocation3 + $0x270] sm:$0xff] %vm3268, %v5727
        %5797 = vst.msk [vmem:[#allocation3 + $0x288] sm:$0xff] %vm3268, %v5729
        %5798 = vst.msk [vmem:[#allocation3 + $0x2a0] sm:$0xff] %vm3268, %v5731
        %5799 = vst.msk [vmem:[#allocation3 + $0x2b8] sm:$0xff] %vm3268, %v5733
        %5800 = vst.msk [vmem:[#allocation3 + $0x2d0] sm:$0xff] %vm3268, %v5735
        %5801 = vst.msk [vmem:[#allocation3 + $0x2e8] sm:$0xff] %vm3268, %v5737
        %v5803 = vrot.slane %v5170, 1
        %v5804 = vrot.slane %v5171, 1
        %v5805 = vsel %vm685, %v5803, %v5804
        %v5806 = vrot.slane %v5172, 1
        %v5807 = vsel %vm685, %v5804, %v5806
        %5840 = vst.msk [vmem:[#allocation3 + $0x8] sm:$0xff] %vm429, %v5263
        %5841 = vst.msk [vmem:[#allocation3 + $0x20] sm:$0xff] %vm429, %v5265
        %5842 = vst.msk [vmem:[#allocation3 + $0x38] sm:$0xff] %vm429, %v5268
        %5843 = vst.msk [vmem:[#allocation3 + $0x50] sm:$0xff] %vm429, %v5270
        %5844 = vst.msk [vmem:[#allocation3 + $0x68] sm:$0xff] %vm429, %v5273
        %5845 = vst.msk [vmem:[#allocation3 + $0x80] sm:$0xff] %vm429, %v5275
        %5846 = vst.msk [vmem:[#allocation3 + $0x98] sm:$0xff] %vm429, %v5278
        %5847 = vst.msk [vmem:[#allocation3 + $0xb0] sm:$0xff] %vm429, %v5280
        %5848 = vst.msk [vmem:[#allocation3 + $0xc8] sm:$0xff] %vm429, %v5283
        %5849 = vst.msk [vmem:[#allocation3 + $0xe0] sm:$0xff] %vm429, %v5285
        %5850 = vst.msk [vmem:[#allocation3 + $0xf8] sm:$0xff] %vm429, %v5288
        %5851 = vst.msk [vmem:[#allocation3 + $0x110] sm:$0xff] %vm429, %v5290
        %5852 = vst.msk [vmem:[#allocation3 + $0x128] sm:$0xff] %vm429, %v5293
        %5853 = vst.msk [vmem:[#allocation3 + $0x140] sm:$0xff] %vm429, %v5295
        %5854 = vst.msk [vmem:[#allocation3 + $0x158] sm:$0xff] %vm429, %v5298
        %5855 = vst.msk [vmem:[#allocation3 + $0x170] sm:$0xff] %vm429, %v5300
        %5856 = vst.msk [vmem:[#allocation3 + $0x188] sm:$0xff] %vm429, %v5303
        %5857 = vst.msk [vmem:[#allocation3 + $0x1a0] sm:$0xff] %vm429, %v5305
        %5858 = vst.msk [vmem:[#allocation3 + $0x1b8] sm:$0xff] %vm429, %v5308
        %5859 = vst.msk [vmem:[#allocation3 + $0x1d0] sm:$0xff] %vm429, %v5310
        %5860 = vst.msk [vmem:[#allocation3 + $0x1e8] sm:$0xff] %vm429, %v5313
        %5861 = vst.msk [vmem:[#allocation3 + $0x200] sm:$0xff] %vm429, %v5315
        %5862 = vst.msk [vmem:[#allocation3 + $0x218] sm:$0xff] %vm429, %v5318
        %5863 = vst.msk [vmem:[#allocation3 + $0x230] sm:$0xff] %vm429, %v5320
        %5864 = vst.msk [vmem:[#allocation3 + $0x248] sm:$0xff] %vm429, %v5323
        %5865 = vst.msk [vmem:[#allocation3 + $0x260] sm:$0xff] %vm429, %v5325
        %5866 = vst.msk [vmem:[#allocation3 + $0x278] sm:$0xff] %vm429, %v5328
        %5867 = vst.msk [vmem:[#allocation3 + $0x290] sm:$0xff] %vm429, %v5330
        %5868 = vst.msk [vmem:[#allocation3 + $0x2a8] sm:$0xff] %vm429, %v5333
        %5869 = vst.msk [vmem:[#allocation3 + $0x2c0] sm:$0xff] %vm429, %v5335
        %5870 = vst.msk [vmem:[#allocation3 + $0x2d8] sm:$0xff] %vm429, %v5805
        %5871 = vst.msk [vmem:[#allocation3 + $0x2f0] sm:$0xff] %vm429, %v5807
        %v5872 = vrot.slane %v5170, 2
        %v5873 = vrot.slane %v5171, 2
        %v5874 = vsel %vm895, %v5872, %v5873
        %v5875 = vrot.slane %v5172, 2
        %v5876 = vsel %vm895, %v5873, %v5875
        %5877 = vrot.lane.b32.xlu0 %v5471, 32
        %v5878 = vpop.permute.xlu0 %5877
        %5879 = vrot.lane.b32.xlu0 %v5473, 32
        %v5880 = vpop.permute.xlu0 %5879
        %5881 = vrot.lane.b32.xlu0 %v5476, 32
        %v5882 = vpop.permute.xlu0 %5881
        %5883 = vrot.lane.b32.xlu0 %v5478, 32
        %v5884 = vpop.permute.xlu0 %5883
        %5885 = vrot.lane.b32.xlu0 %v5481, 32
        %v5886 = vpop.permute.xlu0 %5885
        %5887 = vrot.lane.b32.xlu0 %v5483, 32
        %v5888 = vpop.permute.xlu0 %5887
        %5889 = vrot.lane.b32.xlu0 %v5486, 32
        %v5890 = vpop.permute.xlu0 %5889
        %5891 = vrot.lane.b32.xlu0 %v5488, 32
        %v5892 = vpop.permute.xlu0 %5891
        %5893 = vrot.lane.b32.xlu0 %v5491, 32
        %v5894 = vpop.permute.xlu0 %5893
        %5895 = vrot.lane.b32.xlu0 %v5493, 32
        %v5896 = vpop.permute.xlu0 %5895
        %5897 = vrot.lane.b32.xlu0 %v5496, 32
        %v5898 = vpop.permute.xlu0 %5897
        %5899 = vrot.lane.b32.xlu0 %v5498, 32
        %v5900 = vpop.permute.xlu0 %5899
        %5901 = vrot.lane.b32.xlu0 %v5501, 32
        %v5902 = vpop.permute.xlu0 %5901
        %5903 = vrot.lane.b32.xlu0 %v5503, 32
        %v5904 = vpop.permute.xlu0 %5903
        %5905 = vrot.lane.b32.xlu0 %v5506, 32
        %v5906 = vpop.permute.xlu0 %5905
        %5907 = vrot.lane.b32.xlu0 %v5508, 32
        %v5908 = vpop.permute.xlu0 %5907
        %5909 = vrot.lane.b32.xlu0 %v5511, 32
        %v5910 = vpop.permute.xlu0 %5909
        %5911 = vrot.lane.b32.xlu0 %v5513, 32
        %v5912 = vpop.permute.xlu0 %5911
        %5913 = vrot.lane.b32.xlu0 %v5516, 32
        %v5914 = vpop.permute.xlu0 %5913
        %5915 = vrot.lane.b32.xlu0 %v5518, 32
        %v5916 = vpop.permute.xlu0 %5915
        %5917 = vrot.lane.b32.xlu0 %v5521, 32
        %v5918 = vpop.permute.xlu0 %5917
        %5919 = vrot.lane.b32.xlu0 %v5523, 32
        %v5920 = vpop.permute.xlu0 %5919
        %5921 = vrot.lane.b32.xlu0 %v5526, 32
        %v5922 = vpop.permute.xlu0 %5921
        %5923 = vrot.lane.b32.xlu0 %v5528, 32
        %v5924 = vpop.permute.xlu0 %5923
        %5925 = vrot.lane.b32.xlu0 %v5531, 32
        %v5926 = vpop.permute.xlu0 %5925
        %5927 = vrot.lane.b32.xlu0 %v5533, 32
        %v5928 = vpop.permute.xlu0 %5927
        %5929 = vrot.lane.b32.xlu0 %v5536, 32
        %v5930 = vpop.permute.xlu0 %5929
        %5931 = vrot.lane.b32.xlu0 %v5538, 32
        %v5932 = vpop.permute.xlu0 %5931
        %5933 = vrot.lane.b32.xlu0 %v5541, 32
        %v5934 = vpop.permute.xlu0 %5933
        %5935 = vrot.lane.b32.xlu0 %v5543, 32
        %v5936 = vpop.permute.xlu0 %5935
        %5937 = vrot.lane.b32.xlu0 %v5874, 32
        %v5938 = vpop.permute.xlu0 %5937
        %5939 = vrot.lane.b32.xlu0 %v5876, 32
        %v5940 = vpop.permute.xlu0 %5939
        %5973 = vst.msk [vmem:[#allocation3 + $0x8] sm:$0xff] %vm2928, %v5878
        %5974 = vst.msk [vmem:[#allocation3 + $0x20] sm:$0xff] %vm2928, %v5880
        %5975 = vst.msk [vmem:[#allocation3 + $0x38] sm:$0xff] %vm2928, %v5882
        %5976 = vst.msk [vmem:[#allocation3 + $0x50] sm:$0xff] %vm2928, %v5884
        %5977 = vst.msk [vmem:[#allocation3 + $0x68] sm:$0xff] %vm2928, %v5886
        %5978 = vst.msk [vmem:[#allocation3 + $0x80] sm:$0xff] %vm2928, %v5888
        %5979 = vst.msk [vmem:[#allocation3 + $0x98] sm:$0xff] %vm2928, %v5890
        %5980 = vst.msk [vmem:[#allocation3 + $0xb0] sm:$0xff] %vm2928, %v5892
        %5981 = vst.msk [vmem:[#allocation3 + $0xc8] sm:$0xff] %vm2928, %v5894
        %5982 = vst.msk [vmem:[#allocation3 + $0xe0] sm:$0xff] %vm2928, %v5896
        %5983 = vst.msk [vmem:[#allocation3 + $0xf8] sm:$0xff] %vm2928, %v5898
        %5984 = vst.msk [vmem:[#allocation3 + $0x110] sm:$0xff] %vm2928, %v5900
        %5985 = vst.msk [vmem:[#allocation3 + $0x128] sm:$0xff] %vm2928, %v5902
        %5986 = vst.msk [vmem:[#allocation3 + $0x140] sm:$0xff] %vm2928, %v5904
        %5987 = vst.msk [vmem:[#allocation3 + $0x158] sm:$0xff] %vm2928, %v5906
        %5988 = vst.msk [vmem:[#allocation3 + $0x170] sm:$0xff] %vm2928, %v5908
        %5989 = vst.msk [vmem:[#allocation3 + $0x188] sm:$0xff] %vm2928, %v5910
        %5990 = vst.msk [vmem:[#allocation3 + $0x1a0] sm:$0xff] %vm2928, %v5912
        %5991 = vst.msk [vmem:[#allocation3 + $0x1b8] sm:$0xff] %vm2928, %v5914
        %5992 = vst.msk [vmem:[#allocation3 + $0x1d0] sm:$0xff] %vm2928, %v5916
        %5993 = vst.msk [vmem:[#allocation3 + $0x1e8] sm:$0xff] %vm2928, %v5918
        %5994 = vst.msk [vmem:[#allocation3 + $0x200] sm:$0xff] %vm2928, %v5920
        %5995 = vst.msk [vmem:[#allocation3 + $0x218] sm:$0xff] %vm2928, %v5922
        %5996 = vst.msk [vmem:[#allocation3 + $0x230] sm:$0xff] %vm2928, %v5924
        %5997 = vst.msk [vmem:[#allocation3 + $0x248] sm:$0xff] %vm2928, %v5926
        %5998 = vst.msk [vmem:[#allocation3 + $0x260] sm:$0xff] %vm2928, %v5928
        %5999 = vst.msk [vmem:[#allocation3 + $0x278] sm:$0xff] %vm2928, %v5930
        %6000 = vst.msk [vmem:[#allocation3 + $0x290] sm:$0xff] %vm2928, %v5932
        %6001 = vst.msk [vmem:[#allocation3 + $0x2a8] sm:$0xff] %vm2928, %v5934
        %6002 = vst.msk [vmem:[#allocation3 + $0x2c0] sm:$0xff] %vm2928, %v5936
        %6003 = vst.msk [vmem:[#allocation3 + $0x2d8] sm:$0xff] %vm2928, %v5938
        %6004 = vst.msk [vmem:[#allocation3 + $0x2f0] sm:$0xff] %vm2928, %v5940
        %6007 = vrot.lane.b32.xlu0 %v5128, 64
        %v6008 = vpop.permute.xlu0 %6007
        %6009 = vrot.lane.b32.xlu0 %v5129, 64
        %v6010 = vpop.permute.xlu0 %6009
        %6011 = vrot.lane.b32.xlu0 %v5131, 64
        %v6012 = vpop.permute.xlu0 %6011
        %6013 = vrot.lane.b32.xlu0 %v5132, 64
        %v6014 = vpop.permute.xlu0 %6013
        %6015 = vrot.lane.b32.xlu0 %v5134, 64
        %v6016 = vpop.permute.xlu0 %6015
        %6017 = vrot.lane.b32.xlu0 %v5135, 64
        %v6018 = vpop.permute.xlu0 %6017
        %6019 = vrot.lane.b32.xlu0 %v5137, 64
        %v6020 = vpop.permute.xlu0 %6019
        %6021 = vrot.lane.b32.xlu0 %v5138, 64
        %v6022 = vpop.permute.xlu0 %6021
        %6023 = vrot.lane.b32.xlu0 %v5140, 64
        %v6024 = vpop.permute.xlu0 %6023
        %6025 = vrot.lane.b32.xlu0 %v5141, 64
        %v6026 = vpop.permute.xlu0 %6025
        %6027 = vrot.lane.b32.xlu0 %v5143, 64
        %v6028 = vpop.permute.xlu0 %6027
        %6029 = vrot.lane.b32.xlu0 %v5144, 64
        %v6030 = vpop.permute.xlu0 %6029
        %6031 = vrot.lane.b32.xlu0 %v5146, 64
        %v6032 = vpop.permute.xlu0 %6031
        %6033 = vrot.lane.b32.xlu0 %v5147, 64
        %v6034 = vpop.permute.xlu0 %6033
        %6035 = vrot.lane.b32.xlu0 %v5149, 64
        %v6036 = vpop.permute.xlu0 %6035
        %6037 = vrot.lane.b32.xlu0 %v5150, 64
        %v6038 = vpop.permute.xlu0 %6037
        %6039 = vrot.lane.b32.xlu0 %v5152, 64
        %v6040 = vpop.permute.xlu0 %6039
        %6041 = vrot.lane.b32.xlu0 %v5153, 64
        %v6042 = vpop.permute.xlu0 %6041
        %6043 = vrot.lane.b32.xlu0 %v5155, 64
        %v6044 = vpop.permute.xlu0 %6043
        %6045 = vrot.lane.b32.xlu0 %v5156, 64
        %v6046 = vpop.permute.xlu0 %6045
        %6047 = vrot.lane.b32.xlu0 %v5158, 64
        %v6048 = vpop.permute.xlu0 %6047
        %6049 = vrot.lane.b32.xlu0 %v5159, 64
        %v6050 = vpop.permute.xlu0 %6049
        %6051 = vrot.lane.b32.xlu0 %v5161, 64
        %v6052 = vpop.permute.xlu0 %6051
        %6053 = vrot.lane.b32.xlu0 %v5162, 64
        %v6054 = vpop.permute.xlu0 %6053
        %6055 = vrot.lane.b32.xlu0 %v5164, 64
        %v6056 = vpop.permute.xlu0 %6055
        %6057 = vrot.lane.b32.xlu0 %v5165, 64
        %v6058 = vpop.permute.xlu0 %6057
        %6059 = vrot.lane.b32.xlu0 %v5167, 64
        %v6060 = vpop.permute.xlu0 %6059
        %6061 = vrot.lane.b32.xlu0 %v5168, 64
        %v6062 = vpop.permute.xlu0 %6061
        %6063 = vrot.lane.b32.xlu0 %v5170, 64
        %v6064 = vpop.permute.xlu0 %6063
        %6065 = vrot.lane.b32.xlu0 %v5171, 64
        %v6066 = vpop.permute.xlu0 %6065
        %6067 = vrot.lane.b32.xlu0 %v5173, 64
        %v6068 = vpop.permute.xlu0 %6067
        %6069 = vrot.lane.b32.xlu0 %v5174, 64
        %v6070 = vpop.permute.xlu0 %6069
        %6103 = vst.msk [vmem:[#allocation3 + $0x8] sm:$0xff] %vm3137, %v6008
        %6104 = vst.msk [vmem:[#allocation3 + $0x20] sm:$0xff] %vm3137, %v6010
        %6105 = vst.msk [vmem:[#allocation3 + $0x38] sm:$0xff] %vm3137, %v6012
        %6106 = vst.msk [vmem:[#allocation3 + $0x50] sm:$0xff] %vm3137, %v6014
        %6107 = vst.msk [vmem:[#allocation3 + $0x68] sm:$0xff] %vm3137, %v6016
        %6108 = vst.msk [vmem:[#allocation3 + $0x80] sm:$0xff] %vm3137, %v6018
        %6109 = vst.msk [vmem:[#allocation3 + $0x98] sm:$0xff] %vm3137, %v6020
        %6110 = vst.msk [vmem:[#allocation3 + $0xb0] sm:$0xff] %vm3137, %v6022
        %6111 = vst.msk [vmem:[#allocation3 + $0xc8] sm:$0xff] %vm3137, %v6024
        %6112 = vst.msk [vmem:[#allocation3 + $0xe0] sm:$0xff] %vm3137, %v6026
        %6113 = vst.msk [vmem:[#allocation3 + $0xf8] sm:$0xff] %vm3137, %v6028
        %6114 = vst.msk [vmem:[#allocation3 + $0x110] sm:$0xff] %vm3137, %v6030
        %6115 = vst.msk [vmem:[#allocation3 + $0x128] sm:$0xff] %vm3137, %v6032
        %6116 = vst.msk [vmem:[#allocation3 + $0x140] sm:$0xff] %vm3137, %v6034
        %6117 = vst.msk [vmem:[#allocation3 + $0x158] sm:$0xff] %vm3137, %v6036
        %6118 = vst.msk [vmem:[#allocation3 + $0x170] sm:$0xff] %vm3137, %v6038
        %6119 = vst.msk [vmem:[#allocation3 + $0x188] sm:$0xff] %vm3137, %v6040
        %6120 = vst.msk [vmem:[#allocation3 + $0x1a0] sm:$0xff] %vm3137, %v6042
        %6121 = vst.msk [vmem:[#allocation3 + $0x1b8] sm:$0xff] %vm3137, %v6044
        %6122 = vst.msk [vmem:[#allocation3 + $0x1d0] sm:$0xff] %vm3137, %v6046
        %6123 = vst.msk [vmem:[#allocation3 + $0x1e8] sm:$0xff] %vm3137, %v6048
        %6124 = vst.msk [vmem:[#allocation3 + $0x200] sm:$0xff] %vm3137, %v6050
        %6125 = vst.msk [vmem:[#allocation3 + $0x218] sm:$0xff] %vm3137, %v6052
        %6126 = vst.msk [vmem:[#allocation3 + $0x230] sm:$0xff] %vm3137, %v6054
        %6127 = vst.msk [vmem:[#allocation3 + $0x248] sm:$0xff] %vm3137, %v6056
        %6128 = vst.msk [vmem:[#allocation3 + $0x260] sm:$0xff] %vm3137, %v6058
        %6129 = vst.msk [vmem:[#allocation3 + $0x278] sm:$0xff] %vm3137, %v6060
        %6130 = vst.msk [vmem:[#allocation3 + $0x290] sm:$0xff] %vm3137, %v6062
        %6131 = vst.msk [vmem:[#allocation3 + $0x2a8] sm:$0xff] %vm3137, %v6064
        %6132 = vst.msk [vmem:[#allocation3 + $0x2c0] sm:$0xff] %vm3137, %v6066
        %6133 = vst.msk [vmem:[#allocation3 + $0x2d8] sm:$0xff] %vm3137, %v6068
        %6134 = vst.msk [vmem:[#allocation3 + $0x2f0] sm:$0xff] %vm3137, %v6070
        %v6136 = vrot.slane %v5173, 1
        %v6137 = vrot.slane %v5174, 1
        %v6138 = vsel %vm685, %v6136, %v6137
        %v6139 = vrot.slane %v5175, 1
        %v6140 = vsel %vm685, %v6137, %v6139
        %6141 = vrot.lane.b32.xlu0 %v5268, 96
        %v6142 = vpop.permute.xlu0 %6141
        %6143 = vrot.lane.b32.xlu0 %v5270, 96
        %v6144 = vpop.permute.xlu0 %6143
        %6145 = vrot.lane.b32.xlu0 %v5273, 96
        %v6146 = vpop.permute.xlu0 %6145
        %6147 = vrot.lane.b32.xlu0 %v5275, 96
        %v6148 = vpop.permute.xlu0 %6147
        %6149 = vrot.lane.b32.xlu0 %v5278, 96
        %v6150 = vpop.permute.xlu0 %6149
        %6151 = vrot.lane.b32.xlu0 %v5280, 96
        %v6152 = vpop.permute.xlu0 %6151
        %6153 = vrot.lane.b32.xlu0 %v5283, 96
        %v6154 = vpop.permute.xlu0 %6153
        %6155 = vrot.lane.b32.xlu0 %v5285, 96
        %v6156 = vpop.permute.xlu0 %6155
        %6157 = vrot.lane.b32.xlu0 %v5288, 96
        %v6158 = vpop.permute.xlu0 %6157
        %6159 = vrot.lane.b32.xlu0 %v5290, 96
        %v6160 = vpop.permute.xlu0 %6159
        %6161 = vrot.lane.b32.xlu0 %v5293, 96
        %v6162 = vpop.permute.xlu0 %6161
        %6163 = vrot.lane.b32.xlu0 %v5295, 96
        %v6164 = vpop.permute.xlu0 %6163
        %6165 = vrot.lane.b32.xlu0 %v5298, 96
        %v6166 = vpop.permute.xlu0 %6165
        %6167 = vrot.lane.b32.xlu0 %v5300, 96
        %v6168 = vpop.permute.xlu0 %6167
        %6169 = vrot.lane.b32.xlu0 %v5303, 96
        %v6170 = vpop.permute.xlu0 %6169
        %6171 = vrot.lane.b32.xlu0 %v5305, 96
        %v6172 = vpop.permute.xlu0 %6171
        %6173 = vrot.lane.b32.xlu0 %v5308, 96
        %v6174 = vpop.permute.xlu0 %6173
        %6175 = vrot.lane.b32.xlu0 %v5310, 96
        %v6176 = vpop.permute.xlu0 %6175
        %6177 = vrot.lane.b32.xlu0 %v5313, 96
        %v6178 = vpop.permute.xlu0 %6177
        %6179 = vrot.lane.b32.xlu0 %v5315, 96
        %v6180 = vpop.permute.xlu0 %6179
        %6181 = vrot.lane.b32.xlu0 %v5318, 96
        %v6182 = vpop.permute.xlu0 %6181
        %6183 = vrot.lane.b32.xlu0 %v5320, 96
        %v6184 = vpop.permute.xlu0 %6183
        %6185 = vrot.lane.b32.xlu0 %v5323, 96
        %v6186 = vpop.permute.xlu0 %6185
        %6187 = vrot.lane.b32.xlu0 %v5325, 96
        %v6188 = vpop.permute.xlu0 %6187
        %6189 = vrot.lane.b32.xlu0 %v5328, 96
        %v6190 = vpop.permute.xlu0 %6189
        %6191 = vrot.lane.b32.xlu0 %v5330, 96
        %v6192 = vpop.permute.xlu0 %6191
        %6193 = vrot.lane.b32.xlu0 %v5333, 96
        %v6194 = vpop.permute.xlu0 %6193
        %6195 = vrot.lane.b32.xlu0 %v5335, 96
        %v6196 = vpop.permute.xlu0 %6195
        %6197 = vrot.lane.b32.xlu0 %v5805, 96
        %v6198 = vpop.permute.xlu0 %6197
        %6199 = vrot.lane.b32.xlu0 %v5807, 96
        %v6200 = vpop.permute.xlu0 %6199
        %6201 = vrot.lane.b32.xlu0 %v6138, 96
        %v6202 = vpop.permute.xlu0 %6201
        %6203 = vrot.lane.b32.xlu0 %v6140, 96
        %v6204 = vpop.permute.xlu0 %6203
        %6237 = vst.msk [vmem:[#allocation3 + $0x8] sm:$0xff] %vm3268, %v6142
        %6238 = vst.msk [vmem:[#allocation3 + $0x20] sm:$0xff] %vm3268, %v6144
        %6239 = vst.msk [vmem:[#allocation3 + $0x38] sm:$0xff] %vm3268, %v6146
        %6240 = vst.msk [vmem:[#allocation3 + $0x50] sm:$0xff] %vm3268, %v6148
        %6241 = vst.msk [vmem:[#allocation3 + $0x68] sm:$0xff] %vm3268, %v6150
        %6242 = vst.msk [vmem:[#allocation3 + $0x80] sm:$0xff] %vm3268, %v6152
        %6243 = vst.msk [vmem:[#allocation3 + $0x98] sm:$0xff] %vm3268, %v6154
        %6244 = vst.msk [vmem:[#allocation3 + $0xb0] sm:$0xff] %vm3268, %v6156
        %6245 = vst.msk [vmem:[#allocation3 + $0xc8] sm:$0xff] %vm3268, %v6158
        %6246 = vst.msk [vmem:[#allocation3 + $0xe0] sm:$0xff] %vm3268, %v6160
        %6247 = vst.msk [vmem:[#allocation3 + $0xf8] sm:$0xff] %vm3268, %v6162
        %6248 = vst.msk [vmem:[#allocation3 + $0x110] sm:$0xff] %vm3268, %v6164
        %6249 = vst.msk [vmem:[#allocation3 + $0x128] sm:$0xff] %vm3268, %v6166
        %6250 = vst.msk [vmem:[#allocation3 + $0x140] sm:$0xff] %vm3268, %v6168
        %6251 = vst.msk [vmem:[#allocation3 + $0x158] sm:$0xff] %vm3268, %v6170
        %6252 = vst.msk [vmem:[#allocation3 + $0x170] sm:$0xff] %vm3268, %v6172
        %6253 = vst.msk [vmem:[#allocation3 + $0x188] sm:$0xff] %vm3268, %v6174
        %6254 = vst.msk [vmem:[#allocation3 + $0x1a0] sm:$0xff] %vm3268, %v6176
        %6255 = vst.msk [vmem:[#allocation3 + $0x1b8] sm:$0xff] %vm3268, %v6178
        %6256 = vst.msk [vmem:[#allocation3 + $0x1d0] sm:$0xff] %vm3268, %v6180
        %6257 = vst.msk [vmem:[#allocation3 + $0x1e8] sm:$0xff] %vm3268, %v6182
        %6258 = vst.msk [vmem:[#allocation3 + $0x200] sm:$0xff] %vm3268, %v6184
        %6259 = vst.msk [vmem:[#allocation3 + $0x218] sm:$0xff] %vm3268, %v6186
        %6260 = vst.msk [vmem:[#allocation3 + $0x230] sm:$0xff] %vm3268, %v6188
        %6261 = vst.msk [vmem:[#allocation3 + $0x248] sm:$0xff] %vm3268, %v6190
        %6262 = vst.msk [vmem:[#allocation3 + $0x260] sm:$0xff] %vm3268, %v6192
        %6263 = vst.msk [vmem:[#allocation3 + $0x278] sm:$0xff] %vm3268, %v6194
        %6264 = vst.msk [vmem:[#allocation3 + $0x290] sm:$0xff] %vm3268, %v6196
        %6265 = vst.msk [vmem:[#allocation3 + $0x2a8] sm:$0xff] %vm3268, %v6198
        %6266 = vst.msk [vmem:[#allocation3 + $0x2c0] sm:$0xff] %vm3268, %v6200
        %6267 = vst.msk [vmem:[#allocation3 + $0x2d8] sm:$0xff] %vm3268, %v6202
        %6268 = vst.msk [vmem:[#allocation3 + $0x2f0] sm:$0xff] %vm3268, %v6204
        %v6269 = vrot.slane %v5173, 2
        %v6270 = vrot.slane %v5174, 2
        %v6271 = vsel %vm895, %v6269, %v6270
        %v6272 = vrot.slane %v5175, 2
        %v6273 = vsel %vm895, %v6270, %v6272
        %6306 = vst.msk [vmem:[#allocation3 + $0x10] sm:$0xff] %vm429, %v5476
        %6307 = vst.msk [vmem:[#allocation3 + $0x28] sm:$0xff] %vm429, %v5478
        %6308 = vst.msk [vmem:[#allocation3 + $0x40] sm:$0xff] %vm429, %v5481
        %6309 = vst.msk [vmem:[#allocation3 + $0x58] sm:$0xff] %vm429, %v5483
        %6310 = vst.msk [vmem:[#allocation3 + $0x70] sm:$0xff] %vm429, %v5486
        %6311 = vst.msk [vmem:[#allocation3 + $0x88] sm:$0xff] %vm429, %v5488
        %6312 = vst.msk [vmem:[#allocation3 + $0xa0] sm:$0xff] %vm429, %v5491
        %6313 = vst.msk [vmem:[#allocation3 + $0xb8] sm:$0xff] %vm429, %v5493
        %6314 = vst.msk [vmem:[#allocation3 + $0xd0] sm:$0xff] %vm429, %v5496
        %6315 = vst.msk [vmem:[#allocation3 + $0xe8] sm:$0xff] %vm429, %v5498
        %6316 = vst.msk [vmem:[#allocation3 + $0x100] sm:$0xff] %vm429, %v5501
        %6317 = vst.msk [vmem:[#allocation3 + $0x118] sm:$0xff] %vm429, %v5503
        %6318 = vst.msk [vmem:[#allocation3 + $0x130] sm:$0xff] %vm429, %v5506
        %6319 = vst.msk [vmem:[#allocation3 + $0x148] sm:$0xff] %vm429, %v5508
        %6320 = vst.msk [vmem:[#allocation3 + $0x160] sm:$0xff] %vm429, %v5511
        %6321 = vst.msk [vmem:[#allocation3 + $0x178] sm:$0xff] %vm429, %v5513
        %6322 = vst.msk [vmem:[#allocation3 + $0x190] sm:$0xff] %vm429, %v5516
        %6323 = vst.msk [vmem:[#allocation3 + $0x1a8] sm:$0xff] %vm429, %v5518
        %6324 = vst.msk [vmem:[#allocation3 + $0x1c0] sm:$0xff] %vm429, %v5521
        %6325 = vst.msk [vmem:[#allocation3 + $0x1d8] sm:$0xff] %vm429, %v5523
        %6326 = vst.msk [vmem:[#allocation3 + $0x1f0] sm:$0xff] %vm429, %v5526
        %6327 = vst.msk [vmem:[#allocation3 + $0x208] sm:$0xff] %vm429, %v5528
        %6328 = vst.msk [vmem:[#allocation3 + $0x220] sm:$0xff] %vm429, %v5531
        %6329 = vst.msk [vmem:[#allocation3 + $0x238] sm:$0xff] %vm429, %v5533
        %6330 = vst.msk [vmem:[#allocation3 + $0x250] sm:$0xff] %vm429, %v5536
        %6331 = vst.msk [vmem:[#allocation3 + $0x268] sm:$0xff] %vm429, %v5538
        %6332 = vst.msk [vmem:[#allocation3 + $0x280] sm:$0xff] %vm429, %v5541
        %6333 = vst.msk [vmem:[#allocation3 + $0x298] sm:$0xff] %vm429, %v5543
        %6334 = vst.msk [vmem:[#allocation3 + $0x2b0] sm:$0xff] %vm429, %v5874
        %6335 = vst.msk [vmem:[#allocation3 + $0x2c8] sm:$0xff] %vm429, %v5876
        %6336 = vst.msk [vmem:[#allocation3 + $0x2e0] sm:$0xff] %vm429, %v6271
        %6337 = vst.msk [vmem:[#allocation3 + $0x2f8] sm:$0xff] %vm429, %v6273
        %v6338 = vld [vmem:[#allocation3] sm:$0xff]
        %v6339 = vld [vmem:[#allocation3 + $0x18] sm:$0xff]
        %v6340 = vld [vmem:[#allocation3 + $0x30] sm:$0xff]
        %v6341 = vld [vmem:[#allocation3 + $0x48] sm:$0xff]
        %v6342 = vld [vmem:[#allocation3 + $0x60] sm:$0xff]
        %v6343 = vld [vmem:[#allocation3 + $0x78] sm:$0xff]
        %v6344 = vld [vmem:[#allocation3 + $0x90] sm:$0xff]
        %v6345 = vld [vmem:[#allocation3 + $0xa8] sm:$0xff]
        %v6346 = vld [vmem:[#allocation3 + $0xc0] sm:$0xff]
        %v6347 = vld [vmem:[#allocation3 + $0xd8] sm:$0xff]
        %v6348 = vld [vmem:[#allocation3 + $0xf0] sm:$0xff]
        %v6349 = vld [vmem:[#allocation3 + $0x108] sm:$0xff]
        %v6350 = vld [vmem:[#allocation3 + $0x120] sm:$0xff]
        %v6351 = vld [vmem:[#allocation3 + $0x138] sm:$0xff]
        %v6352 = vld [vmem:[#allocation3 + $0x150] sm:$0xff]
        %v6353 = vld [vmem:[#allocation3 + $0x168] sm:$0xff]
        %v6354 = vld [vmem:[#allocation3 + $0x180] sm:$0xff]
        %v6355 = vld [vmem:[#allocation3 + $0x198] sm:$0xff]
        %v6356 = vld [vmem:[#allocation3 + $0x1b0] sm:$0xff]
        %v6357 = vld [vmem:[#allocation3 + $0x1c8] sm:$0xff]
        %v6358 = vld [vmem:[#allocation3 + $0x1e0] sm:$0xff]
        %v6359 = vld [vmem:[#allocation3 + $0x1f8] sm:$0xff]
        %v6360 = vld [vmem:[#allocation3 + $0x210] sm:$0xff]
        %v6361 = vld [vmem:[#allocation3 + $0x228] sm:$0xff]
        %v6362 = vld [vmem:[#allocation3 + $0x240] sm:$0xff]
        %v6363 = vld [vmem:[#allocation3 + $0x258] sm:$0xff]
        %v6364 = vld [vmem:[#allocation3 + $0x270] sm:$0xff]
        %v6365 = vld [vmem:[#allocation3 + $0x288] sm:$0xff]
        %v6366 = vld [vmem:[#allocation3 + $0x2a0] sm:$0xff]
        %v6367 = vld [vmem:[#allocation3 + $0x2b8] sm:$0xff]
        %v6368 = vld [vmem:[#allocation3 + $0x2d0] sm:$0xff]
        %v6369 = vld [vmem:[#allocation3 + $0x2e8] sm:$0xff]
        %v6370 = vld [vmem:[%s7] sm:$0xff]
        %v6371 = vld [vmem:[%s7 + $0x8] sm:$0xff]
        %v6372 = vld [vmem:[%s7 + $0x10] sm:$0xff]
        %v6373 = vld [vmem:[%s7 + $0x18] sm:$0xff]
        %v6374 = vld [vmem:[%s7 + $0x20] sm:$0xff]
        %v6375 = vld [vmem:[%s7 + $0x28] sm:$0xff]
        %v6376 = vld [vmem:[%s7 + $0x30] sm:$0xff]
        %v6377 = vld [vmem:[%s7 + $0x38] sm:$0xff]
        %v6378 = vld [vmem:[%s7 + $0x40] sm:$0xff]
        %v6379 = vld [vmem:[%s7 + $0x48] sm:$0xff]
        %v6380 = vld [vmem:[%s7 + $0x50] sm:$0xff]
        %v6381 = vld [vmem:[%s7 + $0x58] sm:$0xff]
        %v6382 = vld [vmem:[%s7 + $0x60] sm:$0xff]
        %v6383 = vld [vmem:[%s7 + $0x68] sm:$0xff]
        %v6384 = vld [vmem:[%s7 + $0x70] sm:$0xff]
        %v6385 = vld [vmem:[%s7 + $0x78] sm:$0xff]
        %v6386 = vld [vmem:[#allocation3 + $0x8] sm:$0xff]
        %v6387 = vld [vmem:[#allocation3 + $0x20] sm:$0xff]
        %v6388 = vld [vmem:[#allocation3 + $0x38] sm:$0xff]
        %v6389 = vld [vmem:[#allocation3 + $0x50] sm:$0xff]
        %v6390 = vld [vmem:[#allocation3 + $0x68] sm:$0xff]
        %v6391 = vld [vmem:[#allocation3 + $0x80] sm:$0xff]
        %v6392 = vld [vmem:[#allocation3 + $0x98] sm:$0xff]
        %v6393 = vld [vmem:[#allocation3 + $0xb0] sm:$0xff]
        %v6394 = vld [vmem:[#allocation3 + $0xc8] sm:$0xff]
        %v6395 = vld [vmem:[#allocation3 + $0xe0] sm:$0xff]
        %v6396 = vld [vmem:[#allocation3 + $0xf8] sm:$0xff]
        %v6397 = vld [vmem:[#allocation3 + $0x110] sm:$0xff]
        %v6398 = vld [vmem:[#allocation3 + $0x128] sm:$0xff]
        %v6399 = vld [vmem:[#allocation3 + $0x140] sm:$0xff]
        %v6400 = vld [vmem:[#allocation3 + $0x158] sm:$0xff]
        %v6401 = vld [vmem:[#allocation3 + $0x170] sm:$0xff]
        %v6402 = vld [vmem:[#allocation3 + $0x188] sm:$0xff]
        %v6403 = vld [vmem:[#allocation3 + $0x1a0] sm:$0xff]
        %v6404 = vld [vmem:[#allocation3 + $0x1b8] sm:$0xff]
        %v6405 = vld [vmem:[#allocation3 + $0x1d0] sm:$0xff]
        %v6406 = vld [vmem:[#allocation3 + $0x1e8] sm:$0xff]
        %v6407 = vld [vmem:[#allocation3 + $0x200] sm:$0xff]
        %v6408 = vld [vmem:[#allocation3 + $0x218] sm:$0xff]
        %v6409 = vld [vmem:[#allocation3 + $0x230] sm:$0xff]
        %v6410 = vld [vmem:[#allocation3 + $0x248] sm:$0xff]
        %v6411 = vld [vmem:[#allocation3 + $0x260] sm:$0xff]
        %v6412 = vld [vmem:[#allocation3 + $0x278] sm:$0xff]
        %v6413 = vld [vmem:[#allocation3 + $0x290] sm:$0xff]
        %v6414 = vld [vmem:[#allocation3 + $0x2a8] sm:$0xff]
        %v6415 = vld [vmem:[#allocation3 + $0x2c0] sm:$0xff]
        %v6416 = vld [vmem:[#allocation3 + $0x2d8] sm:$0xff]
        %v6417 = vld [vmem:[#allocation3 + $0x2f0] sm:$0xff]
        %v6418 = vld [vmem:[%s7 + $0x80] sm:$0xff]
        %v6419 = vld [vmem:[%s7 + $0x88] sm:$0xff]
        %v6420 = vld [vmem:[%s7 + $0x90] sm:$0xff]
        %v6421 = vld [vmem:[%s7 + $0x98] sm:$0xff]
        %v6422 = vld [vmem:[%s7 + $0xa0] sm:$0xff]
        %v6423 = vld [vmem:[%s7 + $0xa8] sm:$0xff]
        %v6424 = vld [vmem:[%s7 + $0xb0] sm:$0xff]
        %v6425 = vld [vmem:[%s7 + $0xb8] sm:$0xff]
        %v6426 = vld [vmem:[%s7 + $0xc0] sm:$0xff]
        %v6427 = vld [vmem:[%s7 + $0xc8] sm:$0xff]
        %v6428 = vld [vmem:[%s7 + $0xd0] sm:$0xff]
        %v6429 = vld [vmem:[%s7 + $0xd8] sm:$0xff]
        %v6430 = vld [vmem:[%s7 + $0xe0] sm:$0xff]
        %v6431 = vld [vmem:[%s7 + $0xe8] sm:$0xff]
        %v6432 = vld [vmem:[%s7 + $0xf0] sm:$0xff]
        %v6433 = vld [vmem:[%s7 + $0xf8] sm:$0xff]
        %6434 = vmatprep.subr.mxu0 0.0
        %6435 = vmatpush1.msra.mxu0 %v6418
        %6436 = vmatprep.subr.mxu0 0.0
        %6437 = vmatpush1.msra.mxu0 %v6419
        %6438 = vmatprep.subr.mxu0 0.0
        %6439 = vmatpush1.msra.mxu0 %v6420
        %6440 = vmatprep.subr.mxu0 0.0
        %6441 = vmatpush1.msra.mxu0 %v6421
        %6442 = vmatprep.subr.mxu0 0.0
        %6443 = vmatpush1.msra.mxu0 %v6422
        %6444 = vmatprep.subr.mxu0 0.0
        %6445 = vmatpush1.msra.mxu0 %v6423
        %6446 = vmatprep.subr.mxu0 0.0
        %6447 = vmatpush1.msra.mxu0 %v6424
        %6448 = vmatprep.subr.mxu0 0.0
        %6449 = vmatpush1.msra.mxu0 %v6425
        %6450 = vmatprep.subr.mxu0 0.0
        %6451 = vmatpush1.msra.mxu0 %v6426
        %6452 = vmatprep.subr.mxu0 0.0
        %6453 = vmatpush1.msra.mxu0 %v6427
        %6454 = vmatprep.subr.mxu0 0.0
        %6455 = vmatpush1.msra.mxu0 %v6428
        %6456 = vmatprep.subr.mxu0 0.0
        %6457 = vmatpush1.msra.mxu0 %v6429
        %6458 = vmatprep.subr.mxu0 0.0
        %6459 = vmatpush1.msra.mxu0 %v6430
        %6460 = vmatprep.subr.mxu0 0.0
        %6461 = vmatpush1.msra.mxu0 %v6431
        %6462 = vmatprep.subr.mxu0 0.0
        %6463 = vmatpush1.msra.mxu0 %v6432
        %6464 = vmatprep.subr.mxu0 0.0
        %6465 = vmatpush1.msra.mxu0 %v6433
        %6466 = vmatprep.subr.mxu0 0.0
        %6467 = vmatpush1.msra.mxu0 0.0
        %6468 = vmatprep.subr.mxu0 0.0
        %6469 = vmatpush1.msra.mxu0 0.0
        %6470 = vmatprep.subr.mxu0 0.0
        %6471 = vmatpush1.msra.mxu0 0.0
        %6472 = vmatprep.subr.mxu0 0.0
        %6473 = vmatpush1.msra.mxu0 0.0
        %6474 = vmatprep.subr.mxu0 0.0
        %6475 = vmatpush1.msra.mxu0 0.0
        %6476 = vmatprep.subr.mxu0 0.0
        %6477 = vmatpush1.msra.mxu0 0.0
        %6478 = vmatprep.subr.mxu0 0.0
        %6479 = vmatpush1.msra.mxu0 0.0
        %6480 = vmatprep.subr.mxu0 0.0
        %6481 = vmatpush1.msra.mxu0 0.0
        %6482 = vmatprep.subr.mxu0 0.0
        %6483 = vmatpush1.msra.mxu0 0.0
        %6484 = vmatprep.subr.mxu0 0.0
        %6485 = vmatpush1.msra.mxu0 0.0
        %6486 = vmatprep.subr.mxu0 0.0
        %6487 = vmatpush1.msra.mxu0 0.0
        %6488 = vmatprep.subr.mxu0 0.0
        %6489 = vmatpush1.msra.mxu0 0.0
        %6490 = vmatprep.subr.mxu0 0.0
        %6491 = vmatpush1.msra.mxu0 0.0
        %6492 = vmatprep.subr.mxu0 0.0
        %6493 = vmatpush1.msra.mxu0 0.0
        %6494 = vmatprep.subr.mxu0 0.0
        %6495 = vmatpush1.msra.mxu0 0.0
        %6496 = vmatprep.subr.mxu0 0.0
        %6497 = vmatpush1.msra.mxu0 0.0
        %6498 = vmatprep.mubr.f32.mxu0 0.0
        %6499 = vmatmul.mubr.f32.gmra.mrb[0].mxu0 %v6386
        %v6500 = vpop.f32.mrb[0].mxu0
        %v6501 = vadd.f32 0.0, %v6500
        %v6502 = vpop.f32.mrb[0].mxu0
        %6503 = vmatprep.mubr.f32.mxu0 0.0
        %6504 = vmatmul.mubr.f32.gmra.mrb[0].mxu0 %v6387
        %v6505 = vpop.f32.mrb[0].mxu0
        %v6506 = vadd.f32 0.0, %v6505
        %v6507 = vpop.f32.mrb[0].mxu0
        %6508 = vmatprep.mubr.f32.mxu0 0.0
        %6509 = vmatmul.mubr.f32.gmra.mrb[0].mxu0 %v6388
        %v6510 = vpop.f32.mrb[0].mxu0
        %v6511 = vadd.f32 0.0, %v6510
        %v6512 = vpop.f32.mrb[0].mxu0
        %6513 = vmatprep.mubr.f32.mxu0 0.0
        %6514 = vmatmul.mubr.f32.gmra.mrb[0].mxu0 %v6389
        %v6515 = vpop.f32.mrb[0].mxu0
        %v6516 = vadd.f32 0.0, %v6515
        %v6517 = vpop.f32.mrb[0].mxu0
        %6518 = vmatprep.mubr.f32.mxu0 0.0
        %6519 = vmatmul.mubr.f32.gmra.mrb[0].mxu0 %v6390
        %v6520 = vpop.f32.mrb[0].mxu0
        %v6521 = vadd.f32 0.0, %v6520
        %v6522 = vpop.f32.mrb[0].mxu0
        %6523 = vmatprep.mubr.f32.mxu0 0.0
        %6524 = vmatmul.mubr.f32.gmra.mrb[0].mxu0 %v6391
        %v6525 = vpop.f32.mrb[0].mxu0
        %v6526 = vadd.f32 0.0, %v6525
        %v6527 = vpop.f32.mrb[0].mxu0
        %6528 = vmatprep.mubr.f32.mxu0 0.0
        %6529 = vmatmul.mubr.f32.gmra.mrb[0].mxu0 %v6392
        %v6530 = vpop.f32.mrb[0].mxu0
        %v6531 = vadd.f32 0.0, %v6530
        %v6532 = vpop.f32.mrb[0].mxu0
        %6533 = vmatprep.mubr.f32.mxu0 0.0
        %6534 = vmatmul.mubr.f32.gmra.mrb[0].mxu0 %v6393
        %v6535 = vpop.f32.mrb[0].mxu0
        %v6536 = vadd.f32 0.0, %v6535
        %v6537 = vpop.f32.mrb[0].mxu0
        %6538 = vmatprep.mubr.f32.mxu0 0.0
        %6539 = vmatmul.mubr.f32.gmra.mrb[0].mxu0 %v6394
        %v6540 = vpop.f32.mrb[0].mxu0
        %v6541 = vadd.f32 0.0, %v6540
        %v6542 = vpop.f32.mrb[0].mxu0
        %6543 = vmatprep.mubr.f32.mxu0 0.0
        %6544 = vmatmul.mubr.f32.gmra.mrb[0].mxu0 %v6395
        %v6545 = vpop.f32.mrb[0].mxu0
        %v6546 = vadd.f32 0.0, %v6545
        %v6547 = vpop.f32.mrb[0].mxu0
        %6548 = vmatprep.mubr.f32.mxu0 0.0
        %6549 = vmatmul.mubr.f32.gmra.mrb[0].mxu0 %v6396
        %v6550 = vpop.f32.mrb[0].mxu0
        %v6551 = vadd.f32 0.0, %v6550
        %v6552 = vpop.f32.mrb[0].mxu0
        %6553 = vmatprep.mubr.f32.mxu0 0.0
        %6554 = vmatmul.mubr.f32.gmra.mrb[0].mxu0 %v6397
        %v6555 = vpop.f32.mrb[0].mxu0
        %v6556 = vadd.f32 0.0, %v6555
        %v6557 = vpop.f32.mrb[0].mxu0
        %6558 = vmatprep.mubr.f32.mxu0 0.0
        %6559 = vmatmul.mubr.f32.gmra.mrb[0].mxu0 %v6398
        %v6560 = vpop.f32.mrb[0].mxu0
        %v6561 = vadd.f32 0.0, %v6560
        %v6562 = vpop.f32.mrb[0].mxu0
        %6563 = vmatprep.mubr.f32.mxu0 0.0
        %6564 = vmatmul.mubr.f32.gmra.mrb[0].mxu0 %v6399
        %v6565 = vpop.f32.mrb[0].mxu0
        %v6566 = vadd.f32 0.0, %v6565
        %v6567 = vpop.f32.mrb[0].mxu0
        %6568 = vmatprep.mubr.f32.mxu0 0.0
        %6569 = vmatmul.mubr.f32.gmra.mrb[0].mxu0 %v6400
        %v6570 = vpop.f32.mrb[0].mxu0
        %v6571 = vadd.f32 0.0, %v6570
        %v6572 = vpop.f32.mrb[0].mxu0
        %6573 = vmatprep.mubr.f32.mxu0 0.0
        %6574 = vmatmul.mubr.f32.gmra.mrb[0].mxu0 %v6401
        %v6575 = vpop.f32.mrb[0].mxu0
        %v6576 = vadd.f32 0.0, %v6575
        %v6577 = vpop.f32.mrb[0].mxu0
        %6578 = vmatprep.mubr.f32.mxu0 0.0
        %6579 = vmatmul.mubr.f32.gmra.mrb[0].mxu0 %v6402
        %v6580 = vpop.f32.mrb[0].mxu0
        %v6581 = vadd.f32 0.0, %v6580
        %v6582 = vpop.f32.mrb[0].mxu0
        %6583 = vmatprep.mubr.f32.mxu0 0.0
        %6584 = vmatmul.mubr.f32.gmra.mrb[0].mxu0 %v6403
        %v6585 = vpop.f32.mrb[0].mxu0
        %v6586 = vadd.f32 0.0, %v6585
        %v6587 = vpop.f32.mrb[0].mxu0
        %6588 = vmatprep.mubr.f32.mxu0 0.0
        %6589 = vmatmul.mubr.f32.gmra.mrb[0].mxu0 %v6404
        %v6590 = vpop.f32.mrb[0].mxu0
        %v6591 = vadd.f32 0.0, %v6590
        %v6592 = vpop.f32.mrb[0].mxu0
        %6593 = vmatprep.mubr.f32.mxu0 0.0
        %6594 = vmatmul.mubr.f32.gmra.mrb[0].mxu0 %v6405
        %v6595 = vpop.f32.mrb[0].mxu0
        %v6596 = vadd.f32 0.0, %v6595
        %v6597 = vpop.f32.mrb[0].mxu0
        %6598 = vmatprep.mubr.f32.mxu0 0.0
        %6599 = vmatmul.mubr.f32.gmra.mrb[0].mxu0 %v6406
        %v6600 = vpop.f32.mrb[0].mxu0
        %v6601 = vadd.f32 0.0, %v6600
        %v6602 = vpop.f32.mrb[0].mxu0
        %6603 = vmatprep.mubr.f32.mxu0 0.0
        %6604 = vmatmul.mubr.f32.gmra.mrb[0].mxu0 %v6407
        %v6605 = vpop.f32.mrb[0].mxu0
        %v6606 = vadd.f32 0.0, %v6605
        %v6607 = vpop.f32.mrb[0].mxu0
        %6608 = vmatprep.mubr.f32.mxu0 0.0
        %6609 = vmatmul.mubr.f32.gmra.mrb[0].mxu0 %v6408
        %v6610 = vpop.f32.mrb[0].mxu0
        %v6611 = vadd.f32 0.0, %v6610
        %v6612 = vpop.f32.mrb[0].mxu0
        %6613 = vmatprep.mubr.f32.mxu0 0.0
        %6614 = vmatmul.mubr.f32.gmra.mrb[0].mxu0 %v6409
        %v6615 = vpop.f32.mrb[0].mxu0
        %v6616 = vadd.f32 0.0, %v6615
        %v6617 = vpop.f32.mrb[0].mxu0
        %6618 = vmatprep.mubr.f32.mxu0 0.0
        %6619 = vmatmul.mubr.f32.gmra.mrb[0].mxu0 %v6410
        %v6620 = vpop.f32.mrb[0].mxu0
        %v6621 = vadd.f32 0.0, %v6620
        %v6622 = vpop.f32.mrb[0].mxu0
        %6623 = vmatprep.mubr.f32.mxu0 0.0
        %6624 = vmatmul.mubr.f32.gmra.mrb[0].mxu0 %v6411
        %v6625 = vpop.f32.mrb[0].mxu0
        %v6626 = vadd.f32 0.0, %v6625
        %v6627 = vpop.f32.mrb[0].mxu0
        %6628 = vmatprep.mubr.f32.mxu0 0.0
        %6629 = vmatmul.mubr.f32.gmra.mrb[0].mxu0 %v6412
        %v6630 = vpop.f32.mrb[0].mxu0
        %v6631 = vadd.f32 0.0, %v6630
        %v6632 = vpop.f32.mrb[0].mxu0
        %6633 = vmatprep.mubr.f32.mxu0 0.0
        %6634 = vmatmul.mubr.f32.gmra.mrb[0].mxu0 %v6413
        %v6635 = vpop.f32.mrb[0].mxu0
        %v6636 = vadd.f32 0.0, %v6635
        %v6637 = vpop.f32.mrb[0].mxu0
        %6638 = vmatprep.mubr.f32.mxu0 0.0
        %6639 = vmatmul.mubr.f32.gmra.mrb[0].mxu0 %v6414
        %v6640 = vpop.f32.mrb[0].mxu0
        %v6641 = vadd.f32 0.0, %v6640
        %v6642 = vpop.f32.mrb[0].mxu0
        %6643 = vmatprep.mubr.f32.mxu0 0.0
        %6644 = vmatmul.mubr.f32.gmra.mrb[0].mxu0 %v6415
        %v6645 = vpop.f32.mrb[0].mxu0
        %v6646 = vadd.f32 0.0, %v6645
        %v6647 = vpop.f32.mrb[0].mxu0
        %6648 = vmatprep.mubr.f32.mxu0 0.0
        %6649 = vmatmul.mubr.f32.gmra.mrb[0].mxu0 %v6416
        %v6650 = vpop.f32.mrb[0].mxu0
        %v6651 = vadd.f32 0.0, %v6650
        %v6652 = vpop.f32.mrb[0].mxu0
        %6653 = vmatprep.mubr.f32.mxu0 0.0
        %6654 = vmatmul.mubr.f32.gmra.mrb[0].mxu0 %v6417
        %v6655 = vpop.f32.mrb[0].mxu0
        %v6656 = vadd.f32 0.0, %v6655
        %v6657 = vpop.f32.mrb[0].mxu0
        %6658 = vdwg.mxu0
        %6659 = vmatprep.subr.mxu0 0.0
        %6660 = vmatpush1.msra.mxu0 %v6370
        %6661 = vmatprep.subr.mxu0 0.0
        %6662 = vmatpush1.msra.mxu0 %v6371
        %6663 = vmatprep.subr.mxu0 0.0
        %6664 = vmatpush1.msra.mxu0 %v6372
        %6665 = vmatprep.subr.mxu0 0.0
        %6666 = vmatpush1.msra.mxu0 %v6373
        %6667 = vmatprep.subr.mxu0 0.0
        %6668 = vmatpush1.msra.mxu0 %v6374
        %6669 = vmatprep.subr.mxu0 0.0
        %6670 = vmatpush1.msra.mxu0 %v6375
        %6671 = vmatprep.subr.mxu0 0.0
        %6672 = vmatpush1.msra.mxu0 %v6376
        %6673 = vmatprep.subr.mxu0 0.0
        %6674 = vmatpush1.msra.mxu0 %v6377
        %6675 = vmatprep.subr.mxu0 0.0
        %6676 = vmatpush1.msra.mxu0 %v6378
        %6677 = vmatprep.subr.mxu0 0.0
        %6678 = vmatpush1.msra.mxu0 %v6379
        %6679 = vmatprep.subr.mxu0 0.0
        %6680 = vmatpush1.msra.mxu0 %v6380
        %6681 = vmatprep.subr.mxu0 0.0
        %6682 = vmatpush1.msra.mxu0 %v6381
        %6683 = vmatprep.subr.mxu0 0.0
        %6684 = vmatpush1.msra.mxu0 %v6382
        %6685 = vmatprep.subr.mxu0 0.0
        %6686 = vmatpush1.msra.mxu0 %v6383
        %6687 = vmatprep.subr.mxu0 0.0
        %6688 = vmatpush1.msra.mxu0 %v6384
        %6689 = vmatprep.subr.mxu0 0.0
        %6690 = vmatpush1.msra.mxu0 %v6385
        %6691 = vmatprep.subr.mxu0 0.0
        %6692 = vmatpush1.msra.mxu0 0.0
        %6693 = vmatprep.subr.mxu0 0.0
        %6694 = vmatpush1.msra.mxu0 0.0
        %6695 = vmatprep.subr.mxu0 0.0
        %6696 = vmatpush1.msra.mxu0 0.0
        %6697 = vmatprep.subr.mxu0 0.0
        %6698 = vmatpush1.msra.mxu0 0.0
        %6699 = vmatprep.subr.mxu0 0.0
        %6700 = vmatpush1.msra.mxu0 0.0
        %6701 = vmatprep.subr.mxu0 0.0
        %6702 = vmatpush1.msra.mxu0 0.0
        %6703 = vmatprep.subr.mxu0 0.0
        %6704 = vmatpush1.msra.mxu0 0.0
        %6705 = vmatprep.subr.mxu0 0.0
        %6706 = vmatpush1.msra.mxu0 0.0
        %6707 = vmatprep.subr.mxu0 0.0
        %6708 = vmatpush1.msra.mxu0 0.0
        %6709 = vmatprep.subr.mxu0 0.0
        %6710 = vmatpush1.msra.mxu0 0.0
        %6711 = vmatprep.subr.mxu0 0.0
        %6712 = vmatpush1.msra.mxu0 0.0
        %6713 = vmatprep.subr.mxu0 0.0
        %6714 = vmatpush1.msra.mxu0 0.0
        %6715 = vmatprep.subr.mxu0 0.0
        %6716 = vmatpush1.msra.mxu0 0.0
        %6717 = vmatprep.subr.mxu0 0.0
        %6718 = vmatpush1.msra.mxu0 0.0
        %6719 = vmatprep.subr.mxu0 0.0
        %6720 = vmatpush1.msra.mxu0 0.0
        %6721 = vmatprep.subr.mxu0 0.0
        %6722 = vmatpush1.msra.mxu0 0.0
        %6723 = vmatprep.mubr.f32.mxu0 0.0
        %6724 = vmatmul.mubr.f32.gmra.mrb[0].mxu0 %v6338
        %v6725 = vpop.f32.mrb[0].mxu0
        %v6726 = vadd.f32 %v6501, %v6725
        %v6727 = vpop.f32.mrb[0].mxu0
        %6728 = vmatprep.mubr.f32.mxu0 0.0
        %6729 = vmatmul.mubr.f32.gmra.mrb[0].mxu0 %v6339
        %v6730 = vpop.f32.mrb[0].mxu0
        %v6731 = vadd.f32 %v6506, %v6730
        %v6732 = vpop.f32.mrb[0].mxu0
        %6733 = vmatprep.mubr.f32.mxu0 0.0
        %6734 = vmatmul.mubr.f32.gmra.mrb[0].mxu0 %v6340
        %v6735 = vpop.f32.mrb[0].mxu0
        %v6736 = vadd.f32 %v6511, %v6735
        %v6737 = vpop.f32.mrb[0].mxu0
        %6738 = vmatprep.mubr.f32.mxu0 0.0
        %6739 = vmatmul.mubr.f32.gmra.mrb[0].mxu0 %v6341
        %v6740 = vpop.f32.mrb[0].mxu0
        %v6741 = vadd.f32 %v6516, %v6740
        %v6742 = vpop.f32.mrb[0].mxu0
        %6743 = vmatprep.mubr.f32.mxu0 0.0
        %6744 = vmatmul.mubr.f32.gmra.mrb[0].mxu0 %v6342
        %v6745 = vpop.f32.mrb[0].mxu0
        %v6746 = vadd.f32 %v6521, %v6745
        %v6747 = vpop.f32.mrb[0].mxu0
        %6748 = vmatprep.mubr.f32.mxu0 0.0
        %6749 = vmatmul.mubr.f32.gmra.mrb[0].mxu0 %v6343
        %v6750 = vpop.f32.mrb[0].mxu0
        %v6751 = vadd.f32 %v6526, %v6750
        %v6752 = vpop.f32.mrb[0].mxu0
        %6753 = vmatprep.mubr.f32.mxu0 0.0
        %6754 = vmatmul.mubr.f32.gmra.mrb[0].mxu0 %v6344
        %v6755 = vpop.f32.mrb[0].mxu0
        %v6756 = vadd.f32 %v6531, %v6755
        %v6757 = vpop.f32.mrb[0].mxu0
        %6758 = vmatprep.mubr.f32.mxu0 0.0
        %6759 = vmatmul.mubr.f32.gmra.mrb[0].mxu0 %v6345
        %v6760 = vpop.f32.mrb[0].mxu0
        %v6761 = vadd.f32 %v6536, %v6760
        %v6762 = vpop.f32.mrb[0].mxu0
        %6763 = vmatprep.mubr.f32.mxu0 0.0
        %6764 = vmatmul.mubr.f32.gmra.mrb[0].mxu0 %v6346
        %v6765 = vpop.f32.mrb[0].mxu0
        %v6766 = vadd.f32 %v6541, %v6765
        %v6767 = vpop.f32.mrb[0].mxu0
        %6768 = vmatprep.mubr.f32.mxu0 0.0
        %6769 = vmatmul.mubr.f32.gmra.mrb[0].mxu0 %v6347
        %v6770 = vpop.f32.mrb[0].mxu0
        %v6771 = vadd.f32 %v6546, %v6770
        %v6772 = vpop.f32.mrb[0].mxu0
        %6773 = vmatprep.mubr.f32.mxu0 0.0
        %6774 = vmatmul.mubr.f32.gmra.mrb[0].mxu0 %v6348
        %v6775 = vpop.f32.mrb[0].mxu0
        %v6776 = vadd.f32 %v6551, %v6775
        %v6777 = vpop.f32.mrb[0].mxu0
        %6778 = vmatprep.mubr.f32.mxu0 0.0
        %6779 = vmatmul.mubr.f32.gmra.mrb[0].mxu0 %v6349
        %v6780 = vpop.f32.mrb[0].mxu0
        %v6781 = vadd.f32 %v6556, %v6780
        %v6782 = vpop.f32.mrb[0].mxu0
        %6783 = vmatprep.mubr.f32.mxu0 0.0
        %6784 = vmatmul.mubr.f32.gmra.mrb[0].mxu0 %v6350
        %v6785 = vpop.f32.mrb[0].mxu0
        %v6786 = vadd.f32 %v6561, %v6785
        %v6787 = vpop.f32.mrb[0].mxu0
        %6788 = vmatprep.mubr.f32.mxu0 0.0
        %6789 = vmatmul.mubr.f32.gmra.mrb[0].mxu0 %v6351
        %v6790 = vpop.f32.mrb[0].mxu0
        %v6791 = vadd.f32 %v6566, %v6790
        %v6792 = vpop.f32.mrb[0].mxu0
        %6793 = vmatprep.mubr.f32.mxu0 0.0
        %6794 = vmatmul.mubr.f32.gmra.mrb[0].mxu0 %v6352
        %v6795 = vpop.f32.mrb[0].mxu0
        %v6796 = vadd.f32 %v6571, %v6795
        %v6797 = vpop.f32.mrb[0].mxu0
        %6798 = vmatprep.mubr.f32.mxu0 0.0
        %6799 = vmatmul.mubr.f32.gmra.mrb[0].mxu0 %v6353
        %v6800 = vpop.f32.mrb[0].mxu0
        %v6801 = vadd.f32 %v6576, %v6800
        %v6802 = vpop.f32.mrb[0].mxu0
        %6803 = vmatprep.mubr.f32.mxu0 0.0
        %6804 = vmatmul.mubr.f32.gmra.mrb[0].mxu0 %v6354
        %v6805 = vpop.f32.mrb[0].mxu0
        %v6806 = vadd.f32 %v6581, %v6805
        %v6807 = vpop.f32.mrb[0].mxu0
        %6808 = vmatprep.mubr.f32.mxu0 0.0
        %6809 = vmatmul.mubr.f32.gmra.mrb[0].mxu0 %v6355
        %v6810 = vpop.f32.mrb[0].mxu0
        %v6811 = vadd.f32 %v6586, %v6810
        %v6812 = vpop.f32.mrb[0].mxu0
        %6813 = vmatprep.mubr.f32.mxu0 0.0
        %6814 = vmatmul.mubr.f32.gmra.mrb[0].mxu0 %v6356
        %v6815 = vpop.f32.mrb[0].mxu0
        %v6816 = vadd.f32 %v6591, %v6815
        %v6817 = vpop.f32.mrb[0].mxu0
        %6818 = vmatprep.mubr.f32.mxu0 0.0
        %6819 = vmatmul.mubr.f32.gmra.mrb[0].mxu0 %v6357
        %v6820 = vpop.f32.mrb[0].mxu0
        %v6821 = vadd.f32 %v6596, %v6820
        %v6822 = vpop.f32.mrb[0].mxu0
        %6823 = vmatprep.mubr.f32.mxu0 0.0
        %6824 = vmatmul.mubr.f32.gmra.mrb[0].mxu0 %v6358
        %v6825 = vpop.f32.mrb[0].mxu0
        %v6826 = vadd.f32 %v6601, %v6825
        %v6827 = vpop.f32.mrb[0].mxu0
        %6828 = vmatprep.mubr.f32.mxu0 0.0
        %6829 = vmatmul.mubr.f32.gmra.mrb[0].mxu0 %v6359
        %v6830 = vpop.f32.mrb[0].mxu0
        %v6831 = vadd.f32 %v6606, %v6830
        %v6832 = vpop.f32.mrb[0].mxu0
        %6833 = vmatprep.mubr.f32.mxu0 0.0
        %6834 = vmatmul.mubr.f32.gmra.mrb[0].mxu0 %v6360
        %v6835 = vpop.f32.mrb[0].mxu0
        %v6836 = vadd.f32 %v6611, %v6835
        %v6837 = vpop.f32.mrb[0].mxu0
        %6838 = vmatprep.mubr.f32.mxu0 0.0
        %6839 = vmatmul.mubr.f32.gmra.mrb[0].mxu0 %v6361
        %v6840 = vpop.f32.mrb[0].mxu0
        %v6841 = vadd.f32 %v6616, %v6840
        %v6842 = vpop.f32.mrb[0].mxu0
        %6843 = vmatprep.mubr.f32.mxu0 0.0
        %6844 = vmatmul.mubr.f32.gmra.mrb[0].mxu0 %v6362
        %v6845 = vpop.f32.mrb[0].mxu0
        %v6846 = vadd.f32 %v6621, %v6845
        %v6847 = vpop.f32.mrb[0].mxu0
        %6848 = vmatprep.mubr.f32.mxu0 0.0
        %6849 = vmatmul.mubr.f32.gmra.mrb[0].mxu0 %v6363
        %v6850 = vpop.f32.mrb[0].mxu0
        %v6851 = vadd.f32 %v6626, %v6850
        %v6852 = vpop.f32.mrb[0].mxu0
        %6853 = vmatprep.mubr.f32.mxu0 0.0
        %6854 = vmatmul.mubr.f32.gmra.mrb[0].mxu0 %v6364
        %v6855 = vpop.f32.mrb[0].mxu0
        %v6856 = vadd.f32 %v6631, %v6855
        %v6857 = vpop.f32.mrb[0].mxu0
        %6858 = vmatprep.mubr.f32.mxu0 0.0
        %6859 = vmatmul.mubr.f32.gmra.mrb[0].mxu0 %v6365
        %v6860 = vpop.f32.mrb[0].mxu0
        %v6861 = vadd.f32 %v6636, %v6860
        %v6862 = vpop.f32.mrb[0].mxu0
        %6863 = vmatprep.mubr.f32.mxu0 0.0
        %6864 = vmatmul.mubr.f32.gmra.mrb[0].mxu0 %v6366
        %v6865 = vpop.f32.mrb[0].mxu0
        %v6866 = vadd.f32 %v6641, %v6865
        %v6867 = vpop.f32.mrb[0].mxu0
        %6868 = vmatprep.mubr.f32.mxu0 0.0
        %6869 = vmatmul.mubr.f32.gmra.mrb[0].mxu0 %v6367
        %v6870 = vpop.f32.mrb[0].mxu0
        %v6871 = vadd.f32 %v6646, %v6870
        %v6872 = vpop.f32.mrb[0].mxu0
        %6873 = vmatprep.mubr.f32.mxu0 0.0
        %6874 = vmatmul.mubr.f32.gmra.mrb[0].mxu0 %v6368
        %v6875 = vpop.f32.mrb[0].mxu0
        %v6876 = vadd.f32 %v6651, %v6875
        %v6877 = vpop.f32.mrb[0].mxu0
        %6878 = vmatprep.mubr.f32.mxu0 0.0
        %6879 = vmatmul.mubr.f32.gmra.mrb[0].mxu0 %v6369
        %v6880 = vpop.f32.mrb[0].mxu0
        %v6881 = vadd.f32 %v6656, %v6880
        %v6882 = vpop.f32.mrb[0].mxu0
        %6883 = vdwg.mxu0
        %v6884 = vld [vmem:[#allocation3 + $0x10] sm:$0xff]
        %v6885 = vld [vmem:[#allocation3 + $0x28] sm:$0xff]
        %v6886 = vld [vmem:[#allocation3 + $0x40] sm:$0xff]
        %v6887 = vld [vmem:[#allocation3 + $0x58] sm:$0xff]
        %v6888 = vld [vmem:[#allocation3 + $0x70] sm:$0xff]
        %v6889 = vld [vmem:[#allocation3 + $0x88] sm:$0xff]
        %v6890 = vld [vmem:[#allocation3 + $0xa0] sm:$0xff]
        %v6891 = vld [vmem:[#allocation3 + $0xb8] sm:$0xff]
        %v6892 = vld [vmem:[#allocation3 + $0xd0] sm:$0xff]
        %v6893 = vld [vmem:[#allocation3 + $0xe8] sm:$0xff]
        %v6894 = vld [vmem:[#allocation3 + $0x100] sm:$0xff]
        %v6895 = vld [vmem:[#allocation3 + $0x118] sm:$0xff]
        %v6896 = vld [vmem:[#allocation3 + $0x130] sm:$0xff]
        %v6897 = vld [vmem:[#allocation3 + $0x148] sm:$0xff]
        %v6898 = vld [vmem:[#allocation3 + $0x160] sm:$0xff]
        %v6899 = vld [vmem:[#allocation3 + $0x178] sm:$0xff]
        %v6900 = vld [vmem:[#allocation3 + $0x190] sm:$0xff]
        %v6901 = vld [vmem:[#allocation3 + $0x1a8] sm:$0xff]
        %v6902 = vld [vmem:[#allocation3 + $0x1c0] sm:$0xff]
        %v6903 = vld [vmem:[#allocation3 + $0x1d8] sm:$0xff]
        %v6904 = vld [vmem:[#allocation3 + $0x1f0] sm:$0xff]
        %v6905 = vld [vmem:[#allocation3 + $0x208] sm:$0xff]
        %v6906 = vld [vmem:[#allocation3 + $0x220] sm:$0xff]
        %v6907 = vld [vmem:[#allocation3 + $0x238] sm:$0xff]
        %v6908 = vld [vmem:[#allocation3 + $0x250] sm:$0xff]
        %v6909 = vld [vmem:[#allocation3 + $0x268] sm:$0xff]
        %v6910 = vld [vmem:[#allocation3 + $0x280] sm:$0xff]
        %v6911 = vld [vmem:[#allocation3 + $0x298] sm:$0xff]
        %v6912 = vld [vmem:[#allocation3 + $0x2b0] sm:$0xff]
        %v6913 = vld [vmem:[#allocation3 + $0x2c8] sm:$0xff]
        %v6914 = vld [vmem:[#allocation3 + $0x2e0] sm:$0xff]
        %v6915 = vld [vmem:[#allocation3 + $0x2f8] sm:$0xff]
        %v6916 = vld [vmem:[%s7 + $0x100] sm:$0xff]
        %v6917 = vld [vmem:[%s7 + $0x108] sm:$0xff]
        %v6918 = vld [vmem:[%s7 + $0x110] sm:$0xff]
        %v6919 = vld [vmem:[%s7 + $0x118] sm:$0xff]
        %v6921 = vsel %vm429, %v6884, 0
        %v6924 = vsel %vm429, %v6885, 0
        %v6927 = vsel %vm429, %v6886, 0
        %v6930 = vsel %vm429, %v6887, 0
        %v6933 = vsel %vm429, %v6888, 0
        %v6936 = vsel %vm429, %v6889, 0
        %v6939 = vsel %vm429, %v6890, 0
        %v6942 = vsel %vm429, %v6891, 0
        %v6945 = vsel %vm429, %v6892, 0
        %v6948 = vsel %vm429, %v6893, 0
        %v6951 = vsel %vm429, %v6894, 0
        %v6954 = vsel %vm429, %v6895, 0
        %v6957 = vsel %vm429, %v6896, 0
        %v6960 = vsel %vm429, %v6897, 0
        %v6963 = vsel %vm429, %v6898, 0
        %v6966 = vsel %vm429, %v6899, 0
        %v6969 = vsel %vm429, %v6900, 0
        %v6972 = vsel %vm429, %v6901, 0
        %v6975 = vsel %vm429, %v6902, 0
        %v6978 = vsel %vm429, %v6903, 0
        %v6981 = vsel %vm429, %v6904, 0
        %v6984 = vsel %vm429, %v6905, 0
        %v6987 = vsel %vm429, %v6906, 0
        %v6990 = vsel %vm429, %v6907, 0
        %v6993 = vsel %vm429, %v6908, 0
        %v6996 = vsel %vm429, %v6909, 0
        %v6999 = vsel %vm429, %v6910, 0
        %v7002 = vsel %vm429, %v6911, 0
        %v7005 = vsel %vm429, %v6912, 0
        %v7008 = vsel %vm429, %v6913, 0
        %v7011 = vsel %vm429, %v6914, 0
        %v7014 = vsel %vm429, %v6915, 0
        %7016 = vmatprep.subr.mxu0 0.0
        %7017 = vmatpush1.msra.mxu0 %v6916
        %7018 = vmatprep.subr.mxu0 0.0
        %7019 = vmatpush1.msra.mxu0 %v6917
        %7020 = vmatprep.subr.mxu0 0.0
        %7021 = vmatpush1.msra.mxu0 %v6918
        %7022 = vmatprep.subr.mxu0 0.0
        %7023 = vmatpush1.msra.mxu0 %v6919
        %7024 = vmatprep.subr.mxu0 0.0
        %7025 = vmatpush1.msra.mxu0 0.0
        %7026 = vmatprep.subr.mxu0 0.0
        %7027 = vmatpush1.msra.mxu0 0.0
        %7028 = vmatprep.subr.mxu0 0.0
        %7029 = vmatpush1.msra.mxu0 0.0
        %7030 = vmatprep.subr.mxu0 0.0
        %7031 = vmatpush1.msra.mxu0 0.0
        %7032 = vmatprep.subr.mxu0 0.0
        %7033 = vmatpush1.msra.mxu0 0.0
        %7034 = vmatprep.subr.mxu0 0.0
        %7035 = vmatpush1.msra.mxu0 0.0
        %7036 = vmatprep.subr.mxu0 0.0
        %7037 = vmatpush1.msra.mxu0 0.0
        %7038 = vmatprep.subr.mxu0 0.0
        %7039 = vmatpush1.msra.mxu0 0.0
        %7040 = vmatprep.subr.mxu0 0.0
        %7041 = vmatpush1.msra.mxu0 0.0
        %7042 = vmatprep.subr.mxu0 0.0
        %7043 = vmatpush1.msra.mxu0 0.0
        %7044 = vmatprep.subr.mxu0 0.0
        %7045 = vmatpush1.msra.mxu0 0.0
        %7046 = vmatprep.subr.mxu0 0.0
        %7047 = vmatpush1.msra.mxu0 0.0
        %7048 = vmatprep.subr.mxu0 0.0
        %7049 = vmatpush1.msra.mxu0 0.0
        %7050 = vmatprep.subr.mxu0 0.0
        %7051 = vmatpush1.msra.mxu0 0.0
        %7052 = vmatprep.subr.mxu0 0.0
        %7053 = vmatpush1.msra.mxu0 0.0
        %7054 = vmatprep.subr.mxu0 0.0
        %7055 = vmatpush1.msra.mxu0 0.0
        %7056 = vmatprep.subr.mxu0 0.0
        %7057 = vmatpush1.msra.mxu0 0.0
        %7058 = vmatprep.subr.mxu0 0.0
        %7059 = vmatpush1.msra.mxu0 0.0
        %7060 = vmatprep.subr.mxu0 0.0
        %7061 = vmatpush1.msra.mxu0 0.0
        %7062 = vmatprep.subr.mxu0 0.0
        %7063 = vmatpush1.msra.mxu0 0.0
        %7064 = vmatprep.subr.mxu0 0.0
        %7065 = vmatpush1.msra.mxu0 0.0
        %7066 = vmatprep.subr.mxu0 0.0
        %7067 = vmatpush1.msra.mxu0 0.0
        %7068 = vmatprep.subr.mxu0 0.0
        %7069 = vmatpush1.msra.mxu0 0.0
        %7070 = vmatprep.subr.mxu0 0.0
        %7071 = vmatpush1.msra.mxu0 0.0
        %7072 = vmatprep.subr.mxu0 0.0
        %7073 = vmatpush1.msra.mxu0 0.0
        %7074 = vmatprep.subr.mxu0 0.0
        %7075 = vmatpush1.msra.mxu0 0.0
        %7076 = vmatprep.subr.mxu0 0.0
        %7077 = vmatpush1.msra.mxu0 0.0
        %7078 = vmatprep.subr.mxu0 0.0
        %7079 = vmatpush1.msra.mxu0 0.0
        %7080 = vmatprep.mubr.f32.mxu0 0.0
        %7081 = vmatmul.mubr.f32.gmra.mrb[0].mxu0 %v6921
        %v7082 = vpop.f32.mrb[0].mxu0
        %v7083 = vadd.f32 0.0, %v7082
        %v7084 = vpop.f32.mrb[0].mxu0
        %7085 = vmatprep.mubr.f32.mxu0 0.0
        %7086 = vmatmul.mubr.f32.gmra.mrb[0].mxu0 %v6924
        %v7087 = vpop.f32.mrb[0].mxu0
        %v7088 = vadd.f32 0.0, %v7087
        %v7089 = vpop.f32.mrb[0].mxu0
        %7090 = vmatprep.mubr.f32.mxu0 0.0
        %7091 = vmatmul.mubr.f32.gmra.mrb[0].mxu0 %v6927
        %v7092 = vpop.f32.mrb[0].mxu0
        %v7093 = vadd.f32 0.0, %v7092
        %v7094 = vpop.f32.mrb[0].mxu0
        %7095 = vmatprep.mubr.f32.mxu0 0.0
        %7096 = vmatmul.mubr.f32.gmra.mrb[0].mxu0 %v6930
        %v7097 = vpop.f32.mrb[0].mxu0
        %v7098 = vadd.f32 0.0, %v7097
        %v7099 = vpop.f32.mrb[0].mxu0
        %7100 = vmatprep.mubr.f32.mxu0 0.0
        %7101 = vmatmul.mubr.f32.gmra.mrb[0].mxu0 %v6933
        %v7102 = vpop.f32.mrb[0].mxu0
        %v7103 = vadd.f32 0.0, %v7102
        %v7104 = vpop.f32.mrb[0].mxu0
        %7105 = vmatprep.mubr.f32.mxu0 0.0
        %7106 = vmatmul.mubr.f32.gmra.mrb[0].mxu0 %v6936
        %v7107 = vpop.f32.mrb[0].mxu0
        %v7108 = vadd.f32 0.0, %v7107
        %v7109 = vpop.f32.mrb[0].mxu0
        %7110 = vmatprep.mubr.f32.mxu0 0.0
        %7111 = vmatmul.mubr.f32.gmra.mrb[0].mxu0 %v6939
        %v7112 = vpop.f32.mrb[0].mxu0
        %v7113 = vadd.f32 0.0, %v7112
        %v7114 = vpop.f32.mrb[0].mxu0
        %7115 = vmatprep.mubr.f32.mxu0 0.0
        %7116 = vmatmul.mubr.f32.gmra.mrb[0].mxu0 %v6942
        %v7117 = vpop.f32.mrb[0].mxu0
        %v7118 = vadd.f32 0.0, %v7117
        %v7119 = vpop.f32.mrb[0].mxu0
        %7120 = vmatprep.mubr.f32.mxu0 0.0
        %7121 = vmatmul.mubr.f32.gmra.mrb[0].mxu0 %v6945
        %v7122 = vpop.f32.mrb[0].mxu0
        %v7123 = vadd.f32 0.0, %v7122
        %v7124 = vpop.f32.mrb[0].mxu0
        %7125 = vmatprep.mubr.f32.mxu0 0.0
        %7126 = vmatmul.mubr.f32.gmra.mrb[0].mxu0 %v6948
        %v7127 = vpop.f32.mrb[0].mxu0
        %v7128 = vadd.f32 0.0, %v7127
        %v7129 = vpop.f32.mrb[0].mxu0
        %7130 = vmatprep.mubr.f32.mxu0 0.0
        %7131 = vmatmul.mubr.f32.gmra.mrb[0].mxu0 %v6951
        %v7132 = vpop.f32.mrb[0].mxu0
        %v7133 = vadd.f32 0.0, %v7132
        %v7134 = vpop.f32.mrb[0].mxu0
        %7135 = vmatprep.mubr.f32.mxu0 0.0
        %7136 = vmatmul.mubr.f32.gmra.mrb[0].mxu0 %v6954
        %v7137 = vpop.f32.mrb[0].mxu0
        %v7138 = vadd.f32 0.0, %v7137
        %v7139 = vpop.f32.mrb[0].mxu0
        %7140 = vmatprep.mubr.f32.mxu0 0.0
        %7141 = vmatmul.mubr.f32.gmra.mrb[0].mxu0 %v6957
        %v7142 = vpop.f32.mrb[0].mxu0
        %v7143 = vadd.f32 0.0, %v7142
        %v7144 = vpop.f32.mrb[0].mxu0
        %7145 = vmatprep.mubr.f32.mxu0 0.0
        %7146 = vmatmul.mubr.f32.gmra.mrb[0].mxu0 %v6960
        %v7147 = vpop.f32.mrb[0].mxu0
        %v7148 = vadd.f32 0.0, %v7147
        %v7149 = vpop.f32.mrb[0].mxu0
        %7150 = vmatprep.mubr.f32.mxu0 0.0
        %7151 = vmatmul.mubr.f32.gmra.mrb[0].mxu0 %v6963
        %v7152 = vpop.f32.mrb[0].mxu0
        %v7153 = vadd.f32 0.0, %v7152
        %v7154 = vpop.f32.mrb[0].mxu0
        %7155 = vmatprep.mubr.f32.mxu0 0.0
        %7156 = vmatmul.mubr.f32.gmra.mrb[0].mxu0 %v6966
        %v7157 = vpop.f32.mrb[0].mxu0
        %v7158 = vadd.f32 0.0, %v7157
        %v7159 = vpop.f32.mrb[0].mxu0
        %7160 = vmatprep.mubr.f32.mxu0 0.0
        %7161 = vmatmul.mubr.f32.gmra.mrb[0].mxu0 %v6969
        %v7162 = vpop.f32.mrb[0].mxu0
        %v7163 = vadd.f32 0.0, %v7162
        %v7164 = vpop.f32.mrb[0].mxu0
        %7165 = vmatprep.mubr.f32.mxu0 0.0
        %7166 = vmatmul.mubr.f32.gmra.mrb[0].mxu0 %v6972
        %v7167 = vpop.f32.mrb[0].mxu0
        %v7168 = vadd.f32 0.0, %v7167
        %v7169 = vpop.f32.mrb[0].mxu0
        %7170 = vmatprep.mubr.f32.mxu0 0.0
        %7171 = vmatmul.mubr.f32.gmra.mrb[0].mxu0 %v6975
        %v7172 = vpop.f32.mrb[0].mxu0
        %v7173 = vadd.f32 0.0, %v7172
        %v7174 = vpop.f32.mrb[0].mxu0
        %7175 = vmatprep.mubr.f32.mxu0 0.0
        %7176 = vmatmul.mubr.f32.gmra.mrb[0].mxu0 %v6978
        %v7177 = vpop.f32.mrb[0].mxu0
        %v7178 = vadd.f32 0.0, %v7177
        %v7179 = vpop.f32.mrb[0].mxu0
        %7180 = vmatprep.mubr.f32.mxu0 0.0
        %7181 = vmatmul.mubr.f32.gmra.mrb[0].mxu0 %v6981
        %v7182 = vpop.f32.mrb[0].mxu0
        %v7183 = vadd.f32 0.0, %v7182
        %v7184 = vpop.f32.mrb[0].mxu0
        %7185 = vmatprep.mubr.f32.mxu0 0.0
        %7186 = vmatmul.mubr.f32.gmra.mrb[0].mxu0 %v6984
        %v7187 = vpop.f32.mrb[0].mxu0
        %v7188 = vadd.f32 0.0, %v7187
        %v7189 = vpop.f32.mrb[0].mxu0
        %7190 = vmatprep.mubr.f32.mxu0 0.0
        %7191 = vmatmul.mubr.f32.gmra.mrb[0].mxu0 %v6987
        %v7192 = vpop.f32.mrb[0].mxu0
        %v7193 = vadd.f32 0.0, %v7192
        %v7194 = vpop.f32.mrb[0].mxu0
        %7195 = vmatprep.mubr.f32.mxu0 0.0
        %7196 = vmatmul.mubr.f32.gmra.mrb[0].mxu0 %v6990
        %v7197 = vpop.f32.mrb[0].mxu0
        %v7198 = vadd.f32 0.0, %v7197
        %v7199 = vpop.f32.mrb[0].mxu0
        %7200 = vmatprep.mubr.f32.mxu0 0.0
        %7201 = vmatmul.mubr.f32.gmra.mrb[0].mxu0 %v6993
        %v7202 = vpop.f32.mrb[0].mxu0
        %v7203 = vadd.f32 0.0, %v7202
        %v7204 = vpop.f32.mrb[0].mxu0
        %7205 = vmatprep.mubr.f32.mxu0 0.0
        %7206 = vmatmul.mubr.f32.gmra.mrb[0].mxu0 %v6996
        %v7207 = vpop.f32.mrb[0].mxu0
        %v7208 = vadd.f32 0.0, %v7207
        %v7209 = vpop.f32.mrb[0].mxu0
        %7210 = vmatprep.mubr.f32.mxu0 0.0
        %7211 = vmatmul.mubr.f32.gmra.mrb[0].mxu0 %v6999
        %v7212 = vpop.f32.mrb[0].mxu0
        %v7213 = vadd.f32 0.0, %v7212
        %v7214 = vpop.f32.mrb[0].mxu0
        %7215 = vmatprep.mubr.f32.mxu0 0.0
        %7216 = vmatmul.mubr.f32.gmra.mrb[0].mxu0 %v7002
        %v7217 = vpop.f32.mrb[0].mxu0
        %v7218 = vadd.f32 0.0, %v7217
        %v7219 = vpop.f32.mrb[0].mxu0
        %7220 = vmatprep.mubr.f32.mxu0 0.0
        %7221 = vmatmul.mubr.f32.gmra.mrb[0].mxu0 %v7005
        %v7222 = vpop.f32.mrb[0].mxu0
        %v7223 = vadd.f32 0.0, %v7222
        %v7224 = vpop.f32.mrb[0].mxu0
        %7225 = vmatprep.mubr.f32.mxu0 0.0
        %7226 = vmatmul.mubr.f32.gmra.mrb[0].mxu0 %v7008
        %v7227 = vpop.f32.mrb[0].mxu0
        %v7228 = vadd.f32 0.0, %v7227
        %v7229 = vpop.f32.mrb[0].mxu0
        %7230 = vmatprep.mubr.f32.mxu0 0.0
        %7231 = vmatmul.mubr.f32.gmra.mrb[0].mxu0 %v7011
        %v7232 = vpop.f32.mrb[0].mxu0
        %v7233 = vadd.f32 0.0, %v7232
        %v7234 = vpop.f32.mrb[0].mxu0
        %7235 = vmatprep.mubr.f32.mxu0 0.0
        %7236 = vmatmul.mubr.f32.gmra.mrb[0].mxu0 %v7014
        %v7237 = vpop.f32.mrb[0].mxu0
        %v7238 = vadd.f32 0.0, %v7237
        %v7239 = vpop.f32.mrb[0].mxu0
        %7240 = vdwg.mxu0
        %v7241 = vadd.f32 %v6726, %v7083
        %v7242 = vadd.f32 %v6731, %v7088
        %v7243 = vadd.f32 %v6736, %v7093
        %v7244 = vadd.f32 %v6741, %v7098
        %v7245 = vadd.f32 %v6746, %v7103
        %v7246 = vadd.f32 %v6751, %v7108
        %v7247 = vadd.f32 %v6756, %v7113
        %v7248 = vadd.f32 %v6761, %v7118
        %v7249 = vadd.f32 %v6766, %v7123
        %v7250 = vadd.f32 %v6771, %v7128
        %v7251 = vadd.f32 %v6776, %v7133
        %v7252 = vadd.f32 %v6781, %v7138
        %v7253 = vadd.f32 %v6786, %v7143
        %v7254 = vadd.f32 %v6791, %v7148
        %v7255 = vadd.f32 %v6796, %v7153
        %v7256 = vadd.f32 %v6801, %v7158
        %v7257 = vadd.f32 %v6806, %v7163
        %v7258 = vadd.f32 %v6811, %v7168
        %v7259 = vadd.f32 %v6816, %v7173
        %v7260 = vadd.f32 %v6821, %v7178
        %v7261 = vadd.f32 %v6826, %v7183
        %v7262 = vadd.f32 %v6831, %v7188
        %v7263 = vadd.f32 %v6836, %v7193
        %v7264 = vadd.f32 %v6841, %v7198
        %v7265 = vadd.f32 %v6846, %v7203
        %v7266 = vadd.f32 %v6851, %v7208
        %v7267 = vadd.f32 %v6856, %v7213
        %v7268 = vadd.f32 %v6861, %v7218
        %v7269 = vadd.f32 %v6866, %v7223
        %v7270 = vadd.f32 %v6871, %v7228
        %v7271 = vadd.f32 %v6876, %v7233
        %v7272 = vadd.f32 %v6881, %v7238
        %v7273 = vsel %vm429, %v7241, 0.0
        %v7274 = vsel %vm429, %v7242, 0.0
        %v7275 = vadd.f32 %v7273, %v7274
        %v7276 = vsel %vm429, %v7243, 0.0
        %v7277 = vadd.f32 %v7275, %v7276
        %v7278 = vsel %vm429, %v7244, 0.0
        %v7279 = vadd.f32 %v7277, %v7278
        %v7280 = vsel %vm429, %v7245, 0.0
        %v7281 = vadd.f32 %v7279, %v7280
        %v7282 = vsel %vm429, %v7246, 0.0
        %v7283 = vadd.f32 %v7281, %v7282
        %v7284 = vsel %vm429, %v7247, 0.0
        %v7285 = vadd.f32 %v7283, %v7284
        %v7286 = vsel %vm429, %v7248, 0.0
        %v7287 = vadd.f32 %v7285, %v7286
        %v7288 = vsel %vm429, %v7249, 0.0
        %v7289 = vadd.f32 %v7287, %v7288
        %v7290 = vsel %vm429, %v7250, 0.0
        %v7291 = vadd.f32 %v7289, %v7290
        %v7292 = vsel %vm429, %v7251, 0.0
        %v7293 = vadd.f32 %v7291, %v7292
        %v7294 = vsel %vm429, %v7252, 0.0
        %v7295 = vadd.f32 %v7293, %v7294
        %v7296 = vsel %vm429, %v7253, 0.0
        %v7297 = vadd.f32 %v7295, %v7296
        %v7298 = vsel %vm429, %v7254, 0.0
        %v7299 = vadd.f32 %v7297, %v7298
        %v7300 = vsel %vm429, %v7255, 0.0
        %v7301 = vadd.f32 %v7299, %v7300
        %v7302 = vsel %vm429, %v7256, 0.0
        %v7303 = vadd.f32 %v7301, %v7302
        %v7304 = vsel %vm429, %v7257, 0.0
        %v7305 = vadd.f32 %v7303, %v7304
        %v7306 = vsel %vm429, %v7258, 0.0
        %v7307 = vadd.f32 %v7305, %v7306
        %v7308 = vsel %vm429, %v7259, 0.0
        %v7309 = vadd.f32 %v7307, %v7308
        %v7310 = vsel %vm429, %v7260, 0.0
        %v7311 = vadd.f32 %v7309, %v7310
        %v7312 = vsel %vm429, %v7261, 0.0
        %v7313 = vadd.f32 %v7311, %v7312
        %v7314 = vsel %vm429, %v7262, 0.0
        %v7315 = vadd.f32 %v7313, %v7314
        %v7316 = vsel %vm429, %v7263, 0.0
        %v7317 = vadd.f32 %v7315, %v7316
        %v7318 = vsel %vm429, %v7264, 0.0
        %v7319 = vadd.f32 %v7317, %v7318
        %v7320 = vsel %vm429, %v7265, 0.0
        %v7321 = vadd.f32 %v7319, %v7320
        %v7322 = vsel %vm429, %v7266, 0.0
        %v7323 = vadd.f32 %v7321, %v7322
        %v7324 = vsel %vm429, %v7267, 0.0
        %v7325 = vadd.f32 %v7323, %v7324
        %v7326 = vsel %vm429, %v7268, 0.0
        %v7327 = vadd.f32 %v7325, %v7326
        %v7328 = vsel %vm429, %v7269, 0.0
        %v7329 = vadd.f32 %v7327, %v7328
        %v7330 = vsel %vm429, %v7270, 0.0
        %v7331 = vadd.f32 %v7329, %v7330
        %v7332 = vsel %vm429, %v7271, 0.0
        %v7333 = vadd.f32 %v7331, %v7332
        %v7334 = vsel %vm429, %v7272, 0.0
        %v7335 = vadd.f32 %v7333, %v7334
        %v7336 = vrot.slane %v7335, 4
        %v7337 = vadd.f32 %v7335, %v7336
        %v7338 = vrot.slane %v7337, 2
        %v7339 = vadd.f32 %v7337, %v7338
        %v7340 = vrot.slane %v7339, 1
        %v7341 = vadd.f32 %v7339, %v7340
        %v7342 = vmul.f32 %v7341, 0.00390625
        %v7343 = vmul.f32 %v7241, %v7241
        %v7344 = vmul.f32 %v7242, %v7242
        %v7345 = vmul.f32 %v7243, %v7243
        %v7346 = vmul.f32 %v7244, %v7244
        %v7347 = vmul.f32 %v7245, %v7245
        %v7348 = vmul.f32 %v7246, %v7246
        %v7349 = vmul.f32 %v7247, %v7247
        %v7350 = vmul.f32 %v7248, %v7248
        %v7351 = vmul.f32 %v7249, %v7249
        %v7352 = vmul.f32 %v7250, %v7250
        %v7353 = vmul.f32 %v7251, %v7251
        %v7354 = vmul.f32 %v7252, %v7252
        %v7355 = vmul.f32 %v7253, %v7253
        %v7356 = vmul.f32 %v7254, %v7254
        %v7357 = vmul.f32 %v7255, %v7255
        %v7358 = vmul.f32 %v7256, %v7256
        %v7359 = vmul.f32 %v7257, %v7257
        %v7360 = vmul.f32 %v7258, %v7258
        %v7361 = vmul.f32 %v7259, %v7259
        %v7362 = vmul.f32 %v7260, %v7260
        %v7363 = vmul.f32 %v7261, %v7261
        %v7364 = vmul.f32 %v7262, %v7262
        %v7365 = vmul.f32 %v7263, %v7263
        %v7366 = vmul.f32 %v7264, %v7264
        %v7367 = vmul.f32 %v7265, %v7265
        %v7368 = vmul.f32 %v7266, %v7266
        %v7369 = vmul.f32 %v7267, %v7267
        %v7370 = vmul.f32 %v7268, %v7268
        %v7371 = vmul.f32 %v7269, %v7269
        %v7372 = vmul.f32 %v7270, %v7270
        %v7373 = vmul.f32 %v7271, %v7271
        %v7374 = vmul.f32 %v7272, %v7272
        %v7375 = vsel %vm429, %v7343, 0.0
        %v7376 = vsel %vm429, %v7344, 0.0
        %v7377 = vadd.f32 %v7375, %v7376
        %v7378 = vsel %vm429, %v7345, 0.0
        %v7379 = vadd.f32 %v7377, %v7378
        %v7380 = vsel %vm429, %v7346, 0.0
        %v7381 = vadd.f32 %v7379, %v7380
        %v7382 = vsel %vm429, %v7347, 0.0
        %v7383 = vadd.f32 %v7381, %v7382
        %v7384 = vsel %vm429, %v7348, 0.0
        %v7385 = vadd.f32 %v7383, %v7384
        %v7386 = vsel %vm429, %v7349, 0.0
        %v7387 = vadd.f32 %v7385, %v7386
        %v7388 = vsel %vm429, %v7350, 0.0
        %v7389 = vadd.f32 %v7387, %v7388
        %v7390 = vsel %vm429, %v7351, 0.0
        %v7391 = vadd.f32 %v7389, %v7390
        %v7392 = vsel %vm429, %v7352, 0.0
        %v7393 = vadd.f32 %v7391, %v7392
        %v7394 = vsel %vm429, %v7353, 0.0
        %v7395 = vadd.f32 %v7393, %v7394
        %v7396 = vsel %vm429, %v7354, 0.0
        %v7397 = vadd.f32 %v7395, %v7396
        %v7398 = vsel %vm429, %v7355, 0.0
        %v7399 = vadd.f32 %v7397, %v7398
        %v7400 = vsel %vm429, %v7356, 0.0
        %v7401 = vadd.f32 %v7399, %v7400
        %v7402 = vsel %vm429, %v7357, 0.0
        %v7403 = vadd.f32 %v7401, %v7402
        %v7404 = vsel %vm429, %v7358, 0.0
        %v7405 = vadd.f32 %v7403, %v7404
        %v7406 = vsel %vm429, %v7359, 0.0
        %v7407 = vadd.f32 %v7405, %v7406
        %v7408 = vsel %vm429, %v7360, 0.0
        %v7409 = vadd.f32 %v7407, %v7408
        %v7410 = vsel %vm429, %v7361, 0.0
        %v7411 = vadd.f32 %v7409, %v7410
        %v7412 = vsel %vm429, %v7362, 0.0
        %v7413 = vadd.f32 %v7411, %v7412
        %v7414 = vsel %vm429, %v7363, 0.0
        %v7415 = vadd.f32 %v7413, %v7414
        %v7416 = vsel %vm429, %v7364, 0.0
        %v7417 = vadd.f32 %v7415, %v7416
        %v7418 = vsel %vm429, %v7365, 0.0
        %v7419 = vadd.f32 %v7417, %v7418
        %v7420 = vsel %vm429, %v7366, 0.0
        %v7421 = vadd.f32 %v7419, %v7420
        %v7422 = vsel %vm429, %v7367, 0.0
        %v7423 = vadd.f32 %v7421, %v7422
        %v7424 = vsel %vm429, %v7368, 0.0
        %v7425 = vadd.f32 %v7423, %v7424
        %v7426 = vsel %vm429, %v7369, 0.0
        %v7427 = vadd.f32 %v7425, %v7426
        %v7428 = vsel %vm429, %v7370, 0.0
        %v7429 = vadd.f32 %v7427, %v7428
        %v7430 = vsel %vm429, %v7371, 0.0
        %v7431 = vadd.f32 %v7429, %v7430
        %v7432 = vsel %vm429, %v7372, 0.0
        %v7433 = vadd.f32 %v7431, %v7432
        %v7434 = vsel %vm429, %v7373, 0.0
        %v7435 = vadd.f32 %v7433, %v7434
        %v7436 = vsel %vm429, %v7374, 0.0
        %v7437 = vadd.f32 %v7435, %v7436
        %v7438 = vrot.slane %v7437, 4
        %v7439 = vadd.f32 %v7437, %v7438
        %v7440 = vrot.slane %v7439, 2
        %v7441 = vadd.f32 %v7439, %v7440
        %v7442 = vrot.slane %v7441, 1
        %v7443 = vadd.f32 %v7441, %v7442
        %v7444 = vmul.f32 %v7443, 0.00390625
        %v7445 = vmul.f32 %v7342, %v7342
        %v7446 = vsub.f32 %v7444, %v7445
        %v7447 = vmax.f32 %v7446, 0.0
        %v7448 = vsub.f32 %v7241, %v7342
        %v7449 = vsub.f32 %v7242, %v7342
        %v7450 = vsub.f32 %v7243, %v7342
        %v7451 = vsub.f32 %v7244, %v7342
        %v7452 = vsub.f32 %v7245, %v7342
        %v7453 = vsub.f32 %v7246, %v7342
        %v7454 = vsub.f32 %v7247, %v7342
        %v7455 = vsub.f32 %v7248, %v7342
        %v7456 = vsub.f32 %v7249, %v7342
        %v7457 = vsub.f32 %v7250, %v7342
        %v7458 = vsub.f32 %v7251, %v7342
        %v7459 = vsub.f32 %v7252, %v7342
        %v7460 = vsub.f32 %v7253, %v7342
        %v7461 = vsub.f32 %v7254, %v7342
        %v7462 = vsub.f32 %v7255, %v7342
        %v7463 = vsub.f32 %v7256, %v7342
        %v7464 = vsub.f32 %v7257, %v7342
        %v7465 = vsub.f32 %v7258, %v7342
        %v7466 = vsub.f32 %v7259, %v7342
        %v7467 = vsub.f32 %v7260, %v7342
        %v7468 = vsub.f32 %v7261, %v7342
        %v7469 = vsub.f32 %v7262, %v7342
        %v7470 = vsub.f32 %v7263, %v7342
        %v7471 = vsub.f32 %v7264, %v7342
        %v7472 = vsub.f32 %v7265, %v7342
        %v7473 = vsub.f32 %v7266, %v7342
        %v7474 = vsub.f32 %v7267, %v7342
        %v7475 = vsub.f32 %v7268, %v7342
        %v7476 = vsub.f32 %v7269, %v7342
        %v7477 = vsub.f32 %v7270, %v7342
        %v7478 = vsub.f32 %v7271, %v7342
        %v7479 = vsub.f32 %v7272, %v7342
        %v7480 = vadd.f32 %v7447, 1e-05
        %v7481 = vrsqrt.pop %v7480
        %v7482 = vld [vmem:[%s8] sm:$0x1]
        %v7483 = vmul.f32 %v7481, %v7482
        %v7484 = vlaneseq
        %v7485 = vshrl.u32 %v7484, 7
        %v7486 = vsub.s32 0, %v7485
        %v7487 = vrot.slane %v7483, %v7486
        %v7488 = vmul.f32 %v7448, %v7487
        %v7489 = vmul.f32 %v7449, %v7487
        %v7490 = vmul.f32 %v7450, %v7487
        %v7491 = vmul.f32 %v7451, %v7487
        %v7492 = vmul.f32 %v7452, %v7487
        %v7493 = vmul.f32 %v7453, %v7487
        %v7494 = vmul.f32 %v7454, %v7487
        %v7495 = vmul.f32 %v7455, %v7487
        %v7496 = vmul.f32 %v7456, %v7487
        %v7497 = vmul.f32 %v7457, %v7487
        %v7498 = vmul.f32 %v7458, %v7487
        %v7499 = vmul.f32 %v7459, %v7487
        %v7500 = vmul.f32 %v7460, %v7487
        %v7501 = vmul.f32 %v7461, %v7487
        %v7502 = vmul.f32 %v7462, %v7487
        %v7503 = vmul.f32 %v7463, %v7487
        %v7504 = vmul.f32 %v7464, %v7487
        %v7505 = vmul.f32 %v7465, %v7487
        %v7506 = vmul.f32 %v7466, %v7487
        %v7507 = vmul.f32 %v7467, %v7487
        %v7508 = vmul.f32 %v7468, %v7487
        %v7509 = vmul.f32 %v7469, %v7487
        %v7510 = vmul.f32 %v7470, %v7487
        %v7511 = vmul.f32 %v7471, %v7487
        %v7512 = vmul.f32 %v7472, %v7487
        %v7513 = vmul.f32 %v7473, %v7487
        %v7514 = vmul.f32 %v7474, %v7487
        %v7515 = vmul.f32 %v7475, %v7487
        %v7516 = vmul.f32 %v7476, %v7487
        %v7517 = vmul.f32 %v7477, %v7487
        %v7518 = vmul.f32 %v7478, %v7487
        %v7519 = vmul.f32 %v7479, %v7487
        %v7520 = vld [vmem:[%s9] sm:$0x1]
        %v7522 = vlaneseq
        %v7523 = vshrl.u32 %v7522, 7
        %v7524 = vsub.s32 0, %v7523
        %v7525 = vrot.slane %v7520, %v7524
        %v7527 = vadd.f32 %v7488, %v7525
        %v7528 = vadd.f32 %v7489, %v7525
        %v7529 = vadd.f32 %v7490, %v7525
        %v7530 = vadd.f32 %v7491, %v7525
        %v7531 = vadd.f32 %v7492, %v7525
        %v7532 = vadd.f32 %v7493, %v7525
        %v7533 = vadd.f32 %v7494, %v7525
        %v7534 = vadd.f32 %v7495, %v7525
        %v7535 = vadd.f32 %v7496, %v7525
        %v7536 = vadd.f32 %v7497, %v7525
        %v7537 = vadd.f32 %v7498, %v7525
        %v7538 = vadd.f32 %v7499, %v7525
        %v7539 = vadd.f32 %v7500, %v7525
        %v7540 = vadd.f32 %v7501, %v7525
        %v7541 = vadd.f32 %v7502, %v7525
        %v7542 = vadd.f32 %v7503, %v7525
        %v7543 = vadd.f32 %v7504, %v7525
        %v7544 = vadd.f32 %v7505, %v7525
        %v7545 = vadd.f32 %v7506, %v7525
        %v7546 = vadd.f32 %v7507, %v7525
        %v7547 = vadd.f32 %v7508, %v7525
        %v7548 = vadd.f32 %v7509, %v7525
        %v7549 = vadd.f32 %v7510, %v7525
        %v7550 = vadd.f32 %v7511, %v7525
        %v7551 = vadd.f32 %v7512, %v7525
        %v7552 = vadd.f32 %v7513, %v7525
        %v7553 = vadd.f32 %v7514, %v7525
        %v7554 = vadd.f32 %v7515, %v7525
        %v7555 = vadd.f32 %v7516, %v7525
        %v7556 = vadd.f32 %v7517, %v7525
        %v7557 = vadd.f32 %v7518, %v7525
        %v7558 = vadd.f32 %v7519, %v7525
        %v7559 = vadd.f32 %v2554, %v7527
        %v7560 = vadd.f32 %v2555, %v7528
        %v7561 = vadd.f32 %v2556, %v7529
        %v7562 = vadd.f32 %v2557, %v7530
        %v7563 = vadd.f32 %v2558, %v7531
        %v7564 = vadd.f32 %v2559, %v7532
        %v7565 = vadd.f32 %v2560, %v7533
        %v7566 = vadd.f32 %v2561, %v7534
        %v7567 = vadd.f32 %v2562, %v7535
        %v7568 = vadd.f32 %v2563, %v7536
        %v7569 = vadd.f32 %v2564, %v7537
        %v7570 = vadd.f32 %v2565, %v7538
        %v7571 = vadd.f32 %v2566, %v7539
        %v7572 = vadd.f32 %v2567, %v7540
        %v7573 = vadd.f32 %v2568, %v7541
        %v7574 = vadd.f32 %v2569, %v7542
        %v7575 = vadd.f32 %v2570, %v7543
        %v7576 = vadd.f32 %v2571, %v7544
        %v7577 = vadd.f32 %v2572, %v7545
        %v7578 = vadd.f32 %v2573, %v7546
        %v7579 = vadd.f32 %v2574, %v7547
        %v7580 = vadd.f32 %v2575, %v7548
        %v7581 = vadd.f32 %v2576, %v7549
        %v7582 = vadd.f32 %v2577, %v7550
        %v7583 = vadd.f32 %v2578, %v7551
        %v7584 = vadd.f32 %v2579, %v7552
        %v7585 = vadd.f32 %v2580, %v7553
        %v7586 = vadd.f32 %v2581, %v7554
        %v7587 = vadd.f32 %v2582, %v7555
        %v7588 = vadd.f32 %v2583, %v7556
        %v7589 = vadd.f32 %v2584, %v7557
        %v7590 = vadd.f32 %v2585, %v7558
        %7591 = vst.msk [vmem:[%s517 + $0x1] sm:$0xff] %vm429, %v7559
        %7592 = vst.msk [vmem:[%s517 + $0x9] sm:$0xff] %vm429, %v7560
        %7593 = vst.msk [vmem:[%s517 + $0x19] sm:$0xff] %vm429, %v7561
        %7594 = vst.msk [vmem:[%s517 + $0x21] sm:$0xff] %vm429, %v7562
        %7595 = vst.msk [vmem:[%s517 + $0x31] sm:$0xff] %vm429, %v7563
        %7596 = vst.msk [vmem:[%s517 + $0x39] sm:$0xff] %vm429, %v7564
        %7597 = vst.msk [vmem:[%s517 + $0x49] sm:$0xff] %vm429, %v7565
        %7598 = vst.msk [vmem:[%s517 + $0x51] sm:$0xff] %vm429, %v7566
        %7599 = vst.msk [vmem:[%s517 + $0x61] sm:$0xff] %vm429, %v7567
        %7600 = vst.msk [vmem:[%s517 + $0x69] sm:$0xff] %vm429, %v7568
        %7601 = vst.msk [vmem:[%s517 + $0x79] sm:$0xff] %vm429, %v7569
        %7602 = vst.msk [vmem:[%s517 + $0x81] sm:$0xff] %vm429, %v7570
        %7603 = vst.msk [vmem:[%s517 + $0x91] sm:$0xff] %vm429, %v7571
        %7604 = vst.msk [vmem:[%s517 + $0x99] sm:$0xff] %vm429, %v7572
        %7605 = vst.msk [vmem:[%s517 + $0xa9] sm:$0xff] %vm429, %v7573
        %7606 = vst.msk [vmem:[%s517 + $0xb1] sm:$0xff] %vm429, %v7574
        %7607 = vst.msk [vmem:[%s517 + $0xc1] sm:$0xff] %vm429, %v7575
        %7608 = vst.msk [vmem:[%s517 + $0xc9] sm:$0xff] %vm429, %v7576
        %7609 = vst.msk [vmem:[%s517 + $0xd9] sm:$0xff] %vm429, %v7577
        %7610 = vst.msk [vmem:[%s517 + $0xe1] sm:$0xff] %vm429, %v7578
        %7611 = vst.msk [vmem:[%s517 + $0xf1] sm:$0xff] %vm429, %v7579
        %7612 = vst.msk [vmem:[%s517 + $0xf9] sm:$0xff] %vm429, %v7580
        %7613 = vst.msk [vmem:[%s517 + $0x109] sm:$0xff] %vm429, %v7581
        %7614 = vst.msk [vmem:[%s517 + $0x111] sm:$0xff] %vm429, %v7582
        %7615 = vst.msk [vmem:[%s517 + $0x121] sm:$0xff] %vm429, %v7583
        %7616 = vst.msk [vmem:[%s517 + $0x129] sm:$0xff] %vm429, %v7584
        %7617 = vst.msk [vmem:[%s517 + $0x139] sm:$0xff] %vm429, %v7585
        %7618 = vst.msk [vmem:[%s517 + $0x141] sm:$0xff] %vm429, %v7586
        %7619 = vst.msk [vmem:[%s517 + $0x151] sm:$0xff] %vm429, %v7587
        %7620 = vst.msk [vmem:[%s517 + $0x159] sm:$0xff] %vm429, %v7588
        %7621 = vst.msk [vmem:[%s517 + $0x169] sm:$0xff] %vm429, %v7589
        %7622 = vst.msk [vmem:[%s517 + $0x171] sm:$0xff] %vm429, %v7590
        %v7623 = vld [vmem:[#allocation2] sm:$0xff]
        %v7624 = vld [vmem:[#allocation2 + $0x8] sm:$0xff]
        %v7625 = vld [vmem:[#allocation2 + $0x10] sm:$0x3]
        %v7626 = vld [vmem:[#allocation2 + $0x18] sm:$0xff]
        %v7627 = vld [vmem:[#allocation2 + $0x20] sm:$0xff]
        %v7628 = vld [vmem:[#allocation2 + $0x28] sm:$0x3]
        %v7629 = vld [vmem:[#allocation2 + $0x30] sm:$0xff]
        %v7630 = vld [vmem:[#allocation2 + $0x38] sm:$0xff]
        %v7631 = vld [vmem:[#allocation2 + $0x40] sm:$0x3]
        %v7632 = vld [vmem:[#allocation2 + $0x48] sm:$0xff]
        %v7633 = vld [vmem:[#allocation2 + $0x50] sm:$0xff]
        %v7634 = vld [vmem:[#allocation2 + $0x58] sm:$0x3]
        %v7635 = vld [vmem:[#allocation2 + $0x60] sm:$0xff]
        %v7636 = vld [vmem:[#allocation2 + $0x68] sm:$0xff]
        %v7637 = vld [vmem:[#allocation2 + $0x70] sm:$0x3]
        %v7638 = vld [vmem:[#allocation2 + $0x78] sm:$0xff]
        %v7639 = vld [vmem:[#allocation2 + $0x80] sm:$0xff]
        %v7640 = vld [vmem:[#allocation2 + $0x88] sm:$0x3]
        %v7641 = vld [vmem:[#allocation2 + $0x90] sm:$0xff]
        %v7642 = vld [vmem:[#allocation2 + $0x98] sm:$0xff]
        %v7643 = vld [vmem:[#allocation2 + $0xa0] sm:$0x3]
        %v7644 = vld [vmem:[#allocation2 + $0xa8] sm:$0xff]
        %v7645 = vld [vmem:[#allocation2 + $0xb0] sm:$0xff]
        %v7646 = vld [vmem:[#allocation2 + $0xb8] sm:$0x3]
        %v7647 = vld [vmem:[#allocation2 + $0xc0] sm:$0xff]
        %v7648 = vld [vmem:[#allocation2 + $0xc8] sm:$0xff]
        %v7649 = vld [vmem:[#allocation2 + $0xd0] sm:$0x3]
        %v7650 = vld [vmem:[#allocation2 + $0xd8] sm:$0xff]
        %v7651 = vld [vmem:[#allocation2 + $0xe0] sm:$0xff]
        %v7652 = vld [vmem:[#allocation2 + $0xe8] sm:$0x3]
        %v7653 = vld [vmem:[#allocation2 + $0xf0] sm:$0xff]
        %v7654 = vld [vmem:[#allocation2 + $0xf8] sm:$0xff]
        %v7655 = vld [vmem:[#allocation2 + $0x100] sm:$0x3]
        %v7656 = vld [vmem:[#allocation2 + $0x108] sm:$0xff]
        %v7657 = vld [vmem:[#allocation2 + $0x110] sm:$0xff]
        %v7658 = vld [vmem:[#allocation2 + $0x118] sm:$0x3]
        %v7659 = vld [vmem:[#allocation2 + $0x120] sm:$0xff]
        %v7660 = vld [vmem:[#allocation2 + $0x128] sm:$0xff]
        %v7661 = vld [vmem:[#allocation2 + $0x130] sm:$0x3]
        %v7662 = vld [vmem:[#allocation2 + $0x138] sm:$0xff]
        %v7663 = vld [vmem:[#allocation2 + $0x140] sm:$0xff]
        %v7664 = vld [vmem:[#allocation2 + $0x148] sm:$0x3]
        %v7665 = vld [vmem:[#allocation2 + $0x150] sm:$0xff]
        %v7666 = vld [vmem:[#allocation2 + $0x158] sm:$0xff]
        %v7667 = vld [vmem:[#allocation2 + $0x160] sm:$0x3]
        %v7668 = vld [vmem:[#allocation2 + $0x168] sm:$0xff]
        %v7669 = vld [vmem:[#allocation2 + $0x170] sm:$0xff]
        %v7670 = vld [vmem:[#allocation2 + $0x178] sm:$0x3]
        %v7671 = vld [vmem:[#allocation2 + $0x180] sm:$0xff]
        %v7672 = vld [vmem:[#allocation2 + $0x188] sm:$0xff]
        %v7673 = vld [vmem:[#allocation2 + $0x190] sm:$0x3]
        %v7674 = vld [vmem:[#allocation2 + $0x198] sm:$0xff]
        %v7675 = vld [vmem:[#allocation2 + $0x1a0] sm:$0xff]
        %v7676 = vld [vmem:[#allocation2 + $0x1a8] sm:$0x3]
        %7677 = vst.msk [vmem:[#allocation3] sm:$0xff] %vm429, %v7623
        %7678 = vst.msk [vmem:[#allocation3 + $0x18] sm:$0xff] %vm429, %v7624
        %7679 = vst.msk [vmem:[#allocation3 + $0x30] sm:$0xff] %vm429, %v7626
        %7680 = vst.msk [vmem:[#allocation3 + $0x48] sm:$0xff] %vm429, %v7627
        %7681 = vst.msk [vmem:[#allocation3 + $0x60] sm:$0xff] %vm429, %v7629
        %7682 = vst.msk [vmem:[#allocation3 + $0x78] sm:$0xff] %vm429, %v7630
        %7683 = vst.msk [vmem:[#allocation3 + $0x90] sm:$0xff] %vm429, %v7632
        %7684 = vst.msk [vmem:[#allocation3 + $0xa8] sm:$0xff] %vm429, %v7633
        %7685 = vst.msk [vmem:[#allocation3 + $0xc0] sm:$0xff] %vm429, %v7635
        %7686 = vst.msk [vmem:[#allocation3 + $0xd8] sm:$0xff] %vm429, %v7636
        %7687 = vst.msk [vmem:[#allocation3 + $0xf0] sm:$0xff] %vm429, %v7638
        %7688 = vst.msk [vmem:[#allocation3 + $0x108] sm:$0xff] %vm429, %v7639
        %7689 = vst.msk [vmem:[#allocation3 + $0x120] sm:$0xff] %vm429, %v7641
        %7690 = vst.msk [vmem:[#allocation3 + $0x138] sm:$0xff] %vm429, %v7642
        %7691 = vst.msk [vmem:[#allocation3 + $0x150] sm:$0xff] %vm429, %v7644
        %7692 = vst.msk [vmem:[#allocation3 + $0x168] sm:$0xff] %vm429, %v7645
        %7693 = vst.msk [vmem:[#allocation3 + $0x180] sm:$0xff] %vm429, %v7647
        %7694 = vst.msk [vmem:[#allocation3 + $0x198] sm:$0xff] %vm429, %v7648
        %7695 = vst.msk [vmem:[#allocation3 + $0x1b0] sm:$0xff] %vm429, %v7650
        %7696 = vst.msk [vmem:[#allocation3 + $0x1c8] sm:$0xff] %vm429, %v7651
        %7697 = vst.msk [vmem:[#allocation3 + $0x1e0] sm:$0xff] %vm429, %v7653
        %7698 = vst.msk [vmem:[#allocation3 + $0x1f8] sm:$0xff] %vm429, %v7654
        %7699 = vst.msk [vmem:[#allocation3 + $0x210] sm:$0xff] %vm429, %v7656
        %7700 = vst.msk [vmem:[#allocation3 + $0x228] sm:$0xff] %vm429, %v7657
        %7701 = vst.msk [vmem:[#allocation3 + $0x240] sm:$0xff] %vm429, %v7659
        %7702 = vst.msk [vmem:[#allocation3 + $0x258] sm:$0xff] %vm429, %v7660
        %7703 = vst.msk [vmem:[#allocation3 + $0x270] sm:$0xff] %vm429, %v7662
        %7704 = vst.msk [vmem:[#allocation3 + $0x288] sm:$0xff] %vm429, %v7663
        %7705 = vst.msk [vmem:[#allocation3 + $0x2a0] sm:$0xff] %vm429, %v7665
        %7706 = vst.msk [vmem:[#allocation3 + $0x2b8] sm:$0xff] %vm429, %v7666
        %7707 = vst.msk [vmem:[#allocation3 + $0x2d0] sm:$0xff] %vm429, %v7668
        %7708 = vst.msk [vmem:[#allocation3 + $0x2e8] sm:$0xff] %vm429, %v7669
        %v7757 = vrot.slane %v7623, 1
        %v7758 = vrot.slane %v7624, 1
        %v7759 = vsel %vm685, %v7757, %v7758
        %v7760 = vrot.slane %v7625, 1
        %v7761 = vsel %vm685, %v7758, %v7760
        %v7762 = vrot.slane %v7626, 1
        %v7763 = vrot.slane %v7627, 1
        %v7764 = vsel %vm685, %v7762, %v7763
        %v7765 = vrot.slane %v7628, 1
        %v7766 = vsel %vm685, %v7763, %v7765
        %v7767 = vrot.slane %v7629, 1
        %v7768 = vrot.slane %v7630, 1
        %v7769 = vsel %vm685, %v7767, %v7768
        %v7770 = vrot.slane %v7631, 1
        %v7771 = vsel %vm685, %v7768, %v7770
        %v7772 = vrot.slane %v7632, 1
        %v7773 = vrot.slane %v7633, 1
        %v7774 = vsel %vm685, %v7772, %v7773
        %v7775 = vrot.slane %v7634, 1
        %v7776 = vsel %vm685, %v7773, %v7775
        %v7777 = vrot.slane %v7635, 1
        %v7778 = vrot.slane %v7636, 1
        %v7779 = vsel %vm685, %v7777, %v7778
        %v7780 = vrot.slane %v7637, 1
        %v7781 = vsel %vm685, %v7778, %v7780
        %v7782 = vrot.slane %v7638, 1
        %v7783 = vrot.slane %v7639, 1
        %v7784 = vsel %vm685, %v7782, %v7783
        %v7785 = vrot.slane %v7640, 1
        %v7786 = vsel %vm685, %v7783, %v7785
        %v7787 = vrot.slane %v7641, 1
        %v7788 = vrot.slane %v7642, 1
        %v7789 = vsel %vm685, %v7787, %v7788
        %v7790 = vrot.slane %v7643, 1
        %v7791 = vsel %vm685, %v7788, %v7790
        %v7792 = vrot.slane %v7644, 1
        %v7793 = vrot.slane %v7645, 1
        %v7794 = vsel %vm685, %v7792, %v7793
        %v7795 = vrot.slane %v7646, 1
        %v7796 = vsel %vm685, %v7793, %v7795
        %v7797 = vrot.slane %v7647, 1
        %v7798 = vrot.slane %v7648, 1
        %v7799 = vsel %vm685, %v7797, %v7798
        %v7800 = vrot.slane %v7649, 1
        %v7801 = vsel %vm685, %v7798, %v7800
        %v7802 = vrot.slane %v7650, 1
        %v7803 = vrot.slane %v7651, 1
        %v7804 = vsel %vm685, %v7802, %v7803
        %v7805 = vrot.slane %v7652, 1
        %v7806 = vsel %vm685, %v7803, %v7805
        %v7807 = vrot.slane %v7653, 1
        %v7808 = vrot.slane %v7654, 1
        %v7809 = vsel %vm685, %v7807, %v7808
        %v7810 = vrot.slane %v7655, 1
        %v7811 = vsel %vm685, %v7808, %v7810
        %v7812 = vrot.slane %v7656, 1
        %v7813 = vrot.slane %v7657, 1
        %v7814 = vsel %vm685, %v7812, %v7813
        %v7815 = vrot.slane %v7658, 1
        %v7816 = vsel %vm685, %v7813, %v7815
        %v7817 = vrot.slane %v7659, 1
        %v7818 = vrot.slane %v7660, 1
        %v7819 = vsel %vm685, %v7817, %v7818
        %v7820 = vrot.slane %v7661, 1
        %v7821 = vsel %vm685, %v7818, %v7820
        %v7822 = vrot.slane %v7662, 1
        %v7823 = vrot.slane %v7663, 1
        %v7824 = vsel %vm685, %v7822, %v7823
        %v7825 = vrot.slane %v7664, 1
        %v7826 = vsel %vm685, %v7823, %v7825
        %v7827 = vrot.slane %v7665, 1
        %v7828 = vrot.slane %v7666, 1
        %v7829 = vsel %vm685, %v7827, %v7828
        %v7830 = vrot.slane %v7667, 1
        %v7831 = vsel %vm685, %v7828, %v7830
        %v7832 = vrot.slane %v7668, 1
        %v7833 = vrot.slane %v7669, 1
        %v7834 = vsel %vm685, %v7832, %v7833
        %v7835 = vrot.slane %v7670, 1
        %v7836 = vsel %vm685, %v7833, %v7835
        %7837 = vrot.lane.b32.xlu0 %v7759, 32
        %v7838 = vpop.permute.xlu0 %7837
        %7839 = vrot.lane.b32.xlu0 %v7761, 32
        %v7840 = vpop.permute.xlu0 %7839
        %7841 = vrot.lane.b32.xlu0 %v7764, 32
        %v7842 = vpop.permute.xlu0 %7841
        %7843 = vrot.lane.b32.xlu0 %v7766, 32
        %v7844 = vpop.permute.xlu0 %7843
        %7845 = vrot.lane.b32.xlu0 %v7769, 32
        %v7846 = vpop.permute.xlu0 %7845
        %7847 = vrot.lane.b32.xlu0 %v7771, 32
        %v7848 = vpop.permute.xlu0 %7847
        %7849 = vrot.lane.b32.xlu0 %v7774, 32
        %v7850 = vpop.permute.xlu0 %7849
        %7851 = vrot.lane.b32.xlu0 %v7776, 32
        %v7852 = vpop.permute.xlu0 %7851
        %7853 = vrot.lane.b32.xlu0 %v7779, 32
        %v7854 = vpop.permute.xlu0 %7853
        %7855 = vrot.lane.b32.xlu0 %v7781, 32
        %v7856 = vpop.permute.xlu0 %7855
        %7857 = vrot.lane.b32.xlu0 %v7784, 32
        %v7858 = vpop.permute.xlu0 %7857
        %7859 = vrot.lane.b32.xlu0 %v7786, 32
        %v7860 = vpop.permute.xlu0 %7859
        %7861 = vrot.lane.b32.xlu0 %v7789, 32
        %v7862 = vpop.permute.xlu0 %7861
        %7863 = vrot.lane.b32.xlu0 %v7791, 32
        %v7864 = vpop.permute.xlu0 %7863
        %7865 = vrot.lane.b32.xlu0 %v7794, 32
        %v7866 = vpop.permute.xlu0 %7865
        %7867 = vrot.lane.b32.xlu0 %v7796, 32
        %v7868 = vpop.permute.xlu0 %7867
        %7869 = vrot.lane.b32.xlu0 %v7799, 32
        %v7870 = vpop.permute.xlu0 %7869
        %7871 = vrot.lane.b32.xlu0 %v7801, 32
        %v7872 = vpop.permute.xlu0 %7871
        %7873 = vrot.lane.b32.xlu0 %v7804, 32
        %v7874 = vpop.permute.xlu0 %7873
        %7875 = vrot.lane.b32.xlu0 %v7806, 32
        %v7876 = vpop.permute.xlu0 %7875
        %7877 = vrot.lane.b32.xlu0 %v7809, 32
        %v7878 = vpop.permute.xlu0 %7877
        %7879 = vrot.lane.b32.xlu0 %v7811, 32
        %v7880 = vpop.permute.xlu0 %7879
        %7881 = vrot.lane.b32.xlu0 %v7814, 32
        %v7882 = vpop.permute.xlu0 %7881
        %7883 = vrot.lane.b32.xlu0 %v7816, 32
        %v7884 = vpop.permute.xlu0 %7883
        %7885 = vrot.lane.b32.xlu0 %v7819, 32
        %v7886 = vpop.permute.xlu0 %7885
        %7887 = vrot.lane.b32.xlu0 %v7821, 32
        %v7888 = vpop.permute.xlu0 %7887
        %7889 = vrot.lane.b32.xlu0 %v7824, 32
        %v7890 = vpop.permute.xlu0 %7889
        %7891 = vrot.lane.b32.xlu0 %v7826, 32
        %v7892 = vpop.permute.xlu0 %7891
        %7893 = vrot.lane.b32.xlu0 %v7829, 32
        %v7894 = vpop.permute.xlu0 %7893
        %7895 = vrot.lane.b32.xlu0 %v7831, 32
        %v7896 = vpop.permute.xlu0 %7895
        %7897 = vrot.lane.b32.xlu0 %v7834, 32
        %v7898 = vpop.permute.xlu0 %7897
        %7899 = vrot.lane.b32.xlu0 %v7836, 32
        %v7900 = vpop.permute.xlu0 %7899
        %7933 = vst.msk [vmem:[#allocation3] sm:$0xff] %vm2928, %v7838
        %7934 = vst.msk [vmem:[#allocation3 + $0x18] sm:$0xff] %vm2928, %v7840
        %7935 = vst.msk [vmem:[#allocation3 + $0x30] sm:$0xff] %vm2928, %v7842
        %7936 = vst.msk [vmem:[#allocation3 + $0x48] sm:$0xff] %vm2928, %v7844
        %7937 = vst.msk [vmem:[#allocation3 + $0x60] sm:$0xff] %vm2928, %v7846
        %7938 = vst.msk [vmem:[#allocation3 + $0x78] sm:$0xff] %vm2928, %v7848
        %7939 = vst.msk [vmem:[#allocation3 + $0x90] sm:$0xff] %vm2928, %v7850
        %7940 = vst.msk [vmem:[#allocation3 + $0xa8] sm:$0xff] %vm2928, %v7852
        %7941 = vst.msk [vmem:[#allocation3 + $0xc0] sm:$0xff] %vm2928, %v7854
        %7942 = vst.msk [vmem:[#allocation3 + $0xd8] sm:$0xff] %vm2928, %v7856
        %7943 = vst.msk [vmem:[#allocation3 + $0xf0] sm:$0xff] %vm2928, %v7858
        %7944 = vst.msk [vmem:[#allocation3 + $0x108] sm:$0xff] %vm2928, %v7860
        %7945 = vst.msk [vmem:[#allocation3 + $0x120] sm:$0xff] %vm2928, %v7862
        %7946 = vst.msk [vmem:[#allocation3 + $0x138] sm:$0xff] %vm2928, %v7864
        %7947 = vst.msk [vmem:[#allocation3 + $0x150] sm:$0xff] %vm2928, %v7866
        %7948 = vst.msk [vmem:[#allocation3 + $0x168] sm:$0xff] %vm2928, %v7868
        %7949 = vst.msk [vmem:[#allocation3 + $0x180] sm:$0xff] %vm2928, %v7870
        %7950 = vst.msk [vmem:[#allocation3 + $0x198] sm:$0xff] %vm2928, %v7872
        %7951 = vst.msk [vmem:[#allocation3 + $0x1b0] sm:$0xff] %vm2928, %v7874
        %7952 = vst.msk [vmem:[#allocation3 + $0x1c8] sm:$0xff] %vm2928, %v7876
        %7953 = vst.msk [vmem:[#allocation3 + $0x1e0] sm:$0xff] %vm2928, %v7878
        %7954 = vst.msk [vmem:[#allocation3 + $0x1f8] sm:$0xff] %vm2928, %v7880
        %7955 = vst.msk [vmem:[#allocation3 + $0x210] sm:$0xff] %vm2928, %v7882
        %7956 = vst.msk [vmem:[#allocation3 + $0x228] sm:$0xff] %vm2928, %v7884
        %7957 = vst.msk [vmem:[#allocation3 + $0x240] sm:$0xff] %vm2928, %v7886
        %7958 = vst.msk [vmem:[#allocation3 + $0x258] sm:$0xff] %vm2928, %v7888
        %7959 = vst.msk [vmem:[#allocation3 + $0x270] sm:$0xff] %vm2928, %v7890
        %7960 = vst.msk [vmem:[#allocation3 + $0x288] sm:$0xff] %vm2928, %v7892
        %7961 = vst.msk [vmem:[#allocation3 + $0x2a0] sm:$0xff] %vm2928, %v7894
        %7962 = vst.msk [vmem:[#allocation3 + $0x2b8] sm:$0xff] %vm2928, %v7896
        %7963 = vst.msk [vmem:[#allocation3 + $0x2d0] sm:$0xff] %vm2928, %v7898
        %7964 = vst.msk [vmem:[#allocation3 + $0x2e8] sm:$0xff] %vm2928, %v7900
        %v7965 = vrot.slane %v7623, 2
        %v7966 = vrot.slane %v7624, 2
        %v7967 = vsel %vm895, %v7965, %v7966
        %v7968 = vrot.slane %v7625, 2
        %v7969 = vsel %vm895, %v7966, %v7968
        %v7970 = vrot.slane %v7626, 2
        %v7971 = vrot.slane %v7627, 2
        %v7972 = vsel %vm895, %v7970, %v7971
        %v7973 = vrot.slane %v7628, 2
        %v7974 = vsel %vm895, %v7971, %v7973
        %v7975 = vrot.slane %v7629, 2
        %v7976 = vrot.slane %v7630, 2
        %v7977 = vsel %vm895, %v7975, %v7976
        %v7978 = vrot.slane %v7631, 2
        %v7979 = vsel %vm895, %v7976, %v7978
        %v7980 = vrot.slane %v7632, 2
        %v7981 = vrot.slane %v7633, 2
        %v7982 = vsel %vm895, %v7980, %v7981
        %v7983 = vrot.slane %v7634, 2
        %v7984 = vsel %vm895, %v7981, %v7983
        %v7985 = vrot.slane %v7635, 2
        %v7986 = vrot.slane %v7636, 2
        %v7987 = vsel %vm895, %v7985, %v7986
        %v7988 = vrot.slane %v7637, 2
        %v7989 = vsel %vm895, %v7986, %v7988
        %v7990 = vrot.slane %v7638, 2
        %v7991 = vrot.slane %v7639, 2
        %v7992 = vsel %vm895, %v7990, %v7991
        %v7993 = vrot.slane %v7640, 2
        %v7994 = vsel %vm895, %v7991, %v7993
        %v7995 = vrot.slane %v7641, 2
        %v7996 = vrot.slane %v7642, 2
        %v7997 = vsel %vm895, %v7995, %v7996
        %v7998 = vrot.slane %v7643, 2
        %v7999 = vsel %vm895, %v7996, %v7998
        %v8000 = vrot.slane %v7644, 2
        %v8001 = vrot.slane %v7645, 2
        %v8002 = vsel %vm895, %v8000, %v8001
        %v8003 = vrot.slane %v7646, 2
        %v8004 = vsel %vm895, %v8001, %v8003
        %v8005 = vrot.slane %v7647, 2
        %v8006 = vrot.slane %v7648, 2
        %v8007 = vsel %vm895, %v8005, %v8006
        %v8008 = vrot.slane %v7649, 2
        %v8009 = vsel %vm895, %v8006, %v8008
        %v8010 = vrot.slane %v7650, 2
        %v8011 = vrot.slane %v7651, 2
        %v8012 = vsel %vm895, %v8010, %v8011
        %v8013 = vrot.slane %v7652, 2
        %v8014 = vsel %vm895, %v8011, %v8013
        %v8015 = vrot.slane %v7653, 2
        %v8016 = vrot.slane %v7654, 2
        %v8017 = vsel %vm895, %v8015, %v8016
        %v8018 = vrot.slane %v7655, 2
        %v8019 = vsel %vm895, %v8016, %v8018
        %v8020 = vrot.slane %v7656, 2
        %v8021 = vrot.slane %v7657, 2
        %v8022 = vsel %vm895, %v8020, %v8021
        %v8023 = vrot.slane %v7658, 2
        %v8024 = vsel %vm895, %v8021, %v8023
        %v8025 = vrot.slane %v7659, 2
        %v8026 = vrot.slane %v7660, 2
        %v8027 = vsel %vm895, %v8025, %v8026
        %v8028 = vrot.slane %v7661, 2
        %v8029 = vsel %vm895, %v8026, %v8028
        %v8030 = vrot.slane %v7662, 2
        %v8031 = vrot.slane %v7663, 2
        %v8032 = vsel %vm895, %v8030, %v8031
        %v8033 = vrot.slane %v7664, 2
        %v8034 = vsel %vm895, %v8031, %v8033
        %v8035 = vrot.slane %v7665, 2
        %v8036 = vrot.slane %v7666, 2
        %v8037 = vsel %vm895, %v8035, %v8036
        %v8038 = vrot.slane %v7667, 2
        %v8039 = vsel %vm895, %v8036, %v8038
        %v8040 = vrot.slane %v7668, 2
        %v8041 = vrot.slane %v7669, 2
        %v8042 = vsel %vm895, %v8040, %v8041
        %v8043 = vrot.slane %v7670, 2
        %v8044 = vsel %vm895, %v8041, %v8043
        %8045 = vrot.lane.b32.xlu0 %v7967, 64
        %v8046 = vpop.permute.xlu0 %8045
        %8047 = vrot.lane.b32.xlu0 %v7969, 64
        %v8048 = vpop.permute.xlu0 %8047
        %8049 = vrot.lane.b32.xlu0 %v7972, 64
        %v8050 = vpop.permute.xlu0 %8049
        %8051 = vrot.lane.b32.xlu0 %v7974, 64
        %v8052 = vpop.permute.xlu0 %8051
        %8053 = vrot.lane.b32.xlu0 %v7977, 64
        %v8054 = vpop.permute.xlu0 %8053
        %8055 = vrot.lane.b32.xlu0 %v7979, 64
        %v8056 = vpop.permute.xlu0 %8055
        %8057 = vrot.lane.b32.xlu0 %v7982, 64
        %v8058 = vpop.permute.xlu0 %8057
        %8059 = vrot.lane.b32.xlu0 %v7984, 64
        %v8060 = vpop.permute.xlu0 %8059
        %8061 = vrot.lane.b32.xlu0 %v7987, 64
        %v8062 = vpop.permute.xlu0 %8061
        %8063 = vrot.lane.b32.xlu0 %v7989, 64
        %v8064 = vpop.permute.xlu0 %8063
        %8065 = vrot.lane.b32.xlu0 %v7992, 64
        %v8066 = vpop.permute.xlu0 %8065
        %8067 = vrot.lane.b32.xlu0 %v7994, 64
        %v8068 = vpop.permute.xlu0 %8067
        %8069 = vrot.lane.b32.xlu0 %v7997, 64
        %v8070 = vpop.permute.xlu0 %8069
        %8071 = vrot.lane.b32.xlu0 %v7999, 64
        %v8072 = vpop.permute.xlu0 %8071
        %8073 = vrot.lane.b32.xlu0 %v8002, 64
        %v8074 = vpop.permute.xlu0 %8073
        %8075 = vrot.lane.b32.xlu0 %v8004, 64
        %v8076 = vpop.permute.xlu0 %8075
        %8077 = vrot.lane.b32.xlu0 %v8007, 64
        %v8078 = vpop.permute.xlu0 %8077
        %8079 = vrot.lane.b32.xlu0 %v8009, 64
        %v8080 = vpop.permute.xlu0 %8079
        %8081 = vrot.lane.b32.xlu0 %v8012, 64
        %v8082 = vpop.permute.xlu0 %8081
        %8083 = vrot.lane.b32.xlu0 %v8014, 64
        %v8084 = vpop.permute.xlu0 %8083
        %8085 = vrot.lane.b32.xlu0 %v8017, 64
        %v8086 = vpop.permute.xlu0 %8085
        %8087 = vrot.lane.b32.xlu0 %v8019, 64
        %v8088 = vpop.permute.xlu0 %8087
        %8089 = vrot.lane.b32.xlu0 %v8022, 64
        %v8090 = vpop.permute.xlu0 %8089
        %8091 = vrot.lane.b32.xlu0 %v8024, 64
        %v8092 = vpop.permute.xlu0 %8091
        %8093 = vrot.lane.b32.xlu0 %v8027, 64
        %v8094 = vpop.permute.xlu0 %8093
        %8095 = vrot.lane.b32.xlu0 %v8029, 64
        %v8096 = vpop.permute.xlu0 %8095
        %8097 = vrot.lane.b32.xlu0 %v8032, 64
        %v8098 = vpop.permute.xlu0 %8097
        %8099 = vrot.lane.b32.xlu0 %v8034, 64
        %v8100 = vpop.permute.xlu0 %8099
        %8101 = vrot.lane.b32.xlu0 %v8037, 64
        %v8102 = vpop.permute.xlu0 %8101
        %8103 = vrot.lane.b32.xlu0 %v8039, 64
        %v8104 = vpop.permute.xlu0 %8103
        %8105 = vrot.lane.b32.xlu0 %v8042, 64
        %v8106 = vpop.permute.xlu0 %8105
        %8107 = vrot.lane.b32.xlu0 %v8044, 64
        %v8108 = vpop.permute.xlu0 %8107
        %8141 = vst.msk [vmem:[#allocation3] sm:$0xff] %vm3137, %v8046
        %8142 = vst.msk [vmem:[#allocation3 + $0x18] sm:$0xff] %vm3137, %v8048
        %8143 = vst.msk [vmem:[#allocation3 + $0x30] sm:$0xff] %vm3137, %v8050
        %8144 = vst.msk [vmem:[#allocation3 + $0x48] sm:$0xff] %vm3137, %v8052
        %8145 = vst.msk [vmem:[#allocation3 + $0x60] sm:$0xff] %vm3137, %v8054
        %8146 = vst.msk [vmem:[#allocation3 + $0x78] sm:$0xff] %vm3137, %v8056
        %8147 = vst.msk [vmem:[#allocation3 + $0x90] sm:$0xff] %vm3137, %v8058
        %8148 = vst.msk [vmem:[#allocation3 + $0xa8] sm:$0xff] %vm3137, %v8060
        %8149 = vst.msk [vmem:[#allocation3 + $0xc0] sm:$0xff] %vm3137, %v8062
        %8150 = vst.msk [vmem:[#allocation3 + $0xd8] sm:$0xff] %vm3137, %v8064
        %8151 = vst.msk [vmem:[#allocation3 + $0xf0] sm:$0xff] %vm3137, %v8066
        %8152 = vst.msk [vmem:[#allocation3 + $0x108] sm:$0xff] %vm3137, %v8068
        %8153 = vst.msk [vmem:[#allocation3 + $0x120] sm:$0xff] %vm3137, %v8070
        %8154 = vst.msk [vmem:[#allocation3 + $0x138] sm:$0xff] %vm3137, %v8072
        %8155 = vst.msk [vmem:[#allocation3 + $0x150] sm:$0xff] %vm3137, %v8074
        %8156 = vst.msk [vmem:[#allocation3 + $0x168] sm:$0xff] %vm3137, %v8076
        %8157 = vst.msk [vmem:[#allocation3 + $0x180] sm:$0xff] %vm3137, %v8078
        %8158 = vst.msk [vmem:[#allocation3 + $0x198] sm:$0xff] %vm3137, %v8080
        %8159 = vst.msk [vmem:[#allocation3 + $0x1b0] sm:$0xff] %vm3137, %v8082
        %8160 = vst.msk [vmem:[#allocation3 + $0x1c8] sm:$0xff] %vm3137, %v8084
        %8161 = vst.msk [vmem:[#allocation3 + $0x1e0] sm:$0xff] %vm3137, %v8086
        %8162 = vst.msk [vmem:[#allocation3 + $0x1f8] sm:$0xff] %vm3137, %v8088
        %8163 = vst.msk [vmem:[#allocation3 + $0x210] sm:$0xff] %vm3137, %v8090
        %8164 = vst.msk [vmem:[#allocation3 + $0x228] sm:$0xff] %vm3137, %v8092
        %8165 = vst.msk [vmem:[#allocation3 + $0x240] sm:$0xff] %vm3137, %v8094
        %8166 = vst.msk [vmem:[#allocation3 + $0x258] sm:$0xff] %vm3137, %v8096
        %8167 = vst.msk [vmem:[#allocation3 + $0x270] sm:$0xff] %vm3137, %v8098
        %8168 = vst.msk [vmem:[#allocation3 + $0x288] sm:$0xff] %vm3137, %v8100
        %8169 = vst.msk [vmem:[#allocation3 + $0x2a0] sm:$0xff] %vm3137, %v8102
        %8170 = vst.msk [vmem:[#allocation3 + $0x2b8] sm:$0xff] %vm3137, %v8104
        %8171 = vst.msk [vmem:[#allocation3 + $0x2d0] sm:$0xff] %vm3137, %v8106
        %8172 = vst.msk [vmem:[#allocation3 + $0x2e8] sm:$0xff] %vm3137, %v8108
        %8175 = vrot.lane.b32.xlu0 %v7626, 96
        %v8176 = vpop.permute.xlu0 %8175
        %8177 = vrot.lane.b32.xlu0 %v7627, 96
        %v8178 = vpop.permute.xlu0 %8177
        %8179 = vrot.lane.b32.xlu0 %v7629, 96
        %v8180 = vpop.permute.xlu0 %8179
        %8181 = vrot.lane.b32.xlu0 %v7630, 96
        %v8182 = vpop.permute.xlu0 %8181
        %8183 = vrot.lane.b32.xlu0 %v7632, 96
        %v8184 = vpop.permute.xlu0 %8183
        %8185 = vrot.lane.b32.xlu0 %v7633, 96
        %v8186 = vpop.permute.xlu0 %8185
        %8187 = vrot.lane.b32.xlu0 %v7635, 96
        %v8188 = vpop.permute.xlu0 %8187
        %8189 = vrot.lane.b32.xlu0 %v7636, 96
        %v8190 = vpop.permute.xlu0 %8189
        %8191 = vrot.lane.b32.xlu0 %v7638, 96
        %v8192 = vpop.permute.xlu0 %8191
        %8193 = vrot.lane.b32.xlu0 %v7639, 96
        %v8194 = vpop.permute.xlu0 %8193
        %8195 = vrot.lane.b32.xlu0 %v7641, 96
        %v8196 = vpop.permute.xlu0 %8195
        %8197 = vrot.lane.b32.xlu0 %v7642, 96
        %v8198 = vpop.permute.xlu0 %8197
        %8199 = vrot.lane.b32.xlu0 %v7644, 96
        %v8200 = vpop.permute.xlu0 %8199
        %8201 = vrot.lane.b32.xlu0 %v7645, 96
        %v8202 = vpop.permute.xlu0 %8201
        %8203 = vrot.lane.b32.xlu0 %v7647, 96
        %v8204 = vpop.permute.xlu0 %8203
        %8205 = vrot.lane.b32.xlu0 %v7648, 96
        %v8206 = vpop.permute.xlu0 %8205
        %8207 = vrot.lane.b32.xlu0 %v7650, 96
        %v8208 = vpop.permute.xlu0 %8207
        %8209 = vrot.lane.b32.xlu0 %v7651, 96
        %v8210 = vpop.permute.xlu0 %8209
        %8211 = vrot.lane.b32.xlu0 %v7653, 96
        %v8212 = vpop.permute.xlu0 %8211
        %8213 = vrot.lane.b32.xlu0 %v7654, 96
        %v8214 = vpop.permute.xlu0 %8213
        %8215 = vrot.lane.b32.xlu0 %v7656, 96
        %v8216 = vpop.permute.xlu0 %8215
        %8217 = vrot.lane.b32.xlu0 %v7657, 96
        %v8218 = vpop.permute.xlu0 %8217
        %8219 = vrot.lane.b32.xlu0 %v7659, 96
        %v8220 = vpop.permute.xlu0 %8219
        %8221 = vrot.lane.b32.xlu0 %v7660, 96
        %v8222 = vpop.permute.xlu0 %8221
        %8223 = vrot.lane.b32.xlu0 %v7662, 96
        %v8224 = vpop.permute.xlu0 %8223
        %8225 = vrot.lane.b32.xlu0 %v7663, 96
        %v8226 = vpop.permute.xlu0 %8225
        %8227 = vrot.lane.b32.xlu0 %v7665, 96
        %v8228 = vpop.permute.xlu0 %8227
        %8229 = vrot.lane.b32.xlu0 %v7666, 96
        %v8230 = vpop.permute.xlu0 %8229
        %8231 = vrot.lane.b32.xlu0 %v7668, 96
        %v8232 = vpop.permute.xlu0 %8231
        %8233 = vrot.lane.b32.xlu0 %v7669, 96
        %v8234 = vpop.permute.xlu0 %8233
        %8235 = vrot.lane.b32.xlu0 %v7671, 96
        %v8236 = vpop.permute.xlu0 %8235
        %8237 = vrot.lane.b32.xlu0 %v7672, 96
        %v8238 = vpop.permute.xlu0 %8237
        %8271 = vst.msk [vmem:[#allocation3] sm:$0xff] %vm3268, %v8176
        %8272 = vst.msk [vmem:[#allocation3 + $0x18] sm:$0xff] %vm3268, %v8178
        %8273 = vst.msk [vmem:[#allocation3 + $0x30] sm:$0xff] %vm3268, %v8180
        %8274 = vst.msk [vmem:[#allocation3 + $0x48] sm:$0xff] %vm3268, %v8182
        %8275 = vst.msk [vmem:[#allocation3 + $0x60] sm:$0xff] %vm3268, %v8184
        %8276 = vst.msk [vmem:[#allocation3 + $0x78] sm:$0xff] %vm3268, %v8186
        %8277 = vst.msk [vmem:[#allocation3 + $0x90] sm:$0xff] %vm3268, %v8188
        %8278 = vst.msk [vmem:[#allocation3 + $0xa8] sm:$0xff] %vm3268, %v8190
        %8279 = vst.msk [vmem:[#allocation3 + $0xc0] sm:$0xff] %vm3268, %v8192
        %8280 = vst.msk [vmem:[#allocation3 + $0xd8] sm:$0xff] %vm3268, %v8194
        %8281 = vst.msk [vmem:[#allocation3 + $0xf0] sm:$0xff] %vm3268, %v8196
        %8282 = vst.msk [vmem:[#allocation3 + $0x108] sm:$0xff] %vm3268, %v8198
        %8283 = vst.msk [vmem:[#allocation3 + $0x120] sm:$0xff] %vm3268, %v8200
        %8284 = vst.msk [vmem:[#allocation3 + $0x138] sm:$0xff] %vm3268, %v8202
        %8285 = vst.msk [vmem:[#allocation3 + $0x150] sm:$0xff] %vm3268, %v8204
        %8286 = vst.msk [vmem:[#allocation3 + $0x168] sm:$0xff] %vm3268, %v8206
        %8287 = vst.msk [vmem:[#allocation3 + $0x180] sm:$0xff] %vm3268, %v8208
        %8288 = vst.msk [vmem:[#allocation3 + $0x198] sm:$0xff] %vm3268, %v8210
        %8289 = vst.msk [vmem:[#allocation3 + $0x1b0] sm:$0xff] %vm3268, %v8212
        %8290 = vst.msk [vmem:[#allocation3 + $0x1c8] sm:$0xff] %vm3268, %v8214
        %8291 = vst.msk [vmem:[#allocation3 + $0x1e0] sm:$0xff] %vm3268, %v8216
        %8292 = vst.msk [vmem:[#allocation3 + $0x1f8] sm:$0xff] %vm3268, %v8218
        %8293 = vst.msk [vmem:[#allocation3 + $0x210] sm:$0xff] %vm3268, %v8220
        %8294 = vst.msk [vmem:[#allocation3 + $0x228] sm:$0xff] %vm3268, %v8222
        %8295 = vst.msk [vmem:[#allocation3 + $0x240] sm:$0xff] %vm3268, %v8224
        %8296 = vst.msk [vmem:[#allocation3 + $0x258] sm:$0xff] %vm3268, %v8226
        %8297 = vst.msk [vmem:[#allocation3 + $0x270] sm:$0xff] %vm3268, %v8228
        %8298 = vst.msk [vmem:[#allocation3 + $0x288] sm:$0xff] %vm3268, %v8230
        %8299 = vst.msk [vmem:[#allocation3 + $0x2a0] sm:$0xff] %vm3268, %v8232
        %8300 = vst.msk [vmem:[#allocation3 + $0x2b8] sm:$0xff] %vm3268, %v8234
        %8301 = vst.msk [vmem:[#allocation3 + $0x2d0] sm:$0xff] %vm3268, %v8236
        %8302 = vst.msk [vmem:[#allocation3 + $0x2e8] sm:$0xff] %vm3268, %v8238
        %v8304 = vrot.slane %v7671, 1
        %v8305 = vrot.slane %v7672, 1
        %v8306 = vsel %vm685, %v8304, %v8305
        %v8307 = vrot.slane %v7673, 1
        %v8308 = vsel %vm685, %v8305, %v8307
        %8341 = vst.msk [vmem:[#allocation3 + $0x8] sm:$0xff] %vm429, %v7764
        %8342 = vst.msk [vmem:[#allocation3 + $0x20] sm:$0xff] %vm429, %v7766
        %8343 = vst.msk [vmem:[#allocation3 + $0x38] sm:$0xff] %vm429, %v7769
        %8344 = vst.msk [vmem:[#allocation3 + $0x50] sm:$0xff] %vm429, %v7771
        %8345 = vst.msk [vmem:[#allocation3 + $0x68] sm:$0xff] %vm429, %v7774
        %8346 = vst.msk [vmem:[#allocation3 + $0x80] sm:$0xff] %vm429, %v7776
        %8347 = vst.msk [vmem:[#allocation3 + $0x98] sm:$0xff] %vm429, %v7779
        %8348 = vst.msk [vmem:[#allocation3 + $0xb0] sm:$0xff] %vm429, %v7781
        %8349 = vst.msk [vmem:[#allocation3 + $0xc8] sm:$0xff] %vm429, %v7784
        %8350 = vst.msk [vmem:[#allocation3 + $0xe0] sm:$0xff] %vm429, %v7786
        %8351 = vst.msk [vmem:[#allocation3 + $0xf8] sm:$0xff] %vm429, %v7789
        %8352 = vst.msk [vmem:[#allocation3 + $0x110] sm:$0xff] %vm429, %v7791
        %8353 = vst.msk [vmem:[#allocation3 + $0x128] sm:$0xff] %vm429, %v7794
        %8354 = vst.msk [vmem:[#allocation3 + $0x140] sm:$0xff] %vm429, %v7796
        %8355 = vst.msk [vmem:[#allocation3 + $0x158] sm:$0xff] %vm429, %v7799
        %8356 = vst.msk [vmem:[#allocation3 + $0x170] sm:$0xff] %vm429, %v7801
        %8357 = vst.msk [vmem:[#allocation3 + $0x188] sm:$0xff] %vm429, %v7804
        %8358 = vst.msk [vmem:[#allocation3 + $0x1a0] sm:$0xff] %vm429, %v7806
        %8359 = vst.msk [vmem:[#allocation3 + $0x1b8] sm:$0xff] %vm429, %v7809
        %8360 = vst.msk [vmem:[#allocation3 + $0x1d0] sm:$0xff] %vm429, %v7811
        %8361 = vst.msk [vmem:[#allocation3 + $0x1e8] sm:$0xff] %vm429, %v7814
        %8362 = vst.msk [vmem:[#allocation3 + $0x200] sm:$0xff] %vm429, %v7816
        %8363 = vst.msk [vmem:[#allocation3 + $0x218] sm:$0xff] %vm429, %v7819
        %8364 = vst.msk [vmem:[#allocation3 + $0x230] sm:$0xff] %vm429, %v7821
        %8365 = vst.msk [vmem:[#allocation3 + $0x248] sm:$0xff] %vm429, %v7824
        %8366 = vst.msk [vmem:[#allocation3 + $0x260] sm:$0xff] %vm429, %v7826
        %8367 = vst.msk [vmem:[#allocation3 + $0x278] sm:$0xff] %vm429, %v7829
        %8368 = vst.msk [vmem:[#allocation3 + $0x290] sm:$0xff] %vm429, %v7831
        %8369 = vst.msk [vmem:[#allocation3 + $0x2a8] sm:$0xff] %vm429, %v7834
        %8370 = vst.msk [vmem:[#allocation3 + $0x2c0] sm:$0xff] %vm429, %v7836
        %8371 = vst.msk [vmem:[#allocation3 + $0x2d8] sm:$0xff] %vm429, %v8306
        %8372 = vst.msk [vmem:[#allocation3 + $0x2f0] sm:$0xff] %vm429, %v8308
        %v8373 = vrot.slane %v7671, 2
        %v8374 = vrot.slane %v7672, 2
        %v8375 = vsel %vm895, %v8373, %v8374
        %v8376 = vrot.slane %v7673, 2
        %v8377 = vsel %vm895, %v8374, %v8376
        %8378 = vrot.lane.b32.xlu0 %v7972, 32
        %v8379 = vpop.permute.xlu0 %8378
        %8380 = vrot.lane.b32.xlu0 %v7974, 32
        %v8381 = vpop.permute.xlu0 %8380
        %8382 = vrot.lane.b32.xlu0 %v7977, 32
        %v8383 = vpop.permute.xlu0 %8382
        %8384 = vrot.lane.b32.xlu0 %v7979, 32
        %v8385 = vpop.permute.xlu0 %8384
        %8386 = vrot.lane.b32.xlu0 %v7982, 32
        %v8387 = vpop.permute.xlu0 %8386
        %8388 = vrot.lane.b32.xlu0 %v7984, 32
        %v8389 = vpop.permute.xlu0 %8388
        %8390 = vrot.lane.b32.xlu0 %v7987, 32
        %v8391 = vpop.permute.xlu0 %8390
        %8392 = vrot.lane.b32.xlu0 %v7989, 32
        %v8393 = vpop.permute.xlu0 %8392
        %8394 = vrot.lane.b32.xlu0 %v7992, 32
        %v8395 = vpop.permute.xlu0 %8394
        %8396 = vrot.lane.b32.xlu0 %v7994, 32
        %v8397 = vpop.permute.xlu0 %8396
        %8398 = vrot.lane.b32.xlu0 %v7997, 32
        %v8399 = vpop.permute.xlu0 %8398
        %8400 = vrot.lane.b32.xlu0 %v7999, 32
        %v8401 = vpop.permute.xlu0 %8400
        %8402 = vrot.lane.b32.xlu0 %v8002, 32
        %v8403 = vpop.permute.xlu0 %8402
        %8404 = vrot.lane.b32.xlu0 %v8004, 32
        %v8405 = vpop.permute.xlu0 %8404
        %8406 = vrot.lane.b32.xlu0 %v8007, 32
        %v8407 = vpop.permute.xlu0 %8406
        %8408 = vrot.lane.b32.xlu0 %v8009, 32
        %v8409 = vpop.permute.xlu0 %8408
        %8410 = vrot.lane.b32.xlu0 %v8012, 32
        %v8411 = vpop.permute.xlu0 %8410
        %8412 = vrot.lane.b32.xlu0 %v8014, 32
        %v8413 = vpop.permute.xlu0 %8412
        %8414 = vrot.lane.b32.xlu0 %v8017, 32
        %v8415 = vpop.permute.xlu0 %8414
        %8416 = vrot.lane.b32.xlu0 %v8019, 32
        %v8417 = vpop.permute.xlu0 %8416
        %8418 = vrot.lane.b32.xlu0 %v8022, 32
        %v8419 = vpop.permute.xlu0 %8418
        %8420 = vrot.lane.b32.xlu0 %v8024, 32
        %v8421 = vpop.permute.xlu0 %8420
        %8422 = vrot.lane.b32.xlu0 %v8027, 32
        %v8423 = vpop.permute.xlu0 %8422
        %8424 = vrot.lane.b32.xlu0 %v8029, 32
        %v8425 = vpop.permute.xlu0 %8424
        %8426 = vrot.lane.b32.xlu0 %v8032, 32
        %v8427 = vpop.permute.xlu0 %8426
        %8428 = vrot.lane.b32.xlu0 %v8034, 32
        %v8429 = vpop.permute.xlu0 %8428
        %8430 = vrot.lane.b32.xlu0 %v8037, 32
        %v8431 = vpop.permute.xlu0 %8430
        %8432 = vrot.lane.b32.xlu0 %v8039, 32
        %v8433 = vpop.permute.xlu0 %8432
        %8434 = vrot.lane.b32.xlu0 %v8042, 32
        %v8435 = vpop.permute.xlu0 %8434
        %8436 = vrot.lane.b32.xlu0 %v8044, 32
        %v8437 = vpop.permute.xlu0 %8436
        %8438 = vrot.lane.b32.xlu0 %v8375, 32
        %v8439 = vpop.permute.xlu0 %8438
        %8440 = vrot.lane.b32.xlu0 %v8377, 32
        %v8441 = vpop.permute.xlu0 %8440
        %8474 = vst.msk [vmem:[#allocation3 + $0x8] sm:$0xff] %vm2928, %v8379
        %8475 = vst.msk [vmem:[#allocation3 + $0x20] sm:$0xff] %vm2928, %v8381
        %8476 = vst.msk [vmem:[#allocation3 + $0x38] sm:$0xff] %vm2928, %v8383
        %8477 = vst.msk [vmem:[#allocation3 + $0x50] sm:$0xff] %vm2928, %v8385
        %8478 = vst.msk [vmem:[#allocation3 + $0x68] sm:$0xff] %vm2928, %v8387
        %8479 = vst.msk [vmem:[#allocation3 + $0x80] sm:$0xff] %vm2928, %v8389
        %8480 = vst.msk [vmem:[#allocation3 + $0x98] sm:$0xff] %vm2928, %v8391
        %8481 = vst.msk [vmem:[#allocation3 + $0xb0] sm:$0xff] %vm2928, %v8393
        %8482 = vst.msk [vmem:[#allocation3 + $0xc8] sm:$0xff] %vm2928, %v8395
        %8483 = vst.msk [vmem:[#allocation3 + $0xe0] sm:$0xff] %vm2928, %v8397
        %8484 = vst.msk [vmem:[#allocation3 + $0xf8] sm:$0xff] %vm2928, %v8399
        %8485 = vst.msk [vmem:[#allocation3 + $0x110] sm:$0xff] %vm2928, %v8401
        %8486 = vst.msk [vmem:[#allocation3 + $0x128] sm:$0xff] %vm2928, %v8403
        %8487 = vst.msk [vmem:[#allocation3 + $0x140] sm:$0xff] %vm2928, %v8405
        %8488 = vst.msk [vmem:[#allocation3 + $0x158] sm:$0xff] %vm2928, %v8407
        %8489 = vst.msk [vmem:[#allocation3 + $0x170] sm:$0xff] %vm2928, %v8409
        %8490 = vst.msk [vmem:[#allocation3 + $0x188] sm:$0xff] %vm2928, %v8411
        %8491 = vst.msk [vmem:[#allocation3 + $0x1a0] sm:$0xff] %vm2928, %v8413
        %8492 = vst.msk [vmem:[#allocation3 + $0x1b8] sm:$0xff] %vm2928, %v8415
        %8493 = vst.msk [vmem:[#allocation3 + $0x1d0] sm:$0xff] %vm2928, %v8417
        %8494 = vst.msk [vmem:[#allocation3 + $0x1e8] sm:$0xff] %vm2928, %v8419
        %8495 = vst.msk [vmem:[#allocation3 + $0x200] sm:$0xff] %vm2928, %v8421
        %8496 = vst.msk [vmem:[#allocation3 + $0x218] sm:$0xff] %vm2928, %v8423
        %8497 = vst.msk [vmem:[#allocation3 + $0x230] sm:$0xff] %vm2928, %v8425
        %8498 = vst.msk [vmem:[#allocation3 + $0x248] sm:$0xff] %vm2928, %v8427
        %8499 = vst.msk [vmem:[#allocation3 + $0x260] sm:$0xff] %vm2928, %v8429
        %8500 = vst.msk [vmem:[#allocation3 + $0x278] sm:$0xff] %vm2928, %v8431
        %8501 = vst.msk [vmem:[#allocation3 + $0x290] sm:$0xff] %vm2928, %v8433
        %8502 = vst.msk [vmem:[#allocation3 + $0x2a8] sm:$0xff] %vm2928, %v8435
        %8503 = vst.msk [vmem:[#allocation3 + $0x2c0] sm:$0xff] %vm2928, %v8437
        %8504 = vst.msk [vmem:[#allocation3 + $0x2d8] sm:$0xff] %vm2928, %v8439
        %8505 = vst.msk [vmem:[#allocation3 + $0x2f0] sm:$0xff] %vm2928, %v8441
        %8508 = vrot.lane.b32.xlu0 %v7629, 64
        %v8509 = vpop.permute.xlu0 %8508
        %8510 = vrot.lane.b32.xlu0 %v7630, 64
        %v8511 = vpop.permute.xlu0 %8510
        %8512 = vrot.lane.b32.xlu0 %v7632, 64
        %v8513 = vpop.permute.xlu0 %8512
        %8514 = vrot.lane.b32.xlu0 %v7633, 64
        %v8515 = vpop.permute.xlu0 %8514
        %8516 = vrot.lane.b32.xlu0 %v7635, 64
        %v8517 = vpop.permute.xlu0 %8516
        %8518 = vrot.lane.b32.xlu0 %v7636, 64
        %v8519 = vpop.permute.xlu0 %8518
        %8520 = vrot.lane.b32.xlu0 %v7638, 64
        %v8521 = vpop.permute.xlu0 %8520
        %8522 = vrot.lane.b32.xlu0 %v7639, 64
        %v8523 = vpop.permute.xlu0 %8522
        %8524 = vrot.lane.b32.xlu0 %v7641, 64
        %v8525 = vpop.permute.xlu0 %8524
        %8526 = vrot.lane.b32.xlu0 %v7642, 64
        %v8527 = vpop.permute.xlu0 %8526
        %8528 = vrot.lane.b32.xlu0 %v7644, 64
        %v8529 = vpop.permute.xlu0 %8528
        %8530 = vrot.lane.b32.xlu0 %v7645, 64
        %v8531 = vpop.permute.xlu0 %8530
        %8532 = vrot.lane.b32.xlu0 %v7647, 64
        %v8533 = vpop.permute.xlu0 %8532
        %8534 = vrot.lane.b32.xlu0 %v7648, 64
        %v8535 = vpop.permute.xlu0 %8534
        %8536 = vrot.lane.b32.xlu0 %v7650, 64
        %v8537 = vpop.permute.xlu0 %8536
        %8538 = vrot.lane.b32.xlu0 %v7651, 64
        %v8539 = vpop.permute.xlu0 %8538
        %8540 = vrot.lane.b32.xlu0 %v7653, 64
        %v8541 = vpop.permute.xlu0 %8540
        %8542 = vrot.lane.b32.xlu0 %v7654, 64
        %v8543 = vpop.permute.xlu0 %8542
        %8544 = vrot.lane.b32.xlu0 %v7656, 64
        %v8545 = vpop.permute.xlu0 %8544
        %8546 = vrot.lane.b32.xlu0 %v7657, 64
        %v8547 = vpop.permute.xlu0 %8546
        %8548 = vrot.lane.b32.xlu0 %v7659, 64
        %v8549 = vpop.permute.xlu0 %8548
        %8550 = vrot.lane.b32.xlu0 %v7660, 64
        %v8551 = vpop.permute.xlu0 %8550
        %8552 = vrot.lane.b32.xlu0 %v7662, 64
        %v8553 = vpop.permute.xlu0 %8552
        %8554 = vrot.lane.b32.xlu0 %v7663, 64
        %v8555 = vpop.permute.xlu0 %8554
        %8556 = vrot.lane.b32.xlu0 %v7665, 64
        %v8557 = vpop.permute.xlu0 %8556
        %8558 = vrot.lane.b32.xlu0 %v7666, 64
        %v8559 = vpop.permute.xlu0 %8558
        %8560 = vrot.lane.b32.xlu0 %v7668, 64
        %v8561 = vpop.permute.xlu0 %8560
        %8562 = vrot.lane.b32.xlu0 %v7669, 64
        %v8563 = vpop.permute.xlu0 %8562
        %8564 = vrot.lane.b32.xlu0 %v7671, 64
        %v8565 = vpop.permute.xlu0 %8564
        %8566 = vrot.lane.b32.xlu0 %v7672, 64
        %v8567 = vpop.permute.xlu0 %8566
        %8568 = vrot.lane.b32.xlu0 %v7674, 64
        %v8569 = vpop.permute.xlu0 %8568
        %8570 = vrot.lane.b32.xlu0 %v7675, 64
        %v8571 = vpop.permute.xlu0 %8570
        %8604 = vst.msk [vmem:[#allocation3 + $0x8] sm:$0xff] %vm3137, %v8509
        %8605 = vst.msk [vmem:[#allocation3 + $0x20] sm:$0xff] %vm3137, %v8511
        %8606 = vst.msk [vmem:[#allocation3 + $0x38] sm:$0xff] %vm3137, %v8513
        %8607 = vst.msk [vmem:[#allocation3 + $0x50] sm:$0xff] %vm3137, %v8515
        %8608 = vst.msk [vmem:[#allocation3 + $0x68] sm:$0xff] %vm3137, %v8517
        %8609 = vst.msk [vmem:[#allocation3 + $0x80] sm:$0xff] %vm3137, %v8519
        %8610 = vst.msk [vmem:[#allocation3 + $0x98] sm:$0xff] %vm3137, %v8521
        %8611 = vst.msk [vmem:[#allocation3 + $0xb0] sm:$0xff] %vm3137, %v8523
        %8612 = vst.msk [vmem:[#allocation3 + $0xc8] sm:$0xff] %vm3137, %v8525
        %8613 = vst.msk [vmem:[#allocation3 + $0xe0] sm:$0xff] %vm3137, %v8527
        %8614 = vst.msk [vmem:[#allocation3 + $0xf8] sm:$0xff] %vm3137, %v8529
        %8615 = vst.msk [vmem:[#allocation3 + $0x110] sm:$0xff] %vm3137, %v8531
        %8616 = vst.msk [vmem:[#allocation3 + $0x128] sm:$0xff] %vm3137, %v8533
        %8617 = vst.msk [vmem:[#allocation3 + $0x140] sm:$0xff] %vm3137, %v8535
        %8618 = vst.msk [vmem:[#allocation3 + $0x158] sm:$0xff] %vm3137, %v8537
        %8619 = vst.msk [vmem:[#allocation3 + $0x170] sm:$0xff] %vm3137, %v8539
        %8620 = vst.msk [vmem:[#allocation3 + $0x188] sm:$0xff] %vm3137, %v8541
        %8621 = vst.msk [vmem:[#allocation3 + $0x1a0] sm:$0xff] %vm3137, %v8543
        %8622 = vst.msk [vmem:[#allocation3 + $0x1b8] sm:$0xff] %vm3137, %v8545
        %8623 = vst.msk [vmem:[#allocation3 + $0x1d0] sm:$0xff] %vm3137, %v8547
        %8624 = vst.msk [vmem:[#allocation3 + $0x1e8] sm:$0xff] %vm3137, %v8549
        %8625 = vst.msk [vmem:[#allocation3 + $0x200] sm:$0xff] %vm3137, %v8551
        %8626 = vst.msk [vmem:[#allocation3 + $0x218] sm:$0xff] %vm3137, %v8553
        %8627 = vst.msk [vmem:[#allocation3 + $0x230] sm:$0xff] %vm3137, %v8555
        %8628 = vst.msk [vmem:[#allocation3 + $0x248] sm:$0xff] %vm3137, %v8557
        %8629 = vst.msk [vmem:[#allocation3 + $0x260] sm:$0xff] %vm3137, %v8559
        %8630 = vst.msk [vmem:[#allocation3 + $0x278] sm:$0xff] %vm3137, %v8561
        %8631 = vst.msk [vmem:[#allocation3 + $0x290] sm:$0xff] %vm3137, %v8563
        %8632 = vst.msk [vmem:[#allocation3 + $0x2a8] sm:$0xff] %vm3137, %v8565
        %8633 = vst.msk [vmem:[#allocation3 + $0x2c0] sm:$0xff] %vm3137, %v8567
        %8634 = vst.msk [vmem:[#allocation3 + $0x2d8] sm:$0xff] %vm3137, %v8569
        %8635 = vst.msk [vmem:[#allocation3 + $0x2f0] sm:$0xff] %vm3137, %v8571
        %v8637 = vrot.slane %v7674, 1
        %v8638 = vrot.slane %v7675, 1
        %v8639 = vsel %vm685, %v8637, %v8638
        %v8640 = vrot.slane %v7676, 1
        %v8641 = vsel %vm685, %v8638, %v8640
        %8642 = vrot.lane.b32.xlu0 %v7769, 96
        %v8643 = vpop.permute.xlu0 %8642
        %8644 = vrot.lane.b32.xlu0 %v7771, 96
        %v8645 = vpop.permute.xlu0 %8644
        %8646 = vrot.lane.b32.xlu0 %v7774, 96
        %v8647 = vpop.permute.xlu0 %8646
        %8648 = vrot.lane.b32.xlu0 %v7776, 96
        %v8649 = vpop.permute.xlu0 %8648
        %8650 = vrot.lane.b32.xlu0 %v7779, 96
        %v8651 = vpop.permute.xlu0 %8650
        %8652 = vrot.lane.b32.xlu0 %v7781, 96
        %v8653 = vpop.permute.xlu0 %8652
        %8654 = vrot.lane.b32.xlu0 %v7784, 96
        %v8655 = vpop.permute.xlu0 %8654
        %8656 = vrot.lane.b32.xlu0 %v7786, 96
        %v8657 = vpop.permute.xlu0 %8656
        %8658 = vrot.lane.b32.xlu0 %v7789, 96
        %v8659 = vpop.permute.xlu0 %8658
        %8660 = vrot.lane.b32.xlu0 %v7791, 96
        %v8661 = vpop.permute.xlu0 %8660
        %8662 = vrot.lane.b32.xlu0 %v7794, 96
        %v8663 = vpop.permute.xlu0 %8662
        %8664 = vrot.lane.b32.xlu0 %v7796, 96
        %v8665 = vpop.permute.xlu0 %8664
        %8666 = vrot.lane.b32.xlu0 %v7799, 96
        %v8667 = vpop.permute.xlu0 %8666
        %8668 = vrot.lane.b32.xlu0 %v7801, 96
        %v8669 = vpop.permute.xlu0 %8668
        %8670 = vrot.lane.b32.xlu0 %v7804, 96
        %v8671 = vpop.permute.xlu0 %8670
        %8672 = vrot.lane.b32.xlu0 %v7806, 96
        %v8673 = vpop.permute.xlu0 %8672
        %8674 = vrot.lane.b32.xlu0 %v7809, 96
        %v8675 = vpop.permute.xlu0 %8674
        %8676 = vrot.lane.b32.xlu0 %v7811, 96
        %v8677 = vpop.permute.xlu0 %8676
        %8678 = vrot.lane.b32.xlu0 %v7814, 96
        %v8679 = vpop.permute.xlu0 %8678
        %8680 = vrot.lane.b32.xlu0 %v7816, 96
        %v8681 = vpop.permute.xlu0 %8680
        %8682 = vrot.lane.b32.xlu0 %v7819, 96
        %v8683 = vpop.permute.xlu0 %8682
        %8684 = vrot.lane.b32.xlu0 %v7821, 96
        %v8685 = vpop.permute.xlu0 %8684
        %8686 = vrot.lane.b32.xlu0 %v7824, 96
        %v8687 = vpop.permute.xlu0 %8686
        %8688 = vrot.lane.b32.xlu0 %v7826, 96
        %v8689 = vpop.permute.xlu0 %8688
        %8690 = vrot.lane.b32.xlu0 %v7829, 96
        %v8691 = vpop.permute.xlu0 %8690
        %8692 = vrot.lane.b32.xlu0 %v7831, 96
        %v8693 = vpop.permute.xlu0 %8692
        %8694 = vrot.lane.b32.xlu0 %v7834, 96
        %v8695 = vpop.permute.xlu0 %8694
        %8696 = vrot.lane.b32.xlu0 %v7836, 96
        %v8697 = vpop.permute.xlu0 %8696
        %8698 = vrot.lane.b32.xlu0 %v8306, 96
        %v8699 = vpop.permute.xlu0 %8698
        %8700 = vrot.lane.b32.xlu0 %v8308, 96
        %v8701 = vpop.permute.xlu0 %8700
        %8702 = vrot.lane.b32.xlu0 %v8639, 96
        %v8703 = vpop.permute.xlu0 %8702
        %8704 = vrot.lane.b32.xlu0 %v8641, 96
        %v8705 = vpop.permute.xlu0 %8704
        %8738 = vst.msk [vmem:[#allocation3 + $0x8] sm:$0xff] %vm3268, %v8643
        %8739 = vst.msk [vmem:[#allocation3 + $0x20] sm:$0xff] %vm3268, %v8645
        %8740 = vst.msk [vmem:[#allocation3 + $0x38] sm:$0xff] %vm3268, %v8647
        %8741 = vst.msk [vmem:[#allocation3 + $0x50] sm:$0xff] %vm3268, %v8649
        %8742 = vst.msk [vmem:[#allocation3 + $0x68] sm:$0xff] %vm3268, %v8651
        %8743 = vst.msk [vmem:[#allocation3 + $0x80] sm:$0xff] %vm3268, %v8653
        %8744 = vst.msk [vmem:[#allocation3 + $0x98] sm:$0xff] %vm3268, %v8655
        %8745 = vst.msk [vmem:[#allocation3 + $0xb0] sm:$0xff] %vm3268, %v8657
        %8746 = vst.msk [vmem:[#allocation3 + $0xc8] sm:$0xff] %vm3268, %v8659
        %8747 = vst.msk [vmem:[#allocation3 + $0xe0] sm:$0xff] %vm3268, %v8661
        %8748 = vst.msk [vmem:[#allocation3 + $0xf8] sm:$0xff] %vm3268, %v8663
        %8749 = vst.msk [vmem:[#allocation3 + $0x110] sm:$0xff] %vm3268, %v8665
        %8750 = vst.msk [vmem:[#allocation3 + $0x128] sm:$0xff] %vm3268, %v8667
        %8751 = vst.msk [vmem:[#allocation3 + $0x140] sm:$0xff] %vm3268, %v8669
        %8752 = vst.msk [vmem:[#allocation3 + $0x158] sm:$0xff] %vm3268, %v8671
        %8753 = vst.msk [vmem:[#allocation3 + $0x170] sm:$0xff] %vm3268, %v8673
        %8754 = vst.msk [vmem:[#allocation3 + $0x188] sm:$0xff] %vm3268, %v8675
        %8755 = vst.msk [vmem:[#allocation3 + $0x1a0] sm:$0xff] %vm3268, %v8677
        %8756 = vst.msk [vmem:[#allocation3 + $0x1b8] sm:$0xff] %vm3268, %v8679
        %8757 = vst.msk [vmem:[#allocation3 + $0x1d0] sm:$0xff] %vm3268, %v8681
        %8758 = vst.msk [vmem:[#allocation3 + $0x1e8] sm:$0xff] %vm3268, %v8683
        %8759 = vst.msk [vmem:[#allocation3 + $0x200] sm:$0xff] %vm3268, %v8685
        %8760 = vst.msk [vmem:[#allocation3 + $0x218] sm:$0xff] %vm3268, %v8687
        %8761 = vst.msk [vmem:[#allocation3 + $0x230] sm:$0xff] %vm3268, %v8689
        %8762 = vst.msk [vmem:[#allocation3 + $0x248] sm:$0xff] %vm3268, %v8691
        %8763 = vst.msk [vmem:[#allocation3 + $0x260] sm:$0xff] %vm3268, %v8693
        %8764 = vst.msk [vmem:[#allocation3 + $0x278] sm:$0xff] %vm3268, %v8695
        %8765 = vst.msk [vmem:[#allocation3 + $0x290] sm:$0xff] %vm3268, %v8697
        %8766 = vst.msk [vmem:[#allocation3 + $0x2a8] sm:$0xff] %vm3268, %v8699
        %8767 = vst.msk [vmem:[#allocation3 + $0x2c0] sm:$0xff] %vm3268, %v8701
        %8768 = vst.msk [vmem:[#allocation3 + $0x2d8] sm:$0xff] %vm3268, %v8703
        %8769 = vst.msk [vmem:[#allocation3 + $0x2f0] sm:$0xff] %vm3268, %v8705
        %v8770 = vrot.slane %v7674, 2
        %v8771 = vrot.slane %v7675, 2
        %v8772 = vsel %vm895, %v8770, %v8771
        %v8773 = vrot.slane %v7676, 2
        %v8774 = vsel %vm895, %v8771, %v8773
        %8807 = vst.msk [vmem:[#allocation3 + $0x10] sm:$0xff] %vm429, %v7977
        %8808 = vst.msk [vmem:[#allocation3 + $0x28] sm:$0xff] %vm429, %v7979
        %8809 = vst.msk [vmem:[#allocation3 + $0x40] sm:$0xff] %vm429, %v7982
        %8810 = vst.msk [vmem:[#allocation3 + $0x58] sm:$0xff] %vm429, %v7984
        %8811 = vst.msk [vmem:[#allocation3 + $0x70] sm:$0xff] %vm429, %v7987
        %8812 = vst.msk [vmem:[#allocation3 + $0x88] sm:$0xff] %vm429, %v7989
        %8813 = vst.msk [vmem:[#allocation3 + $0xa0] sm:$0xff] %vm429, %v7992
        %8814 = vst.msk [vmem:[#allocation3 + $0xb8] sm:$0xff] %vm429, %v7994
        %8815 = vst.msk [vmem:[#allocation3 + $0xd0] sm:$0xff] %vm429, %v7997
        %8816 = vst.msk [vmem:[#allocation3 + $0xe8] sm:$0xff] %vm429, %v7999
        %8817 = vst.msk [vmem:[#allocation3 + $0x100] sm:$0xff] %vm429, %v8002
        %8818 = vst.msk [vmem:[#allocation3 + $0x118] sm:$0xff] %vm429, %v8004
        %8819 = vst.msk [vmem:[#allocation3 + $0x130] sm:$0xff] %vm429, %v8007
        %8820 = vst.msk [vmem:[#allocation3 + $0x148] sm:$0xff] %vm429, %v8009
        %8821 = vst.msk [vmem:[#allocation3 + $0x160] sm:$0xff] %vm429, %v8012
        %8822 = vst.msk [vmem:[#allocation3 + $0x178] sm:$0xff] %vm429, %v8014
        %8823 = vst.msk [vmem:[#allocation3 + $0x190] sm:$0xff] %vm429, %v8017
        %8824 = vst.msk [vmem:[#allocation3 + $0x1a8] sm:$0xff] %vm429, %v8019
        %8825 = vst.msk [vmem:[#allocation3 + $0x1c0] sm:$0xff] %vm429, %v8022
        %8826 = vst.msk [vmem:[#allocation3 + $0x1d8] sm:$0xff] %vm429, %v8024
        %8827 = vst.msk [vmem:[#allocation3 + $0x1f0] sm:$0xff] %vm429, %v8027
        %8828 = vst.msk [vmem:[#allocation3 + $0x208] sm:$0xff] %vm429, %v8029
        %8829 = vst.msk [vmem:[#allocation3 + $0x220] sm:$0xff] %vm429, %v8032
        %8830 = vst.msk [vmem:[#allocation3 + $0x238] sm:$0xff] %vm429, %v8034
        %8831 = vst.msk [vmem:[#allocation3 + $0x250] sm:$0xff] %vm429, %v8037
        %8832 = vst.msk [vmem:[#allocation3 + $0x268] sm:$0xff] %vm429, %v8039
        %8833 = vst.msk [vmem:[#allocation3 + $0x280] sm:$0xff] %vm429, %v8042
        %8834 = vst.msk [vmem:[#allocation3 + $0x298] sm:$0xff] %vm429, %v8044
        %8835 = vst.msk [vmem:[#allocation3 + $0x2b0] sm:$0xff] %vm429, %v8375
        %8836 = vst.msk [vmem:[#allocation3 + $0x2c8] sm:$0xff] %vm429, %v8377
        %8837 = vst.msk [vmem:[#allocation3 + $0x2e0] sm:$0xff] %vm429, %v8772
        %8838 = vst.msk [vmem:[#allocation3 + $0x2f8] sm:$0xff] %vm429, %v8774
        %v8839 = vld [vmem:[#allocation3] sm:$0xff]
        %v8840 = vld [vmem:[#allocation3 + $0x18] sm:$0xff]
        %v8841 = vld [vmem:[#allocation3 + $0x30] sm:$0xff]
        %v8842 = vld [vmem:[#allocation3 + $0x48] sm:$0xff]
        %v8843 = vld [vmem:[#allocation3 + $0x60] sm:$0xff]
        %v8844 = vld [vmem:[#allocation3 + $0x78] sm:$0xff]
        %v8845 = vld [vmem:[#allocation3 + $0x90] sm:$0xff]
        %v8846 = vld [vmem:[#allocation3 + $0xa8] sm:$0xff]
        %v8847 = vld [vmem:[#allocation3 + $0xc0] sm:$0xff]
        %v8848 = vld [vmem:[#allocation3 + $0xd8] sm:$0xff]
        %v8849 = vld [vmem:[#allocation3 + $0xf0] sm:$0xff]
        %v8850 = vld [vmem:[#allocation3 + $0x108] sm:$0xff]
        %v8851 = vld [vmem:[#allocation3 + $0x120] sm:$0xff]
        %v8852 = vld [vmem:[#allocation3 + $0x138] sm:$0xff]
        %v8853 = vld [vmem:[#allocation3 + $0x150] sm:$0xff]
        %v8854 = vld [vmem:[#allocation3 + $0x168] sm:$0xff]
        %v8855 = vld [vmem:[#allocation3 + $0x180] sm:$0xff]
        %v8856 = vld [vmem:[#allocation3 + $0x198] sm:$0xff]
        %v8857 = vld [vmem:[#allocation3 + $0x1b0] sm:$0xff]
        %v8858 = vld [vmem:[#allocation3 + $0x1c8] sm:$0xff]
        %v8859 = vld [vmem:[#allocation3 + $0x1e0] sm:$0xff]
        %v8860 = vld [vmem:[#allocation3 + $0x1f8] sm:$0xff]
        %v8861 = vld [vmem:[#allocation3 + $0x210] sm:$0xff]
        %v8862 = vld [vmem:[#allocation3 + $0x228] sm:$0xff]
        %v8863 = vld [vmem:[#allocation3 + $0x240] sm:$0xff]
        %v8864 = vld [vmem:[#allocation3 + $0x258] sm:$0xff]
        %v8865 = vld [vmem:[#allocation3 + $0x270] sm:$0xff]
        %v8866 = vld [vmem:[#allocation3 + $0x288] sm:$0xff]
        %v8867 = vld [vmem:[#allocation3 + $0x2a0] sm:$0xff]
        %v8868 = vld [vmem:[#allocation3 + $0x2b8] sm:$0xff]
        %v8869 = vld [vmem:[#allocation3 + $0x2d0] sm:$0xff]
        %v8870 = vld [vmem:[#allocation3 + $0x2e8] sm:$0xff]
        %v8871 = vld [vmem:[#allocation4] sm:$0xff]
        %v8872 = vld [vmem:[#allocation4 + $0x8] sm:$0xff]
        %v8873 = vld [vmem:[#allocation4 + $0x10] sm:$0xff]
        %v8874 = vld [vmem:[#allocation4 + $0x18] sm:$0xff]
        %v8875 = vld [vmem:[#allocation4 + $0x20] sm:$0xff]
        %v8876 = vld [vmem:[#allocation4 + $0x28] sm:$0xff]
        %v8877 = vld [vmem:[#allocation4 + $0x30] sm:$0xff]
        %v8878 = vld [vmem:[#allocation4 + $0x38] sm:$0xff]
        %v8879 = vld [vmem:[#allocation4 + $0x40] sm:$0xff]
        %v8880 = vld [vmem:[#allocation4 + $0x48] sm:$0xff]
        %v8881 = vld [vmem:[#allocation4 + $0x50] sm:$0xff]
        %v8882 = vld [vmem:[#allocation4 + $0x58] sm:$0xff]
        %v8883 = vld [vmem:[#allocation4 + $0x60] sm:$0xff]
        %v8884 = vld [vmem:[#allocation4 + $0x68] sm:$0xff]
        %v8885 = vld [vmem:[#allocation4 + $0x70] sm:$0xff]
        %v8886 = vld [vmem:[#allocation4 + $0x78] sm:$0xff]
        %v8887 = vld [vmem:[#allocation3 + $0x8] sm:$0xff]
        %v8888 = vld [vmem:[#allocation3 + $0x20] sm:$0xff]
        %v8889 = vld [vmem:[#allocation3 + $0x38] sm:$0xff]
        %v8890 = vld [vmem:[#allocation3 + $0x50] sm:$0xff]
        %v8891 = vld [vmem:[#allocation3 + $0x68] sm:$0xff]
        %v8892 = vld [vmem:[#allocation3 + $0x80] sm:$0xff]
        %v8893 = vld [vmem:[#allocation3 + $0x98] sm:$0xff]
        %v8894 = vld [vmem:[#allocation3 + $0xb0] sm:$0xff]
        %v8895 = vld [vmem:[#allocation3 + $0xc8] sm:$0xff]
        %v8896 = vld [vmem:[#allocation3 + $0xe0] sm:$0xff]
        %v8897 = vld [vmem:[#allocation3 + $0xf8] sm:$0xff]
        %v8898 = vld [vmem:[#allocation3 + $0x110] sm:$0xff]
        %v8899 = vld [vmem:[#allocation3 + $0x128] sm:$0xff]
        %v8900 = vld [vmem:[#allocation3 + $0x140] sm:$0xff]
        %v8901 = vld [vmem:[#allocation3 + $0x158] sm:$0xff]
        %v8902 = vld [vmem:[#allocation3 + $0x170] sm:$0xff]
        %v8903 = vld [vmem:[#allocation3 + $0x188] sm:$0xff]
        %v8904 = vld [vmem:[#allocation3 + $0x1a0] sm:$0xff]
        %v8905 = vld [vmem:[#allocation3 + $0x1b8] sm:$0xff]
        %v8906 = vld [vmem:[#allocation3 + $0x1d0] sm:$0xff]
        %v8907 = vld [vmem:[#allocation3 + $0x1e8] sm:$0xff]
        %v8908 = vld [vmem:[#allocation3 + $0x200] sm:$0xff]
        %v8909 = vld [vmem:[#allocation3 + $0x218] sm:$0xff]
        %v8910 = vld [vmem:[#allocation3 + $0x230] sm:$0xff]
        %v8911 = vld [vmem:[#allocation3 + $0x248] sm:$0xff]
        %v8912 = vld [vmem:[#allocation3 + $0x260] sm:$0xff]
        %v8913 = vld [vmem:[#allocation3 + $0x278] sm:$0xff]
        %v8914 = vld [vmem:[#allocation3 + $0x290] sm:$0xff]
        %v8915 = vld [vmem:[#allocation3 + $0x2a8] sm:$0xff]
        %v8916 = vld [vmem:[#allocation3 + $0x2c0] sm:$0xff]
        %v8917 = vld [vmem:[#allocation3 + $0x2d8] sm:$0xff]
        %v8918 = vld [vmem:[#allocation3 + $0x2f0] sm:$0xff]
        %v8919 = vld [vmem:[#allocation4 + $0x80] sm:$0xff]
        %v8920 = vld [vmem:[#allocation4 + $0x88] sm:$0xff]
        %v8921 = vld [vmem:[#allocation4 + $0x90] sm:$0xff]
        %v8922 = vld [vmem:[#allocation4 + $0x98] sm:$0xff]
        %v8923 = vld [vmem:[#allocation4 + $0xa0] sm:$0xff]
        %v8924 = vld [vmem:[#allocation4 + $0xa8] sm:$0xff]
        %v8925 = vld [vmem:[#allocation4 + $0xb0] sm:$0xff]
        %v8926 = vld [vmem:[#allocation4 + $0xb8] sm:$0xff]
        %v8927 = vld [vmem:[#allocation4 + $0xc0] sm:$0xff]
        %v8928 = vld [vmem:[#allocation4 + $0xc8] sm:$0xff]
        %v8929 = vld [vmem:[#allocation4 + $0xd0] sm:$0xff]
        %v8930 = vld [vmem:[#allocation4 + $0xd8] sm:$0xff]
        %v8931 = vld [vmem:[#allocation4 + $0xe0] sm:$0xff]
        %v8932 = vld [vmem:[#allocation4 + $0xe8] sm:$0xff]
        %v8933 = vld [vmem:[#allocation4 + $0xf0] sm:$0xff]
        %v8934 = vld [vmem:[#allocation4 + $0xf8] sm:$0xff]
        %8935 = vmatprep.subr.mxu0 0.0
        %8936 = vmatpush1.msra.mxu0 %v8919
        %8937 = vmatprep.subr.mxu0 0.0
        %8938 = vmatpush1.msra.mxu0 %v8920
        %8939 = vmatprep.subr.mxu0 0.0
        %8940 = vmatpush1.msra.mxu0 %v8921
        %8941 = vmatprep.subr.mxu0 0.0
        %8942 = vmatpush1.msra.mxu0 %v8922
        %8943 = vmatprep.subr.mxu0 0.0
        %8944 = vmatpush1.msra.mxu0 %v8923
        %8945 = vmatprep.subr.mxu0 0.0
        %8946 = vmatpush1.msra.mxu0 %v8924
        %8947 = vmatprep.subr.mxu0 0.0
        %8948 = vmatpush1.msra.mxu0 %v8925
        %8949 = vmatprep.subr.mxu0 0.0
        %8950 = vmatpush1.msra.mxu0 %v8926
        %8951 = vmatprep.subr.mxu0 0.0
        %8952 = vmatpush1.msra.mxu0 %v8927
        %8953 = vmatprep.subr.mxu0 0.0
        %8954 = vmatpush1.msra.mxu0 %v8928
        %8955 = vmatprep.subr.mxu0 0.0
        %8956 = vmatpush1.msra.mxu0 %v8929
        %8957 = vmatprep.subr.mxu0 0.0
        %8958 = vmatpush1.msra.mxu0 %v8930
        %8959 = vmatprep.subr.mxu0 0.0
        %8960 = vmatpush1.msra.mxu0 %v8931
        %8961 = vmatprep.subr.mxu0 0.0
        %8962 = vmatpush1.msra.mxu0 %v8932
        %8963 = vmatprep.subr.mxu0 0.0
        %8964 = vmatpush1.msra.mxu0 %v8933
        %8965 = vmatprep.subr.mxu0 0.0
        %8966 = vmatpush1.msra.mxu0 %v8934
        %8967 = vmatprep.subr.mxu0 0.0
        %8968 = vmatpush1.msra.mxu0 0.0
        %8969 = vmatprep.subr.mxu0 0.0
        %8970 = vmatpush1.msra.mxu0 0.0
        %8971 = vmatprep.subr.mxu0 0.0
        %8972 = vmatpush1.msra.mxu0 0.0
        %8973 = vmatprep.subr.mxu0 0.0
        %8974 = vmatpush1.msra.mxu0 0.0
        %8975 = vmatprep.subr.mxu0 0.0
        %8976 = vmatpush1.msra.mxu0 0.0
        %8977 = vmatprep.subr.mxu0 0.0
        %8978 = vmatpush1.msra.mxu0 0.0
        %8979 = vmatprep.subr.mxu0 0.0
        %8980 = vmatpush1.msra.mxu0 0.0
        %8981 = vmatprep.subr.mxu0 0.0
        %8982 = vmatpush1.msra.mxu0 0.0
        %8983 = vmatprep.subr.mxu0 0.0
        %8984 = vmatpush1.msra.mxu0 0.0
        %8985 = vmatprep.subr.mxu0 0.0
        %8986 = vmatpush1.msra.mxu0 0.0
        %8987 = vmatprep.subr.mxu0 0.0
        %8988 = vmatpush1.msra.mxu0 0.0
        %8989 = vmatprep.subr.mxu0 0.0
        %8990 = vmatpush1.msra.mxu0 0.0
        %8991 = vmatprep.subr.mxu0 0.0
        %8992 = vmatpush1.msra.mxu0 0.0
        %8993 = vmatprep.subr.mxu0 0.0
        %8994 = vmatpush1.msra.mxu0 0.0
        %8995 = vmatprep.subr.mxu0 0.0
        %8996 = vmatpush1.msra.mxu0 0.0
        %8997 = vmatprep.subr.mxu0 0.0
        %8998 = vmatpush1.msra.mxu0 0.0
        %8999 = vmatprep.mubr.f32.mxu0 0.0
        %9000 = vmatmul.mubr.f32.gmra.mrb[0].mxu0 %v8887
        %v9001 = vpop.f32.mrb[0].mxu0
        %v9002 = vadd.f32 0.0, %v9001
        %v9003 = vpop.f32.mrb[0].mxu0
        %9004 = vmatprep.mubr.f32.mxu0 0.0
        %9005 = vmatmul.mubr.f32.gmra.mrb[0].mxu0 %v8888
        %v9006 = vpop.f32.mrb[0].mxu0
        %v9007 = vadd.f32 0.0, %v9006
        %v9008 = vpop.f32.mrb[0].mxu0
        %9009 = vmatprep.mubr.f32.mxu0 0.0
        %9010 = vmatmul.mubr.f32.gmra.mrb[0].mxu0 %v8889
        %v9011 = vpop.f32.mrb[0].mxu0
        %v9012 = vadd.f32 0.0, %v9011
        %v9013 = vpop.f32.mrb[0].mxu0
        %9014 = vmatprep.mubr.f32.mxu0 0.0
        %9015 = vmatmul.mubr.f32.gmra.mrb[0].mxu0 %v8890
        %v9016 = vpop.f32.mrb[0].mxu0
        %v9017 = vadd.f32 0.0, %v9016
        %v9018 = vpop.f32.mrb[0].mxu0
        %9019 = vmatprep.mubr.f32.mxu0 0.0
        %9020 = vmatmul.mubr.f32.gmra.mrb[0].mxu0 %v8891
        %v9021 = vpop.f32.mrb[0].mxu0
        %v9022 = vadd.f32 0.0, %v9021
        %v9023 = vpop.f32.mrb[0].mxu0
        %9024 = vmatprep.mubr.f32.mxu0 0.0
        %9025 = vmatmul.mubr.f32.gmra.mrb[0].mxu0 %v8892
        %v9026 = vpop.f32.mrb[0].mxu0
        %v9027 = vadd.f32 0.0, %v9026
        %v9028 = vpop.f32.mrb[0].mxu0
        %9029 = vmatprep.mubr.f32.mxu0 0.0
        %9030 = vmatmul.mubr.f32.gmra.mrb[0].mxu0 %v8893
        %v9031 = vpop.f32.mrb[0].mxu0
        %v9032 = vadd.f32 0.0, %v9031
        %v9033 = vpop.f32.mrb[0].mxu0
        %9034 = vmatprep.mubr.f32.mxu0 0.0
        %9035 = vmatmul.mubr.f32.gmra.mrb[0].mxu0 %v8894
        %v9036 = vpop.f32.mrb[0].mxu0
        %v9037 = vadd.f32 0.0, %v9036
        %v9038 = vpop.f32.mrb[0].mxu0
        %9039 = vmatprep.mubr.f32.mxu0 0.0
        %9040 = vmatmul.mubr.f32.gmra.mrb[0].mxu0 %v8895
        %v9041 = vpop.f32.mrb[0].mxu0
        %v9042 = vadd.f32 0.0, %v9041
        %v9043 = vpop.f32.mrb[0].mxu0
        %9044 = vmatprep.mubr.f32.mxu0 0.0
        %9045 = vmatmul.mubr.f32.gmra.mrb[0].mxu0 %v8896
        %v9046 = vpop.f32.mrb[0].mxu0
        %v9047 = vadd.f32 0.0, %v9046
        %v9048 = vpop.f32.mrb[0].mxu0
        %9049 = vmatprep.mubr.f32.mxu0 0.0
        %9050 = vmatmul.mubr.f32.gmra.mrb[0].mxu0 %v8897
        %v9051 = vpop.f32.mrb[0].mxu0
        %v9052 = vadd.f32 0.0, %v9051
        %v9053 = vpop.f32.mrb[0].mxu0
        %9054 = vmatprep.mubr.f32.mxu0 0.0
        %9055 = vmatmul.mubr.f32.gmra.mrb[0].mxu0 %v8898
        %v9056 = vpop.f32.mrb[0].mxu0
        %v9057 = vadd.f32 0.0, %v9056
        %v9058 = vpop.f32.mrb[0].mxu0
        %9059 = vmatprep.mubr.f32.mxu0 0.0
        %9060 = vmatmul.mubr.f32.gmra.mrb[0].mxu0 %v8899
        %v9061 = vpop.f32.mrb[0].mxu0
        %v9062 = vadd.f32 0.0, %v9061
        %v9063 = vpop.f32.mrb[0].mxu0
        %9064 = vmatprep.mubr.f32.mxu0 0.0
        %9065 = vmatmul.mubr.f32.gmra.mrb[0].mxu0 %v8900
        %v9066 = vpop.f32.mrb[0].mxu0
        %v9067 = vadd.f32 0.0, %v9066
        %v9068 = vpop.f32.mrb[0].mxu0
        %9069 = vmatprep.mubr.f32.mxu0 0.0
        %9070 = vmatmul.mubr.f32.gmra.mrb[0].mxu0 %v8901
        %v9071 = vpop.f32.mrb[0].mxu0
        %v9072 = vadd.f32 0.0, %v9071
        %v9073 = vpop.f32.mrb[0].mxu0
        %9074 = vmatprep.mubr.f32.mxu0 0.0
        %9075 = vmatmul.mubr.f32.gmra.mrb[0].mxu0 %v8902
        %v9076 = vpop.f32.mrb[0].mxu0
        %v9077 = vadd.f32 0.0, %v9076
        %v9078 = vpop.f32.mrb[0].mxu0
        %9079 = vmatprep.mubr.f32.mxu0 0.0
        %9080 = vmatmul.mubr.f32.gmra.mrb[0].mxu0 %v8903
        %v9081 = vpop.f32.mrb[0].mxu0
        %v9082 = vadd.f32 0.0, %v9081
        %v9083 = vpop.f32.mrb[0].mxu0
        %9084 = vmatprep.mubr.f32.mxu0 0.0
        %9085 = vmatmul.mubr.f32.gmra.mrb[0].mxu0 %v8904
        %v9086 = vpop.f32.mrb[0].mxu0
        %v9087 = vadd.f32 0.0, %v9086
        %v9088 = vpop.f32.mrb[0].mxu0
        %9089 = vmatprep.mubr.f32.mxu0 0.0
        %9090 = vmatmul.mubr.f32.gmra.mrb[0].mxu0 %v8905
        %v9091 = vpop.f32.mrb[0].mxu0
        %v9092 = vadd.f32 0.0, %v9091
        %v9093 = vpop.f32.mrb[0].mxu0
        %9094 = vmatprep.mubr.f32.mxu0 0.0
        %9095 = vmatmul.mubr.f32.gmra.mrb[0].mxu0 %v8906
        %v9096 = vpop.f32.mrb[0].mxu0
        %v9097 = vadd.f32 0.0, %v9096
        %v9098 = vpop.f32.mrb[0].mxu0
        %9099 = vmatprep.mubr.f32.mxu0 0.0
        %9100 = vmatmul.mubr.f32.gmra.mrb[0].mxu0 %v8907
        %v9101 = vpop.f32.mrb[0].mxu0
        %v9102 = vadd.f32 0.0, %v9101
        %v9103 = vpop.f32.mrb[0].mxu0
        %9104 = vmatprep.mubr.f32.mxu0 0.0
        %9105 = vmatmul.mubr.f32.gmra.mrb[0].mxu0 %v8908
        %v9106 = vpop.f32.mrb[0].mxu0
        %v9107 = vadd.f32 0.0, %v9106
        %v9108 = vpop.f32.mrb[0].mxu0
        %9109 = vmatprep.mubr.f32.mxu0 0.0
        %9110 = vmatmul.mubr.f32.gmra.mrb[0].mxu0 %v8909
        %v9111 = vpop.f32.mrb[0].mxu0
        %v9112 = vadd.f32 0.0, %v9111
        %v9113 = vpop.f32.mrb[0].mxu0
        %9114 = vmatprep.mubr.f32.mxu0 0.0
        %9115 = vmatmul.mubr.f32.gmra.mrb[0].mxu0 %v8910
        %v9116 = vpop.f32.mrb[0].mxu0
        %v9117 = vadd.f32 0.0, %v9116
        %v9118 = vpop.f32.mrb[0].mxu0
        %9119 = vmatprep.mubr.f32.mxu0 0.0
        %9120 = vmatmul.mubr.f32.gmra.mrb[0].mxu0 %v8911
        %v9121 = vpop.f32.mrb[0].mxu0
        %v9122 = vadd.f32 0.0, %v9121
        %v9123 = vpop.f32.mrb[0].mxu0
        %9124 = vmatprep.mubr.f32.mxu0 0.0
        %9125 = vmatmul.mubr.f32.gmra.mrb[0].mxu0 %v8912
        %v9126 = vpop.f32.mrb[0].mxu0
        %v9127 = vadd.f32 0.0, %v9126
        %v9128 = vpop.f32.mrb[0].mxu0
        %9129 = vmatprep.mubr.f32.mxu0 0.0
        %9130 = vmatmul.mubr.f32.gmra.mrb[0].mxu0 %v8913
        %v9131 = vpop.f32.mrb[0].mxu0
        %v9132 = vadd.f32 0.0, %v9131
        %v9133 = vpop.f32.mrb[0].mxu0
        %9134 = vmatprep.mubr.f32.mxu0 0.0
        %9135 = vmatmul.mubr.f32.gmra.mrb[0].mxu0 %v8914
        %v9136 = vpop.f32.mrb[0].mxu0
        %v9137 = vadd.f32 0.0, %v9136
        %v9138 = vpop.f32.mrb[0].mxu0
        %9139 = vmatprep.mubr.f32.mxu0 0.0
        %9140 = vmatmul.mubr.f32.gmra.mrb[0].mxu0 %v8915
        %v9141 = vpop.f32.mrb[0].mxu0
        %v9142 = vadd.f32 0.0, %v9141
        %v9143 = vpop.f32.mrb[0].mxu0
        %9144 = vmatprep.mubr.f32.mxu0 0.0
        %9145 = vmatmul.mubr.f32.gmra.mrb[0].mxu0 %v8916
        %v9146 = vpop.f32.mrb[0].mxu0
        %v9147 = vadd.f32 0.0, %v9146
        %v9148 = vpop.f32.mrb[0].mxu0
        %9149 = vmatprep.mubr.f32.mxu0 0.0
        %9150 = vmatmul.mubr.f32.gmra.mrb[0].mxu0 %v8917
        %v9151 = vpop.f32.mrb[0].mxu0
        %v9152 = vadd.f32 0.0, %v9151
        %v9153 = vpop.f32.mrb[0].mxu0
        %9154 = vmatprep.mubr.f32.mxu0 0.0
        %9155 = vmatmul.mubr.f32.gmra.mrb[0].mxu0 %v8918
        %v9156 = vpop.f32.mrb[0].mxu0
        %v9157 = vadd.f32 0.0, %v9156
        %v9158 = vpop.f32.mrb[0].mxu0
        %9159 = vdwg.mxu0
        %9160 = vmatprep.subr.mxu0 0.0
        %9161 = vmatpush1.msra.mxu0 %v8871
        %9162 = vmatprep.subr.mxu0 0.0
        %9163 = vmatpush1.msra.mxu0 %v8872
        %9164 = vmatprep.subr.mxu0 0.0
        %9165 = vmatpush1.msra.mxu0 %v8873
        %9166 = vmatprep.subr.mxu0 0.0
        %9167 = vmatpush1.msra.mxu0 %v8874
        %9168 = vmatprep.subr.mxu0 0.0
        %9169 = vmatpush1.msra.mxu0 %v8875
        %9170 = vmatprep.subr.mxu0 0.0
        %9171 = vmatpush1.msra.mxu0 %v8876
        %9172 = vmatprep.subr.mxu0 0.0
        %9173 = vmatpush1.msra.mxu0 %v8877
        %9174 = vmatprep.subr.mxu0 0.0
        %9175 = vmatpush1.msra.mxu0 %v8878
        %9176 = vmatprep.subr.mxu0 0.0
        %9177 = vmatpush1.msra.mxu0 %v8879
        %9178 = vmatprep.subr.mxu0 0.0
        %9179 = vmatpush1.msra.mxu0 %v8880
        %9180 = vmatprep.subr.mxu0 0.0
        %9181 = vmatpush1.msra.mxu0 %v8881
        %9182 = vmatprep.subr.mxu0 0.0
        %9183 = vmatpush1.msra.mxu0 %v8882
        %9184 = vmatprep.subr.mxu0 0.0
        %9185 = vmatpush1.msra.mxu0 %v8883
        %9186 = vmatprep.subr.mxu0 0.0
        %9187 = vmatpush1.msra.mxu0 %v8884
        %9188 = vmatprep.subr.mxu0 0.0
        %9189 = vmatpush1.msra.mxu0 %v8885
        %9190 = vmatprep.subr.mxu0 0.0
        %9191 = vmatpush1.msra.mxu0 %v8886
        %9192 = vmatprep.subr.mxu0 0.0
        %9193 = vmatpush1.msra.mxu0 0.0
        %9194 = vmatprep.subr.mxu0 0.0
        %9195 = vmatpush1.msra.mxu0 0.0
        %9196 = vmatprep.subr.mxu0 0.0
        %9197 = vmatpush1.msra.mxu0 0.0
        %9198 = vmatprep.subr.mxu0 0.0
        %9199 = vmatpush1.msra.mxu0 0.0
        %9200 = vmatprep.subr.mxu0 0.0
        %9201 = vmatpush1.msra.mxu0 0.0
        %9202 = vmatprep.subr.mxu0 0.0
        %9203 = vmatpush1.msra.mxu0 0.0
        %9204 = vmatprep.subr.mxu0 0.0
        %9205 = vmatpush1.msra.mxu0 0.0
        %9206 = vmatprep.subr.mxu0 0.0
        %9207 = vmatpush1.msra.mxu0 0.0
        %9208 = vmatprep.subr.mxu0 0.0
        %9209 = vmatpush1.msra.mxu0 0.0
        %9210 = vmatprep.subr.mxu0 0.0
        %9211 = vmatpush1.msra.mxu0 0.0
        %9212 = vmatprep.subr.mxu0 0.0
        %9213 = vmatpush1.msra.mxu0 0.0
        %9214 = vmatprep.subr.mxu0 0.0
        %9215 = vmatpush1.msra.mxu0 0.0
        %9216 = vmatprep.subr.mxu0 0.0
        %9217 = vmatpush1.msra.mxu0 0.0
        %9218 = vmatprep.subr.mxu0 0.0
        %9219 = vmatpush1.msra.mxu0 0.0
        %9220 = vmatprep.subr.mxu0 0.0
        %9221 = vmatpush1.msra.mxu0 0.0
        %9222 = vmatprep.subr.mxu0 0.0
        %9223 = vmatpush1.msra.mxu0 0.0
        %9224 = vmatprep.mubr.f32.mxu0 0.0
        %9225 = vmatmul.mubr.f32.gmra.mrb[0].mxu0 %v8839
        %v9226 = vpop.f32.mrb[0].mxu0
        %v9227 = vadd.f32 %v9002, %v9226
        %v9228 = vpop.f32.mrb[0].mxu0
        %9229 = vmatprep.mubr.f32.mxu0 0.0
        %9230 = vmatmul.mubr.f32.gmra.mrb[0].mxu0 %v8840
        %v9231 = vpop.f32.mrb[0].mxu0
        %v9232 = vadd.f32 %v9007, %v9231
        %v9233 = vpop.f32.mrb[0].mxu0
        %9234 = vmatprep.mubr.f32.mxu0 0.0
        %9235 = vmatmul.mubr.f32.gmra.mrb[0].mxu0 %v8841
        %v9236 = vpop.f32.mrb[0].mxu0
        %v9237 = vadd.f32 %v9012, %v9236
        %v9238 = vpop.f32.mrb[0].mxu0
        %9239 = vmatprep.mubr.f32.mxu0 0.0
        %9240 = vmatmul.mubr.f32.gmra.mrb[0].mxu0 %v8842
        %v9241 = vpop.f32.mrb[0].mxu0
        %v9242 = vadd.f32 %v9017, %v9241
        %v9243 = vpop.f32.mrb[0].mxu0
        %9244 = vmatprep.mubr.f32.mxu0 0.0
        %9245 = vmatmul.mubr.f32.gmra.mrb[0].mxu0 %v8843
        %v9246 = vpop.f32.mrb[0].mxu0
        %v9247 = vadd.f32 %v9022, %v9246
        %v9248 = vpop.f32.mrb[0].mxu0
        %9249 = vmatprep.mubr.f32.mxu0 0.0
        %9250 = vmatmul.mubr.f32.gmra.mrb[0].mxu0 %v8844
        %v9251 = vpop.f32.mrb[0].mxu0
        %v9252 = vadd.f32 %v9027, %v9251
        %v9253 = vpop.f32.mrb[0].mxu0
        %9254 = vmatprep.mubr.f32.mxu0 0.0
        %9255 = vmatmul.mubr.f32.gmra.mrb[0].mxu0 %v8845
        %v9256 = vpop.f32.mrb[0].mxu0
        %v9257 = vadd.f32 %v9032, %v9256
        %v9258 = vpop.f32.mrb[0].mxu0
        %9259 = vmatprep.mubr.f32.mxu0 0.0
        %9260 = vmatmul.mubr.f32.gmra.mrb[0].mxu0 %v8846
        %v9261 = vpop.f32.mrb[0].mxu0
        %v9262 = vadd.f32 %v9037, %v9261
        %v9263 = vpop.f32.mrb[0].mxu0
        %9264 = vmatprep.mubr.f32.mxu0 0.0
        %9265 = vmatmul.mubr.f32.gmra.mrb[0].mxu0 %v8847
        %v9266 = vpop.f32.mrb[0].mxu0
        %v9267 = vadd.f32 %v9042, %v9266
        %v9268 = vpop.f32.mrb[0].mxu0
        %9269 = vmatprep.mubr.f32.mxu0 0.0
        %9270 = vmatmul.mubr.f32.gmra.mrb[0].mxu0 %v8848
        %v9271 = vpop.f32.mrb[0].mxu0
        %v9272 = vadd.f32 %v9047, %v9271
        %v9273 = vpop.f32.mrb[0].mxu0
        %9274 = vmatprep.mubr.f32.mxu0 0.0
        %9275 = vmatmul.mubr.f32.gmra.mrb[0].mxu0 %v8849
        %v9276 = vpop.f32.mrb[0].mxu0
        %v9277 = vadd.f32 %v9052, %v9276
        %v9278 = vpop.f32.mrb[0].mxu0
        %9279 = vmatprep.mubr.f32.mxu0 0.0
        %9280 = vmatmul.mubr.f32.gmra.mrb[0].mxu0 %v8850
        %v9281 = vpop.f32.mrb[0].mxu0
        %v9282 = vadd.f32 %v9057, %v9281
        %v9283 = vpop.f32.mrb[0].mxu0
        %9284 = vmatprep.mubr.f32.mxu0 0.0
        %9285 = vmatmul.mubr.f32.gmra.mrb[0].mxu0 %v8851
        %v9286 = vpop.f32.mrb[0].mxu0
        %v9287 = vadd.f32 %v9062, %v9286
        %v9288 = vpop.f32.mrb[0].mxu0
        %9289 = vmatprep.mubr.f32.mxu0 0.0
        %9290 = vmatmul.mubr.f32.gmra.mrb[0].mxu0 %v8852
        %v9291 = vpop.f32.mrb[0].mxu0
        %v9292 = vadd.f32 %v9067, %v9291
        %v9293 = vpop.f32.mrb[0].mxu0
        %9294 = vmatprep.mubr.f32.mxu0 0.0
        %9295 = vmatmul.mubr.f32.gmra.mrb[0].mxu0 %v8853
        %v9296 = vpop.f32.mrb[0].mxu0
        %v9297 = vadd.f32 %v9072, %v9296
        %v9298 = vpop.f32.mrb[0].mxu0
        %9299 = vmatprep.mubr.f32.mxu0 0.0
        %9300 = vmatmul.mubr.f32.gmra.mrb[0].mxu0 %v8854
        %v9301 = vpop.f32.mrb[0].mxu0
        %v9302 = vadd.f32 %v9077, %v9301
        %v9303 = vpop.f32.mrb[0].mxu0
        %9304 = vmatprep.mubr.f32.mxu0 0.0
        %9305 = vmatmul.mubr.f32.gmra.mrb[0].mxu0 %v8855
        %v9306 = vpop.f32.mrb[0].mxu0
        %v9307 = vadd.f32 %v9082, %v9306
        %v9308 = vpop.f32.mrb[0].mxu0
        %9309 = vmatprep.mubr.f32.mxu0 0.0
        %9310 = vmatmul.mubr.f32.gmra.mrb[0].mxu0 %v8856
        %v9311 = vpop.f32.mrb[0].mxu0
        %v9312 = vadd.f32 %v9087, %v9311
        %v9313 = vpop.f32.mrb[0].mxu0
        %9314 = vmatprep.mubr.f32.mxu0 0.0
        %9315 = vmatmul.mubr.f32.gmra.mrb[0].mxu0 %v8857
        %v9316 = vpop.f32.mrb[0].mxu0
        %v9317 = vadd.f32 %v9092, %v9316
        %v9318 = vpop.f32.mrb[0].mxu0
        %9319 = vmatprep.mubr.f32.mxu0 0.0
        %9320 = vmatmul.mubr.f32.gmra.mrb[0].mxu0 %v8858
        %v9321 = vpop.f32.mrb[0].mxu0
        %v9322 = vadd.f32 %v9097, %v9321
        %v9323 = vpop.f32.mrb[0].mxu0
        %9324 = vmatprep.mubr.f32.mxu0 0.0
        %9325 = vmatmul.mubr.f32.gmra.mrb[0].mxu0 %v8859
        %v9326 = vpop.f32.mrb[0].mxu0
        %v9327 = vadd.f32 %v9102, %v9326
        %v9328 = vpop.f32.mrb[0].mxu0
        %9329 = vmatprep.mubr.f32.mxu0 0.0
        %9330 = vmatmul.mubr.f32.gmra.mrb[0].mxu0 %v8860
        %v9331 = vpop.f32.mrb[0].mxu0
        %v9332 = vadd.f32 %v9107, %v9331
        %v9333 = vpop.f32.mrb[0].mxu0
        %9334 = vmatprep.mubr.f32.mxu0 0.0
        %9335 = vmatmul.mubr.f32.gmra.mrb[0].mxu0 %v8861
        %v9336 = vpop.f32.mrb[0].mxu0
        %v9337 = vadd.f32 %v9112, %v9336
        %v9338 = vpop.f32.mrb[0].mxu0
        %9339 = vmatprep.mubr.f32.mxu0 0.0
        %9340 = vmatmul.mubr.f32.gmra.mrb[0].mxu0 %v8862
        %v9341 = vpop.f32.mrb[0].mxu0
        %v9342 = vadd.f32 %v9117, %v9341
        %v9343 = vpop.f32.mrb[0].mxu0
        %9344 = vmatprep.mubr.f32.mxu0 0.0
        %9345 = vmatmul.mubr.f32.gmra.mrb[0].mxu0 %v8863
        %v9346 = vpop.f32.mrb[0].mxu0
        %v9347 = vadd.f32 %v9122, %v9346
        %v9348 = vpop.f32.mrb[0].mxu0
        %9349 = vmatprep.mubr.f32.mxu0 0.0
        %9350 = vmatmul.mubr.f32.gmra.mrb[0].mxu0 %v8864
        %v9351 = vpop.f32.mrb[0].mxu0
        %v9352 = vadd.f32 %v9127, %v9351
        %v9353 = vpop.f32.mrb[0].mxu0
        %9354 = vmatprep.mubr.f32.mxu0 0.0
        %9355 = vmatmul.mubr.f32.gmra.mrb[0].mxu0 %v8865
        %v9356 = vpop.f32.mrb[0].mxu0
        %v9357 = vadd.f32 %v9132, %v9356
        %v9358 = vpop.f32.mrb[0].mxu0
        %9359 = vmatprep.mubr.f32.mxu0 0.0
        %9360 = vmatmul.mubr.f32.gmra.mrb[0].mxu0 %v8866
        %v9361 = vpop.f32.mrb[0].mxu0
        %v9362 = vadd.f32 %v9137, %v9361
        %v9363 = vpop.f32.mrb[0].mxu0
        %9364 = vmatprep.mubr.f32.mxu0 0.0
        %9365 = vmatmul.mubr.f32.gmra.mrb[0].mxu0 %v8867
        %v9366 = vpop.f32.mrb[0].mxu0
        %v9367 = vadd.f32 %v9142, %v9366
        %v9368 = vpop.f32.mrb[0].mxu0
        %9369 = vmatprep.mubr.f32.mxu0 0.0
        %9370 = vmatmul.mubr.f32.gmra.mrb[0].mxu0 %v8868
        %v9371 = vpop.f32.mrb[0].mxu0
        %v9372 = vadd.f32 %v9147, %v9371
        %v9373 = vpop.f32.mrb[0].mxu0
        %9374 = vmatprep.mubr.f32.mxu0 0.0
        %9375 = vmatmul.mubr.f32.gmra.mrb[0].mxu0 %v8869
        %v9376 = vpop.f32.mrb[0].mxu0
        %v9377 = vadd.f32 %v9152, %v9376
        %v9378 = vpop.f32.mrb[0].mxu0
        %9379 = vmatprep.mubr.f32.mxu0 0.0
        %9380 = vmatmul.mubr.f32.gmra.mrb[0].mxu0 %v8870
        %v9381 = vpop.f32.mrb[0].mxu0
        %v9382 = vadd.f32 %v9157, %v9381
        %v9383 = vpop.f32.mrb[0].mxu0
        %9384 = vdwg.mxu0
        %v9385 = vld [vmem:[#allocation3 + $0x10] sm:$0xff]
        %v9386 = vld [vmem:[#allocation3 + $0x28] sm:$0xff]
        %v9387 = vld [vmem:[#allocation3 + $0x40] sm:$0xff]
        %v9388 = vld [vmem:[#allocation3 + $0x58] sm:$0xff]
        %v9389 = vld [vmem:[#allocation3 + $0x70] sm:$0xff]
        %v9390 = vld [vmem:[#allocation3 + $0x88] sm:$0xff]
        %v9391 = vld [vmem:[#allocation3 + $0xa0] sm:$0xff]
        %v9392 = vld [vmem:[#allocation3 + $0xb8] sm:$0xff]
        %v9393 = vld [vmem:[#allocation3 + $0xd0] sm:$0xff]
        %v9394 = vld [vmem:[#allocation3 + $0xe8] sm:$0xff]
        %v9395 = vld [vmem:[#allocation3 + $0x100] sm:$0xff]
        %v9396 = vld [vmem:[#allocation3 + $0x118] sm:$0xff]
        %v9397 = vld [vmem:[#allocation3 + $0x130] sm:$0xff]
        %v9398 = vld [vmem:[#allocation3 + $0x148] sm:$0xff]
        %v9399 = vld [vmem:[#allocation3 + $0x160] sm:$0xff]
        %v9400 = vld [vmem:[#allocation3 + $0x178] sm:$0xff]
        %v9401 = vld [vmem:[#allocation3 + $0x190] sm:$0xff]
        %v9402 = vld [vmem:[#allocation3 + $0x1a8] sm:$0xff]
        %v9403 = vld [vmem:[#allocation3 + $0x1c0] sm:$0xff]
        %v9404 = vld [vmem:[#allocation3 + $0x1d8] sm:$0xff]
        %v9405 = vld [vmem:[#allocation3 + $0x1f0] sm:$0xff]
        %v9406 = vld [vmem:[#allocation3 + $0x208] sm:$0xff]
        %v9407 = vld [vmem:[#allocation3 + $0x220] sm:$0xff]
        %v9408 = vld [vmem:[#allocation3 + $0x238] sm:$0xff]
        %v9409 = vld [vmem:[#allocation3 + $0x250] sm:$0xff]
        %v9410 = vld [vmem:[#allocation3 + $0x268] sm:$0xff]
        %v9411 = vld [vmem:[#allocation3 + $0x280] sm:$0xff]
        %v9412 = vld [vmem:[#allocation3 + $0x298] sm:$0xff]
        %v9413 = vld [vmem:[#allocation3 + $0x2b0] sm:$0xff]
        %v9414 = vld [vmem:[#allocation3 + $0x2c8] sm:$0xff]
        %v9415 = vld [vmem:[#allocation3 + $0x2e0] sm:$0xff]
        %v9416 = vld [vmem:[#allocation3 + $0x2f8] sm:$0xff]
        %v9417 = vld [vmem:[#allocation4 + $0x100] sm:$0xff]
        %v9418 = vld [vmem:[#allocation4 + $0x108] sm:$0xff]
        %v9419 = vld [vmem:[#allocation4 + $0x110] sm:$0xff]
        %v9420 = vld [vmem:[#allocation4 + $0x118] sm:$0xff]
        %v9422 = vsel %vm429, %v9385, 0
        %v9425 = vsel %vm429, %v9386, 0
        %v9428 = vsel %vm429, %v9387, 0
        %v9431 = vsel %vm429, %v9388, 0
        %v9434 = vsel %vm429, %v9389, 0
        %v9437 = vsel %vm429, %v9390, 0
        %v9440 = vsel %vm429, %v9391, 0
        %v9443 = vsel %vm429, %v9392, 0
        %v9446 = vsel %vm429, %v9393, 0
        %v9449 = vsel %vm429, %v9394, 0
        %v9452 = vsel %vm429, %v9395, 0
        %v9455 = vsel %vm429, %v9396, 0
        %v9458 = vsel %vm429, %v9397, 0
        %v9461 = vsel %vm429, %v9398, 0
        %v9464 = vsel %vm429, %v9399, 0
        %v9467 = vsel %vm429, %v9400, 0
        %v9470 = vsel %vm429, %v9401, 0
        %v9473 = vsel %vm429, %v9402, 0
        %v9476 = vsel %vm429, %v9403, 0
        %v9479 = vsel %vm429, %v9404, 0
        %v9482 = vsel %vm429, %v9405, 0
        %v9485 = vsel %vm429, %v9406, 0
        %v9488 = vsel %vm429, %v9407, 0
        %v9491 = vsel %vm429, %v9408, 0
        %v9494 = vsel %vm429, %v9409, 0
        %v9497 = vsel %vm429, %v9410, 0
        %v9500 = vsel %vm429, %v9411, 0
        %v9503 = vsel %vm429, %v9412, 0
        %v9506 = vsel %vm429, %v9413, 0
        %v9509 = vsel %vm429, %v9414, 0
        %v9512 = vsel %vm429, %v9415, 0
        %v9515 = vsel %vm429, %v9416, 0
        %9517 = vmatprep.subr.mxu0 0.0
        %9518 = vmatpush1.msra.mxu0 %v9417
        %9519 = vmatprep.subr.mxu0 0.0
        %9520 = vmatpush1.msra.mxu0 %v9418
        %9521 = vmatprep.subr.mxu0 0.0
        %9522 = vmatpush1.msra.mxu0 %v9419
        %9523 = vmatprep.subr.mxu0 0.0
        %9524 = vmatpush1.msra.mxu0 %v9420
        %9525 = vmatprep.subr.mxu0 0.0
        %9526 = vmatpush1.msra.mxu0 0.0
        %9527 = vmatprep.subr.mxu0 0.0
        %9528 = vmatpush1.msra.mxu0 0.0
        %9529 = vmatprep.subr.mxu0 0.0
        %9530 = vmatpush1.msra.mxu0 0.0
        %9531 = vmatprep.subr.mxu0 0.0
        %9532 = vmatpush1.msra.mxu0 0.0
        %9533 = vmatprep.subr.mxu0 0.0
        %9534 = vmatpush1.msra.mxu0 0.0
        %9535 = vmatprep.subr.mxu0 0.0
        %9536 = vmatpush1.msra.mxu0 0.0
        %9537 = vmatprep.subr.mxu0 0.0
        %9538 = vmatpush1.msra.mxu0 0.0
        %9539 = vmatprep.subr.mxu0 0.0
        %9540 = vmatpush1.msra.mxu0 0.0
        %9541 = vmatprep.subr.mxu0 0.0
        %9542 = vmatpush1.msra.mxu0 0.0
        %9543 = vmatprep.subr.mxu0 0.0
        %9544 = vmatpush1.msra.mxu0 0.0
        %9545 = vmatprep.subr.mxu0 0.0
        %9546 = vmatpush1.msra.mxu0 0.0
        %9547 = vmatprep.subr.mxu0 0.0
        %9548 = vmatpush1.msra.mxu0 0.0
        %9549 = vmatprep.subr.mxu0 0.0
        %9550 = vmatpush1.msra.mxu0 0.0
        %9551 = vmatprep.subr.mxu0 0.0
        %9552 = vmatpush1.msra.mxu0 0.0
        %9553 = vmatprep.subr.mxu0 0.0
        %9554 = vmatpush1.msra.mxu0 0.0
        %9555 = vmatprep.subr.mxu0 0.0
        %9556 = vmatpush1.msra.mxu0 0.0
        %9557 = vmatprep.subr.mxu0 0.0
        %9558 = vmatpush1.msra.mxu0 0.0
        %9559 = vmatprep.subr.mxu0 0.0
        %9560 = vmatpush1.msra.mxu0 0.0
        %9561 = vmatprep.subr.mxu0 0.0
        %9562 = vmatpush1.msra.mxu0 0.0
        %9563 = vmatprep.subr.mxu0 0.0
        %9564 = vmatpush1.msra.mxu0 0.0
        %9565 = vmatprep.subr.mxu0 0.0
        %9566 = vmatpush1.msra.mxu0 0.0
        %9567 = vmatprep.subr.mxu0 0.0
        %9568 = vmatpush1.msra.mxu0 0.0
        %9569 = vmatprep.subr.mxu0 0.0
        %9570 = vmatpush1.msra.mxu0 0.0
        %9571 = vmatprep.subr.mxu0 0.0
        %9572 = vmatpush1.msra.mxu0 0.0
        %9573 = vmatprep.subr.mxu0 0.0
        %9574 = vmatpush1.msra.mxu0 0.0
        %9575 = vmatprep.subr.mxu0 0.0
        %9576 = vmatpush1.msra.mxu0 0.0
        %9577 = vmatprep.subr.mxu0 0.0
        %9578 = vmatpush1.msra.mxu0 0.0
        %9579 = vmatprep.subr.mxu0 0.0
        %9580 = vmatpush1.msra.mxu0 0.0
        %9581 = vmatprep.mubr.f32.mxu0 0.0
        %9582 = vmatmul.mubr.f32.gmra.mrb[0].mxu0 %v9422
        %v9583 = vpop.f32.mrb[0].mxu0
        %v9584 = vadd.f32 0.0, %v9583
        %v9585 = vpop.f32.mrb[0].mxu0
        %9586 = vmatprep.mubr.f32.mxu0 0.0
        %9587 = vmatmul.mubr.f32.gmra.mrb[0].mxu0 %v9425
        %v9588 = vpop.f32.mrb[0].mxu0
        %v9589 = vadd.f32 0.0, %v9588
        %v9590 = vpop.f32.mrb[0].mxu0
        %9591 = vmatprep.mubr.f32.mxu0 0.0
        %9592 = vmatmul.mubr.f32.gmra.mrb[0].mxu0 %v9428
        %v9593 = vpop.f32.mrb[0].mxu0
        %v9594 = vadd.f32 0.0, %v9593
        %v9595 = vpop.f32.mrb[0].mxu0
        %9596 = vmatprep.mubr.f32.mxu0 0.0
        %9597 = vmatmul.mubr.f32.gmra.mrb[0].mxu0 %v9431
        %v9598 = vpop.f32.mrb[0].mxu0
        %v9599 = vadd.f32 0.0, %v9598
        %v9600 = vpop.f32.mrb[0].mxu0
        %9601 = vmatprep.mubr.f32.mxu0 0.0
        %9602 = vmatmul.mubr.f32.gmra.mrb[0].mxu0 %v9434
        %v9603 = vpop.f32.mrb[0].mxu0
        %v9604 = vadd.f32 0.0, %v9603
        %v9605 = vpop.f32.mrb[0].mxu0
        %9606 = vmatprep.mubr.f32.mxu0 0.0
        %9607 = vmatmul.mubr.f32.gmra.mrb[0].mxu0 %v9437
        %v9608 = vpop.f32.mrb[0].mxu0
        %v9609 = vadd.f32 0.0, %v9608
        %v9610 = vpop.f32.mrb[0].mxu0
        %9611 = vmatprep.mubr.f32.mxu0 0.0
        %9612 = vmatmul.mubr.f32.gmra.mrb[0].mxu0 %v9440
        %v9613 = vpop.f32.mrb[0].mxu0
        %v9614 = vadd.f32 0.0, %v9613
        %v9615 = vpop.f32.mrb[0].mxu0
        %9616 = vmatprep.mubr.f32.mxu0 0.0
        %9617 = vmatmul.mubr.f32.gmra.mrb[0].mxu0 %v9443
        %v9618 = vpop.f32.mrb[0].mxu0
        %v9619 = vadd.f32 0.0, %v9618
        %v9620 = vpop.f32.mrb[0].mxu0
        %9621 = vmatprep.mubr.f32.mxu0 0.0
        %9622 = vmatmul.mubr.f32.gmra.mrb[0].mxu0 %v9446
        %v9623 = vpop.f32.mrb[0].mxu0
        %v9624 = vadd.f32 0.0, %v9623
        %v9625 = vpop.f32.mrb[0].mxu0
        %9626 = vmatprep.mubr.f32.mxu0 0.0
        %9627 = vmatmul.mubr.f32.gmra.mrb[0].mxu0 %v9449
        %v9628 = vpop.f32.mrb[0].mxu0
        %v9629 = vadd.f32 0.0, %v9628
        %v9630 = vpop.f32.mrb[0].mxu0
        %9631 = vmatprep.mubr.f32.mxu0 0.0
        %9632 = vmatmul.mubr.f32.gmra.mrb[0].mxu0 %v9452
        %v9633 = vpop.f32.mrb[0].mxu0
        %v9634 = vadd.f32 0.0, %v9633
        %v9635 = vpop.f32.mrb[0].mxu0
        %9636 = vmatprep.mubr.f32.mxu0 0.0
        %9637 = vmatmul.mubr.f32.gmra.mrb[0].mxu0 %v9455
        %v9638 = vpop.f32.mrb[0].mxu0
        %v9639 = vadd.f32 0.0, %v9638
        %v9640 = vpop.f32.mrb[0].mxu0
        %9641 = vmatprep.mubr.f32.mxu0 0.0
        %9642 = vmatmul.mubr.f32.gmra.mrb[0].mxu0 %v9458
        %v9643 = vpop.f32.mrb[0].mxu0
        %v9644 = vadd.f32 0.0, %v9643
        %v9645 = vpop.f32.mrb[0].mxu0
        %9646 = vmatprep.mubr.f32.mxu0 0.0
        %9647 = vmatmul.mubr.f32.gmra.mrb[0].mxu0 %v9461
        %v9648 = vpop.f32.mrb[0].mxu0
        %v9649 = vadd.f32 0.0, %v9648
        %v9650 = vpop.f32.mrb[0].mxu0
        %9651 = vmatprep.mubr.f32.mxu0 0.0
        %9652 = vmatmul.mubr.f32.gmra.mrb[0].mxu0 %v9464
        %v9653 = vpop.f32.mrb[0].mxu0
        %v9654 = vadd.f32 0.0, %v9653
        %v9655 = vpop.f32.mrb[0].mxu0
        %9656 = vmatprep.mubr.f32.mxu0 0.0
        %9657 = vmatmul.mubr.f32.gmra.mrb[0].mxu0 %v9467
        %v9658 = vpop.f32.mrb[0].mxu0
        %v9659 = vadd.f32 0.0, %v9658
        %v9660 = vpop.f32.mrb[0].mxu0
        %9661 = vmatprep.mubr.f32.mxu0 0.0
        %9662 = vmatmul.mubr.f32.gmra.mrb[0].mxu0 %v9470
        %v9663 = vpop.f32.mrb[0].mxu0
        %v9664 = vadd.f32 0.0, %v9663
        %v9665 = vpop.f32.mrb[0].mxu0
        %9666 = vmatprep.mubr.f32.mxu0 0.0
        %9667 = vmatmul.mubr.f32.gmra.mrb[0].mxu0 %v9473
        %v9668 = vpop.f32.mrb[0].mxu0
        %v9669 = vadd.f32 0.0, %v9668
        %v9670 = vpop.f32.mrb[0].mxu0
        %9671 = vmatprep.mubr.f32.mxu0 0.0
        %9672 = vmatmul.mubr.f32.gmra.mrb[0].mxu0 %v9476
        %v9673 = vpop.f32.mrb[0].mxu0
        %v9674 = vadd.f32 0.0, %v9673
        %v9675 = vpop.f32.mrb[0].mxu0
        %9676 = vmatprep.mubr.f32.mxu0 0.0
        %9677 = vmatmul.mubr.f32.gmra.mrb[0].mxu0 %v9479
        %v9678 = vpop.f32.mrb[0].mxu0
        %v9679 = vadd.f32 0.0, %v9678
        %v9680 = vpop.f32.mrb[0].mxu0
        %9681 = vmatprep.mubr.f32.mxu0 0.0
        %9682 = vmatmul.mubr.f32.gmra.mrb[0].mxu0 %v9482
        %v9683 = vpop.f32.mrb[0].mxu0
        %v9684 = vadd.f32 0.0, %v9683
        %v9685 = vpop.f32.mrb[0].mxu0
        %9686 = vmatprep.mubr.f32.mxu0 0.0
        %9687 = vmatmul.mubr.f32.gmra.mrb[0].mxu0 %v9485
        %v9688 = vpop.f32.mrb[0].mxu0
        %v9689 = vadd.f32 0.0, %v9688
        %v9690 = vpop.f32.mrb[0].mxu0
        %9691 = vmatprep.mubr.f32.mxu0 0.0
        %9692 = vmatmul.mubr.f32.gmra.mrb[0].mxu0 %v9488
        %v9693 = vpop.f32.mrb[0].mxu0
        %v9694 = vadd.f32 0.0, %v9693
        %v9695 = vpop.f32.mrb[0].mxu0
        %9696 = vmatprep.mubr.f32.mxu0 0.0
        %9697 = vmatmul.mubr.f32.gmra.mrb[0].mxu0 %v9491
        %v9698 = vpop.f32.mrb[0].mxu0
        %v9699 = vadd.f32 0.0, %v9698
        %v9700 = vpop.f32.mrb[0].mxu0
        %9701 = vmatprep.mubr.f32.mxu0 0.0
        %9702 = vmatmul.mubr.f32.gmra.mrb[0].mxu0 %v9494
        %v9703 = vpop.f32.mrb[0].mxu0
        %v9704 = vadd.f32 0.0, %v9703
        %v9705 = vpop.f32.mrb[0].mxu0
        %9706 = vmatprep.mubr.f32.mxu0 0.0
        %9707 = vmatmul.mubr.f32.gmra.mrb[0].mxu0 %v9497
        %v9708 = vpop.f32.mrb[0].mxu0
        %v9709 = vadd.f32 0.0, %v9708
        %v9710 = vpop.f32.mrb[0].mxu0
        %9711 = vmatprep.mubr.f32.mxu0 0.0
        %9712 = vmatmul.mubr.f32.gmra.mrb[0].mxu0 %v9500
        %v9713 = vpop.f32.mrb[0].mxu0
        %v9714 = vadd.f32 0.0, %v9713
        %v9715 = vpop.f32.mrb[0].mxu0
        %9716 = vmatprep.mubr.f32.mxu0 0.0
        %9717 = vmatmul.mubr.f32.gmra.mrb[0].mxu0 %v9503
        %v9718 = vpop.f32.mrb[0].mxu0
        %v9719 = vadd.f32 0.0, %v9718
        %v9720 = vpop.f32.mrb[0].mxu0
        %9721 = vmatprep.mubr.f32.mxu0 0.0
        %9722 = vmatmul.mubr.f32.gmra.mrb[0].mxu0 %v9506
        %v9723 = vpop.f32.mrb[0].mxu0
        %v9724 = vadd.f32 0.0, %v9723
        %v9725 = vpop.f32.mrb[0].mxu0
        %9726 = vmatprep.mubr.f32.mxu0 0.0
        %9727 = vmatmul.mubr.f32.gmra.mrb[0].mxu0 %v9509
        %v9728 = vpop.f32.mrb[0].mxu0
        %v9729 = vadd.f32 0.0, %v9728
        %v9730 = vpop.f32.mrb[0].mxu0
        %9731 = vmatprep.mubr.f32.mxu0 0.0
        %9732 = vmatmul.mubr.f32.gmra.mrb[0].mxu0 %v9512
        %v9733 = vpop.f32.mrb[0].mxu0
        %v9734 = vadd.f32 0.0, %v9733
        %v9735 = vpop.f32.mrb[0].mxu0
        %9736 = vmatprep.mubr.f32.mxu0 0.0
        %9737 = vmatmul.mubr.f32.gmra.mrb[0].mxu0 %v9515
        %v9738 = vpop.f32.mrb[0].mxu0
        %v9739 = vadd.f32 0.0, %v9738
        %v9740 = vpop.f32.mrb[0].mxu0
        %9741 = vdwg.mxu0
        %v9742 = vadd.f32 %v9227, %v9584
        %v9743 = vadd.f32 %v9232, %v9589
        %v9744 = vadd.f32 %v9237, %v9594
        %v9745 = vadd.f32 %v9242, %v9599
        %v9746 = vadd.f32 %v9247, %v9604
        %v9747 = vadd.f32 %v9252, %v9609
        %v9748 = vadd.f32 %v9257, %v9614
        %v9749 = vadd.f32 %v9262, %v9619
        %v9750 = vadd.f32 %v9267, %v9624
        %v9751 = vadd.f32 %v9272, %v9629
        %v9752 = vadd.f32 %v9277, %v9634
        %v9753 = vadd.f32 %v9282, %v9639
        %v9754 = vadd.f32 %v9287, %v9644
        %v9755 = vadd.f32 %v9292, %v9649
        %v9756 = vadd.f32 %v9297, %v9654
        %v9757 = vadd.f32 %v9302, %v9659
        %v9758 = vadd.f32 %v9307, %v9664
        %v9759 = vadd.f32 %v9312, %v9669
        %v9760 = vadd.f32 %v9317, %v9674
        %v9761 = vadd.f32 %v9322, %v9679
        %v9762 = vadd.f32 %v9327, %v9684
        %v9763 = vadd.f32 %v9332, %v9689
        %v9764 = vadd.f32 %v9337, %v9694
        %v9765 = vadd.f32 %v9342, %v9699
        %v9766 = vadd.f32 %v9347, %v9704
        %v9767 = vadd.f32 %v9352, %v9709
        %v9768 = vadd.f32 %v9357, %v9714
        %v9769 = vadd.f32 %v9362, %v9719
        %v9770 = vadd.f32 %v9367, %v9724
        %v9771 = vadd.f32 %v9372, %v9729
        %v9772 = vadd.f32 %v9377, %v9734
        %v9773 = vadd.f32 %v9382, %v9739
        %v9774 = vld [vmem:[%s11] sm:$0x1]
        %v9776 = vlaneseq
        %v9777 = vshrl.u32 %v9776, 7
        %v9778 = vsub.s32 0, %v9777
        %v9779 = vrot.slane %v9774, %v9778
        %v9781 = vadd.f32 %v9742, %v9779
        %v9782 = vadd.f32 %v9743, %v9779
        %v9783 = vadd.f32 %v9744, %v9779
        %v9784 = vadd.f32 %v9745, %v9779
        %v9785 = vadd.f32 %v9746, %v9779
        %v9786 = vadd.f32 %v9747, %v9779
        %v9787 = vadd.f32 %v9748, %v9779
        %v9788 = vadd.f32 %v9749, %v9779
        %v9789 = vadd.f32 %v9750, %v9779
        %v9790 = vadd.f32 %v9751, %v9779
        %v9791 = vadd.f32 %v9752, %v9779
        %v9792 = vadd.f32 %v9753, %v9779
        %v9793 = vadd.f32 %v9754, %v9779
        %v9794 = vadd.f32 %v9755, %v9779
        %v9795 = vadd.f32 %v9756, %v9779
        %v9796 = vadd.f32 %v9757, %v9779
        %v9797 = vadd.f32 %v9758, %v9779
        %v9798 = vadd.f32 %v9759, %v9779
        %v9799 = vadd.f32 %v9760, %v9779
        %v9800 = vadd.f32 %v9761, %v9779
        %v9801 = vadd.f32 %v9762, %v9779
        %v9802 = vadd.f32 %v9763, %v9779
        %v9803 = vadd.f32 %v9764, %v9779
        %v9804 = vadd.f32 %v9765, %v9779
        %v9805 = vadd.f32 %v9766, %v9779
        %v9806 = vadd.f32 %v9767, %v9779
        %v9807 = vadd.f32 %v9768, %v9779
        %v9808 = vadd.f32 %v9769, %v9779
        %v9809 = vadd.f32 %v9770, %v9779
        %v9810 = vadd.f32 %v9771, %v9779
        %v9811 = vadd.f32 %v9772, %v9779
        %v9812 = vadd.f32 %v9773, %v9779
        %v9813 = vtanh.pop %v9781
        %v9814 = vtanh.pop %v9782
        %v9815 = vtanh.pop %v9783
        %v9816 = vtanh.pop %v9784
        %v9817 = vtanh.pop %v9785
        %v9818 = vtanh.pop %v9786
        %v9819 = vtanh.pop %v9787
        %v9820 = vtanh.pop %v9788
        %v9821 = vtanh.pop %v9789
        %v9822 = vtanh.pop %v9790
        %v9823 = vtanh.pop %v9791
        %v9824 = vtanh.pop %v9792
        %v9825 = vtanh.pop %v9793
        %v9826 = vtanh.pop %v9794
        %v9827 = vtanh.pop %v9795
        %v9828 = vtanh.pop %v9796
        %v9829 = vtanh.pop %v9797
        %v9830 = vtanh.pop %v9798
        %v9831 = vtanh.pop %v9799
        %v9832 = vtanh.pop %v9800
        %v9833 = vtanh.pop %v9801
        %v9834 = vtanh.pop %v9802
        %v9835 = vtanh.pop %v9803
        %v9836 = vtanh.pop %v9804
        %v9837 = vtanh.pop %v9805
        %v9838 = vtanh.pop %v9806
        %v9839 = vtanh.pop %v9807
        %v9840 = vtanh.pop %v9808
        %v9841 = vtanh.pop %v9809
        %v9842 = vtanh.pop %v9810
        %v9843 = vtanh.pop %v9811
        %v9844 = vtanh.pop %v9812
        %9845 = vst.msk [vmem:[%s428] sm:$0xff] %vm518, %v9813
        %9846 = vst.msk [vmem:[%s428 + $0x8] sm:$0xff] %vm518, %v9814
        %9847 = vst.msk [vmem:[%s428 + $0x10] sm:$0xff] %vm518, %v9815
        %9848 = vst.msk [vmem:[%s428 + $0x18] sm:$0xff] %vm518, %v9816
        %9849 = vst.msk [vmem:[%s428 + $0x20] sm:$0xff] %vm518, %v9817
        %9850 = vst.msk [vmem:[%s428 + $0x28] sm:$0xff] %vm518, %v9818
        %9851 = vst.msk [vmem:[%s428 + $0x30] sm:$0xff] %vm518, %v9819
        %9852 = vst.msk [vmem:[%s428 + $0x38] sm:$0xff] %vm518, %v9820
        %9853 = vst.msk [vmem:[%s428 + $0x40] sm:$0xff] %vm518, %v9821
        %9854 = vst.msk [vmem:[%s428 + $0x48] sm:$0xff] %vm518, %v9822
        %9855 = vst.msk [vmem:[%s428 + $0x50] sm:$0xff] %vm518, %v9823
        %9856 = vst.msk [vmem:[%s428 + $0x58] sm:$0xff] %vm518, %v9824
        %9857 = vst.msk [vmem:[%s428 + $0x60] sm:$0xff] %vm518, %v9825
        %9858 = vst.msk [vmem:[%s428 + $0x68] sm:$0xff] %vm518, %v9826
        %9859 = vst.msk [vmem:[%s428 + $0x70] sm:$0xff] %vm518, %v9827
        %9860 = vst.msk [vmem:[%s428 + $0x78] sm:$0xff] %vm518, %v9828
        %9861 = vst.msk [vmem:[%s428 + $0x80] sm:$0xff] %vm518, %v9829
        %9862 = vst.msk [vmem:[%s428 + $0x88] sm:$0xff] %vm518, %v9830
        %9863 = vst.msk [vmem:[%s428 + $0x90] sm:$0xff] %vm518, %v9831
        %9864 = vst.msk [vmem:[%s428 + $0x98] sm:$0xff] %vm518, %v9832
        %9865 = vst.msk [vmem:[%s428 + $0xa0] sm:$0xff] %vm518, %v9833
        %9866 = vst.msk [vmem:[%s428 + $0xa8] sm:$0xff] %vm518, %v9834
        %9867 = vst.msk [vmem:[%s428 + $0xb0] sm:$0xff] %vm518, %v9835
        %9868 = vst.msk [vmem:[%s428 + $0xb8] sm:$0xff] %vm518, %v9836
        %9869 = vst.msk [vmem:[%s428 + $0xc0] sm:$0xff] %vm518, %v9837
        %9870 = vst.msk [vmem:[%s428 + $0xc8] sm:$0xff] %vm518, %v9838
        %9871 = vst.msk [vmem:[%s428 + $0xd0] sm:$0xff] %vm518, %v9839
        %9872 = vst.msk [vmem:[%s428 + $0xd8] sm:$0xff] %vm518, %v9840
        %9873 = vst.msk [vmem:[%s428 + $0xe0] sm:$0xff] %vm518, %v9841
        %9874 = vst.msk [vmem:[%s428 + $0xe8] sm:$0xff] %vm518, %v9842
        %9875 = vst.msk [vmem:[%s428 + $0xf0] sm:$0xff] %vm518, %v9843
        %9876 = vst.msk [vmem:[%s428 + $0xf8] sm:$0xff] %vm518, %v9844
        %p9877 = scmp.lt.s32.totalorder %s24, 1
        %s9878 = scalar_select %p9877, %s24, 1
        %s9879 = smul.addr %s9878, 32
        %s9880 = smul.addr %s9879, 8
        %s9881 = scalar_lea.vmem %s12, %s9880
        // Predicated region
        $region73: #{iit_generate.1} parent=67 // pred_check
          %p9882 = pneg %p299
        $region74: #{iit_generate.1} parent=67 // pred_check_branch
          %9884 = sbr.rel (%p9882) target = $region76
        $region75: #{iit_generate.1} parent=67 // pred_region
          _
        $region76: #{iit_generate.1} parent=67 // pred_fallthru
          _
      $region68: #{iit_generate.1} parent=5 // pred_fallthru
        _
      %p9885 = scmp.le.s32.totalorder 2, %s19
      // Predicated region
      $region77: #{iit_generate.1} parent=5 // pred_check
        %p9886 = pneg %p9885
      $region78: #{iit_generate.1} parent=5 // pred_check_branch
        %9888 = sbr.rel (%p9886) target = $region80
      $region79: #{iit_generate.1} parent=5 // pred_region
        %s9889 = ssub.s32 %s19, 2
        // Predicated region
        $region81: #{iit_generate.1} parent=79 // pred_check
          %p9890 = pneg %p305
        $region82: #{iit_generate.1} parent=79 // pred_check_branch
          %9892 = sbr.rel (%p9890) target = $region84
        $region83: #{iit_generate.1} parent=79 // pred_region
          %p9893 = scmp.lt.s32.totalorder %s25, 1
          %s9894 = scalar_select %p9893, %s25, 1
          %s9895 = smul.addr %s9894, 32
          %s9896 = smul.addr %s9895, 8
          %s9897 = scalar_lea.vmem %s12, %s9896
        $region84: #{iit_generate.1} parent=79 // pred_fallthru
          _
      $region80: #{iit_generate.1} parent=5 // pred_fallthru
        _
    $region6: #{iit_generate.1} parent=1 // loop_footer
      %s23 = sadd.s32 1, %s19
    $region7: #{iit_generate.1} parent=1 // loop_footer_branch
      %18 = sbr.rel target = $region3
    $region8: #{iit_generate.1} parent=1 // loop_exit
      _
    %9898 = vsyncpa [#allocation5], 1
    %s9899 = scalar_lea.sflag [#allocation5], 1
    %9900 = vsyncpa %s9899, 1

</llo_original>
